<compile_context>
chip_gen: v5e
topology: v5e:2x2
jax: 0.10.0
libtpu: 0.0.40
codegen_flags: <defaults>
</compile_context>

<pallas_src>
from functools import partial

import numpy as np
import jax
import jax.numpy as jnp
from jax.experimental import pallas as pl
from jax.experimental.pallas import tpu as pltpu


# ------------------------- helpers -------------------------

def _causal_mask(S):
    r = jnp.arange(S)
    # large finite negative (not -inf): exp(-1e9 - max) underflows to exactly 0
    # in f32, so padded keys contribute zero probability.
    return jnp.where(r[None, :] > r[:, None], -1e9, 0.0).astype(jnp.float32)


def _layernorm(v, g, b, eps=1e-5):
    mu = jnp.mean(v, axis=-1, keepdims=True)
    var = jnp.mean(jnp.square(v - mu), axis=-1, keepdims=True)
    return (v - mu) * jax.lax.rsqrt(var + eps) * g + b


def _linear_bf16(v, w_t, b):
    # v: (B, S, in) f32, w_t: (in, out) bf16 (pre-transposed torch weight), b: (1, out) f32
    Bv, Sv, IN = v.shape
    out = jnp.dot(v.reshape(Bv * Sv, IN).astype(jnp.bfloat16), w_t,
                  preferred_element_type=jnp.float32)
    return out.reshape(Bv, Sv, w_t.shape[1]) + b


def _vmem_capacity_bytes():
    try:
        cap = getattr(pltpu.get_tpu_info(), "vmem_capacity_bytes", None)
        if cap:
            return int(cap)
    except Exception:
        pass
    return 64 << 20  # conservative: v7x per-core VMEM


# ------------------------------ kernel -------------------------------

def _text_encoder_kernel(n_heads,
                         x0_ref, mask_ref,
                         ln1g_ref, ln1b_ref, win_ref, bin_ref,
                         wout_ref, bout_ref, ln2g_ref, ln2b_ref,
                         wfc_ref, bfc_ref, wpr_ref, bpr_ref,
                         lnfg_ref, lnfb_ref,
                         out_ref, x_scr):
    layer = pl.program_id(1)

    # first layer of this batch tile: load prompt+pos into the persistent carry
    @pl.when(layer == 0)
    def _():
        x_scr[...] = x0_ref[...]

    x = x_scr[...]                                   # (Bt, S, W) f32
    Bt, S, W = x.shape
    hd = W // n_heads

    # mask hoisted & broadcast ONCE (JAX does not CSE broadcast_in_dim)
    mask_b = jnp.broadcast_to(mask_ref[...], (Bt, S, S))

    # ---- residual attention block: x = x + attn(ln_1(x)) ----
    xa = _layernorm(x, ln1g_ref[...], ln1b_ref[...])
    qkv = _linear_bf16(xa, win_ref[...], bin_ref[...])   # (Bt, S, 3W) f32
    q = qkv[:, :, 0 * W:1 * W]                           # 1/sqrt(hd) already folded in
    k = qkv[:, :, 1 * W:2 * W]
    v = qkv[:, :, 2 * W:3 * W]

    # per-head output projection accumulated in f32: no attn scratch slab, no
    # 64-lane masked column stores, one (Bt*S, W) accumulator.
    attn_acc = jnp.zeros((Bt * S, W), jnp.float32)
    for h in range(n_heads):                              # static head loop (see TODO above)
        lo = h * hd
        qh = q[:, :, lo:lo + hd].astype(jnp.bfloat16)
        kh = k[:, :, lo:lo + hd].astype(jnp.bfloat16)
        vh = v[:, :, lo:lo + hd].astype(jnp.bfloat16)
        s = jnp.einsum('bqd,bkd->bqk', qh, kh,
                       preferred_element_type=jnp.float32) + mask_b
        s = s - jnp.max(s, axis=-1, keepdims=True)
        p = jnp.exp(s)
        p = p * pl.reciprocal(jnp.sum(p, axis=-1, keepdims=True), approx=True)
        oh = jnp.einsum('bqk,bkd->bqd', p.astype(jnp.bfloat16), vh,
                        preferred_element_type=jnp.float32)
        attn_acc = attn_acc + jnp.dot(
            oh.reshape(Bt * S, hd).astype(jnp.bfloat16),
            wout_ref[lo:lo + hd, :],                     # (hd, W) bf16 slice of out proj
            preferred_element_type=jnp.float32)

    x = x + attn_acc.reshape(Bt, S, W) + bout_ref[...]

    # ---- MLP block: x = x + c_proj(quick_gelu(c_fc(ln_2(x)))) ----
    xm = _layernorm(x, ln2g_ref[...], ln2b_ref[...])
    hfc = _linear_bf16(xm, wfc_ref[...], bfc_ref[...])   # (Bt, S, 4W)
    hfc = hfc * jax.nn.sigmoid(1.702 * hfc)              # QuickGELU
    x = x + _linear_bf16(hfc, wpr_ref[...], bpr_ref[...])

    x_scr[...] = x                                        # carry to next layer
    # per-layer output with ln_final applied, as in torch.stack + ln_final
    out_ref[0] = _layernorm(x, lnfg_ref[...], lnfb_ref[...]).astype(out_ref.dtype)


# ----------------------------- wrapper --------------------------------

def text_encoder_forward(prompt, params, n_heads, batch_block=None,
                         seq_align=128, out_dtype=jnp.bfloat16,
                         mlp_weight_buffers=None):
    B, S, W = prompt.shape
    L = params["ln1_g"].shape[0]
    assert W % n_heads == 0
    # weight-DMA amortization: default to the FULL batch (nb=1) so each layer's
    # weights are streamed once; only split on v7x when compute-bound per core.
    batch_block = B if batch_block is None else batch_block
    assert B % batch_block == 0
    nb = B // batch_block
    hd = W // n_heads

    # pad the sequence so score tiles / reductions / outputs are lane-aligned.
    S_pad = (-(-S // seq_align) * seq_align) if seq_align else S

    x0 = (prompt + params["pos_emb"][None]).astype(jnp.float32)   # glue add
    if S_pad != S:
        x0 = jnp.pad(x0, ((0, 0), (0, S_pad - S), (0, 0)))        # pad rows -> masked out
    mask = _causal_mask(S_pad)

    # pre-transpose torch Linear weights -> (in, out); fold the query scale into
    # the q columns of w_in / b_in; stream everything as bf16.
    scale = float(hd) ** -0.5
    win_t = jnp.swapaxes(params["w_in"], 1, 2)                    # (L, W, 3W)
    win_t = win_t.at[:, :, :W].multiply(scale).astype(jnp.bfloat16)
    b_in = params["b_in"].at[:, :, :W].multiply(scale)            # f32 biases
    wout_t = jnp.swapaxes(params["w_out"], 1, 2).astype(jnp.bfloat16)   # (L, W, W)
    wfc_t = jnp.swapaxes(params["w_fc"], 1, 2).astype(jnp.bfloat16)     # (L, W, 4W)
    wpr_t = jnp.swapaxes(params["w_pr"], 1, 2).astype(jnp.bfloat16)     # (L, 4W, W)

    def per_layer(a, nbuf=None):
        nd = a.ndim
        kw = {}
        if nbuf is not None and nbuf != 2:
            kw = dict(pipeline_mode=pl.Buffered(nbuf))   # e.g. 3 on v5e if DMA exposed
        return pl.BlockSpec((pl.Squeezed(),) + a.shape[1:],
                            lambda b, l: (l,) + (0,) * (nd - 1), **kw)

    def shared(a):
        nd = a.ndim
        return pl.BlockSpec(a.shape, lambda b, l: (0,) * nd)

    args = (x0, mask,
            params["ln1_g"], params["ln1_b"], win_t, b_in,
            wout_t, params["b_out"], params["ln2_g"], params["ln2_b"],
            wfc_t, params["b_fc"], wpr_t, params["b_pr"],
            params["lnf_g"], params["lnf_b"])

    in_specs = [
        pl.BlockSpec((batch_block, S_pad, W), lambda b, l: (b, 0, 0)),   # x0 (batch-tiled)
        shared(mask),
        per_layer(params["ln1_g"]), per_layer(params["ln1_b"]),
        per_layer(win_t), per_layer(b_in),
        per_layer(wout_t), per_layer(params["b_out"]),
        per_layer(params["ln2_g"]), per_layer(params["ln2_b"]),
        per_layer(wfc_t, mlp_weight_buffers), per_layer(params["b_fc"]),
        per_layer(wpr_t, mlp_weight_buffers), per_layer(params["b_pr"]),
        shared(params["lnf_g"]), shared(params["lnf_b"]),
    ]

    # explicit VMEM budget, clamped to physical capacity (64 MiB/core on v7x).
    cap = _vmem_capacity_bytes()
    wtile = 12 * W * W * 2 + 9 * W * 4                     # bf16 weights + f32 biases / layer
    atile = batch_block * S_pad * W * 4                    # one f32 activation tile
    stile = batch_block * S_pad * S_pad * 4                # one f32 score tile
    obytes = batch_block * S_pad * W * jnp.dtype(out_dtype).itemsize
    need = 2 * wtile + 16 * atile + 4 * stile + 2 * obytes + (8 << 20)
    vmem_limit = int(min(max(need, 32 << 20), (cap * 9) // 10))

    out = pl.pallas_call(
        partial(_text_encoder_kernel, n_heads),
        out_shape=jax.ShapeDtypeStruct((L, B, S_pad, W), out_dtype),
        grid_spec=pltpu.PrefetchScalarGridSpec(
            num_scalar_prefetch=0,
            grid=(nb, L),                    # batch tiles (parallel) x layers (sequential)
            in_specs=in_specs,
            out_specs=pl.BlockSpec((1, batch_block, S_pad, W),
                                   lambda b, l: (l, b, 0, 0)),
            scratch_shapes=[
                pltpu.VMEM((batch_block, S_pad, W), jnp.float32),   # residual-stream carry
            ],
        ),
        compiler_params=pltpu.CompilerParams(
            dimension_semantics=("parallel", "arbitrary"),
            vmem_limit_bytes=vmem_limit),
    )(*args)
    return out[:, :, :S, :] if S_pad != S else out


# -------------------- deterministic parameter init --------------------

def init_params(key, layers, width, seq):
    ks = jax.random.split(key, 10)
    std = 0.02

    def rnd(k, shape):
        return (std * jax.random.normal(k, shape)).astype(jnp.float32)

    return dict(
        pos_emb=rnd(ks[0], (seq, width)),
        ln1_g=jnp.ones((layers, 1, width), jnp.float32),
        ln1_b=jnp.zeros((layers, 1, width), jnp.float32),
        w_in=rnd(ks[1], (layers, 3 * width, width)),
        b_in=rnd(ks[2], (layers, 1, 3 * width)),
        w_out=rnd(ks[3], (layers, width, width)),
        b_out=rnd(ks[4], (layers, 1, width)),
        ln2_g=jnp.ones((layers, 1, width), jnp.float32),
        ln2_b=jnp.zeros((layers, 1, width), jnp.float32),
        w_fc=rnd(ks[5], (layers, 4 * width, width)),
        b_fc=rnd(ks[6], (layers, 1, 4 * width)),
        w_pr=rnd(ks[7], (layers, width, 4 * width)),
        b_pr=rnd(ks[8], (layers, 1, width)),
        lnf_g=jnp.ones((1, 1, width), jnp.float32),
        lnf_b=jnp.zeros((1, 1, width), jnp.float32),
    )


# ------------------------ pure-JAX reference ---------------------------
# Mirrors the kernel's compute dtypes (bf16 matmul inputs, f32 accumulation) so
# the correctness check is tight; semantics match the torch module (unpadded).

def ref_forward(prompt, params, n_heads):
    B, S, W = prompt.shape
    L = params["ln1_g"].shape[0]
    hd = W // n_heads
    bf = jnp.bfloat16

    def ln(v, g, b):
        mu = v.mean(-1, keepdims=True)
        var = ((v - mu) ** 2).mean(-1, keepdims=True)
        return (v - mu) / jnp.sqrt(var + 1e-5) * g.reshape(-1) + b.reshape(-1)

    def lin(v, w, b):
        return jnp.dot(v.astype(bf), w.T.astype(bf),
                       preferred_element_type=jnp.float32) + b.reshape(-1)

    x = prompt + params["pos_emb"][None]
    mask = _causal_mask(S)
    outs = []
    for i in range(L):
        xa = ln(x, params["ln1_g"][i], params["ln1_b"][i])
        qkv = lin(xa, params["w_in"][i], params["b_in"][i])
        q, k, v = jnp.split(qkv, 3, axis=-1)
        q = (q * hd ** -0.5).reshape(B, S, n_heads, hd).astype(bf)
        k = k.reshape(B, S, n_heads, hd).astype(bf)
        v = v.reshape(B, S, n_heads, hd).astype(bf)
        s = jnp.einsum('bqhd,bkhd->bhqk', q, k,
                       preferred_element_type=jnp.float32) + mask
        p = jax.nn.softmax(s, axis=-1)
        a = jnp.einsum('bhqk,bkhd->bqhd', p.astype(bf), v,
                       preferred_element_type=jnp.float32).reshape(B, S, W)
        a = lin(a, params["w_out"][i], params["b_out"][i])
        x = x + a
        xm = ln(x, params["ln2_g"][i], params["ln2_b"][i])
        h = lin(xm, params["w_fc"][i], params["b_fc"][i])
        h = h * jax.nn.sigmoid(1.702 * h)
        x = x + lin(h, params["w_pr"][i], params["b_pr"][i])
        outs.append(x)
    tf = jnp.stack(outs)  # (L, B, S, W)
    return ln(tf, params["lnf_g"], params["lnf_b"])


# -------------------------------- main ---------------------------------

if __name__ == "__main__":
    B, S, W, H, L = 2, 8, 32, 4, 3   # batch prompts, context, width, heads, layers
    # TODO(synk): the module's unused `textual_projection` / `proj()` helper is not
    # part of forward() and is omitted here.
    key = jax.random.PRNGKey(0)
    kp, kw = jax.random.split(key)
    prompt = jax.random.normal(kp, (B, S, W), jnp.float32)
    params = init_params(kw, L, W, S)

    # default batch_block = B -> nb=1: every layer's weights DMA'd exactly once;
    # the sequence is padded to 128 inside the wrapper and sliced back.
    out = text_encoder_forward(prompt, params, H)
    out = jax.block_until_ready(out)
    assert out.shape == (L, B, S, W)

    ref = ref_forward(prompt, params, H)
    np.testing.assert_allclose(np.asarray(out, dtype=np.float32), np.asarray(ref),
                               rtol=3e-2, atol=3e-2)
    print("KERNEL_OK")
</pallas_src>

<mosaic_0001>
module attributes {stable_mosaic.version = 11 : i64} {
  func.func @_text_encoder_kernel(%arg0: i32, %arg1: i32, %arg2: memref<2x128x32xf32, #tpu.memory_space<vmem>>, %arg3: memref<128x128xf32, #tpu.memory_space<vmem>>, %arg4: memref<1x1x32xf32, #tpu.memory_space<vmem>>, %arg5: memref<1x1x32xf32, #tpu.memory_space<vmem>>, %arg6: memref<1x32x96xbf16, #tpu.memory_space<vmem>>, %arg7: memref<1x1x96xf32, #tpu.memory_space<vmem>>, %arg8: memref<1x32x32xbf16, #tpu.memory_space<vmem>>, %arg9: memref<1x1x32xf32, #tpu.memory_space<vmem>>, %arg10: memref<1x1x32xf32, #tpu.memory_space<vmem>>, %arg11: memref<1x1x32xf32, #tpu.memory_space<vmem>>, %arg12: memref<1x32x128xbf16, #tpu.memory_space<vmem>>, %arg13: memref<1x1x128xf32, #tpu.memory_space<vmem>>, %arg14: memref<1x128x32xbf16, #tpu.memory_space<vmem>>, %arg15: memref<1x1x32xf32, #tpu.memory_space<vmem>>, %arg16: memref<1x1x32xf32, #tpu.memory_space<vmem>>, %arg17: memref<1x1x32xf32, #tpu.memory_space<vmem>>, %arg18: memref<1x2x128x32xbf16, #tpu.memory_space<vmem>>, %arg19: memref<2x128x32xf32, #tpu.memory_space<vmem>>) attributes {dimension_semantics = [#tpu.dimension_semantics<parallel>, #tpu.dimension_semantics<arbitrary>], iteration_bounds = array<i64: 1, 3>, scalar_prefetch = 0 : i64, scratch_operands = 1 : i64, tpu.core_type = #tpu.core_type<tc>, window_params = [{transform_indices = @transform_0, window_bounds = array<i64: 2, 128, 32>}, {pipeline_mode = #tpu.pipeline_mode<synchronous>, transform_indices = @transform_1, window_bounds = array<i64: 128, 128>}, {transform_indices = @transform_2, window_bounds = array<i64: 1, 1, 32>}, {transform_indices = @transform_3, window_bounds = array<i64: 1, 1, 32>}, {transform_indices = @transform_4, window_bounds = array<i64: 1, 32, 96>}, {transform_indices = @transform_5, window_bounds = array<i64: 1, 1, 96>}, {transform_indices = @transform_6, window_bounds = array<i64: 1, 32, 32>}, {transform_indices = @transform_7, window_bounds = array<i64: 1, 1, 32>}, {transform_indices = @transform_8, window_bounds = array<i64: 1, 1, 32>}, {transform_indices = @transform_9, window_bounds = array<i64: 1, 1, 32>}, {transform_indices = @transform_10, window_bounds = array<i64: 1, 32, 128>}, {transform_indices = @transform_11, window_bounds = array<i64: 1, 1, 128>}, {transform_indices = @transform_12, window_bounds = array<i64: 1, 128, 32>}, {transform_indices = @transform_13, window_bounds = array<i64: 1, 1, 32>}, {pipeline_mode = #tpu.pipeline_mode<synchronous>, transform_indices = @transform_14, window_bounds = array<i64: 1, 1, 32>}, {pipeline_mode = #tpu.pipeline_mode<synchronous>, transform_indices = @transform_15, window_bounds = array<i64: 1, 1, 32>}, {transform_indices = @transform_16, window_bounds = array<i64: 1, 2, 128, 32>}]} {
    %c0_i32 = arith.constant 0 : i32
    %0 = arith.cmpi eq, %arg1, %c0_i32 : i32
    %1 = arith.extui %0 : i1 to i32
    %c0_i32_0 = arith.constant 0 : i32
    %2 = arith.cmpi ne, %1, %c0_i32_0 : i32
    scf.if %2 {
      %c0_100 = arith.constant 0 : index
      %c0_101 = arith.constant 0 : index
      %c0_102 = arith.constant 0 : index
      %249 = vector.load %arg2[%c0_100, %c0_101, %c0_102] : memref<2x128x32xf32, #tpu.memory_space<vmem>>, vector<2x128x32xf32>
      %c0_103 = arith.constant 0 : index
      %c0_104 = arith.constant 0 : index
      %c0_105 = arith.constant 0 : index
      %250 = vector.load %arg19[%c0_103, %c0_104, %c0_105] : memref<2x128x32xf32, #tpu.memory_space<vmem>>, vector<2x128x32xf32>
      tpu.vector_store %arg19[%c0_103, %c0_104, %c0_105], %249 {strides = array<i32>} : memref<2x128x32xf32, #tpu.memory_space<vmem>>, vector<2x128x32xf32>,
    } else {
    }
    %c0 = arith.constant 0 : index
    %c0_1 = arith.constant 0 : index
    %c0_2 = arith.constant 0 : index
    %3 = vector.load %arg19[%c0, %c0_1, %c0_2] : memref<2x128x32xf32, #tpu.memory_space<vmem>>, vector<2x128x32xf32>
    %c0_3 = arith.constant 0 : index
    %c0_4 = arith.constant 0 : index
    %4 = vector.load %arg3[%c0_3, %c0_4] : memref<128x128xf32, #tpu.memory_space<vmem>>, vector<128x128xf32>
    %5 = vector.shape_cast %4 : vector<128x128xf32> to vector<1x128x128xf32>
    %6 = vector.broadcast %5 : vector<1x128x128xf32> to vector<2x128x128xf32>
    %c0_5 = arith.constant 0 : index
    %c0_6 = arith.constant 0 : index
    %c0_7 = arith.constant 0 : index
    %7 = vector.load %arg4[%c0_5, %c0_6, %c0_7] : memref<1x1x32xf32, #tpu.memory_space<vmem>>, vector<1x1x32xf32>
    %8 = vector.shape_cast %7 : vector<1x1x32xf32> to vector<1x32xf32>
    %c0_8 = arith.constant 0 : index
    %c0_9 = arith.constant 0 : index
    %c0_10 = arith.constant 0 : index
    %9 = vector.load %arg5[%c0_8, %c0_9, %c0_10] : memref<1x1x32xf32, #tpu.memory_space<vmem>>, vector<1x1x32xf32>
    %10 = vector.shape_cast %9 : vector<1x1x32xf32> to vector<1x32xf32>
    %cst = arith.constant dense<0.000000e+00> : vector<2x128xf32>
    %11 = vector.multi_reduction <add>, %3, %cst [2] : vector<2x128x32xf32> to vector<2x128xf32>
    %12 = vector.shape_cast %11 : vector<2x128xf32> to vector<2x128x1xf32>
    %cst_11 = arith.constant 3.200000e+01 : f32
    %13 = vector.broadcast %cst_11 : f32 to vector<2x128x1xf32>
    %14 = arith.divf %12, %13 : vector<2x128x1xf32>
    %15 = vector.broadcast %14 : vector<2x128x1xf32> to vector<2x128x32xf32>
    %16 = arith.subf %3, %15 : vector<2x128x32xf32>
    %17 = arith.mulf %16, %16 : vector<2x128x32xf32>
    %cst_12 = arith.constant dense<0.000000e+00> : vector<2x128xf32>
    %18 = vector.multi_reduction <add>, %17, %cst_12 [2] : vector<2x128x32xf32> to vector<2x128xf32>
    %19 = vector.shape_cast %18 : vector<2x128xf32> to vector<2x128x1xf32>
    %cst_13 = arith.constant 3.200000e+01 : f32
    %20 = vector.broadcast %cst_13 : f32 to vector<2x128x1xf32>
    %21 = arith.divf %19, %20 : vector<2x128x1xf32>
    %22 = vector.broadcast %14 : vector<2x128x1xf32> to vector<2x128x32xf32>
    %23 = arith.subf %3, %22 : vector<2x128x32xf32>
    %cst_14 = arith.constant 9.99999974E-6 : f32
    %24 = vector.broadcast %cst_14 : f32 to vector<2x128x1xf32>
    %25 = arith.addf %21, %24 : vector<2x128x1xf32>
    %26 = math.rsqrt %25 : vector<2x128x1xf32>
    %27 = vector.broadcast %26 : vector<2x128x1xf32> to vector<2x128x32xf32>
    %28 = arith.mulf %23, %27 : vector<2x128x32xf32>
    %29 = vector.shape_cast %8 : vector<1x32xf32> to vector<1x1x32xf32>
    %30 = vector.broadcast %29 : vector<1x1x32xf32> to vector<2x128x32xf32>
    %31 = arith.mulf %28, %30 : vector<2x128x32xf32>
    %32 = vector.shape_cast %10 : vector<1x32xf32> to vector<1x1x32xf32>
    %33 = vector.broadcast %32 : vector<1x1x32xf32> to vector<2x128x32xf32>
    %34 = arith.addf %31, %33 : vector<2x128x32xf32>
    %c0_15 = arith.constant 0 : index
    %c0_16 = arith.constant 0 : index
    %c0_17 = arith.constant 0 : index
    %35 = vector.load %arg6[%c0_15, %c0_16, %c0_17] : memref<1x32x96xbf16, #tpu.memory_space<vmem>>, vector<1x32x96xbf16>
    %36 = vector.shape_cast %35 : vector<1x32x96xbf16> to vector<32x96xbf16>
    %c0_18 = arith.constant 0 : index
    %c0_19 = arith.constant 0 : index
    %c0_20 = arith.constant 0 : index
    %37 = vector.load %arg7[%c0_18, %c0_19, %c0_20] : memref<1x1x96xf32, #tpu.memory_space<vmem>>, vector<1x1x96xf32>
    %38 = vector.shape_cast %37 : vector<1x1x96xf32> to vector<1x96xf32>
    %39 = vector.shape_cast %34 : vector<2x128x32xf32> to vector<256x32xf32>
    %40 = arith.truncf %39 : vector<256x32xf32> to vector<256x32xbf16>
    %cst_21 = arith.constant dense<0.000000e+00> : vector<256x96xf32>
    %41 = tpu.matmul %40, %36, %cst_21 {dimension_numbers = #tpu.dot_dimension_numbers<[1], [0], [0], [1], [0, 0, 1, 1], [], []>} : vector<256x32xbf16>, vector<32x96xbf16>, vector<256x96xf32> -> vector<256x96xf32>
    %42 = vector.shape_cast %41 : vector<256x96xf32> to vector<2x128x96xf32>
    %43 = vector.shape_cast %38 : vector<1x96xf32> to vector<1x1x96xf32>
    %44 = vector.broadcast %43 : vector<1x1x96xf32> to vector<2x128x96xf32>
    %45 = arith.addf %42, %44 : vector<2x128x96xf32>
    %46 = vector.extract_strided_slice %45 {offsets = [0, 0, 0], sizes = [2, 128, 32], strides = [1, 1, 1]} : vector<2x128x96xf32> to vector<2x128x32xf32>
    %47 = vector.extract_strided_slice %45 {offsets = [0, 0, 32], sizes = [2, 128, 32], strides = [1, 1, 1]} : vector<2x128x96xf32> to vector<2x128x32xf32>
    %48 = vector.extract_strided_slice %45 {offsets = [0, 0, 64], sizes = [2, 128, 32], strides = [1, 1, 1]} : vector<2x128x96xf32> to vector<2x128x32xf32>
    %cst_22 = arith.constant 0.000000e+00 : f32
    %49 = vector.broadcast %cst_22 : f32 to vector<256x32xf32>
    %50 = vector.extract_strided_slice %46 {offsets = [0, 0, 0], sizes = [2, 128, 8], strides = [1, 1, 1]} : vector<2x128x32xf32> to vector<2x128x8xf32>
    %51 = arith.truncf %50 : vector<2x128x8xf32> to vector<2x128x8xbf16>
    %52 = vector.extract_strided_slice %47 {offsets = [0, 0, 0], sizes = [2, 128, 8], strides = [1, 1, 1]} : vector<2x128x32xf32> to vector<2x128x8xf32>
    %53 = arith.truncf %52 : vector<2x128x8xf32> to vector<2x128x8xbf16>
    %54 = vector.extract_strided_slice %48 {offsets = [0, 0, 0], sizes = [2, 128, 8], strides = [1, 1, 1]} : vector<2x128x32xf32> to vector<2x128x8xf32>
    %55 = arith.truncf %54 : vector<2x128x8xf32> to vector<2x128x8xbf16>
    "tpu.trace_start"() <{level = 10 : i32, message = "bqd,bkd->bqk"}> : () -> ()
    %cst_23 = arith.constant dense<0.000000e+00> : vector<2x128x128xf32>
    %56 = tpu.matmul %51, %53, %cst_23 {dimension_numbers = #tpu.dot_dimension_numbers<[2], [2], [1], [1], [0, 0, 0, 1, 1, 1], [0], [0]>} : vector<2x128x8xbf16>, vector<2x128x8xbf16>, vector<2x128x128xf32> -> vector<2x128x128xf32>
    "tpu.trace_stop"() : () -> ()
    %57 = arith.addf %56, %6 : vector<2x128x128xf32>
    %cst_24 = arith.constant dense<0xFF800000> : vector<2x128xf32>
    %58 = vector.multi_reduction <maximumf>, %57, %cst_24 [2] : vector<2x128x128xf32> to vector<2x128xf32>
    %59 = vector.shape_cast %58 : vector<2x128xf32> to vector<2x128x1xf32>
    %60 = vector.broadcast %59 : vector<2x128x1xf32> to vector<2x128x128xf32>
    %61 = arith.subf %57, %60 : vector<2x128x128xf32>
    %62 = math.exp %61 : vector<2x128x128xf32>
    %cst_25 = arith.constant dense<0.000000e+00> : vector<2x128xf32>
    %63 = vector.multi_reduction <add>, %62, %cst_25 [2] : vector<2x128x128xf32> to vector<2x128xf32>
    %64 = vector.shape_cast %63 : vector<2x128xf32> to vector<2x128x1xf32>
    %65 = tpu.reciprocal %64 {approx = true} : vector<2x128x1xf32> -> vector<2x128x1xf32>
    %66 = vector.broadcast %65 : vector<2x128x1xf32> to vector<2x128x128xf32>
    %67 = arith.mulf %62, %66 : vector<2x128x128xf32>
    %68 = arith.truncf %67 : vector<2x128x128xf32> to vector<2x128x128xbf16>
    "tpu.trace_start"() <{level = 10 : i32, message = "bqk,bkd->bqd"}> : () -> ()
    %cst_26 = arith.constant dense<0.000000e+00> : vector<2x128x8xf32>
    %69 = tpu.matmul %68, %55, %cst_26 {dimension_numbers = #tpu.dot_dimension_numbers<[2], [1], [1], [2], [0, 0, 0, 1, 1, 2], [0], [0]>} : vector<2x128x128xbf16>, vector<2x128x8xbf16>, vector<2x128x8xf32> -> vector<2x128x8xf32>
    "tpu.trace_stop"() : () -> ()
    %70 = vector.shape_cast %69 : vector<2x128x8xf32> to vector<256x8xf32>
    %71 = arith.truncf %70 : vector<256x8xf32> to vector<256x8xbf16>
    %c0_27 = arith.constant 0 : index
    %c0_28 = arith.constant 0 : index
    %c0_29 = arith.constant 0 : index
    %72 = vector.load %arg8[%c0_27, %c0_28, %c0_29] : memref<1x32x32xbf16, #tpu.memory_space<vmem>>, vector<1x8x32xbf16>
    %73 = vector.shape_cast %72 : vector<1x8x32xbf16> to vector<8x32xbf16>
    %cst_30 = arith.constant dense<0.000000e+00> : vector<256x32xf32>
    %74 = tpu.matmul %71, %73, %cst_30 {dimension_numbers = #tpu.dot_dimension_numbers<[1], [0], [0], [1], [0, 0, 1, 1], [], []>} : vector<256x8xbf16>, vector<8x32xbf16>, vector<256x32xf32> -> vector<256x32xf32>
    %75 = arith.addf %49, %74 : vector<256x32xf32>
    %76 = vector.extract_strided_slice %46 {offsets = [0, 0, 8], sizes = [2, 128, 8], strides = [1, 1, 1]} : vector<2x128x32xf32> to vector<2x128x8xf32>
    %77 = arith.truncf %76 : vector<2x128x8xf32> to vector<2x128x8xbf16>
    %78 = vector.extract_strided_slice %47 {offsets = [0, 0, 8], sizes = [2, 128, 8], strides = [1, 1, 1]} : vector<2x128x32xf32> to vector<2x128x8xf32>
    %79 = arith.truncf %78 : vector<2x128x8xf32> to vector<2x128x8xbf16>
    %80 = vector.extract_strided_slice %48 {offsets = [0, 0, 8], sizes = [2, 128, 8], strides = [1, 1, 1]} : vector<2x128x32xf32> to vector<2x128x8xf32>
    %81 = arith.truncf %80 : vector<2x128x8xf32> to vector<2x128x8xbf16>
    "tpu.trace_start"() <{level = 10 : i32, message = "bqd,bkd->bqk"}> : () -> ()
    %cst_31 = arith.constant dense<0.000000e+00> : vector<2x128x128xf32>
    %82 = tpu.matmul %77, %79, %cst_31 {dimension_numbers = #tpu.dot_dimension_numbers<[2], [2], [1], [1], [0, 0, 0, 1, 1, 1], [0], [0]>} : vector<2x128x8xbf16>, vector<2x128x8xbf16>, vector<2x128x128xf32> -> vector<2x128x128xf32>
    "tpu.trace_stop"() : () -> ()
    %83 = arith.addf %82, %6 : vector<2x128x128xf32>
    %cst_32 = arith.constant dense<0xFF800000> : vector<2x128xf32>
    %84 = vector.multi_reduction <maximumf>, %83, %cst_32 [2] : vector<2x128x128xf32> to vector<2x128xf32>
    %85 = vector.shape_cast %84 : vector<2x128xf32> to vector<2x128x1xf32>
    %86 = vector.broadcast %85 : vector<2x128x1xf32> to vector<2x128x128xf32>
    %87 = arith.subf %83, %86 : vector<2x128x128xf32>
    %88 = math.exp %87 : vector<2x128x128xf32>
    %cst_33 = arith.constant dense<0.000000e+00> : vector<2x128xf32>
    %89 = vector.multi_reduction <add>, %88, %cst_33 [2] : vector<2x128x128xf32> to vector<2x128xf32>
    %90 = vector.shape_cast %89 : vector<2x128xf32> to vector<2x128x1xf32>
    %91 = tpu.reciprocal %90 {approx = true} : vector<2x128x1xf32> -> vector<2x128x1xf32>
    %92 = vector.broadcast %91 : vector<2x128x1xf32> to vector<2x128x128xf32>
    %93 = arith.mulf %88, %92 : vector<2x128x128xf32>
    %94 = arith.truncf %93 : vector<2x128x128xf32> to vector<2x128x128xbf16>
    "tpu.trace_start"() <{level = 10 : i32, message = "bqk,bkd->bqd"}> : () -> ()
    %cst_34 = arith.constant dense<0.000000e+00> : vector<2x128x8xf32>
    %95 = tpu.matmul %94, %81, %cst_34 {dimension_numbers = #tpu.dot_dimension_numbers<[2], [1], [1], [2], [0, 0, 0, 1, 1, 2], [0], [0]>} : vector<2x128x128xbf16>, vector<2x128x8xbf16>, vector<2x128x8xf32> -> vector<2x128x8xf32>
    "tpu.trace_stop"() : () -> ()
    %96 = vector.shape_cast %95 : vector<2x128x8xf32> to vector<256x8xf32>
    %97 = arith.truncf %96 : vector<256x8xf32> to vector<256x8xbf16>
    %c0_35 = arith.constant 0 : index
    %c8 = arith.constant 8 : index
    %c0_36 = arith.constant 0 : index
    %98 = vector.load %arg8[%c0_35, %c8, %c0_36] : memref<1x32x32xbf16, #tpu.memory_space<vmem>>, vector<1x8x32xbf16>
    %99 = vector.shape_cast %98 : vector<1x8x32xbf16> to vector<8x32xbf16>
    %cst_37 = arith.constant dense<0.000000e+00> : vector<256x32xf32>
    %100 = tpu.matmul %97, %99, %cst_37 {dimension_numbers = #tpu.dot_dimension_numbers<[1], [0], [0], [1], [0, 0, 1, 1], [], []>} : vector<256x8xbf16>, vector<8x32xbf16>, vector<256x32xf32> -> vector<256x32xf32>
    %101 = arith.addf %75, %100 : vector<256x32xf32>
    %102 = vector.extract_strided_slice %46 {offsets = [0, 0, 16], sizes = [2, 128, 8], strides = [1, 1, 1]} : vector<2x128x32xf32> to vector<2x128x8xf32>
    %103 = arith.truncf %102 : vector<2x128x8xf32> to vector<2x128x8xbf16>
    %104 = vector.extract_strided_slice %47 {offsets = [0, 0, 16], sizes = [2, 128, 8], strides = [1, 1, 1]} : vector<2x128x32xf32> to vector<2x128x8xf32>
    %105 = arith.truncf %104 : vector<2x128x8xf32> to vector<2x128x8xbf16>
    %106 = vector.extract_strided_slice %48 {offsets = [0, 0, 16], sizes = [2, 128, 8], strides = [1, 1, 1]} : vector<2x128x32xf32> to vector<2x128x8xf32>
    %107 = arith.truncf %106 : vector<2x128x8xf32> to vector<2x128x8xbf16>
    "tpu.trace_start"() <{level = 10 : i32, message = "bqd,bkd->bqk"}> : () -> ()
    %cst_38 = arith.constant dense<0.000000e+00> : vector<2x128x128xf32>
    %108 = tpu.matmul %103, %105, %cst_38 {dimension_numbers = #tpu.dot_dimension_numbers<[2], [2], [1], [1], [0, 0, 0, 1, 1, 1], [0], [0]>} : vector<2x128x8xbf16>, vector<2x128x8xbf16>, vector<2x128x128xf32> -> vector<2x128x128xf32>
    "tpu.trace_stop"() : () -> ()
    %109 = arith.addf %108, %6 : vector<2x128x128xf32>
    %cst_39 = arith.constant dense<0xFF800000> : vector<2x128xf32>
    %110 = vector.multi_reduction <maximumf>, %109, %cst_39 [2] : vector<2x128x128xf32> to vector<2x128xf32>
    %111 = vector.shape_cast %110 : vector<2x128xf32> to vector<2x128x1xf32>
    %112 = vector.broadcast %111 : vector<2x128x1xf32> to vector<2x128x128xf32>
    %113 = arith.subf %109, %112 : vector<2x128x128xf32>
    %114 = math.exp %113 : vector<2x128x128xf32>
    %cst_40 = arith.constant dense<0.000000e+00> : vector<2x128xf32>
    %115 = vector.multi_reduction <add>, %114, %cst_40 [2] : vector<2x128x128xf32> to vector<2x128xf32>
    %116 = vector.shape_cast %115 : vector<2x128xf32> to vector<2x128x1xf32>
    %117 = tpu.reciprocal %116 {approx = true} : vector<2x128x1xf32> -> vector<2x128x1xf32>
    %118 = vector.broadcast %117 : vector<2x128x1xf32> to vector<2x128x128xf32>
    %119 = arith.mulf %114, %118 : vector<2x128x128xf32>
    %120 = arith.truncf %119 : vector<2x128x128xf32> to vector<2x128x128xbf16>
    "tpu.trace_start"() <{level = 10 : i32, message = "bqk,bkd->bqd"}> : () -> ()
    %cst_41 = arith.constant dense<0.000000e+00> : vector<2x128x8xf32>
    %121 = tpu.matmul %120, %107, %cst_41 {dimension_numbers = #tpu.dot_dimension_numbers<[2], [1], [1], [2], [0, 0, 0, 1, 1, 2], [0], [0]>} : vector<2x128x128xbf16>, vector<2x128x8xbf16>, vector<2x128x8xf32> -> vector<2x128x8xf32>
    "tpu.trace_stop"() : () -> ()
    %122 = vector.shape_cast %121 : vector<2x128x8xf32> to vector<256x8xf32>
    %123 = arith.truncf %122 : vector<256x8xf32> to vector<256x8xbf16>
    %c0_42 = arith.constant 0 : index
    %c16 = arith.constant 16 : index
    %c0_43 = arith.constant 0 : index
    %124 = vector.load %arg8[%c0_42, %c16, %c0_43] : memref<1x32x32xbf16, #tpu.memory_space<vmem>>, vector<1x8x32xbf16>
    %125 = vector.shape_cast %124 : vector<1x8x32xbf16> to vector<8x32xbf16>
    %cst_44 = arith.constant dense<0.000000e+00> : vector<256x32xf32>
    %126 = tpu.matmul %123, %125, %cst_44 {dimension_numbers = #tpu.dot_dimension_numbers<[1], [0], [0], [1], [0, 0, 1, 1], [], []>} : vector<256x8xbf16>, vector<8x32xbf16>, vector<256x32xf32> -> vector<256x32xf32>
    %127 = arith.addf %101, %126 : vector<256x32xf32>
    %128 = vector.extract_strided_slice %46 {offsets = [0, 0, 24], sizes = [2, 128, 8], strides = [1, 1, 1]} : vector<2x128x32xf32> to vector<2x128x8xf32>
    %129 = arith.truncf %128 : vector<2x128x8xf32> to vector<2x128x8xbf16>
    %130 = vector.extract_strided_slice %47 {offsets = [0, 0, 24], sizes = [2, 128, 8], strides = [1, 1, 1]} : vector<2x128x32xf32> to vector<2x128x8xf32>
    %131 = arith.truncf %130 : vector<2x128x8xf32> to vector<2x128x8xbf16>
    %132 = vector.extract_strided_slice %48 {offsets = [0, 0, 24], sizes = [2, 128, 8], strides = [1, 1, 1]} : vector<2x128x32xf32> to vector<2x128x8xf32>
    %133 = arith.truncf %132 : vector<2x128x8xf32> to vector<2x128x8xbf16>
    "tpu.trace_start"() <{level = 10 : i32, message = "bqd,bkd->bqk"}> : () -> ()
    %cst_45 = arith.constant dense<0.000000e+00> : vector<2x128x128xf32>
    %134 = tpu.matmul %129, %131, %cst_45 {dimension_numbers = #tpu.dot_dimension_numbers<[2], [2], [1], [1], [0, 0, 0, 1, 1, 1], [0], [0]>} : vector<2x128x8xbf16>, vector<2x128x8xbf16>, vector<2x128x128xf32> -> vector<2x128x128xf32>
    "tpu.trace_stop"() : () -> ()
    %135 = arith.addf %134, %6 : vector<2x128x128xf32>
    %cst_46 = arith.constant dense<0xFF800000> : vector<2x128xf32>
    %136 = vector.multi_reduction <maximumf>, %135, %cst_46 [2] : vector<2x128x128xf32> to vector<2x128xf32>
    %137 = vector.shape_cast %136 : vector<2x128xf32> to vector<2x128x1xf32>
    %138 = vector.broadcast %137 : vector<2x128x1xf32> to vector<2x128x128xf32>
    %139 = arith.subf %135, %138 : vector<2x128x128xf32>
    %140 = math.exp %139 : vector<2x128x128xf32>
    %cst_47 = arith.constant dense<0.000000e+00> : vector<2x128xf32>
    %141 = vector.multi_reduction <add>, %140, %cst_47 [2] : vector<2x128x128xf32> to vector<2x128xf32>
    %142 = vector.shape_cast %141 : vector<2x128xf32> to vector<2x128x1xf32>
    %143 = tpu.reciprocal %142 {approx = true} : vector<2x128x1xf32> -> vector<2x128x1xf32>
    %144 = vector.broadcast %143 : vector<2x128x1xf32> to vector<2x128x128xf32>
    %145 = arith.mulf %140, %144 : vector<2x128x128xf32>
    %146 = arith.truncf %145 : vector<2x128x128xf32> to vector<2x128x128xbf16>
    "tpu.trace_start"() <{level = 10 : i32, message = "bqk,bkd->bqd"}> : () -> ()
    %cst_48 = arith.constant dense<0.000000e+00> : vector<2x128x8xf32>
    %147 = tpu.matmul %146, %133, %cst_48 {dimension_numbers = #tpu.dot_dimension_numbers<[2], [1], [1], [2], [0, 0, 0, 1, 1, 2], [0], [0]>} : vector<2x128x128xbf16>, vector<2x128x8xbf16>, vector<2x128x8xf32> -> vector<2x128x8xf32>
    "tpu.trace_stop"() : () -> ()
    %148 = vector.shape_cast %147 : vector<2x128x8xf32> to vector<256x8xf32>
    %149 = arith.truncf %148 : vector<256x8xf32> to vector<256x8xbf16>
    %c0_49 = arith.constant 0 : index
    %c24 = arith.constant 24 : index
    %c0_50 = arith.constant 0 : index
    %150 = vector.load %arg8[%c0_49, %c24, %c0_50] : memref<1x32x32xbf16, #tpu.memory_space<vmem>>, vector<1x8x32xbf16>
    %151 = vector.shape_cast %150 : vector<1x8x32xbf16> to vector<8x32xbf16>
    %cst_51 = arith.constant dense<0.000000e+00> : vector<256x32xf32>
    %152 = tpu.matmul %149, %151, %cst_51 {dimension_numbers = #tpu.dot_dimension_numbers<[1], [0], [0], [1], [0, 0, 1, 1], [], []>} : vector<256x8xbf16>, vector<8x32xbf16>, vector<256x32xf32> -> vector<256x32xf32>
    %153 = arith.addf %127, %152 : vector<256x32xf32>
    %154 = vector.shape_cast %153 : vector<256x32xf32> to vector<2x128x32xf32>
    %155 = arith.addf %3, %154 : vector<2x128x32xf32>
    %c0_52 = arith.constant 0 : index
    %c0_53 = arith.constant 0 : index
    %c0_54 = arith.constant 0 : index
    %156 = vector.load %arg9[%c0_52, %c0_53, %c0_54] : memref<1x1x32xf32, #tpu.memory_space<vmem>>, vector<1x1x32xf32>
    %157 = vector.shape_cast %156 : vector<1x1x32xf32> to vector<1x32xf32>
    %158 = vector.shape_cast %157 : vector<1x32xf32> to vector<1x1x32xf32>
    %159 = vector.broadcast %158 : vector<1x1x32xf32> to vector<2x128x32xf32>
    %160 = arith.addf %155, %159 : vector<2x128x32xf32>
    %c0_55 = arith.constant 0 : index
    %c0_56 = arith.constant 0 : index
    %c0_57 = arith.constant 0 : index
    %161 = vector.load %arg10[%c0_55, %c0_56, %c0_57] : memref<1x1x32xf32, #tpu.memory_space<vmem>>, vector<1x1x32xf32>
    %162 = vector.shape_cast %161 : vector<1x1x32xf32> to vector<1x32xf32>
    %c0_58 = arith.constant 0 : index
    %c0_59 = arith.constant 0 : index
    %c0_60 = arith.constant 0 : index
    %163 = vector.load %arg11[%c0_58, %c0_59, %c0_60] : memref<1x1x32xf32, #tpu.memory_space<vmem>>, vector<1x1x32xf32>
    %164 = vector.shape_cast %163 : vector<1x1x32xf32> to vector<1x32xf32>
    %cst_61 = arith.constant dense<0.000000e+00> : vector<2x128xf32>
    %165 = vector.multi_reduction <add>, %160, %cst_61 [2] : vector<2x128x32xf32> to vector<2x128xf32>
    %166 = vector.shape_cast %165 : vector<2x128xf32> to vector<2x128x1xf32>
    %cst_62 = arith.constant 3.200000e+01 : f32
    %167 = vector.broadcast %cst_62 : f32 to vector<2x128x1xf32>
    %168 = arith.divf %166, %167 : vector<2x128x1xf32>
    %169 = vector.broadcast %168 : vector<2x128x1xf32> to vector<2x128x32xf32>
    %170 = arith.subf %160, %169 : vector<2x128x32xf32>
    %171 = arith.mulf %170, %170 : vector<2x128x32xf32>
    %cst_63 = arith.constant dense<0.000000e+00> : vector<2x128xf32>
    %172 = vector.multi_reduction <add>, %171, %cst_63 [2] : vector<2x128x32xf32> to vector<2x128xf32>
    %173 = vector.shape_cast %172 : vector<2x128xf32> to vector<2x128x1xf32>
    %cst_64 = arith.constant 3.200000e+01 : f32
    %174 = vector.broadcast %cst_64 : f32 to vector<2x128x1xf32>
    %175 = arith.divf %173, %174 : vector<2x128x1xf32>
    %176 = vector.broadcast %168 : vector<2x128x1xf32> to vector<2x128x32xf32>
    %177 = arith.subf %160, %176 : vector<2x128x32xf32>
    %cst_65 = arith.constant 9.99999974E-6 : f32
    %178 = vector.broadcast %cst_65 : f32 to vector<2x128x1xf32>
    %179 = arith.addf %175, %178 : vector<2x128x1xf32>
    %180 = math.rsqrt %179 : vector<2x128x1xf32>
    %181 = vector.broadcast %180 : vector<2x128x1xf32> to vector<2x128x32xf32>
    %182 = arith.mulf %177, %181 : vector<2x128x32xf32>
    %183 = vector.shape_cast %162 : vector<1x32xf32> to vector<1x1x32xf32>
    %184 = vector.broadcast %183 : vector<1x1x32xf32> to vector<2x128x32xf32>
    %185 = arith.mulf %182, %184 : vector<2x128x32xf32>
    %186 = vector.shape_cast %164 : vector<1x32xf32> to vector<1x1x32xf32>
    %187 = vector.broadcast %186 : vector<1x1x32xf32> to vector<2x128x32xf32>
    %188 = arith.addf %185, %187 : vector<2x128x32xf32>
    %c0_66 = arith.constant 0 : index
    %c0_67 = arith.constant 0 : index
    %c0_68 = arith.constant 0 : index
    %189 = vector.load %arg12[%c0_66, %c0_67, %c0_68] : memref<1x32x128xbf16, #tpu.memory_space<vmem>>, vector<1x32x128xbf16>
    %190 = vector.shape_cast %189 : vector<1x32x128xbf16> to vector<32x128xbf16>
    %c0_69 = arith.constant 0 : index
    %c0_70 = arith.constant 0 : index
    %c0_71 = arith.constant 0 : index
    %191 = vector.load %arg13[%c0_69, %c0_70, %c0_71] : memref<1x1x128xf32, #tpu.memory_space<vmem>>, vector<1x1x128xf32>
    %192 = vector.shape_cast %191 : vector<1x1x128xf32> to vector<1x128xf32>
    %193 = vector.shape_cast %188 : vector<2x128x32xf32> to vector<256x32xf32>
    %194 = arith.truncf %193 : vector<256x32xf32> to vector<256x32xbf16>
    %cst_72 = arith.constant dense<0.000000e+00> : vector<256x128xf32>
    %195 = tpu.matmul %194, %190, %cst_72 {dimension_numbers = #tpu.dot_dimension_numbers<[1], [0], [0], [1], [0, 0, 1, 1], [], []>} : vector<256x32xbf16>, vector<32x128xbf16>, vector<256x128xf32> -> vector<256x128xf32>
    %196 = vector.shape_cast %195 : vector<256x128xf32> to vector<2x128x128xf32>
    %197 = vector.shape_cast %192 : vector<1x128xf32> to vector<1x1x128xf32>
    %198 = vector.broadcast %197 : vector<1x1x128xf32> to vector<2x128x128xf32>
    %199 = arith.addf %196, %198 : vector<2x128x128xf32>
    %cst_73 = arith.constant 1.702000e+00 : f32
    %200 = vector.broadcast %cst_73 : f32 to vector<2x128x128xf32>
    %201 = arith.mulf %200, %199 : vector<2x128x128xf32>
    %202 = arith.negf %201 : vector<2x128x128xf32>
    %203 = math.exp %202 : vector<2x128x128xf32>
    %cst_74 = arith.constant 1.000000e+00 : f32
    %204 = vector.broadcast %cst_74 : f32 to vector<2x128x128xf32>
    %205 = arith.addf %204, %203 : vector<2x128x128xf32>
    %206 = arith.divf %204, %205 : vector<2x128x128xf32>
    %207 = arith.mulf %199, %206 : vector<2x128x128xf32>
    %c0_75 = arith.constant 0 : index
    %c0_76 = arith.constant 0 : index
    %c0_77 = arith.constant 0 : index
    %208 = vector.load %arg14[%c0_75, %c0_76, %c0_77] : memref<1x128x32xbf16, #tpu.memory_space<vmem>>, vector<1x128x32xbf16>
    %209 = vector.shape_cast %208 : vector<1x128x32xbf16> to vector<128x32xbf16>
    %c0_78 = arith.constant 0 : index
    %c0_79 = arith.constant 0 : index
    %c0_80 = arith.constant 0 : index
    %210 = vector.load %arg15[%c0_78, %c0_79, %c0_80] : memref<1x1x32xf32, #tpu.memory_space<vmem>>, vector<1x1x32xf32>
    %211 = vector.shape_cast %210 : vector<1x1x32xf32> to vector<1x32xf32>
    %212 = vector.shape_cast %207 : vector<2x128x128xf32> to vector<256x128xf32>
    %213 = arith.truncf %212 : vector<256x128xf32> to vector<256x128xbf16>
    %cst_81 = arith.constant dense<0.000000e+00> : vector<256x32xf32>
    %214 = tpu.matmul %213, %209, %cst_81 {dimension_numbers = #tpu.dot_dimension_numbers<[1], [0], [0], [1], [0, 0, 1, 1], [], []>} : vector<256x128xbf16>, vector<128x32xbf16>, vector<256x32xf32> -> vector<256x32xf32>
    %215 = vector.shape_cast %214 : vector<256x32xf32> to vector<2x128x32xf32>
    %216 = vector.shape_cast %211 : vector<1x32xf32> to vector<1x1x32xf32>
    %217 = vector.broadcast %216 : vector<1x1x32xf32> to vector<2x128x32xf32>
    %218 = arith.addf %215, %217 : vector<2x128x32xf32>
    %219 = arith.addf %160, %218 : vector<2x128x32xf32>
    %c0_82 = arith.constant 0 : index
    %c0_83 = arith.constant 0 : index
    %c0_84 = arith.constant 0 : index
    %220 = vector.load %arg19[%c0_82, %c0_83, %c0_84] : memref<2x128x32xf32, #tpu.memory_space<vmem>>, vector<2x128x32xf32>
    tpu.vector_store %arg19[%c0_82, %c0_83, %c0_84], %219 {strides = array<i32>} : memref<2x128x32xf32, #tpu.memory_space<vmem>>, vector<2x128x32xf32>,
    %c0_85 = arith.constant 0 : index
    %c0_86 = arith.constant 0 : index
    %c0_87 = arith.constant 0 : index
    %221 = vector.load %arg16[%c0_85, %c0_86, %c0_87] : memref<1x1x32xf32, #tpu.memory_space<vmem>>, vector<1x1x32xf32>
    %c0_88 = arith.constant 0 : index
    %c0_89 = arith.constant 0 : index
    %c0_90 = arith.constant 0 : index
    %222 = vector.load %arg17[%c0_88, %c0_89, %c0_90] : memref<1x1x32xf32, #tpu.memory_space<vmem>>, vector<1x1x32xf32>
    %cst_91 = arith.constant dense<0.000000e+00> : vector<2x128xf32>
    %223 = vector.multi_reduction <add>, %219, %cst_91 [2] : vector<2x128x32xf32> to vector<2x128xf32>
    %224 = vector.shape_cast %223 : vector<2x128xf32> to vector<2x128x1xf32>
    %cst_92 = arith.constant 3.200000e+01 : f32
    %225 = vector.broadcast %cst_92 : f32 to vector<2x128x1xf32>
    %226 = arith.divf %224, %225 : vector<2x128x1xf32>
    %227 = vector.broadcast %226 : vector<2x128x1xf32> to vector<2x128x32xf32>
    %228 = arith.subf %219, %227 : vector<2x128x32xf32>
    %229 = arith.mulf %228, %228 : vector<2x128x32xf32>
    %cst_93 = arith.constant dense<0.000000e+00> : vector<2x128xf32>
    %230 = vector.multi_reduction <add>, %229, %cst_93 [2] : vector<2x128x32xf32> to vector<2x128xf32>
    %231 = vector.shape_cast %230 : vector<2x128xf32> to vector<2x128x1xf32>
    %cst_94 = arith.constant 3.200000e+01 : f32
    %232 = vector.broadcast %cst_94 : f32 to vector<2x128x1xf32>
    %233 = arith.divf %231, %232 : vector<2x128x1xf32>
    %234 = vector.broadcast %226 : vector<2x128x1xf32> to vector<2x128x32xf32>
    %235 = arith.subf %219, %234 : vector<2x128x32xf32>
    %cst_95 = arith.constant 9.99999974E-6 : f32
    %236 = vector.broadcast %cst_95 : f32 to vector<2x128x1xf32>
    %237 = arith.addf %233, %236 : vector<2x128x1xf32>
    %238 = math.rsqrt %237 : vector<2x128x1xf32>
    %239 = vector.broadcast %238 : vector<2x128x1xf32> to vector<2x128x32xf32>
    %240 = arith.mulf %235, %239 : vector<2x128x32xf32>
    %241 = vector.broadcast %221 : vector<1x1x32xf32> to vector<2x128x32xf32>
    %242 = arith.mulf %240, %241 : vector<2x128x32xf32>
    %243 = vector.broadcast %222 : vector<1x1x32xf32> to vector<2x128x32xf32>
    %244 = arith.addf %242, %243 : vector<2x128x32xf32>
    %245 = arith.truncf %244 : vector<2x128x32xf32> to vector<2x128x32xbf16>
    %c0_96 = arith.constant 0 : index
    %c0_97 = arith.constant 0 : index
    %c0_98 = arith.constant 0 : index
    %c0_99 = arith.constant 0 : index
    %246 = vector.load %arg18[%c0_96, %c0_97, %c0_98, %c0_99] : memref<1x2x128x32xbf16, #tpu.memory_space<vmem>>, vector<1x2x128x32xbf16>
    %247 = vector.shape_cast %246 : vector<1x2x128x32xbf16> to vector<2x128x32xbf16>
    %248 = vector.shape_cast %245 : vector<2x128x32xbf16> to vector<1x2x128x32xbf16>
    tpu.vector_store %arg18[%c0_96, %c0_97, %c0_98, %c0_99], %248 {strides = array<i32>} : memref<1x2x128x32xbf16, #tpu.memory_space<vmem>>, vector<1x2x128x32xbf16>,
    return
  }
  func.func @transform_0(%arg0: i32, %arg1: i32) -> (i32, i32, i32) {
    %c0_i32 = arith.constant 0 : i32
    %c0_i32_0 = arith.constant 0 : i32
    %c0_i32_1 = arith.constant 0 : i32
    return %arg0, %c0_i32, %c0_i32_0 : i32, i32, i32
  }
  func.func @transform_1(%arg0: i32, %arg1: i32) -> (i32, i32) {
    %c0_i32 = arith.constant 0 : i32
    %c0_i32_0 = arith.constant 0 : i32
    %c0_i32_1 = arith.constant 0 : i32
    return %c0_i32, %c0_i32_0 : i32, i32
  }
  func.func @transform_2(%arg0: i32, %arg1: i32) -> (i32, i32, i32) {
    %c0_i32 = arith.constant 0 : i32
    %c0_i32_0 = arith.constant 0 : i32
    %c0_i32_1 = arith.constant 0 : i32
    return %arg1, %c0_i32, %c0_i32_0 : i32, i32, i32
  }
  func.func @transform_3(%arg0: i32, %arg1: i32) -> (i32, i32, i32) {
    %c0_i32 = arith.constant 0 : i32
    %c0_i32_0 = arith.constant 0 : i32
    %c0_i32_1 = arith.constant 0 : i32
    return %arg1, %c0_i32, %c0_i32_0 : i32, i32, i32
  }
  func.func @transform_4(%arg0: i32, %arg1: i32) -> (i32, i32, i32) {
    %c0_i32 = arith.constant 0 : i32
    %c0_i32_0 = arith.constant 0 : i32
    %c0_i32_1 = arith.constant 0 : i32
    return %arg1, %c0_i32, %c0_i32_0 : i32, i32, i32
  }
  func.func @transform_5(%arg0: i32, %arg1: i32) -> (i32, i32, i32) {
    %c0_i32 = arith.constant 0 : i32
    %c0_i32_0 = arith.constant 0 : i32
    %c0_i32_1 = arith.constant 0 : i32
    return %arg1, %c0_i32, %c0_i32_0 : i32, i32, i32
  }
  func.func @transform_6(%arg0: i32, %arg1: i32) -> (i32, i32, i32) {
    %c0_i32 = arith.constant 0 : i32
    %c0_i32_0 = arith.constant 0 : i32
    %c0_i32_1 = arith.constant 0 : i32
    return %arg1, %c0_i32, %c0_i32_0 : i32, i32, i32
  }
  func.func @transform_7(%arg0: i32, %arg1: i32) -> (i32, i32, i32) {
    %c0_i32 = arith.constant 0 : i32
    %c0_i32_0 = arith.constant 0 : i32
    %c0_i32_1 = arith.constant 0 : i32
    return %arg1, %c0_i32, %c0_i32_0 : i32, i32, i32
  }
  func.func @transform_8(%arg0: i32, %arg1: i32) -> (i32, i32, i32) {
    %c0_i32 = arith.constant 0 : i32
    %c0_i32_0 = arith.constant 0 : i32
    %c0_i32_1 = arith.constant 0 : i32
    return %arg1, %c0_i32, %c0_i32_0 : i32, i32, i32
  }
  func.func @transform_9(%arg0: i32, %arg1: i32) -> (i32, i32, i32) {
    %c0_i32 = arith.constant 0 : i32
    %c0_i32_0 = arith.constant 0 : i32
    %c0_i32_1 = arith.constant 0 : i32
    return %arg1, %c0_i32, %c0_i32_0 : i32, i32, i32
  }
  func.func @transform_10(%arg0: i32, %arg1: i32) -> (i32, i32, i32) {
    %c0_i32 = arith.constant 0 : i32
    %c0_i32_0 = arith.constant 0 : i32
    %c0_i32_1 = arith.constant 0 : i32
    return %arg1, %c0_i32, %c0_i32_0 : i32, i32, i32
  }
  func.func @transform_11(%arg0: i32, %arg1: i32) -> (i32, i32, i32) {
    %c0_i32 = arith.constant 0 : i32
    %c0_i32_0 = arith.constant 0 : i32
    %c0_i32_1 = arith.constant 0 : i32
    return %arg1, %c0_i32, %c0_i32_0 : i32, i32, i32
  }
  func.func @transform_12(%arg0: i32, %arg1: i32) -> (i32, i32, i32) {
    %c0_i32 = arith.constant 0 : i32
    %c0_i32_0 = arith.constant 0 : i32
    %c0_i32_1 = arith.constant 0 : i32
    return %arg1, %c0_i32, %c0_i32_0 : i32, i32, i32
  }
  func.func @transform_13(%arg0: i32, %arg1: i32) -> (i32, i32, i32) {
    %c0_i32 = arith.constant 0 : i32
    %c0_i32_0 = arith.constant 0 : i32
    %c0_i32_1 = arith.constant 0 : i32
    return %arg1, %c0_i32, %c0_i32_0 : i32, i32, i32
  }
  func.func @transform_14(%arg0: i32, %arg1: i32) -> (i32, i32, i32) {
    %c0_i32 = arith.constant 0 : i32
    %c0_i32_0 = arith.constant 0 : i32
    %c0_i32_1 = arith.constant 0 : i32
    %c0_i32_2 = arith.constant 0 : i32
    return %c0_i32, %c0_i32_0, %c0_i32_1 : i32, i32, i32
  }
  func.func @transform_15(%arg0: i32, %arg1: i32) -> (i32, i32, i32) {
    %c0_i32 = arith.constant 0 : i32
    %c0_i32_0 = arith.constant 0 : i32
    %c0_i32_1 = arith.constant 0 : i32
    %c0_i32_2 = arith.constant 0 : i32
    return %c0_i32, %c0_i32_0, %c0_i32_1 : i32, i32, i32
  }
  func.func @transform_16(%arg0: i32, %arg1: i32) -> (i32, i32, i32, i32) {
    %c0_i32 = arith.constant 0 : i32
    %c0_i32_0 = arith.constant 0 : i32
    %c0_i32_1 = arith.constant 0 : i32
    return %arg1, %arg0, %c0_i32, %c0_i32_0 : i32, i32, i32, i32
  }
}

</mosaic_0001>

<llo_original>
// kernel: tpu_custom_call.1
$region0: #{tpu_custom_call.1}
  #allocation0 [shape = 'u32[]', space=smem, size = 0x4, offset = 0x4, fixed_abs, tag = 'smem constant byte address 0x4 - core index']
  #allocation1 [shape = 'u32[72,128]{1,0:T(1,128)}', space=vmem, size = 0x9000, scoped, tag = 'internal scratch']
  #allocation2 [shape = 'f32[2,128,32]{2,1,0:T(8,128)}', space=vmem, size = 0x20000, scoped, tag = 'scratch operand']
  %s0 = inlined_call_operand.vmem [shape: f32[2,128,32], index: 0, kind: input, shape index: {}]
  %s1 = inlined_call_operand.vmem [shape: f32[128,128], index: 1, kind: input, shape index: {}]
  %s2 = inlined_call_operand.vmem [shape: f32[3,1,32], index: 2, kind: input, shape index: {}]
  %s3 = inlined_call_operand.vmem [shape: f32[3,1,32], index: 3, kind: input, shape index: {}]
  %s4 = inlined_call_operand.vmem [shape: bf16[3,32,96], index: 4, kind: input, shape index: {}]
  %s5 = inlined_call_operand.vmem [shape: f32[3,1,96], index: 5, kind: input, shape index: {}]
  %s6 = inlined_call_operand.vmem [shape: bf16[3,32,32], index: 6, kind: input, shape index: {}]
  %s7 = inlined_call_operand.vmem [shape: f32[3,1,32], index: 7, kind: input, shape index: {}]
  %s8 = inlined_call_operand.vmem [shape: f32[3,1,32], index: 8, kind: input, shape index: {}]
  %s9 = inlined_call_operand.vmem [shape: f32[3,1,32], index: 9, kind: input, shape index: {}]
  %s10 = inlined_call_operand.vmem [shape: bf16[3,32,128], index: 10, kind: input, shape index: {}]
  %s11 = inlined_call_operand.vmem [shape: f32[3,1,128], index: 11, kind: input, shape index: {}]
  %s12 = inlined_call_operand.vmem [shape: bf16[3,128,32], index: 12, kind: input, shape index: {}]
  %s13 = inlined_call_operand.vmem [shape: f32[3,1,32], index: 13, kind: input, shape index: {}]
  %s14 = inlined_call_operand.vmem [shape: f32[1,1,32], index: 14, kind: input, shape index: {}]
  %s15 = inlined_call_operand.vmem [shape: f32[1,1,32], index: 15, kind: input, shape index: {}]
  %s16 = inlined_call_operand.vmem [shape: bf16[3,2,128,32], index: 16, kind: output, shape index: {}]
  %s17 = sld [smem:[#allocation0]]
  $region101: #{tpu_custom_call.1} parent=0
    _
  %s19 = ssub.s32 1, %s17
  %s20 = scalar_select 0, %s19, %s17
  loop: start=0, step=1, limit=5
  $region2: #{tpu_custom_call.1} parent=0 // loop_pre_header
    _
  $region3: #{tpu_custom_call.1} parent=0 // loop_header
    %s22 = sphi 0, %s26
    %p23 = scmp.ge.s32.totalorder %s22, 5
    %s29 = sphi 0, %s41
    %s30 = sphi 0, %s37
    %s31 = sphi 0, %s29
    %s32 = sphi 0, %s30
    %s33 = sphi 0, %s31
    %s34 = sphi 0, %s32
    %s44 = sphi 0, %s46
    %s47 = sphi 0, %s44
    %s48 = sphi 0, %s47
    %s64 = sphi 0, %s48
    %s68 = sphi 0, %s68
    %s70 = sphi 0, %s68
    %s71 = sphi 0, %s70
    %s85 = sphi 0, %s71
    %s91 = sphi 0, %s93
    %s94 = sphi 0, %s91
    %s95 = sphi 0, %s94
    %s111 = sphi 0, %s95
    %s117 = sphi 0, %s119
    %s120 = sphi 0, %s117
    %s121 = sphi 0, %s120
    %s137 = sphi 0, %s121
    %s143 = sphi 0, %s145
    %s146 = sphi 0, %s143
    %s147 = sphi 0, %s146
    %s163 = sphi 0, %s147
    %s169 = sphi 0, %s171
    %s172 = sphi 0, %s169
    %s173 = sphi 0, %s172
    %s189 = sphi 0, %s173
    %s195 = sphi 0, %s197
    %s198 = sphi 0, %s195
    %s199 = sphi 0, %s198
    %s215 = sphi 0, %s199
    %s221 = sphi 0, %s223
    %s224 = sphi 0, %s221
    %s225 = sphi 0, %s224
    %s241 = sphi 0, %s225
    %s247 = sphi 0, %s249
    %s250 = sphi 0, %s247
    %s251 = sphi 0, %s250
    %s267 = sphi 0, %s251
    %s273 = sphi 0, %s275
    %s276 = sphi 0, %s273
    %s277 = sphi 0, %s276
    %s293 = sphi 0, %s277
    %s299 = sphi 0, %s301
    %s302 = sphi 0, %s299
    %s303 = sphi 0, %s302
    %s319 = sphi 0, %s303
    %s325 = sphi 0, %s327
    %s328 = sphi 0, %s325
    %s329 = sphi 0, %s328
    %s345 = sphi 0, %s329
    %s351 = sphi 0, %s353
    %s354 = sphi 0, %s351
    %s355 = sphi 0, %s354
    %s371 = sphi 0, %s355
    %s377 = sphi 0, %s379
    %s380 = sphi 0, %s377
    %s381 = sphi 0, %s380
    %s397 = sphi 0, %s381
    %s401 = sphi 0, %s401
    %s403 = sphi 0, %s401
    %s404 = sphi 0, %s403
    %s418 = sphi 0, %s404
    %s422 = sphi 0, %s422
    %s424 = sphi 0, %s422
    %s425 = sphi 0, %s424
    %s439 = sphi 0, %s425
    %s447 = sphi 0, %s449
    %s450 = sphi 0, %s447
    %s451 = sphi 0, %s450
    %s467 = sphi 0, %s451
  $region4: #{tpu_custom_call.1} parent=0 // loop_header_branch
    %25 = sbr.rel (%p23) target = $region8
  $region5: #{tpu_custom_call.1} parent=0 // loop_body
    %s27 = ssub.s32 %s22, 1
    %s28 = ssub.s32 %s22, 2
    %s35 = sadd.s32 1, %s30
    %p36 = scmp.ge.s32.totalorder %s35, 3
    %s37 = scalar_select %p36, 0, %s35
    %s38 = sadd.s32 1, %s29
    %s39 = scalar_select %p36, %s38, %s29
    %p40 = scmp.ge.s32.totalorder %s39, 1
    %s41 = scalar_select %p40, 0, %s39
    %s42 = ssub.s32 %s29, %s41
    %p43 = scmp.eq.s32.totalorder %s42, 0
    %s45 = sadd.s32 %s44, 1
    %s46 = scalar_select %p43, %s44, %s45
    %p49 = pneg %p43
    %p50 = scmp.eq.s32.totalorder %s22, 2
    %p51 = por %p49, %p50
    %p52 = scmp.ne.s32.totalorder %s44, %s47
    %p53 = scmp.eq.s32.totalorder %s22, 0
    %p54 = por %p52, %p53
    %p55 = scmp.ne.s32.totalorder %s44, %s47
    %p56 = scmp.eq.s32.totalorder %s27, 2
    %p57 = por %p55, %p56
    %p58 = scmp.ne.s32.totalorder %s47, %s48
    %p59 = scmp.eq.s32.totalorder %s27, 0
    %p60 = por %p58, %p59
    %p61 = scmp.ne.s32.totalorder %s47, %s48
    %p62 = scmp.eq.s32.totalorder %s28, 2
    %p63 = por %p61, %p62
    %p65 = scmp.ne.s32.totalorder %s48, %s64
    %p66 = scmp.eq.s32.totalorder %s28, 0
    %p67 = por %p65, %p66
    %s69 = sadd.s32 %s68, 1
    %p72 = scmp.eq.s32.totalorder %s22, 2
    %p73 = scmp.ne.s32.totalorder %s68, %s70
    %p74 = scmp.eq.s32.totalorder %s22, 0
    %p75 = por %p73, %p74
    %p76 = scmp.ne.s32.totalorder %s68, %s70
    %p77 = scmp.eq.s32.totalorder %s27, 2
    %p78 = por %p76, %p77
    %p79 = scmp.ne.s32.totalorder %s70, %s71
    %p80 = scmp.eq.s32.totalorder %s27, 0
    %p81 = por %p79, %p80
    %p82 = scmp.ne.s32.totalorder %s70, %s71
    %p83 = scmp.eq.s32.totalorder %s28, 2
    %p84 = por %p82, %p83
    %p86 = scmp.ne.s32.totalorder %s71, %s85
    %p87 = scmp.eq.s32.totalorder %s28, 0
    %p88 = por %p86, %p87
    %s89 = ssub.s32 %s30, %s37
    %p90 = scmp.eq.s32.totalorder %s89, 0
    %s92 = sadd.s32 %s91, 1
    %s93 = scalar_select %p90, %s91, %s92
    %p96 = pneg %p90
    %p97 = scmp.eq.s32.totalorder %s22, 2
    %p98 = por %p96, %p97
    %p99 = scmp.ne.s32.totalorder %s91, %s94
    %p100 = scmp.eq.s32.totalorder %s22, 0
    %p101 = por %p99, %p100
    %p102 = scmp.ne.s32.totalorder %s91, %s94
    %p103 = scmp.eq.s32.totalorder %s27, 2
    %p104 = por %p102, %p103
    %p105 = scmp.ne.s32.totalorder %s94, %s95
    %p106 = scmp.eq.s32.totalorder %s27, 0
    %p107 = por %p105, %p106
    %p108 = scmp.ne.s32.totalorder %s94, %s95
    %p109 = scmp.eq.s32.totalorder %s28, 2
    %p110 = por %p108, %p109
    %p112 = scmp.ne.s32.totalorder %s95, %s111
    %p113 = scmp.eq.s32.totalorder %s28, 0
    %p114 = por %p112, %p113
    %s115 = ssub.s32 %s30, %s37
    %p116 = scmp.eq.s32.totalorder %s115, 0
    %s118 = sadd.s32 %s117, 1
    %s119 = scalar_select %p116, %s117, %s118
    %p122 = pneg %p116
    %p123 = scmp.eq.s32.totalorder %s22, 2
    %p124 = por %p122, %p123
    %p125 = scmp.ne.s32.totalorder %s117, %s120
    %p126 = scmp.eq.s32.totalorder %s22, 0
    %p127 = por %p125, %p126
    %p128 = scmp.ne.s32.totalorder %s117, %s120
    %p129 = scmp.eq.s32.totalorder %s27, 2
    %p130 = por %p128, %p129
    %p131 = scmp.ne.s32.totalorder %s120, %s121
    %p132 = scmp.eq.s32.totalorder %s27, 0
    %p133 = por %p131, %p132
    %p134 = scmp.ne.s32.totalorder %s120, %s121
    %p135 = scmp.eq.s32.totalorder %s28, 2
    %p136 = por %p134, %p135
    %p138 = scmp.ne.s32.totalorder %s121, %s137
    %p139 = scmp.eq.s32.totalorder %s28, 0
    %p140 = por %p138, %p139
    %s141 = ssub.s32 %s30, %s37
    %p142 = scmp.eq.s32.totalorder %s141, 0
    %s144 = sadd.s32 %s143, 1
    %s145 = scalar_select %p142, %s143, %s144
    %p148 = pneg %p142
    %p149 = scmp.eq.s32.totalorder %s22, 2
    %p150 = por %p148, %p149
    %p151 = scmp.ne.s32.totalorder %s143, %s146
    %p152 = scmp.eq.s32.totalorder %s22, 0
    %p153 = por %p151, %p152
    %p154 = scmp.ne.s32.totalorder %s143, %s146
    %p155 = scmp.eq.s32.totalorder %s27, 2
    %p156 = por %p154, %p155
    %p157 = scmp.ne.s32.totalorder %s146, %s147
    %p158 = scmp.eq.s32.totalorder %s27, 0
    %p159 = por %p157, %p158
    %p160 = scmp.ne.s32.totalorder %s146, %s147
    %p161 = scmp.eq.s32.totalorder %s28, 2
    %p162 = por %p160, %p161
    %p164 = scmp.ne.s32.totalorder %s147, %s163
    %p165 = scmp.eq.s32.totalorder %s28, 0
    %p166 = por %p164, %p165
    %s167 = ssub.s32 %s30, %s37
    %p168 = scmp.eq.s32.totalorder %s167, 0
    %s170 = sadd.s32 %s169, 1
    %s171 = scalar_select %p168, %s169, %s170
    %p174 = pneg %p168
    %p175 = scmp.eq.s32.totalorder %s22, 2
    %p176 = por %p174, %p175
    %p177 = scmp.ne.s32.totalorder %s169, %s172
    %p178 = scmp.eq.s32.totalorder %s22, 0
    %p179 = por %p177, %p178
    %p180 = scmp.ne.s32.totalorder %s169, %s172
    %p181 = scmp.eq.s32.totalorder %s27, 2
    %p182 = por %p180, %p181
    %p183 = scmp.ne.s32.totalorder %s172, %s173
    %p184 = scmp.eq.s32.totalorder %s27, 0
    %p185 = por %p183, %p184
    %p186 = scmp.ne.s32.totalorder %s172, %s173
    %p187 = scmp.eq.s32.totalorder %s28, 2
    %p188 = por %p186, %p187
    %p190 = scmp.ne.s32.totalorder %s173, %s189
    %p191 = scmp.eq.s32.totalorder %s28, 0
    %p192 = por %p190, %p191
    %s193 = ssub.s32 %s30, %s37
    %p194 = scmp.eq.s32.totalorder %s193, 0
    %s196 = sadd.s32 %s195, 1
    %s197 = scalar_select %p194, %s195, %s196
    %p200 = pneg %p194
    %p201 = scmp.eq.s32.totalorder %s22, 2
    %p202 = por %p200, %p201
    %p203 = scmp.ne.s32.totalorder %s195, %s198
    %p204 = scmp.eq.s32.totalorder %s22, 0
    %p205 = por %p203, %p204
    %p206 = scmp.ne.s32.totalorder %s195, %s198
    %p207 = scmp.eq.s32.totalorder %s27, 2
    %p208 = por %p206, %p207
    %p209 = scmp.ne.s32.totalorder %s198, %s199
    %p210 = scmp.eq.s32.totalorder %s27, 0
    %p211 = por %p209, %p210
    %p212 = scmp.ne.s32.totalorder %s198, %s199
    %p213 = scmp.eq.s32.totalorder %s28, 2
    %p214 = por %p212, %p213
    %p216 = scmp.ne.s32.totalorder %s199, %s215
    %p217 = scmp.eq.s32.totalorder %s28, 0
    %p218 = por %p216, %p217
    %s219 = ssub.s32 %s30, %s37
    %p220 = scmp.eq.s32.totalorder %s219, 0
    %s222 = sadd.s32 %s221, 1
    %s223 = scalar_select %p220, %s221, %s222
    %p226 = pneg %p220
    %p227 = scmp.eq.s32.totalorder %s22, 2
    %p228 = por %p226, %p227
    %p229 = scmp.ne.s32.totalorder %s221, %s224
    %p230 = scmp.eq.s32.totalorder %s22, 0
    %p231 = por %p229, %p230
    %p232 = scmp.ne.s32.totalorder %s221, %s224
    %p233 = scmp.eq.s32.totalorder %s27, 2
    %p234 = por %p232, %p233
    %p235 = scmp.ne.s32.totalorder %s224, %s225
    %p236 = scmp.eq.s32.totalorder %s27, 0
    %p237 = por %p235, %p236
    %p238 = scmp.ne.s32.totalorder %s224, %s225
    %p239 = scmp.eq.s32.totalorder %s28, 2
    %p240 = por %p238, %p239
    %p242 = scmp.ne.s32.totalorder %s225, %s241
    %p243 = scmp.eq.s32.totalorder %s28, 0
    %p244 = por %p242, %p243
    %s245 = ssub.s32 %s30, %s37
    %p246 = scmp.eq.s32.totalorder %s245, 0
    %s248 = sadd.s32 %s247, 1
    %s249 = scalar_select %p246, %s247, %s248
    %p252 = pneg %p246
    %p253 = scmp.eq.s32.totalorder %s22, 2
    %p254 = por %p252, %p253
    %p255 = scmp.ne.s32.totalorder %s247, %s250
    %p256 = scmp.eq.s32.totalorder %s22, 0
    %p257 = por %p255, %p256
    %p258 = scmp.ne.s32.totalorder %s247, %s250
    %p259 = scmp.eq.s32.totalorder %s27, 2
    %p260 = por %p258, %p259
    %p261 = scmp.ne.s32.totalorder %s250, %s251
    %p262 = scmp.eq.s32.totalorder %s27, 0
    %p263 = por %p261, %p262
    %p264 = scmp.ne.s32.totalorder %s250, %s251
    %p265 = scmp.eq.s32.totalorder %s28, 2
    %p266 = por %p264, %p265
    %p268 = scmp.ne.s32.totalorder %s251, %s267
    %p269 = scmp.eq.s32.totalorder %s28, 0
    %p270 = por %p268, %p269
    %s271 = ssub.s32 %s30, %s37
    %p272 = scmp.eq.s32.totalorder %s271, 0
    %s274 = sadd.s32 %s273, 1
    %s275 = scalar_select %p272, %s273, %s274
    %p278 = pneg %p272
    %p279 = scmp.eq.s32.totalorder %s22, 2
    %p280 = por %p278, %p279
    %p281 = scmp.ne.s32.totalorder %s273, %s276
    %p282 = scmp.eq.s32.totalorder %s22, 0
    %p283 = por %p281, %p282
    %p284 = scmp.ne.s32.totalorder %s273, %s276
    %p285 = scmp.eq.s32.totalorder %s27, 2
    %p286 = por %p284, %p285
    %p287 = scmp.ne.s32.totalorder %s276, %s277
    %p288 = scmp.eq.s32.totalorder %s27, 0
    %p289 = por %p287, %p288
    %p290 = scmp.ne.s32.totalorder %s276, %s277
    %p291 = scmp.eq.s32.totalorder %s28, 2
    %p292 = por %p290, %p291
    %p294 = scmp.ne.s32.totalorder %s277, %s293
    %p295 = scmp.eq.s32.totalorder %s28, 0
    %p296 = por %p294, %p295
    %s297 = ssub.s32 %s30, %s37
    %p298 = scmp.eq.s32.totalorder %s297, 0
    %s300 = sadd.s32 %s299, 1
    %s301 = scalar_select %p298, %s299, %s300
    %p304 = pneg %p298
    %p305 = scmp.eq.s32.totalorder %s22, 2
    %p306 = por %p304, %p305
    %p307 = scmp.ne.s32.totalorder %s299, %s302
    %p308 = scmp.eq.s32.totalorder %s22, 0
    %p309 = por %p307, %p308
    %p310 = scmp.ne.s32.totalorder %s299, %s302
    %p311 = scmp.eq.s32.totalorder %s27, 2
    %p312 = por %p310, %p311
    %p313 = scmp.ne.s32.totalorder %s302, %s303
    %p314 = scmp.eq.s32.totalorder %s27, 0
    %p315 = por %p313, %p314
    %p316 = scmp.ne.s32.totalorder %s302, %s303
    %p317 = scmp.eq.s32.totalorder %s28, 2
    %p318 = por %p316, %p317
    %p320 = scmp.ne.s32.totalorder %s303, %s319
    %p321 = scmp.eq.s32.totalorder %s28, 0
    %p322 = por %p320, %p321
    %s323 = ssub.s32 %s30, %s37
    %p324 = scmp.eq.s32.totalorder %s323, 0
    %s326 = sadd.s32 %s325, 1
    %s327 = scalar_select %p324, %s325, %s326
    %p330 = pneg %p324
    %p331 = scmp.eq.s32.totalorder %s22, 2
    %p332 = por %p330, %p331
    %p333 = scmp.ne.s32.totalorder %s325, %s328
    %p334 = scmp.eq.s32.totalorder %s22, 0
    %p335 = por %p333, %p334
    %p336 = scmp.ne.s32.totalorder %s325, %s328
    %p337 = scmp.eq.s32.totalorder %s27, 2
    %p338 = por %p336, %p337
    %p339 = scmp.ne.s32.totalorder %s328, %s329
    %p340 = scmp.eq.s32.totalorder %s27, 0
    %p341 = por %p339, %p340
    %p342 = scmp.ne.s32.totalorder %s328, %s329
    %p343 = scmp.eq.s32.totalorder %s28, 2
    %p344 = por %p342, %p343
    %p346 = scmp.ne.s32.totalorder %s329, %s345
    %p347 = scmp.eq.s32.totalorder %s28, 0
    %p348 = por %p346, %p347
    %s349 = ssub.s32 %s30, %s37
    %p350 = scmp.eq.s32.totalorder %s349, 0
    %s352 = sadd.s32 %s351, 1
    %s353 = scalar_select %p350, %s351, %s352
    %p356 = pneg %p350
    %p357 = scmp.eq.s32.totalorder %s22, 2
    %p358 = por %p356, %p357
    %p359 = scmp.ne.s32.totalorder %s351, %s354
    %p360 = scmp.eq.s32.totalorder %s22, 0
    %p361 = por %p359, %p360
    %p362 = scmp.ne.s32.totalorder %s351, %s354
    %p363 = scmp.eq.s32.totalorder %s27, 2
    %p364 = por %p362, %p363
    %p365 = scmp.ne.s32.totalorder %s354, %s355
    %p366 = scmp.eq.s32.totalorder %s27, 0
    %p367 = por %p365, %p366
    %p368 = scmp.ne.s32.totalorder %s354, %s355
    %p369 = scmp.eq.s32.totalorder %s28, 2
    %p370 = por %p368, %p369
    %p372 = scmp.ne.s32.totalorder %s355, %s371
    %p373 = scmp.eq.s32.totalorder %s28, 0
    %p374 = por %p372, %p373
    %s375 = ssub.s32 %s30, %s37
    %p376 = scmp.eq.s32.totalorder %s375, 0
    %s378 = sadd.s32 %s377, 1
    %s379 = scalar_select %p376, %s377, %s378
    %p382 = pneg %p376
    %p383 = scmp.eq.s32.totalorder %s22, 2
    %p384 = por %p382, %p383
    %p385 = scmp.ne.s32.totalorder %s377, %s380
    %p386 = scmp.eq.s32.totalorder %s22, 0
    %p387 = por %p385, %p386
    %p388 = scmp.ne.s32.totalorder %s377, %s380
    %p389 = scmp.eq.s32.totalorder %s27, 2
    %p390 = por %p388, %p389
    %p391 = scmp.ne.s32.totalorder %s380, %s381
    %p392 = scmp.eq.s32.totalorder %s27, 0
    %p393 = por %p391, %p392
    %p394 = scmp.ne.s32.totalorder %s380, %s381
    %p395 = scmp.eq.s32.totalorder %s28, 2
    %p396 = por %p394, %p395
    %p398 = scmp.ne.s32.totalorder %s381, %s397
    %p399 = scmp.eq.s32.totalorder %s28, 0
    %p400 = por %p398, %p399
    %s402 = sadd.s32 %s401, 1
    %p405 = scmp.eq.s32.totalorder %s22, 2
    %p406 = scmp.ne.s32.totalorder %s401, %s403
    %p407 = scmp.eq.s32.totalorder %s22, 0
    %p408 = por %p406, %p407
    %p409 = scmp.ne.s32.totalorder %s401, %s403
    %p410 = scmp.eq.s32.totalorder %s27, 2
    %p411 = por %p409, %p410
    %p412 = scmp.ne.s32.totalorder %s403, %s404
    %p413 = scmp.eq.s32.totalorder %s27, 0
    %p414 = por %p412, %p413
    %p415 = scmp.ne.s32.totalorder %s403, %s404
    %p416 = scmp.eq.s32.totalorder %s28, 2
    %p417 = por %p415, %p416
    %p419 = scmp.ne.s32.totalorder %s404, %s418
    %p420 = scmp.eq.s32.totalorder %s28, 0
    %p421 = por %p419, %p420
    %s423 = sadd.s32 %s422, 1
    %p426 = scmp.eq.s32.totalorder %s22, 2
    %p427 = scmp.ne.s32.totalorder %s422, %s424
    %p428 = scmp.eq.s32.totalorder %s22, 0
    %p429 = por %p427, %p428
    %p430 = scmp.ne.s32.totalorder %s422, %s424
    %p431 = scmp.eq.s32.totalorder %s27, 2
    %p432 = por %p430, %p431
    %p433 = scmp.ne.s32.totalorder %s424, %s425
    %p434 = scmp.eq.s32.totalorder %s27, 0
    %p435 = por %p433, %p434
    %p436 = scmp.ne.s32.totalorder %s424, %s425
    %p437 = scmp.eq.s32.totalorder %s28, 2
    %p438 = por %p436, %p437
    %p440 = scmp.ne.s32.totalorder %s425, %s439
    %p441 = scmp.eq.s32.totalorder %s28, 0
    %p442 = por %p440, %p441
    %s443 = ssub.s32 %s30, %s37
    %s444 = ssub.s32 %s29, %s41
    %s445 = sor.u32 %s443, %s444
    %p446 = scmp.eq.s32.totalorder %s445, 0
    %s448 = sadd.s32 %s447, 1
    %s449 = scalar_select %p446, %s447, %s448
    %p452 = pneg %p446
    %p453 = scmp.eq.s32.totalorder %s22, 2
    %p454 = por %p452, %p453
    %p455 = scmp.ne.s32.totalorder %s447, %s450
    %p456 = scmp.eq.s32.totalorder %s22, 0
    %p457 = por %p455, %p456
    %p458 = scmp.ne.s32.totalorder %s447, %s450
    %p459 = scmp.eq.s32.totalorder %s27, 2
    %p460 = por %p458, %p459
    %p461 = scmp.ne.s32.totalorder %s450, %s451
    %p462 = scmp.eq.s32.totalorder %s27, 0
    %p463 = por %p461, %p462
    %p464 = scmp.ne.s32.totalorder %s450, %s451
    %p465 = scmp.eq.s32.totalorder %s28, 2
    %p466 = por %p464, %p465
    %p468 = scmp.ne.s32.totalorder %s451, %s467
    %p469 = scmp.eq.s32.totalorder %s28, 0
    %p470 = por %p468, %p469
    %p471 = scmp.le.s32.totalorder 1, %s22
    %p472 = scmp.lt.s32.totalorder %s22, 4
    %p473 = pnand %p471, %p472
    %p474 = pneg %p473
    // Predicated region
    $region9: #{tpu_custom_call.1} parent=5 // pred_check
      _
    $region10: #{tpu_custom_call.1} parent=5 // pred_check_branch
      %476 = sbr.rel (%p473) target = $region12
    $region11: #{tpu_custom_call.1} parent=5 // pred_region
      %s477 = ssub.s32 %s22, 1
      // Predicated region
      $region13: #{tpu_custom_call.1} parent=11 // pred_check
        %p478 = pneg %p60
      $region14: #{tpu_custom_call.1} parent=11 // pred_check_branch
        %480 = sbr.rel (%p478) target = $region16
      $region15: #{tpu_custom_call.1} parent=11 // pred_region
        %s481 = smul.u32 2, %s31
        %p482 = scmp.lt.s32.totalorder %s481, 1
        %s483 = scalar_select %p482, %s481, 1
        %s484 = smul.addr %s483, 16
        %s485 = smul.addr %s484, 8
        %s486 = scalar_lea.vmem %s0, %s485
        %s487 = smul.u32 2, %s31
      $region16: #{tpu_custom_call.1} parent=11 // pred_fallthru
        _
      // Predicated region
      $region17: #{tpu_custom_call.1} parent=11 // pred_check
        %p488 = pneg %p81
      $region18: #{tpu_custom_call.1} parent=11 // pred_check_branch
        %490 = sbr.rel (%p488) target = $region20
      $region19: #{tpu_custom_call.1} parent=11 // pred_region
        _
      $region20: #{tpu_custom_call.1} parent=11 // pred_fallthru
        _
      // Predicated region
      $region21: #{tpu_custom_call.1} parent=11 // pred_check
        %p491 = pneg %p414
      $region22: #{tpu_custom_call.1} parent=11 // pred_check_branch
        %493 = sbr.rel (%p491) target = $region24
      $region23: #{tpu_custom_call.1} parent=11 // pred_region
        _
      $region24: #{tpu_custom_call.1} parent=11 // pred_fallthru
        _
      // Predicated region
      $region25: #{tpu_custom_call.1} parent=11 // pred_check
        %p494 = pneg %p435
      $region26: #{tpu_custom_call.1} parent=11 // pred_check_branch
        %496 = sbr.rel (%p494) target = $region28
      $region27: #{tpu_custom_call.1} parent=11 // pred_region
        _
      $region28: #{tpu_custom_call.1} parent=11 // pred_fallthru
        _
    $region12: #{tpu_custom_call.1} parent=5 // pred_fallthru
      _
    %p497 = scmp.lt.s32.totalorder %s22, 3
    // Predicated region
    $region29: #{tpu_custom_call.1} parent=5 // pred_check
      %p498 = pneg %p497
    $region30: #{tpu_custom_call.1} parent=5 // pred_check_branch
      %500 = sbr.rel (%p498) target = $region32
    $region31: #{tpu_custom_call.1} parent=5 // pred_region
      // Predicated region
      $region33: #{tpu_custom_call.1} parent=31 // pred_check
        %p501 = pneg %p101
      $region34: #{tpu_custom_call.1} parent=31 // pred_check_branch
        %503 = sbr.rel (%p501) target = $region36
      $region35: #{tpu_custom_call.1} parent=31 // pred_region
        %p504 = scmp.lt.s32.totalorder %s30, 2
        %s505 = scalar_select %p504, %s30, 2
        %s506 = scalar_lea.vmem %s2, %s505
      $region36: #{tpu_custom_call.1} parent=31 // pred_fallthru
        _
      // Predicated region
      $region37: #{tpu_custom_call.1} parent=31 // pred_check
        %p507 = pneg %p127
      $region38: #{tpu_custom_call.1} parent=31 // pred_check_branch
        %509 = sbr.rel (%p507) target = $region40
      $region39: #{tpu_custom_call.1} parent=31 // pred_region
        %p510 = scmp.lt.s32.totalorder %s30, 2
        %s511 = scalar_select %p510, %s30, 2
        %s512 = scalar_lea.vmem %s3, %s511
      $region40: #{tpu_custom_call.1} parent=31 // pred_fallthru
        _
      // Predicated region
      $region41: #{tpu_custom_call.1} parent=31 // pred_check
        %p513 = pneg %p153
      $region42: #{tpu_custom_call.1} parent=31 // pred_check_branch
        %515 = sbr.rel (%p513) target = $region44
      $region43: #{tpu_custom_call.1} parent=31 // pred_region
        %p516 = scmp.lt.s32.totalorder %s30, 2
        %s517 = scalar_select %p516, %s30, 2
        %s518 = smul.addr %s517, 4
        %s519 = smul.addr %s518, 4
        %s520 = scalar_lea.vmem %s4, %s519
      $region44: #{tpu_custom_call.1} parent=31 // pred_fallthru
        _
      // Predicated region
      $region45: #{tpu_custom_call.1} parent=31 // pred_check
        %p521 = pneg %p179
      $region46: #{tpu_custom_call.1} parent=31 // pred_check_branch
        %523 = sbr.rel (%p521) target = $region48
      $region47: #{tpu_custom_call.1} parent=31 // pred_region
        %p524 = scmp.lt.s32.totalorder %s30, 2
        %s525 = scalar_select %p524, %s30, 2
        %s526 = scalar_lea.vmem %s5, %s525
      $region48: #{tpu_custom_call.1} parent=31 // pred_fallthru
        _
      // Predicated region
      $region49: #{tpu_custom_call.1} parent=31 // pred_check
        %p527 = pneg %p205
      $region50: #{tpu_custom_call.1} parent=31 // pred_check_branch
        %529 = sbr.rel (%p527) target = $region52
      $region51: #{tpu_custom_call.1} parent=31 // pred_region
        %p530 = scmp.lt.s32.totalorder %s30, 2
        %s531 = scalar_select %p530, %s30, 2
        %s532 = smul.addr %s531, 4
        %s533 = smul.addr %s532, 4
        %s534 = scalar_lea.vmem %s6, %s533
      $region52: #{tpu_custom_call.1} parent=31 // pred_fallthru
        _
      // Predicated region
      $region53: #{tpu_custom_call.1} parent=31 // pred_check
        %p535 = pneg %p231
      $region54: #{tpu_custom_call.1} parent=31 // pred_check_branch
        %537 = sbr.rel (%p535) target = $region56
      $region55: #{tpu_custom_call.1} parent=31 // pred_region
        %p538 = scmp.lt.s32.totalorder %s30, 2
        %s539 = scalar_select %p538, %s30, 2
        %s540 = scalar_lea.vmem %s7, %s539
      $region56: #{tpu_custom_call.1} parent=31 // pred_fallthru
        _
      // Predicated region
      $region57: #{tpu_custom_call.1} parent=31 // pred_check
        %p541 = pneg %p257
      $region58: #{tpu_custom_call.1} parent=31 // pred_check_branch
        %543 = sbr.rel (%p541) target = $region60
      $region59: #{tpu_custom_call.1} parent=31 // pred_region
        %p544 = scmp.lt.s32.totalorder %s30, 2
        %s545 = scalar_select %p544, %s30, 2
        %s546 = scalar_lea.vmem %s8, %s545
      $region60: #{tpu_custom_call.1} parent=31 // pred_fallthru
        _
      // Predicated region
      $region61: #{tpu_custom_call.1} parent=31 // pred_check
        %p547 = pneg %p283
      $region62: #{tpu_custom_call.1} parent=31 // pred_check_branch
        %549 = sbr.rel (%p547) target = $region64
      $region63: #{tpu_custom_call.1} parent=31 // pred_region
        %p550 = scmp.lt.s32.totalorder %s30, 2
        %s551 = scalar_select %p550, %s30, 2
        %s552 = scalar_lea.vmem %s9, %s551
      $region64: #{tpu_custom_call.1} parent=31 // pred_fallthru
        _
      // Predicated region
      $region65: #{tpu_custom_call.1} parent=31 // pred_check
        %p553 = pneg %p309
      $region66: #{tpu_custom_call.1} parent=31 // pred_check_branch
        %555 = sbr.rel (%p553) target = $region68
      $region67: #{tpu_custom_call.1} parent=31 // pred_region
        %p556 = scmp.lt.s32.totalorder %s30, 2
        %s557 = scalar_select %p556, %s30, 2
        %s558 = smul.addr %s557, 4
        %s559 = smul.addr %s558, 4
        %s560 = scalar_lea.vmem %s10, %s559
      $region68: #{tpu_custom_call.1} parent=31 // pred_fallthru
        _
      // Predicated region
      $region69: #{tpu_custom_call.1} parent=31 // pred_check
        %p561 = pneg %p335
      $region70: #{tpu_custom_call.1} parent=31 // pred_check_branch
        %563 = sbr.rel (%p561) target = $region72
      $region71: #{tpu_custom_call.1} parent=31 // pred_region
        %p564 = scmp.lt.s32.totalorder %s30, 2
        %s565 = scalar_select %p564, %s30, 2
        %s566 = scalar_lea.vmem %s11, %s565
      $region72: #{tpu_custom_call.1} parent=31 // pred_fallthru
        _
      // Predicated region
      $region73: #{tpu_custom_call.1} parent=31 // pred_check
        %p567 = pneg %p361
      $region74: #{tpu_custom_call.1} parent=31 // pred_check_branch
        %569 = sbr.rel (%p567) target = $region76
      $region75: #{tpu_custom_call.1} parent=31 // pred_region
        %p570 = scmp.lt.s32.totalorder %s30, 2
        %s571 = scalar_select %p570, %s30, 2
        %s572 = smul.addr %s571, 16
        %s573 = smul.addr %s572, 4
        %s574 = scalar_lea.vmem %s12, %s573
      $region76: #{tpu_custom_call.1} parent=31 // pred_fallthru
        _
      // Predicated region
      $region77: #{tpu_custom_call.1} parent=31 // pred_check
        %p575 = pneg %p387
      $region78: #{tpu_custom_call.1} parent=31 // pred_check_branch
        %577 = sbr.rel (%p575) target = $region80
      $region79: #{tpu_custom_call.1} parent=31 // pred_region
        %p578 = scmp.lt.s32.totalorder %s30, 2
        %s579 = scalar_select %p578, %s30, 2
        %s580 = scalar_lea.vmem %s13, %s579
      $region80: #{tpu_custom_call.1} parent=31 // pred_fallthru
        _
    $region32: #{tpu_custom_call.1} parent=5 // pred_fallthru
      _
    %p581 = scmp.le.s32.totalorder 1, %s22
    %p582 = scmp.lt.s32.totalorder %s22, 4
    %p583 = pnand %p581, %p582
    %p584 = pneg %p583
    // Predicated region
    $region81: #{tpu_custom_call.1} parent=5 // pred_check
      _
    $region82: #{tpu_custom_call.1} parent=5 // pred_check_branch
      %586 = sbr.rel (%p583) target = $region84
    $region83: #{tpu_custom_call.1} parent=5 // pred_region
      %s587 = ssub.s32 %s22, 1
      %s588 = smul.u32 2, %s31
      %p589 = scmp.lt.s32.totalorder %s588, 1
      %s590 = scalar_select %p589, %s588, 1
      %s591 = smul.addr %s590, 16
      %s592 = smul.addr %s591, 8
      %s593 = scalar_lea.vmem %s0, %s592
      %p594 = pneg %p60
      %p595 = pneg %p57
      %p596 = pneg %p81
      %p597 = pneg %p78
      %p598 = scmp.lt.s32.totalorder %s32, 2
      %s599 = scalar_select %p598, %s32, 2
      %s600 = scalar_lea.vmem %s2, %s599
      %p601 = pneg %p107
      %p602 = pneg %p104
      %p603 = scmp.lt.s32.totalorder %s32, 2
      %s604 = scalar_select %p603, %s32, 2
      %s605 = scalar_lea.vmem %s3, %s604
      %p606 = pneg %p133
      %p607 = pneg %p130
      %p608 = scmp.lt.s32.totalorder %s32, 2
      %s609 = scalar_select %p608, %s32, 2
      %s610 = smul.addr %s609, 4
      %s611 = smul.addr %s610, 4
      %s612 = scalar_lea.vmem %s4, %s611
      %p613 = pneg %p159
      %p614 = pneg %p156
      %p615 = scmp.lt.s32.totalorder %s32, 2
      %s616 = scalar_select %p615, %s32, 2
      %s617 = scalar_lea.vmem %s5, %s616
      %p618 = pneg %p185
      %p619 = pneg %p182
      %p620 = scmp.lt.s32.totalorder %s32, 2
      %s621 = scalar_select %p620, %s32, 2
      %s622 = smul.addr %s621, 4
      %s623 = smul.addr %s622, 4
      %s624 = scalar_lea.vmem %s6, %s623
      %p625 = pneg %p211
      %p626 = pneg %p208
      %p627 = scmp.lt.s32.totalorder %s32, 2
      %s628 = scalar_select %p627, %s32, 2
      %s629 = scalar_lea.vmem %s7, %s628
      %p630 = pneg %p237
      %p631 = pneg %p234
      %p632 = scmp.lt.s32.totalorder %s32, 2
      %s633 = scalar_select %p632, %s32, 2
      %s634 = scalar_lea.vmem %s8, %s633
      %p635 = pneg %p263
      %p636 = pneg %p260
      %p637 = scmp.lt.s32.totalorder %s32, 2
      %s638 = scalar_select %p637, %s32, 2
      %s639 = scalar_lea.vmem %s9, %s638
      %p640 = pneg %p289
      %p641 = pneg %p286
      %p642 = scmp.lt.s32.totalorder %s32, 2
      %s643 = scalar_select %p642, %s32, 2
      %s644 = smul.addr %s643, 4
      %s645 = smul.addr %s644, 4
      %s646 = scalar_lea.vmem %s10, %s645
      %p647 = pneg %p315
      %p648 = pneg %p312
      %p649 = scmp.lt.s32.totalorder %s32, 2
      %s650 = scalar_select %p649, %s32, 2
      %s651 = scalar_lea.vmem %s11, %s650
      %p652 = pneg %p341
      %p653 = pneg %p338
      %p654 = scmp.lt.s32.totalorder %s32, 2
      %s655 = scalar_select %p654, %s32, 2
      %s656 = smul.addr %s655, 16
      %s657 = smul.addr %s656, 4
      %s658 = scalar_lea.vmem %s12, %s657
      %p659 = pneg %p367
      %p660 = pneg %p364
      %p661 = scmp.lt.s32.totalorder %s32, 2
      %s662 = scalar_select %p661, %s32, 2
      %s663 = scalar_lea.vmem %s13, %s662
      %p664 = pneg %p393
      %p665 = pneg %p390
      %p666 = pneg %p414
      %p667 = pneg %p411
      %p668 = pneg %p435
      %p669 = pneg %p432
      %p670 = pneg %p463
      %p671 = pneg %p460
      %s672 = smul.u32 2, %s31
      %p673 = scmp.lt.s32.totalorder %s32, 2
      %s674 = scalar_select %p673, %s32, 2
      %p675 = scmp.lt.s32.totalorder %s672, 1
      %s676 = scalar_select %p675, %s672, 1
      %s677 = smul.addr %s676, 16
      %s678 = smul.addr %s674, 32
      %s679 = sadd.s32 %s677, %s678
      %s680 = smul.addr %s679, 4
      %s681 = scalar_lea.vmem %s16, %s680
      %s682 = smul.u32 2, %s31
      %p683 = scmp.lt.s32.totalorder %s682, 1
      %s684 = scalar_select %p683, %s682, 1
      %s685 = smul.addr %s684, 16
      %s686 = smul.addr %s685, 8
      %s687 = scalar_lea.vmem %s0, %s686
      %s688 = smul.u32 2, %s31
      %p689 = scmp.lt.s32.totalorder %s32, 2
      %s690 = scalar_select %p689, %s32, 2
      %s691 = scalar_lea.vmem %s2, %s690
      %p692 = scmp.lt.s32.totalorder %s32, 2
      %s693 = scalar_select %p692, %s32, 2
      %s694 = scalar_lea.vmem %s3, %s693
      %p695 = scmp.lt.s32.totalorder %s32, 2
      %s696 = scalar_select %p695, %s32, 2
      %s697 = smul.addr %s696, 4
      %s698 = smul.addr %s697, 4
      %s699 = scalar_lea.vmem %s4, %s698
      %p700 = scmp.lt.s32.totalorder %s32, 2
      %s701 = scalar_select %p700, %s32, 2
      %s702 = scalar_lea.vmem %s5, %s701
      %p703 = scmp.lt.s32.totalorder %s32, 2
      %s704 = scalar_select %p703, %s32, 2
      %s705 = smul.addr %s704, 4
      %s706 = smul.addr %s705, 4
      %s707 = scalar_lea.vmem %s6, %s706
      %p708 = scmp.lt.s32.totalorder %s32, 2
      %s709 = scalar_select %p708, %s32, 2
      %s710 = scalar_lea.vmem %s7, %s709
      %p711 = scmp.lt.s32.totalorder %s32, 2
      %s712 = scalar_select %p711, %s32, 2
      %s713 = scalar_lea.vmem %s8, %s712
      %p714 = scmp.lt.s32.totalorder %s32, 2
      %s715 = scalar_select %p714, %s32, 2
      %s716 = scalar_lea.vmem %s9, %s715
      %p717 = scmp.lt.s32.totalorder %s32, 2
      %s718 = scalar_select %p717, %s32, 2
      %s719 = smul.addr %s718, 4
      %s720 = smul.addr %s719, 4
      %s721 = scalar_lea.vmem %s10, %s720
      %p722 = scmp.lt.s32.totalorder %s32, 2
      %s723 = scalar_select %p722, %s32, 2
      %s724 = scalar_lea.vmem %s11, %s723
      %p725 = scmp.lt.s32.totalorder %s32, 2
      %s726 = scalar_select %p725, %s32, 2
      %s727 = smul.addr %s726, 16
      %s728 = smul.addr %s727, 4
      %s729 = scalar_lea.vmem %s12, %s728
      %p730 = scmp.lt.s32.totalorder %s32, 2
      %s731 = scalar_select %p730, %s32, 2
      %s732 = scalar_lea.vmem %s13, %s731
      %s733 = smul.u32 2, %s31
      %p734 = scmp.lt.s32.totalorder %s32, 2
      %s735 = scalar_select %p734, %s32, 2
      %p736 = scmp.lt.s32.totalorder %s733, 1
      %s737 = scalar_select %p736, %s733, 1
      %s738 = smul.addr %s737, 16
      %s739 = smul.addr %s735, 32
      %s740 = sadd.s32 %s738, %s739
      %s741 = smul.addr %s740, 4
      %s742 = scalar_lea.vmem %s16, %s741
      %s743 = smul.u32 2, %s31
      %p745 = scmp.eq.s32.totalorder %s32, 0
      // Predicated region
      $region85: #{tpu_custom_call.1} parent=83 // pred_check
        %p746 = pneg %p745
      $region86: #{tpu_custom_call.1} parent=83 // pred_check_branch
        %748 = sbr.rel (%p746) target = $region88
      $region87: #{tpu_custom_call.1} parent=83 // pred_region
        %v749 = vld [vmem:[%s687] sm:$0xff]
        %v750 = vld [vmem:[%s687 + $0x8] sm:$0xff]
        %v751 = vld [vmem:[%s687 + $0x10] sm:$0xff]
        %v752 = vld [vmem:[%s687 + $0x18] sm:$0xff]
        %v753 = vld [vmem:[%s687 + $0x20] sm:$0xff]
        %v754 = vld [vmem:[%s687 + $0x28] sm:$0xff]
        %v755 = vld [vmem:[%s687 + $0x30] sm:$0xff]
        %v756 = vld [vmem:[%s687 + $0x38] sm:$0xff]
        %v757 = vld [vmem:[%s687 + $0x40] sm:$0xff]
        %v758 = vld [vmem:[%s687 + $0x48] sm:$0xff]
        %v759 = vld [vmem:[%s687 + $0x50] sm:$0xff]
        %v760 = vld [vmem:[%s687 + $0x58] sm:$0xff]
        %v761 = vld [vmem:[%s687 + $0x60] sm:$0xff]
        %v762 = vld [vmem:[%s687 + $0x68] sm:$0xff]
        %v763 = vld [vmem:[%s687 + $0x70] sm:$0xff]
        %v764 = vld [vmem:[%s687 + $0x78] sm:$0xff]
        %v765 = vld [vmem:[%s687 + $0x80] sm:$0xff]
        %v766 = vld [vmem:[%s687 + $0x88] sm:$0xff]
        %v767 = vld [vmem:[%s687 + $0x90] sm:$0xff]
        %v768 = vld [vmem:[%s687 + $0x98] sm:$0xff]
        %v769 = vld [vmem:[%s687 + $0xa0] sm:$0xff]
        %v770 = vld [vmem:[%s687 + $0xa8] sm:$0xff]
        %v771 = vld [vmem:[%s687 + $0xb0] sm:$0xff]
        %v772 = vld [vmem:[%s687 + $0xb8] sm:$0xff]
        %v773 = vld [vmem:[%s687 + $0xc0] sm:$0xff]
        %v774 = vld [vmem:[%s687 + $0xc8] sm:$0xff]
        %v775 = vld [vmem:[%s687 + $0xd0] sm:$0xff]
        %v776 = vld [vmem:[%s687 + $0xd8] sm:$0xff]
        %v777 = vld [vmem:[%s687 + $0xe0] sm:$0xff]
        %v778 = vld [vmem:[%s687 + $0xe8] sm:$0xff]
        %v779 = vld [vmem:[%s687 + $0xf0] sm:$0xff]
        %v780 = vld [vmem:[%s687 + $0xf8] sm:$0xff]
        %vm781 = vcmask 261120
        %782 = vst.msk [vmem:[#allocation2] sm:$0xff] %vm781, %v749
        %783 = vst.msk [vmem:[#allocation2 + $0x8] sm:$0xff] %vm781, %v750
        %784 = vst.msk [vmem:[#allocation2 + $0x10] sm:$0xff] %vm781, %v751
        %785 = vst.msk [vmem:[#allocation2 + $0x18] sm:$0xff] %vm781, %v752
        %786 = vst.msk [vmem:[#allocation2 + $0x20] sm:$0xff] %vm781, %v753
        %787 = vst.msk [vmem:[#allocation2 + $0x28] sm:$0xff] %vm781, %v754
        %788 = vst.msk [vmem:[#allocation2 + $0x30] sm:$0xff] %vm781, %v755
        %789 = vst.msk [vmem:[#allocation2 + $0x38] sm:$0xff] %vm781, %v756
        %790 = vst.msk [vmem:[#allocation2 + $0x40] sm:$0xff] %vm781, %v757
        %791 = vst.msk [vmem:[#allocation2 + $0x48] sm:$0xff] %vm781, %v758
        %792 = vst.msk [vmem:[#allocation2 + $0x50] sm:$0xff] %vm781, %v759
        %793 = vst.msk [vmem:[#allocation2 + $0x58] sm:$0xff] %vm781, %v760
        %794 = vst.msk [vmem:[#allocation2 + $0x60] sm:$0xff] %vm781, %v761
        %795 = vst.msk [vmem:[#allocation2 + $0x68] sm:$0xff] %vm781, %v762
        %796 = vst.msk [vmem:[#allocation2 + $0x70] sm:$0xff] %vm781, %v763
        %797 = vst.msk [vmem:[#allocation2 + $0x78] sm:$0xff] %vm781, %v764
        %798 = vst.msk [vmem:[#allocation2 + $0x80] sm:$0xff] %vm781, %v765
        %799 = vst.msk [vmem:[#allocation2 + $0x88] sm:$0xff] %vm781, %v766
        %800 = vst.msk [vmem:[#allocation2 + $0x90] sm:$0xff] %vm781, %v767
        %801 = vst.msk [vmem:[#allocation2 + $0x98] sm:$0xff] %vm781, %v768
        %802 = vst.msk [vmem:[#allocation2 + $0xa0] sm:$0xff] %vm781, %v769
        %803 = vst.msk [vmem:[#allocation2 + $0xa8] sm:$0xff] %vm781, %v770
        %804 = vst.msk [vmem:[#allocation2 + $0xb0] sm:$0xff] %vm781, %v771
        %805 = vst.msk [vmem:[#allocation2 + $0xb8] sm:$0xff] %vm781, %v772
        %806 = vst.msk [vmem:[#allocation2 + $0xc0] sm:$0xff] %vm781, %v773
        %807 = vst.msk [vmem:[#allocation2 + $0xc8] sm:$0xff] %vm781, %v774
        %808 = vst.msk [vmem:[#allocation2 + $0xd0] sm:$0xff] %vm781, %v775
        %809 = vst.msk [vmem:[#allocation2 + $0xd8] sm:$0xff] %vm781, %v776
        %810 = vst.msk [vmem:[#allocation2 + $0xe0] sm:$0xff] %vm781, %v777
        %811 = vst.msk [vmem:[#allocation2 + $0xe8] sm:$0xff] %vm781, %v778
        %812 = vst.msk [vmem:[#allocation2 + $0xf0] sm:$0xff] %vm781, %v779
        %813 = vst.msk [vmem:[#allocation2 + $0xf8] sm:$0xff] %vm781, %v780
      $region88: #{tpu_custom_call.1} parent=83 // pred_fallthru
        _
      %v814 = vld [vmem:[#allocation2] sm:$0xff]
      %v815 = vld [vmem:[#allocation2 + $0x8] sm:$0xff]
      %v816 = vld [vmem:[#allocation2 + $0x10] sm:$0xff]
      %v817 = vld [vmem:[#allocation2 + $0x18] sm:$0xff]
      %v818 = vld [vmem:[#allocation2 + $0x20] sm:$0xff]
      %v819 = vld [vmem:[#allocation2 + $0x28] sm:$0xff]
      %v820 = vld [vmem:[#allocation2 + $0x30] sm:$0xff]
      %v821 = vld [vmem:[#allocation2 + $0x38] sm:$0xff]
      %v822 = vld [vmem:[#allocation2 + $0x40] sm:$0xff]
      %v823 = vld [vmem:[#allocation2 + $0x48] sm:$0xff]
      %v824 = vld [vmem:[#allocation2 + $0x50] sm:$0xff]
      %v825 = vld [vmem:[#allocation2 + $0x58] sm:$0xff]
      %v826 = vld [vmem:[#allocation2 + $0x60] sm:$0xff]
      %v827 = vld [vmem:[#allocation2 + $0x68] sm:$0xff]
      %v828 = vld [vmem:[#allocation2 + $0x70] sm:$0xff]
      %v829 = vld [vmem:[#allocation2 + $0x78] sm:$0xff]
      %v830 = vld [vmem:[#allocation2 + $0x80] sm:$0xff]
      %v831 = vld [vmem:[#allocation2 + $0x88] sm:$0xff]
      %v832 = vld [vmem:[#allocation2 + $0x90] sm:$0xff]
      %v833 = vld [vmem:[#allocation2 + $0x98] sm:$0xff]
      %v834 = vld [vmem:[#allocation2 + $0xa0] sm:$0xff]
      %v835 = vld [vmem:[#allocation2 + $0xa8] sm:$0xff]
      %v836 = vld [vmem:[#allocation2 + $0xb0] sm:$0xff]
      %v837 = vld [vmem:[#allocation2 + $0xb8] sm:$0xff]
      %v838 = vld [vmem:[#allocation2 + $0xc0] sm:$0xff]
      %v839 = vld [vmem:[#allocation2 + $0xc8] sm:$0xff]
      %v840 = vld [vmem:[#allocation2 + $0xd0] sm:$0xff]
      %v841 = vld [vmem:[#allocation2 + $0xd8] sm:$0xff]
      %v842 = vld [vmem:[#allocation2 + $0xe0] sm:$0xff]
      %v843 = vld [vmem:[#allocation2 + $0xe8] sm:$0xff]
      %v844 = vld [vmem:[#allocation2 + $0xf0] sm:$0xff]
      %v845 = vld [vmem:[#allocation2 + $0xf8] sm:$0xff]
      %v846 = vld [vmem:[%s1] sm:$0xff]
      %v847 = vld [vmem:[%s1 + $0x8] sm:$0xff]
      %v848 = vld [vmem:[%s1 + $0x10] sm:$0xff]
      %v849 = vld [vmem:[%s1 + $0x18] sm:$0xff]
      %v850 = vld [vmem:[%s1 + $0x20] sm:$0xff]
      %v851 = vld [vmem:[%s1 + $0x28] sm:$0xff]
      %v852 = vld [vmem:[%s1 + $0x30] sm:$0xff]
      %v853 = vld [vmem:[%s1 + $0x38] sm:$0xff]
      %v854 = vld [vmem:[%s1 + $0x40] sm:$0xff]
      %v855 = vld [vmem:[%s1 + $0x48] sm:$0xff]
      %v856 = vld [vmem:[%s1 + $0x50] sm:$0xff]
      %v857 = vld [vmem:[%s1 + $0x58] sm:$0xff]
      %v858 = vld [vmem:[%s1 + $0x60] sm:$0xff]
      %v859 = vld [vmem:[%s1 + $0x68] sm:$0xff]
      %v860 = vld [vmem:[%s1 + $0x70] sm:$0xff]
      %v861 = vld [vmem:[%s1 + $0x78] sm:$0xff]
      %v862 = vld [vmem:[%s691] sm:$0x1]
      %v863 = vld [vmem:[%s694] sm:$0x1]
      %vm864 = vcmask 261120
      %v865 = vsel %vm864, %v814, 0.0
      %866 = vadd.xlane.f32.xlu0 %v865
      %v867 = vpop.xlane.xlu0 %866
      %v868 = vsel %vm864, %v815, 0.0
      %869 = vadd.xlane.f32.xlu0 %v868
      %v870 = vpop.xlane.xlu0 %869
      %v871 = vsel %vm864, %v816, 0.0
      %872 = vadd.xlane.f32.xlu0 %v871
      %v873 = vpop.xlane.xlu0 %872
      %v874 = vsel %vm864, %v817, 0.0
      %875 = vadd.xlane.f32.xlu0 %v874
      %v876 = vpop.xlane.xlu0 %875
      %v877 = vsel %vm864, %v818, 0.0
      %878 = vadd.xlane.f32.xlu0 %v877
      %v879 = vpop.xlane.xlu0 %878
      %v880 = vsel %vm864, %v819, 0.0
      %881 = vadd.xlane.f32.xlu0 %v880
      %v882 = vpop.xlane.xlu0 %881
      %v883 = vsel %vm864, %v820, 0.0
      %884 = vadd.xlane.f32.xlu0 %v883
      %v885 = vpop.xlane.xlu0 %884
      %v886 = vsel %vm864, %v821, 0.0
      %887 = vadd.xlane.f32.xlu0 %v886
      %v888 = vpop.xlane.xlu0 %887
      %v889 = vsel %vm864, %v822, 0.0
      %890 = vadd.xlane.f32.xlu0 %v889
      %v891 = vpop.xlane.xlu0 %890
      %v892 = vsel %vm864, %v823, 0.0
      %893 = vadd.xlane.f32.xlu0 %v892
      %v894 = vpop.xlane.xlu0 %893
      %v895 = vsel %vm864, %v824, 0.0
      %896 = vadd.xlane.f32.xlu0 %v895
      %v897 = vpop.xlane.xlu0 %896
      %v898 = vsel %vm864, %v825, 0.0
      %899 = vadd.xlane.f32.xlu0 %v898
      %v900 = vpop.xlane.xlu0 %899
      %v901 = vsel %vm864, %v826, 0.0
      %902 = vadd.xlane.f32.xlu0 %v901
      %v903 = vpop.xlane.xlu0 %902
      %v904 = vsel %vm864, %v827, 0.0
      %905 = vadd.xlane.f32.xlu0 %v904
      %v906 = vpop.xlane.xlu0 %905
      %v907 = vsel %vm864, %v828, 0.0
      %908 = vadd.xlane.f32.xlu0 %v907
      %v909 = vpop.xlane.xlu0 %908
      %v910 = vsel %vm864, %v829, 0.0
      %911 = vadd.xlane.f32.xlu0 %v910
      %v912 = vpop.xlane.xlu0 %911
      %v913 = vsel %vm864, %v830, 0.0
      %914 = vadd.xlane.f32.xlu0 %v913
      %v915 = vpop.xlane.xlu0 %914
      %v916 = vsel %vm864, %v831, 0.0
      %917 = vadd.xlane.f32.xlu0 %v916
      %v918 = vpop.xlane.xlu0 %917
      %v919 = vsel %vm864, %v832, 0.0
      %920 = vadd.xlane.f32.xlu0 %v919
      %v921 = vpop.xlane.xlu0 %920
      %v922 = vsel %vm864, %v833, 0.0
      %923 = vadd.xlane.f32.xlu0 %v922
      %v924 = vpop.xlane.xlu0 %923
      %v925 = vsel %vm864, %v834, 0.0
      %926 = vadd.xlane.f32.xlu0 %v925
      %v927 = vpop.xlane.xlu0 %926
      %v928 = vsel %vm864, %v835, 0.0
      %929 = vadd.xlane.f32.xlu0 %v928
      %v930 = vpop.xlane.xlu0 %929
      %v931 = vsel %vm864, %v836, 0.0
      %932 = vadd.xlane.f32.xlu0 %v931
      %v933 = vpop.xlane.xlu0 %932
      %v934 = vsel %vm864, %v837, 0.0
      %935 = vadd.xlane.f32.xlu0 %v934
      %v936 = vpop.xlane.xlu0 %935
      %v937 = vsel %vm864, %v838, 0.0
      %938 = vadd.xlane.f32.xlu0 %v937
      %v939 = vpop.xlane.xlu0 %938
      %v940 = vsel %vm864, %v839, 0.0
      %941 = vadd.xlane.f32.xlu0 %v940
      %v942 = vpop.xlane.xlu0 %941
      %v943 = vsel %vm864, %v840, 0.0
      %944 = vadd.xlane.f32.xlu0 %v943
      %v945 = vpop.xlane.xlu0 %944
      %v946 = vsel %vm864, %v841, 0.0
      %947 = vadd.xlane.f32.xlu0 %v946
      %v948 = vpop.xlane.xlu0 %947
      %v949 = vsel %vm864, %v842, 0.0
      %950 = vadd.xlane.f32.xlu0 %v949
      %v951 = vpop.xlane.xlu0 %950
      %v952 = vsel %vm864, %v843, 0.0
      %953 = vadd.xlane.f32.xlu0 %v952
      %v954 = vpop.xlane.xlu0 %953
      %v955 = vsel %vm864, %v844, 0.0
      %956 = vadd.xlane.f32.xlu0 %v955
      %v957 = vpop.xlane.xlu0 %956
      %v958 = vsel %vm864, %v845, 0.0
      %959 = vadd.xlane.f32.xlu0 %v958
      %v960 = vpop.xlane.xlu0 %959
      %v961 = vrcp.pop 32.0
      %v962 = vmul.f32 32.0, %v961
      %v963 = vsub.f32 1.0, %v962
      %v964 = vmul.f32 %v961, %v963
      %v965 = vadd.f32 %v961, %v964
      %vm966 = vweird.f32 %v961
      %v967 = vsel %vm966, %v961, %v965
      %v968 = vmul.f32 %v867, %v967
      %v969 = vmul.f32 %v870, %v967
      %v970 = vmul.f32 %v873, %v967
      %v971 = vmul.f32 %v876, %v967
      %v972 = vmul.f32 %v879, %v967
      %v973 = vmul.f32 %v882, %v967
      %v974 = vmul.f32 %v885, %v967
      %v975 = vmul.f32 %v888, %v967
      %v976 = vmul.f32 %v891, %v967
      %v977 = vmul.f32 %v894, %v967
      %v978 = vmul.f32 %v897, %v967
      %v979 = vmul.f32 %v900, %v967
      %v980 = vmul.f32 %v903, %v967
      %v981 = vmul.f32 %v906, %v967
      %v982 = vmul.f32 %v909, %v967
      %v983 = vmul.f32 %v912, %v967
      %v984 = vmul.f32 %v915, %v967
      %v985 = vmul.f32 %v918, %v967
      %v986 = vmul.f32 %v921, %v967
      %v987 = vmul.f32 %v924, %v967
      %v988 = vmul.f32 %v927, %v967
      %v989 = vmul.f32 %v930, %v967
      %v990 = vmul.f32 %v933, %v967
      %v991 = vmul.f32 %v936, %v967
      %v992 = vmul.f32 %v939, %v967
      %v993 = vmul.f32 %v942, %v967
      %v994 = vmul.f32 %v945, %v967
      %v995 = vmul.f32 %v948, %v967
      %v996 = vmul.f32 %v951, %v967
      %v997 = vmul.f32 %v954, %v967
      %v998 = vmul.f32 %v957, %v967
      %v999 = vmul.f32 %v960, %v967
      %v1000 = vsub.f32 %v814, %v968
      %v1001 = vsub.f32 %v815, %v969
      %v1002 = vsub.f32 %v816, %v970
      %v1003 = vsub.f32 %v817, %v971
      %v1004 = vsub.f32 %v818, %v972
      %v1005 = vsub.f32 %v819, %v973
      %v1006 = vsub.f32 %v820, %v974
      %v1007 = vsub.f32 %v821, %v975
      %v1008 = vsub.f32 %v822, %v976
      %v1009 = vsub.f32 %v823, %v977
      %v1010 = vsub.f32 %v824, %v978
      %v1011 = vsub.f32 %v825, %v979
      %v1012 = vsub.f32 %v826, %v980
      %v1013 = vsub.f32 %v827, %v981
      %v1014 = vsub.f32 %v828, %v982
      %v1015 = vsub.f32 %v829, %v983
      %v1016 = vsub.f32 %v830, %v984
      %v1017 = vsub.f32 %v831, %v985
      %v1018 = vsub.f32 %v832, %v986
      %v1019 = vsub.f32 %v833, %v987
      %v1020 = vsub.f32 %v834, %v988
      %v1021 = vsub.f32 %v835, %v989
      %v1022 = vsub.f32 %v836, %v990
      %v1023 = vsub.f32 %v837, %v991
      %v1024 = vsub.f32 %v838, %v992
      %v1025 = vsub.f32 %v839, %v993
      %v1026 = vsub.f32 %v840, %v994
      %v1027 = vsub.f32 %v841, %v995
      %v1028 = vsub.f32 %v842, %v996
      %v1029 = vsub.f32 %v843, %v997
      %v1030 = vsub.f32 %v844, %v998
      %v1031 = vsub.f32 %v845, %v999
      %v1032 = vmul.f32 %v1000, %v1000
      %v1033 = vmul.f32 %v1001, %v1001
      %v1034 = vmul.f32 %v1002, %v1002
      %v1035 = vmul.f32 %v1003, %v1003
      %v1036 = vmul.f32 %v1004, %v1004
      %v1037 = vmul.f32 %v1005, %v1005
      %v1038 = vmul.f32 %v1006, %v1006
      %v1039 = vmul.f32 %v1007, %v1007
      %v1040 = vmul.f32 %v1008, %v1008
      %v1041 = vmul.f32 %v1009, %v1009
      %v1042 = vmul.f32 %v1010, %v1010
      %v1043 = vmul.f32 %v1011, %v1011
      %v1044 = vmul.f32 %v1012, %v1012
      %v1045 = vmul.f32 %v1013, %v1013
      %v1046 = vmul.f32 %v1014, %v1014
      %v1047 = vmul.f32 %v1015, %v1015
      %v1048 = vmul.f32 %v1016, %v1016
      %v1049 = vmul.f32 %v1017, %v1017
      %v1050 = vmul.f32 %v1018, %v1018
      %v1051 = vmul.f32 %v1019, %v1019
      %v1052 = vmul.f32 %v1020, %v1020
      %v1053 = vmul.f32 %v1021, %v1021
      %v1054 = vmul.f32 %v1022, %v1022
      %v1055 = vmul.f32 %v1023, %v1023
      %v1056 = vmul.f32 %v1024, %v1024
      %v1057 = vmul.f32 %v1025, %v1025
      %v1058 = vmul.f32 %v1026, %v1026
      %v1059 = vmul.f32 %v1027, %v1027
      %v1060 = vmul.f32 %v1028, %v1028
      %v1061 = vmul.f32 %v1029, %v1029
      %v1062 = vmul.f32 %v1030, %v1030
      %v1063 = vmul.f32 %v1031, %v1031
      %v1064 = vsel %vm864, %v1032, 0.0
      %1065 = vadd.xlane.f32.xlu0 %v1064
      %v1066 = vpop.xlane.xlu0 %1065
      %v1067 = vsel %vm864, %v1033, 0.0
      %1068 = vadd.xlane.f32.xlu0 %v1067
      %v1069 = vpop.xlane.xlu0 %1068
      %v1070 = vsel %vm864, %v1034, 0.0
      %1071 = vadd.xlane.f32.xlu0 %v1070
      %v1072 = vpop.xlane.xlu0 %1071
      %v1073 = vsel %vm864, %v1035, 0.0
      %1074 = vadd.xlane.f32.xlu0 %v1073
      %v1075 = vpop.xlane.xlu0 %1074
      %v1076 = vsel %vm864, %v1036, 0.0
      %1077 = vadd.xlane.f32.xlu0 %v1076
      %v1078 = vpop.xlane.xlu0 %1077
      %v1079 = vsel %vm864, %v1037, 0.0
      %1080 = vadd.xlane.f32.xlu0 %v1079
      %v1081 = vpop.xlane.xlu0 %1080
      %v1082 = vsel %vm864, %v1038, 0.0
      %1083 = vadd.xlane.f32.xlu0 %v1082
      %v1084 = vpop.xlane.xlu0 %1083
      %v1085 = vsel %vm864, %v1039, 0.0
      %1086 = vadd.xlane.f32.xlu0 %v1085
      %v1087 = vpop.xlane.xlu0 %1086
      %v1088 = vsel %vm864, %v1040, 0.0
      %1089 = vadd.xlane.f32.xlu0 %v1088
      %v1090 = vpop.xlane.xlu0 %1089
      %v1091 = vsel %vm864, %v1041, 0.0
      %1092 = vadd.xlane.f32.xlu0 %v1091
      %v1093 = vpop.xlane.xlu0 %1092
      %v1094 = vsel %vm864, %v1042, 0.0
      %1095 = vadd.xlane.f32.xlu0 %v1094
      %v1096 = vpop.xlane.xlu0 %1095
      %v1097 = vsel %vm864, %v1043, 0.0
      %1098 = vadd.xlane.f32.xlu0 %v1097
      %v1099 = vpop.xlane.xlu0 %1098
      %v1100 = vsel %vm864, %v1044, 0.0
      %1101 = vadd.xlane.f32.xlu0 %v1100
      %v1102 = vpop.xlane.xlu0 %1101
      %v1103 = vsel %vm864, %v1045, 0.0
      %1104 = vadd.xlane.f32.xlu0 %v1103
      %v1105 = vpop.xlane.xlu0 %1104
      %v1106 = vsel %vm864, %v1046, 0.0
      %1107 = vadd.xlane.f32.xlu0 %v1106
      %v1108 = vpop.xlane.xlu0 %1107
      %v1109 = vsel %vm864, %v1047, 0.0
      %1110 = vadd.xlane.f32.xlu0 %v1109
      %v1111 = vpop.xlane.xlu0 %1110
      %v1112 = vsel %vm864, %v1048, 0.0
      %1113 = vadd.xlane.f32.xlu0 %v1112
      %v1114 = vpop.xlane.xlu0 %1113
      %v1115 = vsel %vm864, %v1049, 0.0
      %1116 = vadd.xlane.f32.xlu0 %v1115
      %v1117 = vpop.xlane.xlu0 %1116
      %v1118 = vsel %vm864, %v1050, 0.0
      %1119 = vadd.xlane.f32.xlu0 %v1118
      %v1120 = vpop.xlane.xlu0 %1119
      %v1121 = vsel %vm864, %v1051, 0.0
      %1122 = vadd.xlane.f32.xlu0 %v1121
      %v1123 = vpop.xlane.xlu0 %1122
      %v1124 = vsel %vm864, %v1052, 0.0
      %1125 = vadd.xlane.f32.xlu0 %v1124
      %v1126 = vpop.xlane.xlu0 %1125
      %v1127 = vsel %vm864, %v1053, 0.0
      %1128 = vadd.xlane.f32.xlu0 %v1127
      %v1129 = vpop.xlane.xlu0 %1128
      %v1130 = vsel %vm864, %v1054, 0.0
      %1131 = vadd.xlane.f32.xlu0 %v1130
      %v1132 = vpop.xlane.xlu0 %1131
      %v1133 = vsel %vm864, %v1055, 0.0
      %1134 = vadd.xlane.f32.xlu0 %v1133
      %v1135 = vpop.xlane.xlu0 %1134
      %v1136 = vsel %vm864, %v1056, 0.0
      %1137 = vadd.xlane.f32.xlu0 %v1136
      %v1138 = vpop.xlane.xlu0 %1137
      %v1139 = vsel %vm864, %v1057, 0.0
      %1140 = vadd.xlane.f32.xlu0 %v1139
      %v1141 = vpop.xlane.xlu0 %1140
      %v1142 = vsel %vm864, %v1058, 0.0
      %1143 = vadd.xlane.f32.xlu0 %v1142
      %v1144 = vpop.xlane.xlu0 %1143
      %v1145 = vsel %vm864, %v1059, 0.0
      %1146 = vadd.xlane.f32.xlu0 %v1145
      %v1147 = vpop.xlane.xlu0 %1146
      %v1148 = vsel %vm864, %v1060, 0.0
      %1149 = vadd.xlane.f32.xlu0 %v1148
      %v1150 = vpop.xlane.xlu0 %1149
      %v1151 = vsel %vm864, %v1061, 0.0
      %1152 = vadd.xlane.f32.xlu0 %v1151
      %v1153 = vpop.xlane.xlu0 %1152
      %v1154 = vsel %vm864, %v1062, 0.0
      %1155 = vadd.xlane.f32.xlu0 %v1154
      %v1156 = vpop.xlane.xlu0 %1155
      %v1157 = vsel %vm864, %v1063, 0.0
      %1158 = vadd.xlane.f32.xlu0 %v1157
      %v1159 = vpop.xlane.xlu0 %1158
      %v1160 = vmul.f32 %v1066, %v967
      %v1161 = vmul.f32 %v1069, %v967
      %v1162 = vmul.f32 %v1072, %v967
      %v1163 = vmul.f32 %v1075, %v967
      %v1164 = vmul.f32 %v1078, %v967
      %v1165 = vmul.f32 %v1081, %v967
      %v1166 = vmul.f32 %v1084, %v967
      %v1167 = vmul.f32 %v1087, %v967
      %v1168 = vmul.f32 %v1090, %v967
      %v1169 = vmul.f32 %v1093, %v967
      %v1170 = vmul.f32 %v1096, %v967
      %v1171 = vmul.f32 %v1099, %v967
      %v1172 = vmul.f32 %v1102, %v967
      %v1173 = vmul.f32 %v1105, %v967
      %v1174 = vmul.f32 %v1108, %v967
      %v1175 = vmul.f32 %v1111, %v967
      %v1176 = vmul.f32 %v1114, %v967
      %v1177 = vmul.f32 %v1117, %v967
      %v1178 = vmul.f32 %v1120, %v967
      %v1179 = vmul.f32 %v1123, %v967
      %v1180 = vmul.f32 %v1126, %v967
      %v1181 = vmul.f32 %v1129, %v967
      %v1182 = vmul.f32 %v1132, %v967
      %v1183 = vmul.f32 %v1135, %v967
      %v1184 = vmul.f32 %v1138, %v967
      %v1185 = vmul.f32 %v1141, %v967
      %v1186 = vmul.f32 %v1144, %v967
      %v1187 = vmul.f32 %v1147, %v967
      %v1188 = vmul.f32 %v1150, %v967
      %v1189 = vmul.f32 %v1153, %v967
      %v1190 = vmul.f32 %v1156, %v967
      %v1191 = vmul.f32 %v1159, %v967
      %v1192 = vadd.f32 %v1160, 1e-05
      %v1193 = vadd.f32 %v1161, 1e-05
      %v1194 = vadd.f32 %v1162, 1e-05
      %v1195 = vadd.f32 %v1163, 1e-05
      %v1196 = vadd.f32 %v1164, 1e-05
      %v1197 = vadd.f32 %v1165, 1e-05
      %v1198 = vadd.f32 %v1166, 1e-05
      %v1199 = vadd.f32 %v1167, 1e-05
      %v1200 = vadd.f32 %v1168, 1e-05
      %v1201 = vadd.f32 %v1169, 1e-05
      %v1202 = vadd.f32 %v1170, 1e-05
      %v1203 = vadd.f32 %v1171, 1e-05
      %v1204 = vadd.f32 %v1172, 1e-05
      %v1205 = vadd.f32 %v1173, 1e-05
      %v1206 = vadd.f32 %v1174, 1e-05
      %v1207 = vadd.f32 %v1175, 1e-05
      %v1208 = vadd.f32 %v1176, 1e-05
      %v1209 = vadd.f32 %v1177, 1e-05
      %v1210 = vadd.f32 %v1178, 1e-05
      %v1211 = vadd.f32 %v1179, 1e-05
      %v1212 = vadd.f32 %v1180, 1e-05
      %v1213 = vadd.f32 %v1181, 1e-05
      %v1214 = vadd.f32 %v1182, 1e-05
      %v1215 = vadd.f32 %v1183, 1e-05
      %v1216 = vadd.f32 %v1184, 1e-05
      %v1217 = vadd.f32 %v1185, 1e-05
      %v1218 = vadd.f32 %v1186, 1e-05
      %v1219 = vadd.f32 %v1187, 1e-05
      %v1220 = vadd.f32 %v1188, 1e-05
      %v1221 = vadd.f32 %v1189, 1e-05
      %v1222 = vadd.f32 %v1190, 1e-05
      %v1223 = vadd.f32 %v1191, 1e-05
      %v1224 = vrsqrt.pop %v1192
      %v1225 = vmul.f32 %v1224, %v1192
      %v1226 = vmul.f32 %v1225, %v1224
      %v1227 = vmul.f32 0.5, %v1226
      %v1228 = vsub.f32 1.5, %v1227
      %v1229 = vmul.f32 %v1224, %v1228
      %vm1230 = vweird.f32 %v1192
      %vm1231 = vweird.f32 %v1224
      %vm1232 = vmor %vm1230, %vm1231
      %v1233 = vsel %vm1232, %v1224, %v1229
      %v1234 = vrsqrt.pop %v1193
      %v1235 = vmul.f32 %v1234, %v1193
      %v1236 = vmul.f32 %v1235, %v1234
      %v1237 = vmul.f32 0.5, %v1236
      %v1238 = vsub.f32 1.5, %v1237
      %v1239 = vmul.f32 %v1234, %v1238
      %vm1240 = vweird.f32 %v1193
      %vm1241 = vweird.f32 %v1234
      %vm1242 = vmor %vm1240, %vm1241
      %v1243 = vsel %vm1242, %v1234, %v1239
      %v1244 = vrsqrt.pop %v1194
      %v1245 = vmul.f32 %v1244, %v1194
      %v1246 = vmul.f32 %v1245, %v1244
      %v1247 = vmul.f32 0.5, %v1246
      %v1248 = vsub.f32 1.5, %v1247
      %v1249 = vmul.f32 %v1244, %v1248
      %vm1250 = vweird.f32 %v1194
      %vm1251 = vweird.f32 %v1244
      %vm1252 = vmor %vm1250, %vm1251
      %v1253 = vsel %vm1252, %v1244, %v1249
      %v1254 = vrsqrt.pop %v1195
      %v1255 = vmul.f32 %v1254, %v1195
      %v1256 = vmul.f32 %v1255, %v1254
      %v1257 = vmul.f32 0.5, %v1256
      %v1258 = vsub.f32 1.5, %v1257
      %v1259 = vmul.f32 %v1254, %v1258
      %vm1260 = vweird.f32 %v1195
      %vm1261 = vweird.f32 %v1254
      %vm1262 = vmor %vm1260, %vm1261
      %v1263 = vsel %vm1262, %v1254, %v1259
      %v1264 = vrsqrt.pop %v1196
      %v1265 = vmul.f32 %v1264, %v1196
      %v1266 = vmul.f32 %v1265, %v1264
      %v1267 = vmul.f32 0.5, %v1266
      %v1268 = vsub.f32 1.5, %v1267
      %v1269 = vmul.f32 %v1264, %v1268
      %vm1270 = vweird.f32 %v1196
      %vm1271 = vweird.f32 %v1264
      %vm1272 = vmor %vm1270, %vm1271
      %v1273 = vsel %vm1272, %v1264, %v1269
      %v1274 = vrsqrt.pop %v1197
      %v1275 = vmul.f32 %v1274, %v1197
      %v1276 = vmul.f32 %v1275, %v1274
      %v1277 = vmul.f32 0.5, %v1276
      %v1278 = vsub.f32 1.5, %v1277
      %v1279 = vmul.f32 %v1274, %v1278
      %vm1280 = vweird.f32 %v1197
      %vm1281 = vweird.f32 %v1274
      %vm1282 = vmor %vm1280, %vm1281
      %v1283 = vsel %vm1282, %v1274, %v1279
      %v1284 = vrsqrt.pop %v1198
      %v1285 = vmul.f32 %v1284, %v1198
      %v1286 = vmul.f32 %v1285, %v1284
      %v1287 = vmul.f32 0.5, %v1286
      %v1288 = vsub.f32 1.5, %v1287
      %v1289 = vmul.f32 %v1284, %v1288
      %vm1290 = vweird.f32 %v1198
      %vm1291 = vweird.f32 %v1284
      %vm1292 = vmor %vm1290, %vm1291
      %v1293 = vsel %vm1292, %v1284, %v1289
      %v1294 = vrsqrt.pop %v1199
      %v1295 = vmul.f32 %v1294, %v1199
      %v1296 = vmul.f32 %v1295, %v1294
      %v1297 = vmul.f32 0.5, %v1296
      %v1298 = vsub.f32 1.5, %v1297
      %v1299 = vmul.f32 %v1294, %v1298
      %vm1300 = vweird.f32 %v1199
      %vm1301 = vweird.f32 %v1294
      %vm1302 = vmor %vm1300, %vm1301
      %v1303 = vsel %vm1302, %v1294, %v1299
      %v1304 = vrsqrt.pop %v1200
      %v1305 = vmul.f32 %v1304, %v1200
      %v1306 = vmul.f32 %v1305, %v1304
      %v1307 = vmul.f32 0.5, %v1306
      %v1308 = vsub.f32 1.5, %v1307
      %v1309 = vmul.f32 %v1304, %v1308
      %vm1310 = vweird.f32 %v1200
      %vm1311 = vweird.f32 %v1304
      %vm1312 = vmor %vm1310, %vm1311
      %v1313 = vsel %vm1312, %v1304, %v1309
      %v1314 = vrsqrt.pop %v1201
      %v1315 = vmul.f32 %v1314, %v1201
      %v1316 = vmul.f32 %v1315, %v1314
      %v1317 = vmul.f32 0.5, %v1316
      %v1318 = vsub.f32 1.5, %v1317
      %v1319 = vmul.f32 %v1314, %v1318
      %vm1320 = vweird.f32 %v1201
      %vm1321 = vweird.f32 %v1314
      %vm1322 = vmor %vm1320, %vm1321
      %v1323 = vsel %vm1322, %v1314, %v1319
      %v1324 = vrsqrt.pop %v1202
      %v1325 = vmul.f32 %v1324, %v1202
      %v1326 = vmul.f32 %v1325, %v1324
      %v1327 = vmul.f32 0.5, %v1326
      %v1328 = vsub.f32 1.5, %v1327
      %v1329 = vmul.f32 %v1324, %v1328
      %vm1330 = vweird.f32 %v1202
      %vm1331 = vweird.f32 %v1324
      %vm1332 = vmor %vm1330, %vm1331
      %v1333 = vsel %vm1332, %v1324, %v1329
      %v1334 = vrsqrt.pop %v1203
      %v1335 = vmul.f32 %v1334, %v1203
      %v1336 = vmul.f32 %v1335, %v1334
      %v1337 = vmul.f32 0.5, %v1336
      %v1338 = vsub.f32 1.5, %v1337
      %v1339 = vmul.f32 %v1334, %v1338
      %vm1340 = vweird.f32 %v1203
      %vm1341 = vweird.f32 %v1334
      %vm1342 = vmor %vm1340, %vm1341
      %v1343 = vsel %vm1342, %v1334, %v1339
      %v1344 = vrsqrt.pop %v1204
      %v1345 = vmul.f32 %v1344, %v1204
      %v1346 = vmul.f32 %v1345, %v1344
      %v1347 = vmul.f32 0.5, %v1346
      %v1348 = vsub.f32 1.5, %v1347
      %v1349 = vmul.f32 %v1344, %v1348
      %vm1350 = vweird.f32 %v1204
      %vm1351 = vweird.f32 %v1344
      %vm1352 = vmor %vm1350, %vm1351
      %v1353 = vsel %vm1352, %v1344, %v1349
      %v1354 = vrsqrt.pop %v1205
      %v1355 = vmul.f32 %v1354, %v1205
      %v1356 = vmul.f32 %v1355, %v1354
      %v1357 = vmul.f32 0.5, %v1356
      %v1358 = vsub.f32 1.5, %v1357
      %v1359 = vmul.f32 %v1354, %v1358
      %vm1360 = vweird.f32 %v1205
      %vm1361 = vweird.f32 %v1354
      %vm1362 = vmor %vm1360, %vm1361
      %v1363 = vsel %vm1362, %v1354, %v1359
      %v1364 = vrsqrt.pop %v1206
      %v1365 = vmul.f32 %v1364, %v1206
      %v1366 = vmul.f32 %v1365, %v1364
      %v1367 = vmul.f32 0.5, %v1366
      %v1368 = vsub.f32 1.5, %v1367
      %v1369 = vmul.f32 %v1364, %v1368
      %vm1370 = vweird.f32 %v1206
      %vm1371 = vweird.f32 %v1364
      %vm1372 = vmor %vm1370, %vm1371
      %v1373 = vsel %vm1372, %v1364, %v1369
      %v1374 = vrsqrt.pop %v1207
      %v1375 = vmul.f32 %v1374, %v1207
      %v1376 = vmul.f32 %v1375, %v1374
      %v1377 = vmul.f32 0.5, %v1376
      %v1378 = vsub.f32 1.5, %v1377
      %v1379 = vmul.f32 %v1374, %v1378
      %vm1380 = vweird.f32 %v1207
      %vm1381 = vweird.f32 %v1374
      %vm1382 = vmor %vm1380, %vm1381
      %v1383 = vsel %vm1382, %v1374, %v1379
      %v1384 = vrsqrt.pop %v1208
      %v1385 = vmul.f32 %v1384, %v1208
      %v1386 = vmul.f32 %v1385, %v1384
      %v1387 = vmul.f32 0.5, %v1386
      %v1388 = vsub.f32 1.5, %v1387
      %v1389 = vmul.f32 %v1384, %v1388
      %vm1390 = vweird.f32 %v1208
      %vm1391 = vweird.f32 %v1384
      %vm1392 = vmor %vm1390, %vm1391
      %v1393 = vsel %vm1392, %v1384, %v1389
      %v1394 = vrsqrt.pop %v1209
      %v1395 = vmul.f32 %v1394, %v1209
      %v1396 = vmul.f32 %v1395, %v1394
      %v1397 = vmul.f32 0.5, %v1396
      %v1398 = vsub.f32 1.5, %v1397
      %v1399 = vmul.f32 %v1394, %v1398
      %vm1400 = vweird.f32 %v1209
      %vm1401 = vweird.f32 %v1394
      %vm1402 = vmor %vm1400, %vm1401
      %v1403 = vsel %vm1402, %v1394, %v1399
      %v1404 = vrsqrt.pop %v1210
      %v1405 = vmul.f32 %v1404, %v1210
      %v1406 = vmul.f32 %v1405, %v1404
      %v1407 = vmul.f32 0.5, %v1406
      %v1408 = vsub.f32 1.5, %v1407
      %v1409 = vmul.f32 %v1404, %v1408
      %vm1410 = vweird.f32 %v1210
      %vm1411 = vweird.f32 %v1404
      %vm1412 = vmor %vm1410, %vm1411
      %v1413 = vsel %vm1412, %v1404, %v1409
      %v1414 = vrsqrt.pop %v1211
      %v1415 = vmul.f32 %v1414, %v1211
      %v1416 = vmul.f32 %v1415, %v1414
      %v1417 = vmul.f32 0.5, %v1416
      %v1418 = vsub.f32 1.5, %v1417
      %v1419 = vmul.f32 %v1414, %v1418
      %vm1420 = vweird.f32 %v1211
      %vm1421 = vweird.f32 %v1414
      %vm1422 = vmor %vm1420, %vm1421
      %v1423 = vsel %vm1422, %v1414, %v1419
      %v1424 = vrsqrt.pop %v1212
      %v1425 = vmul.f32 %v1424, %v1212
      %v1426 = vmul.f32 %v1425, %v1424
      %v1427 = vmul.f32 0.5, %v1426
      %v1428 = vsub.f32 1.5, %v1427
      %v1429 = vmul.f32 %v1424, %v1428
      %vm1430 = vweird.f32 %v1212
      %vm1431 = vweird.f32 %v1424
      %vm1432 = vmor %vm1430, %vm1431
      %v1433 = vsel %vm1432, %v1424, %v1429
      %v1434 = vrsqrt.pop %v1213
      %v1435 = vmul.f32 %v1434, %v1213
      %v1436 = vmul.f32 %v1435, %v1434
      %v1437 = vmul.f32 0.5, %v1436
      %v1438 = vsub.f32 1.5, %v1437
      %v1439 = vmul.f32 %v1434, %v1438
      %vm1440 = vweird.f32 %v1213
      %vm1441 = vweird.f32 %v1434
      %vm1442 = vmor %vm1440, %vm1441
      %v1443 = vsel %vm1442, %v1434, %v1439
      %v1444 = vrsqrt.pop %v1214
      %v1445 = vmul.f32 %v1444, %v1214
      %v1446 = vmul.f32 %v1445, %v1444
      %v1447 = vmul.f32 0.5, %v1446
      %v1448 = vsub.f32 1.5, %v1447
      %v1449 = vmul.f32 %v1444, %v1448
      %vm1450 = vweird.f32 %v1214
      %vm1451 = vweird.f32 %v1444
      %vm1452 = vmor %vm1450, %vm1451
      %v1453 = vsel %vm1452, %v1444, %v1449
      %v1454 = vrsqrt.pop %v1215
      %v1455 = vmul.f32 %v1454, %v1215
      %v1456 = vmul.f32 %v1455, %v1454
      %v1457 = vmul.f32 0.5, %v1456
      %v1458 = vsub.f32 1.5, %v1457
      %v1459 = vmul.f32 %v1454, %v1458
      %vm1460 = vweird.f32 %v1215
      %vm1461 = vweird.f32 %v1454
      %vm1462 = vmor %vm1460, %vm1461
      %v1463 = vsel %vm1462, %v1454, %v1459
      %v1464 = vrsqrt.pop %v1216
      %v1465 = vmul.f32 %v1464, %v1216
      %v1466 = vmul.f32 %v1465, %v1464
      %v1467 = vmul.f32 0.5, %v1466
      %v1468 = vsub.f32 1.5, %v1467
      %v1469 = vmul.f32 %v1464, %v1468
      %vm1470 = vweird.f32 %v1216
      %vm1471 = vweird.f32 %v1464
      %vm1472 = vmor %vm1470, %vm1471
      %v1473 = vsel %vm1472, %v1464, %v1469
      %v1474 = vrsqrt.pop %v1217
      %v1475 = vmul.f32 %v1474, %v1217
      %v1476 = vmul.f32 %v1475, %v1474
      %v1477 = vmul.f32 0.5, %v1476
      %v1478 = vsub.f32 1.5, %v1477
      %v1479 = vmul.f32 %v1474, %v1478
      %vm1480 = vweird.f32 %v1217
      %vm1481 = vweird.f32 %v1474
      %vm1482 = vmor %vm1480, %vm1481
      %v1483 = vsel %vm1482, %v1474, %v1479
      %v1484 = vrsqrt.pop %v1218
      %v1485 = vmul.f32 %v1484, %v1218
      %v1486 = vmul.f32 %v1485, %v1484
      %v1487 = vmul.f32 0.5, %v1486
      %v1488 = vsub.f32 1.5, %v1487
      %v1489 = vmul.f32 %v1484, %v1488
      %vm1490 = vweird.f32 %v1218
      %vm1491 = vweird.f32 %v1484
      %vm1492 = vmor %vm1490, %vm1491
      %v1493 = vsel %vm1492, %v1484, %v1489
      %v1494 = vrsqrt.pop %v1219
      %v1495 = vmul.f32 %v1494, %v1219
      %v1496 = vmul.f32 %v1495, %v1494
      %v1497 = vmul.f32 0.5, %v1496
      %v1498 = vsub.f32 1.5, %v1497
      %v1499 = vmul.f32 %v1494, %v1498
      %vm1500 = vweird.f32 %v1219
      %vm1501 = vweird.f32 %v1494
      %vm1502 = vmor %vm1500, %vm1501
      %v1503 = vsel %vm1502, %v1494, %v1499
      %v1504 = vrsqrt.pop %v1220
      %v1505 = vmul.f32 %v1504, %v1220
      %v1506 = vmul.f32 %v1505, %v1504
      %v1507 = vmul.f32 0.5, %v1506
      %v1508 = vsub.f32 1.5, %v1507
      %v1509 = vmul.f32 %v1504, %v1508
      %vm1510 = vweird.f32 %v1220
      %vm1511 = vweird.f32 %v1504
      %vm1512 = vmor %vm1510, %vm1511
      %v1513 = vsel %vm1512, %v1504, %v1509
      %v1514 = vrsqrt.pop %v1221
      %v1515 = vmul.f32 %v1514, %v1221
      %v1516 = vmul.f32 %v1515, %v1514
      %v1517 = vmul.f32 0.5, %v1516
      %v1518 = vsub.f32 1.5, %v1517
      %v1519 = vmul.f32 %v1514, %v1518
      %vm1520 = vweird.f32 %v1221
      %vm1521 = vweird.f32 %v1514
      %vm1522 = vmor %vm1520, %vm1521
      %v1523 = vsel %vm1522, %v1514, %v1519
      %v1524 = vrsqrt.pop %v1222
      %v1525 = vmul.f32 %v1524, %v1222
      %v1526 = vmul.f32 %v1525, %v1524
      %v1527 = vmul.f32 0.5, %v1526
      %v1528 = vsub.f32 1.5, %v1527
      %v1529 = vmul.f32 %v1524, %v1528
      %vm1530 = vweird.f32 %v1222
      %vm1531 = vweird.f32 %v1524
      %vm1532 = vmor %vm1530, %vm1531
      %v1533 = vsel %vm1532, %v1524, %v1529
      %v1534 = vrsqrt.pop %v1223
      %v1535 = vmul.f32 %v1534, %v1223
      %v1536 = vmul.f32 %v1535, %v1534
      %v1537 = vmul.f32 0.5, %v1536
      %v1538 = vsub.f32 1.5, %v1537
      %v1539 = vmul.f32 %v1534, %v1538
      %vm1540 = vweird.f32 %v1223
      %vm1541 = vweird.f32 %v1534
      %vm1542 = vmor %vm1540, %vm1541
      %v1543 = vsel %vm1542, %v1534, %v1539
      %v1544 = vmul.f32 %v1000, %v1233
      %v1545 = vmul.f32 %v1001, %v1243
      %v1546 = vmul.f32 %v1002, %v1253
      %v1547 = vmul.f32 %v1003, %v1263
      %v1548 = vmul.f32 %v1004, %v1273
      %v1549 = vmul.f32 %v1005, %v1283
      %v1550 = vmul.f32 %v1006, %v1293
      %v1551 = vmul.f32 %v1007, %v1303
      %v1552 = vmul.f32 %v1008, %v1313
      %v1553 = vmul.f32 %v1009, %v1323
      %v1554 = vmul.f32 %v1010, %v1333
      %v1555 = vmul.f32 %v1011, %v1343
      %v1556 = vmul.f32 %v1012, %v1353
      %v1557 = vmul.f32 %v1013, %v1363
      %v1558 = vmul.f32 %v1014, %v1373
      %v1559 = vmul.f32 %v1015, %v1383
      %v1560 = vmul.f32 %v1016, %v1393
      %v1561 = vmul.f32 %v1017, %v1403
      %v1562 = vmul.f32 %v1018, %v1413
      %v1563 = vmul.f32 %v1019, %v1423
      %v1564 = vmul.f32 %v1020, %v1433
      %v1565 = vmul.f32 %v1021, %v1443
      %v1566 = vmul.f32 %v1022, %v1453
      %v1567 = vmul.f32 %v1023, %v1463
      %v1568 = vmul.f32 %v1024, %v1473
      %v1569 = vmul.f32 %v1025, %v1483
      %v1570 = vmul.f32 %v1026, %v1493
      %v1571 = vmul.f32 %v1027, %v1503
      %v1572 = vmul.f32 %v1028, %v1513
      %v1573 = vmul.f32 %v1029, %v1523
      %v1574 = vmul.f32 %v1030, %v1533
      %v1575 = vmul.f32 %v1031, %v1543
      %v1577 = vperm.slane %v862, 0
      %v1579 = vmul.f32 %v1544, %v1577
      %v1580 = vmul.f32 %v1545, %v1577
      %v1581 = vmul.f32 %v1546, %v1577
      %v1582 = vmul.f32 %v1547, %v1577
      %v1583 = vmul.f32 %v1548, %v1577
      %v1584 = vmul.f32 %v1549, %v1577
      %v1585 = vmul.f32 %v1550, %v1577
      %v1586 = vmul.f32 %v1551, %v1577
      %v1587 = vmul.f32 %v1552, %v1577
      %v1588 = vmul.f32 %v1553, %v1577
      %v1589 = vmul.f32 %v1554, %v1577
      %v1590 = vmul.f32 %v1555, %v1577
      %v1591 = vmul.f32 %v1556, %v1577
      %v1592 = vmul.f32 %v1557, %v1577
      %v1593 = vmul.f32 %v1558, %v1577
      %v1594 = vmul.f32 %v1559, %v1577
      %v1595 = vmul.f32 %v1560, %v1577
      %v1596 = vmul.f32 %v1561, %v1577
      %v1597 = vmul.f32 %v1562, %v1577
      %v1598 = vmul.f32 %v1563, %v1577
      %v1599 = vmul.f32 %v1564, %v1577
      %v1600 = vmul.f32 %v1565, %v1577
      %v1601 = vmul.f32 %v1566, %v1577
      %v1602 = vmul.f32 %v1567, %v1577
      %v1603 = vmul.f32 %v1568, %v1577
      %v1604 = vmul.f32 %v1569, %v1577
      %v1605 = vmul.f32 %v1570, %v1577
      %v1606 = vmul.f32 %v1571, %v1577
      %v1607 = vmul.f32 %v1572, %v1577
      %v1608 = vmul.f32 %v1573, %v1577
      %v1609 = vmul.f32 %v1574, %v1577
      %v1610 = vmul.f32 %v1575, %v1577
      %v1612 = vperm.slane %v863, 0
      %v1614 = vadd.f32 %v1579, %v1612
      %v1615 = vadd.f32 %v1580, %v1612
      %v1616 = vadd.f32 %v1581, %v1612
      %v1617 = vadd.f32 %v1582, %v1612
      %v1618 = vadd.f32 %v1583, %v1612
      %v1619 = vadd.f32 %v1584, %v1612
      %v1620 = vadd.f32 %v1585, %v1612
      %v1621 = vadd.f32 %v1586, %v1612
      %v1622 = vadd.f32 %v1587, %v1612
      %v1623 = vadd.f32 %v1588, %v1612
      %v1624 = vadd.f32 %v1589, %v1612
      %v1625 = vadd.f32 %v1590, %v1612
      %v1626 = vadd.f32 %v1591, %v1612
      %v1627 = vadd.f32 %v1592, %v1612
      %v1628 = vadd.f32 %v1593, %v1612
      %v1629 = vadd.f32 %v1594, %v1612
      %v1630 = vadd.f32 %v1595, %v1612
      %v1631 = vadd.f32 %v1596, %v1612
      %v1632 = vadd.f32 %v1597, %v1612
      %v1633 = vadd.f32 %v1598, %v1612
      %v1634 = vadd.f32 %v1599, %v1612
      %v1635 = vadd.f32 %v1600, %v1612
      %v1636 = vadd.f32 %v1601, %v1612
      %v1637 = vadd.f32 %v1602, %v1612
      %v1638 = vadd.f32 %v1603, %v1612
      %v1639 = vadd.f32 %v1604, %v1612
      %v1640 = vadd.f32 %v1605, %v1612
      %v1641 = vadd.f32 %v1606, %v1612
      %v1642 = vadd.f32 %v1607, %v1612
      %v1643 = vadd.f32 %v1608, %v1612
      %v1644 = vadd.f32 %v1609, %v1612
      %v1645 = vadd.f32 %v1610, %v1612
      %v1646 = vld [vmem:[%s699] sm:$0xf]
      %v1647 = vld [vmem:[%s699 + $0x4] sm:$0xf]
      %v1648 = vld [vmem:[%s699 + $0x8] sm:$0xf]
      %v1649 = vld [vmem:[%s699 + $0xc] sm:$0xf]
      %v1650 = vld [vmem:[%s702] sm:$0x1]
      %v1651 = vpack.c.bf16 %v1615, %v1614
      %v1652 = vpack.c.bf16 %v1617, %v1616
      %v1653 = vpack.c.bf16 %v1619, %v1618
      %v1654 = vpack.c.bf16 %v1621, %v1620
      %v1655 = vpack.c.bf16 %v1623, %v1622
      %v1656 = vpack.c.bf16 %v1625, %v1624
      %v1657 = vpack.c.bf16 %v1627, %v1626
      %v1658 = vpack.c.bf16 %v1629, %v1628
      %v1659 = vpack.c.bf16 %v1631, %v1630
      %v1660 = vpack.c.bf16 %v1633, %v1632
      %v1661 = vpack.c.bf16 %v1635, %v1634
      %v1662 = vpack.c.bf16 %v1637, %v1636
      %v1663 = vpack.c.bf16 %v1639, %v1638
      %v1664 = vpack.c.bf16 %v1641, %v1640
      %v1665 = vpack.c.bf16 %v1643, %v1642
      %v1666 = vpack.c.bf16 %v1645, %v1644
      %v1671 = vunpack.c.l.b16 %v1646
      %v1672 = vunpack.c.l.b16 %v1647
      %v1673 = vunpack.c.l.b16 %v1648
      %v1674 = vunpack.c.l.b16 %v1649
      %v1675 = vpack.c.b16 %v1672, %v1671
      %v1676 = vpack.c.b16 %v1674, %v1673
      %v1680 = vsel %vm864, %v1651, 0
      %v1683 = vsel %vm864, %v1652, 0
      %v1686 = vsel %vm864, %v1653, 0
      %v1689 = vsel %vm864, %v1654, 0
      %v1692 = vsel %vm864, %v1655, 0
      %v1695 = vsel %vm864, %v1656, 0
      %v1698 = vsel %vm864, %v1657, 0
      %v1701 = vsel %vm864, %v1658, 0
      %v1704 = vsel %vm864, %v1659, 0
      %v1707 = vsel %vm864, %v1660, 0
      %v1710 = vsel %vm864, %v1661, 0
      %v1713 = vsel %vm864, %v1662, 0
      %v1716 = vsel %vm864, %v1663, 0
      %v1719 = vsel %vm864, %v1664, 0
      %v1722 = vsel %vm864, %v1665, 0
      %v1725 = vsel %vm864, %v1666, 0
      %1727 = vmatpush.bf16.msra.mxu0 0
      %1728 = vmatpush.bf16.msra.mxu0 0
      %1729 = vmatpush.bf16.msra.mxu0 0
      %1730 = vmatpush.bf16.msra.mxu0 0
      %1731 = vmatpush.bf16.msra.mxu0 0
      %1732 = vmatpush.bf16.msra.mxu0 0
      %1733 = vmatpush.bf16.msra.mxu0 %v1676
      %1734 = vmatpush.bf16.msra.mxu0 %v1675
      %1735 = vmatmul.bf16.gmra.mxu0 %v1680
      %v1736 = vpop.f32.mrf.mxu0
      %v1737 = vadd.f32 0.0, %v1736
      %v1738 = vpop.f32.mrf.mxu0
      %v1739 = vadd.f32 0.0, %v1738
      %1740 = vmatmul.bf16.gmra.mxu0 %v1683
      %v1741 = vpop.f32.mrf.mxu0
      %v1742 = vadd.f32 0.0, %v1741
      %v1743 = vpop.f32.mrf.mxu0
      %v1744 = vadd.f32 0.0, %v1743
      %1745 = vmatmul.bf16.gmra.mxu0 %v1686
      %v1746 = vpop.f32.mrf.mxu0
      %v1747 = vadd.f32 0.0, %v1746
      %v1748 = vpop.f32.mrf.mxu0
      %v1749 = vadd.f32 0.0, %v1748
      %1750 = vmatmul.bf16.gmra.mxu0 %v1689
      %v1751 = vpop.f32.mrf.mxu0
      %v1752 = vadd.f32 0.0, %v1751
      %v1753 = vpop.f32.mrf.mxu0
      %v1754 = vadd.f32 0.0, %v1753
      %1755 = vmatmul.bf16.gmra.mxu0 %v1692
      %v1756 = vpop.f32.mrf.mxu0
      %v1757 = vadd.f32 0.0, %v1756
      %v1758 = vpop.f32.mrf.mxu0
      %v1759 = vadd.f32 0.0, %v1758
      %1760 = vmatmul.bf16.gmra.mxu0 %v1695
      %v1761 = vpop.f32.mrf.mxu0
      %v1762 = vadd.f32 0.0, %v1761
      %v1763 = vpop.f32.mrf.mxu0
      %v1764 = vadd.f32 0.0, %v1763
      %1765 = vmatmul.bf16.gmra.mxu0 %v1698
      %v1766 = vpop.f32.mrf.mxu0
      %v1767 = vadd.f32 0.0, %v1766
      %v1768 = vpop.f32.mrf.mxu0
      %v1769 = vadd.f32 0.0, %v1768
      %1770 = vmatmul.bf16.gmra.mxu0 %v1701
      %v1771 = vpop.f32.mrf.mxu0
      %v1772 = vadd.f32 0.0, %v1771
      %v1773 = vpop.f32.mrf.mxu0
      %v1774 = vadd.f32 0.0, %v1773
      %1775 = vmatmul.bf16.gmra.mxu0 %v1704
      %v1776 = vpop.f32.mrf.mxu0
      %v1777 = vadd.f32 0.0, %v1776
      %v1778 = vpop.f32.mrf.mxu0
      %v1779 = vadd.f32 0.0, %v1778
      %1780 = vmatmul.bf16.gmra.mxu0 %v1707
      %v1781 = vpop.f32.mrf.mxu0
      %v1782 = vadd.f32 0.0, %v1781
      %v1783 = vpop.f32.mrf.mxu0
      %v1784 = vadd.f32 0.0, %v1783
      %1785 = vmatmul.bf16.gmra.mxu0 %v1710
      %v1786 = vpop.f32.mrf.mxu0
      %v1787 = vadd.f32 0.0, %v1786
      %v1788 = vpop.f32.mrf.mxu0
      %v1789 = vadd.f32 0.0, %v1788
      %1790 = vmatmul.bf16.gmra.mxu0 %v1713
      %v1791 = vpop.f32.mrf.mxu0
      %v1792 = vadd.f32 0.0, %v1791
      %v1793 = vpop.f32.mrf.mxu0
      %v1794 = vadd.f32 0.0, %v1793
      %1795 = vmatmul.bf16.gmra.mxu0 %v1716
      %v1796 = vpop.f32.mrf.mxu0
      %v1797 = vadd.f32 0.0, %v1796
      %v1798 = vpop.f32.mrf.mxu0
      %v1799 = vadd.f32 0.0, %v1798
      %1800 = vmatmul.bf16.gmra.mxu0 %v1719
      %v1801 = vpop.f32.mrf.mxu0
      %v1802 = vadd.f32 0.0, %v1801
      %v1803 = vpop.f32.mrf.mxu0
      %v1804 = vadd.f32 0.0, %v1803
      %1805 = vmatmul.bf16.gmra.mxu0 %v1722
      %v1806 = vpop.f32.mrf.mxu0
      %v1807 = vadd.f32 0.0, %v1806
      %v1808 = vpop.f32.mrf.mxu0
      %v1809 = vadd.f32 0.0, %v1808
      %1810 = vmatmul.bf16.gmra.mxu0 %v1725
      %v1811 = vpop.f32.mrf.mxu0
      %v1812 = vadd.f32 0.0, %v1811
      %v1813 = vpop.f32.mrf.mxu0
      %v1814 = vadd.f32 0.0, %v1813
      %1815 = vdwg.mxu0
      %v1817 = vperm.slane %v1650, 0
      %v1819 = vadd.f32 %v1737, %v1817
      %v1820 = vadd.f32 %v1739, %v1817
      %v1821 = vadd.f32 %v1742, %v1817
      %v1822 = vadd.f32 %v1744, %v1817
      %v1823 = vadd.f32 %v1747, %v1817
      %v1824 = vadd.f32 %v1749, %v1817
      %v1825 = vadd.f32 %v1752, %v1817
      %v1826 = vadd.f32 %v1754, %v1817
      %v1827 = vadd.f32 %v1757, %v1817
      %v1828 = vadd.f32 %v1759, %v1817
      %v1829 = vadd.f32 %v1762, %v1817
      %v1830 = vadd.f32 %v1764, %v1817
      %v1831 = vadd.f32 %v1767, %v1817
      %v1832 = vadd.f32 %v1769, %v1817
      %v1833 = vadd.f32 %v1772, %v1817
      %v1834 = vadd.f32 %v1774, %v1817
      %v1835 = vadd.f32 %v1777, %v1817
      %v1836 = vadd.f32 %v1779, %v1817
      %v1837 = vadd.f32 %v1782, %v1817
      %v1838 = vadd.f32 %v1784, %v1817
      %v1839 = vadd.f32 %v1787, %v1817
      %v1840 = vadd.f32 %v1789, %v1817
      %v1841 = vadd.f32 %v1792, %v1817
      %v1842 = vadd.f32 %v1794, %v1817
      %v1843 = vadd.f32 %v1797, %v1817
      %v1844 = vadd.f32 %v1799, %v1817
      %v1845 = vadd.f32 %v1802, %v1817
      %v1846 = vadd.f32 %v1804, %v1817
      %v1847 = vadd.f32 %v1807, %v1817
      %v1848 = vadd.f32 %v1809, %v1817
      %v1849 = vadd.f32 %v1812, %v1817
      %v1850 = vadd.f32 %v1814, %v1817
      %v1851 = vpack.c.bf16 %v1819, %v1819
      %v1852 = vpack.c.bf16 %v1820, %v1820
      %v1853 = vpack.c.bf16 %v1821, %v1821
      %v1854 = vpack.c.bf16 %v1822, %v1822
      %v1855 = vpack.c.bf16 %v1823, %v1823
      %v1856 = vpack.c.bf16 %v1824, %v1824
      %v1857 = vpack.c.bf16 %v1825, %v1825
      %v1858 = vpack.c.bf16 %v1826, %v1826
      %v1859 = vpack.c.bf16 %v1827, %v1827
      %v1860 = vpack.c.bf16 %v1828, %v1828
      %v1861 = vpack.c.bf16 %v1829, %v1829
      %v1862 = vpack.c.bf16 %v1830, %v1830
      %v1863 = vpack.c.bf16 %v1831, %v1831
      %v1864 = vpack.c.bf16 %v1832, %v1832
      %v1865 = vpack.c.bf16 %v1833, %v1833
      %v1866 = vpack.c.bf16 %v1834, %v1834
      %v1867 = vpack.c.bf16 %v1835, %v1835
      %v1868 = vpack.c.bf16 %v1836, %v1836
      %v1869 = vpack.c.bf16 %v1837, %v1837
      %v1870 = vpack.c.bf16 %v1838, %v1838
      %v1871 = vpack.c.bf16 %v1839, %v1839
      %v1872 = vpack.c.bf16 %v1840, %v1840
      %v1873 = vpack.c.bf16 %v1841, %v1841
      %v1874 = vpack.c.bf16 %v1842, %v1842
      %v1875 = vpack.c.bf16 %v1843, %v1843
      %v1876 = vpack.c.bf16 %v1844, %v1844
      %v1877 = vpack.c.bf16 %v1845, %v1845
      %v1878 = vpack.c.bf16 %v1846, %v1846
      %v1879 = vpack.c.bf16 %v1847, %v1847
      %v1880 = vpack.c.bf16 %v1848, %v1848
      %v1881 = vpack.c.bf16 %v1849, %v1849
      %v1882 = vpack.c.bf16 %v1850, %v1850
      %v1899 = vunpack.c.l.b16 %v1851
      %v1900 = vunpack.c.l.b16 %v1852
      %v1901 = vunpack.c.l.b16 %v1853
      %v1902 = vunpack.c.l.b16 %v1854
      %v1903 = vunpack.c.l.b16 %v1855
      %v1904 = vunpack.c.l.b16 %v1856
      %v1905 = vunpack.c.l.b16 %v1857
      %v1906 = vunpack.c.l.b16 %v1858
      %v1907 = vunpack.c.l.b16 %v1859
      %v1908 = vunpack.c.l.b16 %v1860
      %v1909 = vunpack.c.l.b16 %v1861
      %v1910 = vunpack.c.l.b16 %v1862
      %v1911 = vunpack.c.l.b16 %v1863
      %v1912 = vunpack.c.l.b16 %v1864
      %v1913 = vunpack.c.l.b16 %v1865
      %v1914 = vunpack.c.l.b16 %v1866
      %v1915 = vpack.c.b16 %v1900, %v1899
      %v1916 = vpack.c.b16 %v1902, %v1901
      %v1917 = vpack.c.b16 %v1904, %v1903
      %v1918 = vpack.c.b16 %v1906, %v1905
      %v1919 = vpack.c.b16 %v1908, %v1907
      %v1920 = vpack.c.b16 %v1910, %v1909
      %v1921 = vpack.c.b16 %v1912, %v1911
      %v1922 = vpack.c.b16 %v1914, %v1913
      %1923 = vrot.lane.b32.xlu0 %v1915, 96
      %v1924 = vpop.permute.xlu0 %1923
      %1925 = vrot.lane.b32.xlu0 %v1916, 96
      %v1926 = vpop.permute.xlu0 %1925
      %1927 = vrot.lane.b32.xlu0 %v1917, 96
      %v1928 = vpop.permute.xlu0 %1927
      %1929 = vrot.lane.b32.xlu0 %v1918, 96
      %v1930 = vpop.permute.xlu0 %1929
      %1931 = vrot.lane.b32.xlu0 %v1919, 96
      %v1932 = vpop.permute.xlu0 %1931
      %1933 = vrot.lane.b32.xlu0 %v1920, 96
      %v1934 = vpop.permute.xlu0 %1933
      %1935 = vrot.lane.b32.xlu0 %v1921, 96
      %v1936 = vpop.permute.xlu0 %1935
      %1937 = vrot.lane.b32.xlu0 %v1922, 96
      %v1938 = vpop.permute.xlu0 %1937
      %vm1939 = vcmask 64512
      %v1941 = vsel %vm1939, %v1915, 0
      %v1944 = vsel %vm1939, %v1916, 0
      %v1947 = vsel %vm1939, %v1917, 0
      %v1950 = vsel %vm1939, %v1918, 0
      %v1953 = vsel %vm1939, %v1919, 0
      %v1956 = vsel %vm1939, %v1920, 0
      %v1959 = vsel %vm1939, %v1921, 0
      %v1962 = vsel %vm1939, %v1922, 0
      %v1965 = vsel %vm1939, %v1924, 0
      %v1968 = vsel %vm1939, %v1926, 0
      %v1971 = vsel %vm1939, %v1928, 0
      %v1974 = vsel %vm1939, %v1930, 0
      %v1977 = vsel %vm1939, %v1932, 0
      %v1980 = vsel %vm1939, %v1934, 0
      %v1983 = vsel %vm1939, %v1936, 0
      %v1986 = vsel %vm1939, %v1938, 0
      %1988 = vmatpush.bf16.xpose.msra.mxu0 %v1986
      %1989 = vmatpush.bf16.xpose.msra.mxu0 %v1983
      %1990 = vmatpush.bf16.xpose.msra.mxu0 %v1980
      %1991 = vmatpush.bf16.xpose.msra.mxu0 %v1977
      %1992 = vmatpush.bf16.xpose.msra.mxu0 %v1974
      %1993 = vmatpush.bf16.xpose.msra.mxu0 %v1971
      %1994 = vmatpush.bf16.xpose.msra.mxu0 %v1968
      %1995 = vmatpush.bf16.xpose.msra.mxu0 %v1965
      %1996 = vmatmul.bf16.gmra.mxu0 %v1941
      %v1997 = vpop.f32.mrf.mxu0
      %v1998 = vadd.f32 %v846, %v1997
      %v1999 = vpop.f32.mrf.mxu0
      %v2000 = vadd.f32 %v847, %v1999
      %2001 = vmatmul.bf16.gmra.mxu0 %v1944
      %v2002 = vpop.f32.mrf.mxu0
      %v2003 = vadd.f32 %v848, %v2002
      %v2004 = vpop.f32.mrf.mxu0
      %v2005 = vadd.f32 %v849, %v2004
      %2006 = vmatmul.bf16.gmra.mxu0 %v1947
      %v2007 = vpop.f32.mrf.mxu0
      %v2008 = vadd.f32 %v850, %v2007
      %v2009 = vpop.f32.mrf.mxu0
      %v2010 = vadd.f32 %v851, %v2009
      %2011 = vmatmul.bf16.gmra.mxu0 %v1950
      %v2012 = vpop.f32.mrf.mxu0
      %v2013 = vadd.f32 %v852, %v2012
      %v2014 = vpop.f32.mrf.mxu0
      %v2015 = vadd.f32 %v853, %v2014
      %2016 = vmatmul.bf16.gmra.mxu0 %v1953
      %v2017 = vpop.f32.mrf.mxu0
      %v2018 = vadd.f32 %v854, %v2017
      %v2019 = vpop.f32.mrf.mxu0
      %v2020 = vadd.f32 %v855, %v2019
      %2021 = vmatmul.bf16.gmra.mxu0 %v1956
      %v2022 = vpop.f32.mrf.mxu0
      %v2023 = vadd.f32 %v856, %v2022
      %v2024 = vpop.f32.mrf.mxu0
      %v2025 = vadd.f32 %v857, %v2024
      %2026 = vmatmul.bf16.gmra.mxu0 %v1959
      %v2027 = vpop.f32.mrf.mxu0
      %v2028 = vadd.f32 %v858, %v2027
      %v2029 = vpop.f32.mrf.mxu0
      %v2030 = vadd.f32 %v859, %v2029
      %2031 = vmatmul.bf16.gmra.mxu0 %v1962
      %v2032 = vpop.f32.mrf.mxu0
      %v2033 = vadd.f32 %v860, %v2032
      %v2034 = vpop.f32.mrf.mxu0
      %v2035 = vadd.f32 %v861, %v2034
      %2036 = vdwg.mxu0
      %v2053 = vunpack.c.l.b16 %v1867
      %v2054 = vunpack.c.l.b16 %v1868
      %v2055 = vunpack.c.l.b16 %v1869
      %v2056 = vunpack.c.l.b16 %v1870
      %v2057 = vunpack.c.l.b16 %v1871
      %v2058 = vunpack.c.l.b16 %v1872
      %v2059 = vunpack.c.l.b16 %v1873
      %v2060 = vunpack.c.l.b16 %v1874
      %v2061 = vunpack.c.l.b16 %v1875
      %v2062 = vunpack.c.l.b16 %v1876
      %v2063 = vunpack.c.l.b16 %v1877
      %v2064 = vunpack.c.l.b16 %v1878
      %v2065 = vunpack.c.l.b16 %v1879
      %v2066 = vunpack.c.l.b16 %v1880
      %v2067 = vunpack.c.l.b16 %v1881
      %v2068 = vunpack.c.l.b16 %v1882
      %v2069 = vpack.c.b16 %v2054, %v2053
      %v2070 = vpack.c.b16 %v2056, %v2055
      %v2071 = vpack.c.b16 %v2058, %v2057
      %v2072 = vpack.c.b16 %v2060, %v2059
      %v2073 = vpack.c.b16 %v2062, %v2061
      %v2074 = vpack.c.b16 %v2064, %v2063
      %v2075 = vpack.c.b16 %v2066, %v2065
      %v2076 = vpack.c.b16 %v2068, %v2067
      %2077 = vrot.lane.b32.xlu0 %v2069, 96
      %v2078 = vpop.permute.xlu0 %2077
      %2079 = vrot.lane.b32.xlu0 %v2070, 96
      %v2080 = vpop.permute.xlu0 %2079
      %2081 = vrot.lane.b32.xlu0 %v2071, 96
      %v2082 = vpop.permute.xlu0 %2081
      %2083 = vrot.lane.b32.xlu0 %v2072, 96
      %v2084 = vpop.permute.xlu0 %2083
      %2085 = vrot.lane.b32.xlu0 %v2073, 96
      %v2086 = vpop.permute.xlu0 %2085
      %2087 = vrot.lane.b32.xlu0 %v2074, 96
      %v2088 = vpop.permute.xlu0 %2087
      %2089 = vrot.lane.b32.xlu0 %v2075, 96
      %v2090 = vpop.permute.xlu0 %2089
      %2091 = vrot.lane.b32.xlu0 %v2076, 96
      %v2092 = vpop.permute.xlu0 %2091
      %v2094 = vsel %vm1939, %v2069, 0
      %v2097 = vsel %vm1939, %v2070, 0
      %v2100 = vsel %vm1939, %v2071, 0
      %v2103 = vsel %vm1939, %v2072, 0
      %v2106 = vsel %vm1939, %v2073, 0
      %v2109 = vsel %vm1939, %v2074, 0
      %v2112 = vsel %vm1939, %v2075, 0
      %v2115 = vsel %vm1939, %v2076, 0
      %v2118 = vsel %vm1939, %v2078, 0
      %v2121 = vsel %vm1939, %v2080, 0
      %v2124 = vsel %vm1939, %v2082, 0
      %v2127 = vsel %vm1939, %v2084, 0
      %v2130 = vsel %vm1939, %v2086, 0
      %v2133 = vsel %vm1939, %v2088, 0
      %v2136 = vsel %vm1939, %v2090, 0
      %v2139 = vsel %vm1939, %v2092, 0
      %2141 = vmatpush.bf16.xpose.msra.mxu0 %v2139
      %2142 = vmatpush.bf16.xpose.msra.mxu0 %v2136
      %2143 = vmatpush.bf16.xpose.msra.mxu0 %v2133
      %2144 = vmatpush.bf16.xpose.msra.mxu0 %v2130
      %2145 = vmatpush.bf16.xpose.msra.mxu0 %v2127
      %2146 = vmatpush.bf16.xpose.msra.mxu0 %v2124
      %2147 = vmatpush.bf16.xpose.msra.mxu0 %v2121
      %2148 = vmatpush.bf16.xpose.msra.mxu0 %v2118
      %2149 = vmatmul.bf16.gmra.mxu0 %v2094
      %v2150 = vpop.f32.mrf.mxu0
      %v2151 = vadd.f32 %v846, %v2150
      %v2152 = vpop.f32.mrf.mxu0
      %v2153 = vadd.f32 %v847, %v2152
      %2154 = vmatmul.bf16.gmra.mxu0 %v2097
      %v2155 = vpop.f32.mrf.mxu0
      %v2156 = vadd.f32 %v848, %v2155
      %v2157 = vpop.f32.mrf.mxu0
      %v2158 = vadd.f32 %v849, %v2157
      %2159 = vmatmul.bf16.gmra.mxu0 %v2100
      %v2160 = vpop.f32.mrf.mxu0
      %v2161 = vadd.f32 %v850, %v2160
      %v2162 = vpop.f32.mrf.mxu0
      %v2163 = vadd.f32 %v851, %v2162
      %2164 = vmatmul.bf16.gmra.mxu0 %v2103
      %v2165 = vpop.f32.mrf.mxu0
      %v2166 = vadd.f32 %v852, %v2165
      %v2167 = vpop.f32.mrf.mxu0
      %v2168 = vadd.f32 %v853, %v2167
      %2169 = vmatmul.bf16.gmra.mxu0 %v2106
      %v2170 = vpop.f32.mrf.mxu0
      %v2171 = vadd.f32 %v854, %v2170
      %v2172 = vpop.f32.mrf.mxu0
      %v2173 = vadd.f32 %v855, %v2172
      %2174 = vmatmul.bf16.gmra.mxu0 %v2109
      %v2175 = vpop.f32.mrf.mxu0
      %v2176 = vadd.f32 %v856, %v2175
      %v2177 = vpop.f32.mrf.mxu0
      %v2178 = vadd.f32 %v857, %v2177
      %2179 = vmatmul.bf16.gmra.mxu0 %v2112
      %v2180 = vpop.f32.mrf.mxu0
      %v2181 = vadd.f32 %v858, %v2180
      %v2182 = vpop.f32.mrf.mxu0
      %v2183 = vadd.f32 %v859, %v2182
      %2184 = vmatmul.bf16.gmra.mxu0 %v2115
      %v2185 = vpop.f32.mrf.mxu0
      %v2186 = vadd.f32 %v860, %v2185
      %v2187 = vpop.f32.mrf.mxu0
      %v2188 = vadd.f32 %v861, %v2187
      %2189 = vdwg.mxu0
      %2190 = vmax.xlane.f32.xlu0 %v1998
      %v2191 = vpop.xlane.xlu0 %2190
      %2192 = vmax.xlane.f32.xlu0 %v2000
      %v2193 = vpop.xlane.xlu0 %2192
      %2194 = vmax.xlane.f32.xlu0 %v2003
      %v2195 = vpop.xlane.xlu0 %2194
      %2196 = vmax.xlane.f32.xlu0 %v2005
      %v2197 = vpop.xlane.xlu0 %2196
      %2198 = vmax.xlane.f32.xlu0 %v2008
      %v2199 = vpop.xlane.xlu0 %2198
      %2200 = vmax.xlane.f32.xlu0 %v2010
      %v2201 = vpop.xlane.xlu0 %2200
      %2202 = vmax.xlane.f32.xlu0 %v2013
      %v2203 = vpop.xlane.xlu0 %2202
      %2204 = vmax.xlane.f32.xlu0 %v2015
      %v2205 = vpop.xlane.xlu0 %2204
      %2206 = vmax.xlane.f32.xlu0 %v2018
      %v2207 = vpop.xlane.xlu0 %2206
      %2208 = vmax.xlane.f32.xlu0 %v2020
      %v2209 = vpop.xlane.xlu0 %2208
      %2210 = vmax.xlane.f32.xlu0 %v2023
      %v2211 = vpop.xlane.xlu0 %2210
      %2212 = vmax.xlane.f32.xlu0 %v2025
      %v2213 = vpop.xlane.xlu0 %2212
      %2214 = vmax.xlane.f32.xlu0 %v2028
      %v2215 = vpop.xlane.xlu0 %2214
      %2216 = vmax.xlane.f32.xlu0 %v2030
      %v2217 = vpop.xlane.xlu0 %2216
      %2218 = vmax.xlane.f32.xlu0 %v2033
      %v2219 = vpop.xlane.xlu0 %2218
      %2220 = vmax.xlane.f32.xlu0 %v2035
      %v2221 = vpop.xlane.xlu0 %2220
      %2222 = vmax.xlane.f32.xlu0 %v2151
      %v2223 = vpop.xlane.xlu0 %2222
      %2224 = vmax.xlane.f32.xlu0 %v2153
      %v2225 = vpop.xlane.xlu0 %2224
      %2226 = vmax.xlane.f32.xlu0 %v2156
      %v2227 = vpop.xlane.xlu0 %2226
      %2228 = vmax.xlane.f32.xlu0 %v2158
      %v2229 = vpop.xlane.xlu0 %2228
      %2230 = vmax.xlane.f32.xlu0 %v2161
      %v2231 = vpop.xlane.xlu0 %2230
      %2232 = vmax.xlane.f32.xlu0 %v2163
      %v2233 = vpop.xlane.xlu0 %2232
      %2234 = vmax.xlane.f32.xlu0 %v2166
      %v2235 = vpop.xlane.xlu0 %2234
      %2236 = vmax.xlane.f32.xlu0 %v2168
      %v2237 = vpop.xlane.xlu0 %2236
      %2238 = vmax.xlane.f32.xlu0 %v2171
      %v2239 = vpop.xlane.xlu0 %2238
      %2240 = vmax.xlane.f32.xlu0 %v2173
      %v2241 = vpop.xlane.xlu0 %2240
      %2242 = vmax.xlane.f32.xlu0 %v2176
      %v2243 = vpop.xlane.xlu0 %2242
      %2244 = vmax.xlane.f32.xlu0 %v2178
      %v2245 = vpop.xlane.xlu0 %2244
      %2246 = vmax.xlane.f32.xlu0 %v2181
      %v2247 = vpop.xlane.xlu0 %2246
      %2248 = vmax.xlane.f32.xlu0 %v2183
      %v2249 = vpop.xlane.xlu0 %2248
      %2250 = vmax.xlane.f32.xlu0 %v2186
      %v2251 = vpop.xlane.xlu0 %2250
      %2252 = vmax.xlane.f32.xlu0 %v2188
      %v2253 = vpop.xlane.xlu0 %2252
      %v2254 = vsub.f32 %v1998, %v2191
      %v2255 = vsub.f32 %v2000, %v2193
      %v2256 = vsub.f32 %v2003, %v2195
      %v2257 = vsub.f32 %v2005, %v2197
      %v2258 = vsub.f32 %v2008, %v2199
      %v2259 = vsub.f32 %v2010, %v2201
      %v2260 = vsub.f32 %v2013, %v2203
      %v2261 = vsub.f32 %v2015, %v2205
      %v2262 = vsub.f32 %v2018, %v2207
      %v2263 = vsub.f32 %v2020, %v2209
      %v2264 = vsub.f32 %v2023, %v2211
      %v2265 = vsub.f32 %v2025, %v2213
      %v2266 = vsub.f32 %v2028, %v2215
      %v2267 = vsub.f32 %v2030, %v2217
      %v2268 = vsub.f32 %v2033, %v2219
      %v2269 = vsub.f32 %v2035, %v2221
      %v2270 = vsub.f32 %v2151, %v2223
      %v2271 = vsub.f32 %v2153, %v2225
      %v2272 = vsub.f32 %v2156, %v2227
      %v2273 = vsub.f32 %v2158, %v2229
      %v2274 = vsub.f32 %v2161, %v2231
      %v2275 = vsub.f32 %v2163, %v2233
      %v2276 = vsub.f32 %v2166, %v2235
      %v2277 = vsub.f32 %v2168, %v2237
      %v2278 = vsub.f32 %v2171, %v2239
      %v2279 = vsub.f32 %v2173, %v2241
      %v2280 = vsub.f32 %v2176, %v2243
      %v2281 = vsub.f32 %v2178, %v2245
      %v2282 = vsub.f32 %v2181, %v2247
      %v2283 = vsub.f32 %v2183, %v2249
      %v2284 = vsub.f32 %v2186, %v2251
      %v2285 = vsub.f32 %v2188, %v2253
      %v2286 = vmul.f32 %v2254, 1.442695
      %v2287 = vpow.pop %v2286
      %v2288 = vmul.f32 %v2255, 1.442695
      %v2289 = vpow.pop %v2288
      %v2290 = vmul.f32 %v2256, 1.442695
      %v2291 = vpow.pop %v2290
      %v2292 = vmul.f32 %v2257, 1.442695
      %v2293 = vpow.pop %v2292
      %v2294 = vmul.f32 %v2258, 1.442695
      %v2295 = vpow.pop %v2294
      %v2296 = vmul.f32 %v2259, 1.442695
      %v2297 = vpow.pop %v2296
      %v2298 = vmul.f32 %v2260, 1.442695
      %v2299 = vpow.pop %v2298
      %v2300 = vmul.f32 %v2261, 1.442695
      %v2301 = vpow.pop %v2300
      %v2302 = vmul.f32 %v2262, 1.442695
      %v2303 = vpow.pop %v2302
      %v2304 = vmul.f32 %v2263, 1.442695
      %v2305 = vpow.pop %v2304
      %v2306 = vmul.f32 %v2264, 1.442695
      %v2307 = vpow.pop %v2306
      %v2308 = vmul.f32 %v2265, 1.442695
      %v2309 = vpow.pop %v2308
      %v2310 = vmul.f32 %v2266, 1.442695
      %v2311 = vpow.pop %v2310
      %v2312 = vmul.f32 %v2267, 1.442695
      %v2313 = vpow.pop %v2312
      %v2314 = vmul.f32 %v2268, 1.442695
      %v2315 = vpow.pop %v2314
      %v2316 = vmul.f32 %v2269, 1.442695
      %v2317 = vpow.pop %v2316
      %v2318 = vmul.f32 %v2270, 1.442695
      %v2319 = vpow.pop %v2318
      %v2320 = vmul.f32 %v2271, 1.442695
      %v2321 = vpow.pop %v2320
      %v2322 = vmul.f32 %v2272, 1.442695
      %v2323 = vpow.pop %v2322
      %v2324 = vmul.f32 %v2273, 1.442695
      %v2325 = vpow.pop %v2324
      %v2326 = vmul.f32 %v2274, 1.442695
      %v2327 = vpow.pop %v2326
      %v2328 = vmul.f32 %v2275, 1.442695
      %v2329 = vpow.pop %v2328
      %v2330 = vmul.f32 %v2276, 1.442695
      %v2331 = vpow.pop %v2330
      %v2332 = vmul.f32 %v2277, 1.442695
      %v2333 = vpow.pop %v2332
      %v2334 = vmul.f32 %v2278, 1.442695
      %v2335 = vpow.pop %v2334
      %v2336 = vmul.f32 %v2279, 1.442695
      %v2337 = vpow.pop %v2336
      %v2338 = vmul.f32 %v2280, 1.442695
      %v2339 = vpow.pop %v2338
      %v2340 = vmul.f32 %v2281, 1.442695
      %v2341 = vpow.pop %v2340
      %v2342 = vmul.f32 %v2282, 1.442695
      %v2343 = vpow.pop %v2342
      %v2344 = vmul.f32 %v2283, 1.442695
      %v2345 = vpow.pop %v2344
      %v2346 = vmul.f32 %v2284, 1.442695
      %v2347 = vpow.pop %v2346
      %v2348 = vmul.f32 %v2285, 1.442695
      %v2349 = vpow.pop %v2348
      %2350 = vadd.xlane.f32.xlu0 %v2287
      %v2351 = vpop.xlane.xlu0 %2350
      %2352 = vadd.xlane.f32.xlu0 %v2289
      %v2353 = vpop.xlane.xlu0 %2352
      %2354 = vadd.xlane.f32.xlu0 %v2291
      %v2355 = vpop.xlane.xlu0 %2354
      %2356 = vadd.xlane.f32.xlu0 %v2293
      %v2357 = vpop.xlane.xlu0 %2356
      %2358 = vadd.xlane.f32.xlu0 %v2295
      %v2359 = vpop.xlane.xlu0 %2358
      %2360 = vadd.xlane.f32.xlu0 %v2297
      %v2361 = vpop.xlane.xlu0 %2360
      %2362 = vadd.xlane.f32.xlu0 %v2299
      %v2363 = vpop.xlane.xlu0 %2362
      %2364 = vadd.xlane.f32.xlu0 %v2301
      %v2365 = vpop.xlane.xlu0 %2364
      %2366 = vadd.xlane.f32.xlu0 %v2303
      %v2367 = vpop.xlane.xlu0 %2366
      %2368 = vadd.xlane.f32.xlu0 %v2305
      %v2369 = vpop.xlane.xlu0 %2368
      %2370 = vadd.xlane.f32.xlu0 %v2307
      %v2371 = vpop.xlane.xlu0 %2370
      %2372 = vadd.xlane.f32.xlu0 %v2309
      %v2373 = vpop.xlane.xlu0 %2372
      %2374 = vadd.xlane.f32.xlu0 %v2311
      %v2375 = vpop.xlane.xlu0 %2374
      %2376 = vadd.xlane.f32.xlu0 %v2313
      %v2377 = vpop.xlane.xlu0 %2376
      %2378 = vadd.xlane.f32.xlu0 %v2315
      %v2379 = vpop.xlane.xlu0 %2378
      %2380 = vadd.xlane.f32.xlu0 %v2317
      %v2381 = vpop.xlane.xlu0 %2380
      %2382 = vadd.xlane.f32.xlu0 %v2319
      %v2383 = vpop.xlane.xlu0 %2382
      %2384 = vadd.xlane.f32.xlu0 %v2321
      %v2385 = vpop.xlane.xlu0 %2384
      %2386 = vadd.xlane.f32.xlu0 %v2323
      %v2387 = vpop.xlane.xlu0 %2386
      %2388 = vadd.xlane.f32.xlu0 %v2325
      %v2389 = vpop.xlane.xlu0 %2388
      %2390 = vadd.xlane.f32.xlu0 %v2327
      %v2391 = vpop.xlane.xlu0 %2390
      %2392 = vadd.xlane.f32.xlu0 %v2329
      %v2393 = vpop.xlane.xlu0 %2392
      %2394 = vadd.xlane.f32.xlu0 %v2331
      %v2395 = vpop.xlane.xlu0 %2394
      %2396 = vadd.xlane.f32.xlu0 %v2333
      %v2397 = vpop.xlane.xlu0 %2396
      %2398 = vadd.xlane.f32.xlu0 %v2335
      %v2399 = vpop.xlane.xlu0 %2398
      %2400 = vadd.xlane.f32.xlu0 %v2337
      %v2401 = vpop.xlane.xlu0 %2400
      %2402 = vadd.xlane.f32.xlu0 %v2339
      %v2403 = vpop.xlane.xlu0 %2402
      %2404 = vadd.xlane.f32.xlu0 %v2341
      %v2405 = vpop.xlane.xlu0 %2404
      %2406 = vadd.xlane.f32.xlu0 %v2343
      %v2407 = vpop.xlane.xlu0 %2406
      %2408 = vadd.xlane.f32.xlu0 %v2345
      %v2409 = vpop.xlane.xlu0 %2408
      %2410 = vadd.xlane.f32.xlu0 %v2347
      %v2411 = vpop.xlane.xlu0 %2410
      %2412 = vadd.xlane.f32.xlu0 %v2349
      %v2413 = vpop.xlane.xlu0 %2412
      %v2414 = vrcp.pop %v2351
      %v2415 = vrcp.pop %v2353
      %v2416 = vrcp.pop %v2355
      %v2417 = vrcp.pop %v2357
      %v2418 = vrcp.pop %v2359
      %v2419 = vrcp.pop %v2361
      %v2420 = vrcp.pop %v2363
      %v2421 = vrcp.pop %v2365
      %v2422 = vrcp.pop %v2367
      %v2423 = vrcp.pop %v2369
      %v2424 = vrcp.pop %v2371
      %v2425 = vrcp.pop %v2373
      %v2426 = vrcp.pop %v2375
      %v2427 = vrcp.pop %v2377
      %v2428 = vrcp.pop %v2379
      %v2429 = vrcp.pop %v2381
      %v2430 = vrcp.pop %v2383
      %v2431 = vrcp.pop %v2385
      %v2432 = vrcp.pop %v2387
      %v2433 = vrcp.pop %v2389
      %v2434 = vrcp.pop %v2391
      %v2435 = vrcp.pop %v2393
      %v2436 = vrcp.pop %v2395
      %v2437 = vrcp.pop %v2397
      %v2438 = vrcp.pop %v2399
      %v2439 = vrcp.pop %v2401
      %v2440 = vrcp.pop %v2403
      %v2441 = vrcp.pop %v2405
      %v2442 = vrcp.pop %v2407
      %v2443 = vrcp.pop %v2409
      %v2444 = vrcp.pop %v2411
      %v2445 = vrcp.pop %v2413
      %v2446 = vmul.f32 %v2287, %v2414
      %v2447 = vmul.f32 %v2289, %v2415
      %v2448 = vmul.f32 %v2291, %v2416
      %v2449 = vmul.f32 %v2293, %v2417
      %v2450 = vmul.f32 %v2295, %v2418
      %v2451 = vmul.f32 %v2297, %v2419
      %v2452 = vmul.f32 %v2299, %v2420
      %v2453 = vmul.f32 %v2301, %v2421
      %v2454 = vmul.f32 %v2303, %v2422
      %v2455 = vmul.f32 %v2305, %v2423
      %v2456 = vmul.f32 %v2307, %v2424
      %v2457 = vmul.f32 %v2309, %v2425
      %v2458 = vmul.f32 %v2311, %v2426
      %v2459 = vmul.f32 %v2313, %v2427
      %v2460 = vmul.f32 %v2315, %v2428
      %v2461 = vmul.f32 %v2317, %v2429
      %v2462 = vmul.f32 %v2319, %v2430
      %v2463 = vmul.f32 %v2321, %v2431
      %v2464 = vmul.f32 %v2323, %v2432
      %v2465 = vmul.f32 %v2325, %v2433
      %v2466 = vmul.f32 %v2327, %v2434
      %v2467 = vmul.f32 %v2329, %v2435
      %v2468 = vmul.f32 %v2331, %v2436
      %v2469 = vmul.f32 %v2333, %v2437
      %v2470 = vmul.f32 %v2335, %v2438
      %v2471 = vmul.f32 %v2337, %v2439
      %v2472 = vmul.f32 %v2339, %v2440
      %v2473 = vmul.f32 %v2341, %v2441
      %v2474 = vmul.f32 %v2343, %v2442
      %v2475 = vmul.f32 %v2345, %v2443
      %v2476 = vmul.f32 %v2347, %v2444
      %v2477 = vmul.f32 %v2349, %v2445
      %v2478 = vpack.c.bf16 %v2446, %v2446
      %v2479 = vpack.c.bf16 %v2447, %v2447
      %v2480 = vpack.c.bf16 %v2448, %v2448
      %v2481 = vpack.c.bf16 %v2449, %v2449
      %v2482 = vpack.c.bf16 %v2450, %v2450
      %v2483 = vpack.c.bf16 %v2451, %v2451
      %v2484 = vpack.c.bf16 %v2452, %v2452
      %v2485 = vpack.c.bf16 %v2453, %v2453
      %v2486 = vpack.c.bf16 %v2454, %v2454
      %v2487 = vpack.c.bf16 %v2455, %v2455
      %v2488 = vpack.c.bf16 %v2456, %v2456
      %v2489 = vpack.c.bf16 %v2457, %v2457
      %v2490 = vpack.c.bf16 %v2458, %v2458
      %v2491 = vpack.c.bf16 %v2459, %v2459
      %v2492 = vpack.c.bf16 %v2460, %v2460
      %v2493 = vpack.c.bf16 %v2461, %v2461
      %v2494 = vpack.c.bf16 %v2462, %v2462
      %v2495 = vpack.c.bf16 %v2463, %v2463
      %v2496 = vpack.c.bf16 %v2464, %v2464
      %v2497 = vpack.c.bf16 %v2465, %v2465
      %v2498 = vpack.c.bf16 %v2466, %v2466
      %v2499 = vpack.c.bf16 %v2467, %v2467
      %v2500 = vpack.c.bf16 %v2468, %v2468
      %v2501 = vpack.c.bf16 %v2469, %v2469
      %v2502 = vpack.c.bf16 %v2470, %v2470
      %v2503 = vpack.c.bf16 %v2471, %v2471
      %v2504 = vpack.c.bf16 %v2472, %v2472
      %v2505 = vpack.c.bf16 %v2473, %v2473
      %v2506 = vpack.c.bf16 %v2474, %v2474
      %v2507 = vpack.c.bf16 %v2475, %v2475
      %v2508 = vpack.c.bf16 %v2476, %v2476
      %v2509 = vpack.c.bf16 %v2477, %v2477
      %v2526 = vunpack.c.l.b16 %v2478
      %v2527 = vunpack.c.l.b16 %v2479
      %v2528 = vunpack.c.l.b16 %v2480
      %v2529 = vunpack.c.l.b16 %v2481
      %v2530 = vunpack.c.l.b16 %v2482
      %v2531 = vunpack.c.l.b16 %v2483
      %v2532 = vunpack.c.l.b16 %v2484
      %v2533 = vunpack.c.l.b16 %v2485
      %v2534 = vunpack.c.l.b16 %v2486
      %v2535 = vunpack.c.l.b16 %v2487
      %v2536 = vunpack.c.l.b16 %v2488
      %v2537 = vunpack.c.l.b16 %v2489
      %v2538 = vunpack.c.l.b16 %v2490
      %v2539 = vunpack.c.l.b16 %v2491
      %v2540 = vunpack.c.l.b16 %v2492
      %v2541 = vunpack.c.l.b16 %v2493
      %v2542 = vpack.c.b16 %v2527, %v2526
      %v2543 = vpack.c.b16 %v2529, %v2528
      %v2544 = vpack.c.b16 %v2531, %v2530
      %v2545 = vpack.c.b16 %v2533, %v2532
      %v2546 = vpack.c.b16 %v2535, %v2534
      %v2547 = vpack.c.b16 %v2537, %v2536
      %v2548 = vpack.c.b16 %v2539, %v2538
      %v2549 = vpack.c.b16 %v2541, %v2540
      %2558 = vrot.lane.b32.xlu0 %v1915, 64
      %v2559 = vpop.permute.xlu0 %2558
      %2560 = vrot.lane.b32.xlu0 %v1916, 64
      %v2561 = vpop.permute.xlu0 %2560
      %2562 = vrot.lane.b32.xlu0 %v1917, 64
      %v2563 = vpop.permute.xlu0 %2562
      %2564 = vrot.lane.b32.xlu0 %v1918, 64
      %v2565 = vpop.permute.xlu0 %2564
      %2566 = vrot.lane.b32.xlu0 %v1919, 64
      %v2567 = vpop.permute.xlu0 %2566
      %2568 = vrot.lane.b32.xlu0 %v1920, 64
      %v2569 = vpop.permute.xlu0 %2568
      %2570 = vrot.lane.b32.xlu0 %v1921, 64
      %v2571 = vpop.permute.xlu0 %2570
      %2572 = vrot.lane.b32.xlu0 %v1922, 64
      %v2573 = vpop.permute.xlu0 %2572
      %2582 = vmatpush.bf16.msra.mxu0 %v2573
      %2583 = vmatpush.bf16.msra.mxu0 %v2571
      %2584 = vmatpush.bf16.msra.mxu0 %v2569
      %2585 = vmatpush.bf16.msra.mxu0 %v2567
      %2586 = vmatpush.bf16.msra.mxu0 %v2565
      %2587 = vmatpush.bf16.msra.mxu0 %v2563
      %2588 = vmatpush.bf16.msra.mxu0 %v2561
      %2589 = vmatpush.bf16.msra.mxu0 %v2559
      %2590 = vmatmul.bf16.gmra.mxu0 %v2542
      %v2591 = vpop.f32.mrf.mxu0
      %v2592 = vadd.f32 0.0, %v2591
      %v2593 = vpop.f32.mrf.mxu0
      %v2594 = vadd.f32 0.0, %v2593
      %2595 = vmatmul.bf16.gmra.mxu0 %v2543
      %v2596 = vpop.f32.mrf.mxu0
      %v2597 = vadd.f32 0.0, %v2596
      %v2598 = vpop.f32.mrf.mxu0
      %v2599 = vadd.f32 0.0, %v2598
      %2600 = vmatmul.bf16.gmra.mxu0 %v2544
      %v2601 = vpop.f32.mrf.mxu0
      %v2602 = vadd.f32 0.0, %v2601
      %v2603 = vpop.f32.mrf.mxu0
      %v2604 = vadd.f32 0.0, %v2603
      %2605 = vmatmul.bf16.gmra.mxu0 %v2545
      %v2606 = vpop.f32.mrf.mxu0
      %v2607 = vadd.f32 0.0, %v2606
      %v2608 = vpop.f32.mrf.mxu0
      %v2609 = vadd.f32 0.0, %v2608
      %2610 = vmatmul.bf16.gmra.mxu0 %v2546
      %v2611 = vpop.f32.mrf.mxu0
      %v2612 = vadd.f32 0.0, %v2611
      %v2613 = vpop.f32.mrf.mxu0
      %v2614 = vadd.f32 0.0, %v2613
      %2615 = vmatmul.bf16.gmra.mxu0 %v2547
      %v2616 = vpop.f32.mrf.mxu0
      %v2617 = vadd.f32 0.0, %v2616
      %v2618 = vpop.f32.mrf.mxu0
      %v2619 = vadd.f32 0.0, %v2618
      %2620 = vmatmul.bf16.gmra.mxu0 %v2548
      %v2621 = vpop.f32.mrf.mxu0
      %v2622 = vadd.f32 0.0, %v2621
      %v2623 = vpop.f32.mrf.mxu0
      %v2624 = vadd.f32 0.0, %v2623
      %2625 = vmatmul.bf16.gmra.mxu0 %v2549
      %v2626 = vpop.f32.mrf.mxu0
      %v2627 = vadd.f32 0.0, %v2626
      %v2628 = vpop.f32.mrf.mxu0
      %v2629 = vadd.f32 0.0, %v2628
      %2630 = vdwg.mxu0
      %v2647 = vunpack.c.l.b16 %v2494
      %v2648 = vunpack.c.l.b16 %v2495
      %v2649 = vunpack.c.l.b16 %v2496
      %v2650 = vunpack.c.l.b16 %v2497
      %v2651 = vunpack.c.l.b16 %v2498
      %v2652 = vunpack.c.l.b16 %v2499
      %v2653 = vunpack.c.l.b16 %v2500
      %v2654 = vunpack.c.l.b16 %v2501
      %v2655 = vunpack.c.l.b16 %v2502
      %v2656 = vunpack.c.l.b16 %v2503
      %v2657 = vunpack.c.l.b16 %v2504
      %v2658 = vunpack.c.l.b16 %v2505
      %v2659 = vunpack.c.l.b16 %v2506
      %v2660 = vunpack.c.l.b16 %v2507
      %v2661 = vunpack.c.l.b16 %v2508
      %v2662 = vunpack.c.l.b16 %v2509
      %v2663 = vpack.c.b16 %v2648, %v2647
      %v2664 = vpack.c.b16 %v2650, %v2649
      %v2665 = vpack.c.b16 %v2652, %v2651
      %v2666 = vpack.c.b16 %v2654, %v2653
      %v2667 = vpack.c.b16 %v2656, %v2655
      %v2668 = vpack.c.b16 %v2658, %v2657
      %v2669 = vpack.c.b16 %v2660, %v2659
      %v2670 = vpack.c.b16 %v2662, %v2661
      %2679 = vrot.lane.b32.xlu0 %v2069, 64
      %v2680 = vpop.permute.xlu0 %2679
      %2681 = vrot.lane.b32.xlu0 %v2070, 64
      %v2682 = vpop.permute.xlu0 %2681
      %2683 = vrot.lane.b32.xlu0 %v2071, 64
      %v2684 = vpop.permute.xlu0 %2683
      %2685 = vrot.lane.b32.xlu0 %v2072, 64
      %v2686 = vpop.permute.xlu0 %2685
      %2687 = vrot.lane.b32.xlu0 %v2073, 64
      %v2688 = vpop.permute.xlu0 %2687
      %2689 = vrot.lane.b32.xlu0 %v2074, 64
      %v2690 = vpop.permute.xlu0 %2689
      %2691 = vrot.lane.b32.xlu0 %v2075, 64
      %v2692 = vpop.permute.xlu0 %2691
      %2693 = vrot.lane.b32.xlu0 %v2076, 64
      %v2694 = vpop.permute.xlu0 %2693
      %2703 = vmatpush.bf16.msra.mxu0 %v2694
      %2704 = vmatpush.bf16.msra.mxu0 %v2692
      %2705 = vmatpush.bf16.msra.mxu0 %v2690
      %2706 = vmatpush.bf16.msra.mxu0 %v2688
      %2707 = vmatpush.bf16.msra.mxu0 %v2686
      %2708 = vmatpush.bf16.msra.mxu0 %v2684
      %2709 = vmatpush.bf16.msra.mxu0 %v2682
      %2710 = vmatpush.bf16.msra.mxu0 %v2680
      %2711 = vmatmul.bf16.gmra.mxu0 %v2663
      %v2712 = vpop.f32.mrf.mxu0
      %v2713 = vadd.f32 0.0, %v2712
      %v2714 = vpop.f32.mrf.mxu0
      %v2715 = vadd.f32 0.0, %v2714
      %2716 = vmatmul.bf16.gmra.mxu0 %v2664
      %v2717 = vpop.f32.mrf.mxu0
      %v2718 = vadd.f32 0.0, %v2717
      %v2719 = vpop.f32.mrf.mxu0
      %v2720 = vadd.f32 0.0, %v2719
      %2721 = vmatmul.bf16.gmra.mxu0 %v2665
      %v2722 = vpop.f32.mrf.mxu0
      %v2723 = vadd.f32 0.0, %v2722
      %v2724 = vpop.f32.mrf.mxu0
      %v2725 = vadd.f32 0.0, %v2724
      %2726 = vmatmul.bf16.gmra.mxu0 %v2666
      %v2727 = vpop.f32.mrf.mxu0
      %v2728 = vadd.f32 0.0, %v2727
      %v2729 = vpop.f32.mrf.mxu0
      %v2730 = vadd.f32 0.0, %v2729
      %2731 = vmatmul.bf16.gmra.mxu0 %v2667
      %v2732 = vpop.f32.mrf.mxu0
      %v2733 = vadd.f32 0.0, %v2732
      %v2734 = vpop.f32.mrf.mxu0
      %v2735 = vadd.f32 0.0, %v2734
      %2736 = vmatmul.bf16.gmra.mxu0 %v2668
      %v2737 = vpop.f32.mrf.mxu0
      %v2738 = vadd.f32 0.0, %v2737
      %v2739 = vpop.f32.mrf.mxu0
      %v2740 = vadd.f32 0.0, %v2739
      %2741 = vmatmul.bf16.gmra.mxu0 %v2669
      %v2742 = vpop.f32.mrf.mxu0
      %v2743 = vadd.f32 0.0, %v2742
      %v2744 = vpop.f32.mrf.mxu0
      %v2745 = vadd.f32 0.0, %v2744
      %2746 = vmatmul.bf16.gmra.mxu0 %v2670
      %v2747 = vpop.f32.mrf.mxu0
      %v2748 = vadd.f32 0.0, %v2747
      %v2749 = vpop.f32.mrf.mxu0
      %v2750 = vadd.f32 0.0, %v2749
      %2751 = vdwg.mxu0
      %v2752 = vpack.c.bf16 %v2594, %v2592
      %v2753 = vpack.c.bf16 %v2599, %v2597
      %v2754 = vpack.c.bf16 %v2604, %v2602
      %v2755 = vpack.c.bf16 %v2609, %v2607
      %v2756 = vpack.c.bf16 %v2614, %v2612
      %v2757 = vpack.c.bf16 %v2619, %v2617
      %v2758 = vpack.c.bf16 %v2624, %v2622
      %v2759 = vpack.c.bf16 %v2629, %v2627
      %v2760 = vpack.c.bf16 %v2715, %v2713
      %v2761 = vpack.c.bf16 %v2720, %v2718
      %v2762 = vpack.c.bf16 %v2725, %v2723
      %v2763 = vpack.c.bf16 %v2730, %v2728
      %v2764 = vpack.c.bf16 %v2735, %v2733
      %v2765 = vpack.c.bf16 %v2740, %v2738
      %v2766 = vpack.c.bf16 %v2745, %v2743
      %v2767 = vpack.c.bf16 %v2750, %v2748
      %v2768 = vld [vmem:[%s707] sm:$0xf]
      %2769 = vrot.lane.b32.xlu0 %v1915, 120
      %v2770 = vpop.permute.xlu0 %2769
      %2771 = vrot.lane.b32.xlu0 %v1916, 120
      %v2772 = vpop.permute.xlu0 %2771
      %2773 = vrot.lane.b32.xlu0 %v1917, 120
      %v2774 = vpop.permute.xlu0 %2773
      %2775 = vrot.lane.b32.xlu0 %v1918, 120
      %v2776 = vpop.permute.xlu0 %2775
      %2777 = vrot.lane.b32.xlu0 %v1919, 120
      %v2778 = vpop.permute.xlu0 %2777
      %2779 = vrot.lane.b32.xlu0 %v1920, 120
      %v2780 = vpop.permute.xlu0 %2779
      %2781 = vrot.lane.b32.xlu0 %v1921, 120
      %v2782 = vpop.permute.xlu0 %2781
      %2783 = vrot.lane.b32.xlu0 %v1922, 120
      %v2784 = vpop.permute.xlu0 %2783
      %2785 = vrot.lane.b32.xlu0 %v1915, 88
      %v2786 = vpop.permute.xlu0 %2785
      %2787 = vrot.lane.b32.xlu0 %v1916, 88
      %v2788 = vpop.permute.xlu0 %2787
      %2789 = vrot.lane.b32.xlu0 %v1917, 88
      %v2790 = vpop.permute.xlu0 %2789
      %2791 = vrot.lane.b32.xlu0 %v1918, 88
      %v2792 = vpop.permute.xlu0 %2791
      %2793 = vrot.lane.b32.xlu0 %v1919, 88
      %v2794 = vpop.permute.xlu0 %2793
      %2795 = vrot.lane.b32.xlu0 %v1920, 88
      %v2796 = vpop.permute.xlu0 %2795
      %2797 = vrot.lane.b32.xlu0 %v1921, 88
      %v2798 = vpop.permute.xlu0 %2797
      %2799 = vrot.lane.b32.xlu0 %v1922, 88
      %v2800 = vpop.permute.xlu0 %2799
      %v2802 = vsel %vm1939, %v2770, 0
      %v2805 = vsel %vm1939, %v2772, 0
      %v2808 = vsel %vm1939, %v2774, 0
      %v2811 = vsel %vm1939, %v2776, 0
      %v2814 = vsel %vm1939, %v2778, 0
      %v2817 = vsel %vm1939, %v2780, 0
      %v2820 = vsel %vm1939, %v2782, 0
      %v2823 = vsel %vm1939, %v2784, 0
      %v2826 = vsel %vm1939, %v2786, 0
      %v2829 = vsel %vm1939, %v2788, 0
      %v2832 = vsel %vm1939, %v2790, 0
      %v2835 = vsel %vm1939, %v2792, 0
      %v2838 = vsel %vm1939, %v2794, 0
      %v2841 = vsel %vm1939, %v2796, 0
      %v2844 = vsel %vm1939, %v2798, 0
      %v2847 = vsel %vm1939, %v2800, 0
      %2849 = vmatpush.bf16.xpose.msra.mxu0 %v2847
      %2850 = vmatpush.bf16.xpose.msra.mxu0 %v2844
      %2851 = vmatpush.bf16.xpose.msra.mxu0 %v2841
      %2852 = vmatpush.bf16.xpose.msra.mxu0 %v2838
      %2853 = vmatpush.bf16.xpose.msra.mxu0 %v2835
      %2854 = vmatpush.bf16.xpose.msra.mxu0 %v2832
      %2855 = vmatpush.bf16.xpose.msra.mxu0 %v2829
      %2856 = vmatpush.bf16.xpose.msra.mxu0 %v2826
      %2857 = vmatmul.bf16.gmra.mxu0 %v2802
      %v2858 = vpop.f32.mrf.mxu0
      %v2859 = vadd.f32 %v846, %v2858
      %v2860 = vpop.f32.mrf.mxu0
      %v2861 = vadd.f32 %v847, %v2860
      %2862 = vmatmul.bf16.gmra.mxu0 %v2805
      %v2863 = vpop.f32.mrf.mxu0
      %v2864 = vadd.f32 %v848, %v2863
      %v2865 = vpop.f32.mrf.mxu0
      %v2866 = vadd.f32 %v849, %v2865
      %2867 = vmatmul.bf16.gmra.mxu0 %v2808
      %v2868 = vpop.f32.mrf.mxu0
      %v2869 = vadd.f32 %v850, %v2868
      %v2870 = vpop.f32.mrf.mxu0
      %v2871 = vadd.f32 %v851, %v2870
      %2872 = vmatmul.bf16.gmra.mxu0 %v2811
      %v2873 = vpop.f32.mrf.mxu0
      %v2874 = vadd.f32 %v852, %v2873
      %v2875 = vpop.f32.mrf.mxu0
      %v2876 = vadd.f32 %v853, %v2875
      %2877 = vmatmul.bf16.gmra.mxu0 %v2814
      %v2878 = vpop.f32.mrf.mxu0
      %v2879 = vadd.f32 %v854, %v2878
      %v2880 = vpop.f32.mrf.mxu0
      %v2881 = vadd.f32 %v855, %v2880
      %2882 = vmatmul.bf16.gmra.mxu0 %v2817
      %v2883 = vpop.f32.mrf.mxu0
      %v2884 = vadd.f32 %v856, %v2883
      %v2885 = vpop.f32.mrf.mxu0
      %v2886 = vadd.f32 %v857, %v2885
      %2887 = vmatmul.bf16.gmra.mxu0 %v2820
      %v2888 = vpop.f32.mrf.mxu0
      %v2889 = vadd.f32 %v858, %v2888
      %v2890 = vpop.f32.mrf.mxu0
      %v2891 = vadd.f32 %v859, %v2890
      %2892 = vmatmul.bf16.gmra.mxu0 %v2823
      %v2893 = vpop.f32.mrf.mxu0
      %v2894 = vadd.f32 %v860, %v2893
      %v2895 = vpop.f32.mrf.mxu0
      %v2896 = vadd.f32 %v861, %v2895
      %2897 = vdwg.mxu0
      %2898 = vrot.lane.b32.xlu0 %v2069, 120
      %v2899 = vpop.permute.xlu0 %2898
      %2900 = vrot.lane.b32.xlu0 %v2070, 120
      %v2901 = vpop.permute.xlu0 %2900
      %2902 = vrot.lane.b32.xlu0 %v2071, 120
      %v2903 = vpop.permute.xlu0 %2902
      %2904 = vrot.lane.b32.xlu0 %v2072, 120
      %v2905 = vpop.permute.xlu0 %2904
      %2906 = vrot.lane.b32.xlu0 %v2073, 120
      %v2907 = vpop.permute.xlu0 %2906
      %2908 = vrot.lane.b32.xlu0 %v2074, 120
      %v2909 = vpop.permute.xlu0 %2908
      %2910 = vrot.lane.b32.xlu0 %v2075, 120
      %v2911 = vpop.permute.xlu0 %2910
      %2912 = vrot.lane.b32.xlu0 %v2076, 120
      %v2913 = vpop.permute.xlu0 %2912
      %2914 = vrot.lane.b32.xlu0 %v2069, 88
      %v2915 = vpop.permute.xlu0 %2914
      %2916 = vrot.lane.b32.xlu0 %v2070, 88
      %v2917 = vpop.permute.xlu0 %2916
      %2918 = vrot.lane.b32.xlu0 %v2071, 88
      %v2919 = vpop.permute.xlu0 %2918
      %2920 = vrot.lane.b32.xlu0 %v2072, 88
      %v2921 = vpop.permute.xlu0 %2920
      %2922 = vrot.lane.b32.xlu0 %v2073, 88
      %v2923 = vpop.permute.xlu0 %2922
      %2924 = vrot.lane.b32.xlu0 %v2074, 88
      %v2925 = vpop.permute.xlu0 %2924
      %2926 = vrot.lane.b32.xlu0 %v2075, 88
      %v2927 = vpop.permute.xlu0 %2926
      %2928 = vrot.lane.b32.xlu0 %v2076, 88
      %v2929 = vpop.permute.xlu0 %2928
      %v2931 = vsel %vm1939, %v2899, 0
      %v2934 = vsel %vm1939, %v2901, 0
      %v2937 = vsel %vm1939, %v2903, 0
      %v2940 = vsel %vm1939, %v2905, 0
      %v2943 = vsel %vm1939, %v2907, 0
      %v2946 = vsel %vm1939, %v2909, 0
      %v2949 = vsel %vm1939, %v2911, 0
      %v2952 = vsel %vm1939, %v2913, 0
      %v2955 = vsel %vm1939, %v2915, 0
      %v2958 = vsel %vm1939, %v2917, 0
      %v2961 = vsel %vm1939, %v2919, 0
      %v2964 = vsel %vm1939, %v2921, 0
      %v2967 = vsel %vm1939, %v2923, 0
      %v2970 = vsel %vm1939, %v2925, 0
      %v2973 = vsel %vm1939, %v2927, 0
      %v2976 = vsel %vm1939, %v2929, 0
      %2978 = vmatpush.bf16.xpose.msra.mxu0 %v2976
      %2979 = vmatpush.bf16.xpose.msra.mxu0 %v2973
      %2980 = vmatpush.bf16.xpose.msra.mxu0 %v2970
      %2981 = vmatpush.bf16.xpose.msra.mxu0 %v2967
      %2982 = vmatpush.bf16.xpose.msra.mxu0 %v2964
      %2983 = vmatpush.bf16.xpose.msra.mxu0 %v2961
      %2984 = vmatpush.bf16.xpose.msra.mxu0 %v2958
      %2985 = vmatpush.bf16.xpose.msra.mxu0 %v2955
      %2986 = vmatmul.bf16.gmra.mxu0 %v2931
      %v2987 = vpop.f32.mrf.mxu0
      %v2988 = vadd.f32 %v846, %v2987
      %v2989 = vpop.f32.mrf.mxu0
      %v2990 = vadd.f32 %v847, %v2989
      %2991 = vmatmul.bf16.gmra.mxu0 %v2934
      %v2992 = vpop.f32.mrf.mxu0
      %v2993 = vadd.f32 %v848, %v2992
      %v2994 = vpop.f32.mrf.mxu0
      %v2995 = vadd.f32 %v849, %v2994
      %2996 = vmatmul.bf16.gmra.mxu0 %v2937
      %v2997 = vpop.f32.mrf.mxu0
      %v2998 = vadd.f32 %v850, %v2997
      %v2999 = vpop.f32.mrf.mxu0
      %v3000 = vadd.f32 %v851, %v2999
      %3001 = vmatmul.bf16.gmra.mxu0 %v2940
      %v3002 = vpop.f32.mrf.mxu0
      %v3003 = vadd.f32 %v852, %v3002
      %v3004 = vpop.f32.mrf.mxu0
      %v3005 = vadd.f32 %v853, %v3004
      %3006 = vmatmul.bf16.gmra.mxu0 %v2943
      %v3007 = vpop.f32.mrf.mxu0
      %v3008 = vadd.f32 %v854, %v3007
      %v3009 = vpop.f32.mrf.mxu0
      %v3010 = vadd.f32 %v855, %v3009
      %3011 = vmatmul.bf16.gmra.mxu0 %v2946
      %v3012 = vpop.f32.mrf.mxu0
      %v3013 = vadd.f32 %v856, %v3012
      %v3014 = vpop.f32.mrf.mxu0
      %v3015 = vadd.f32 %v857, %v3014
      %3016 = vmatmul.bf16.gmra.mxu0 %v2949
      %v3017 = vpop.f32.mrf.mxu0
      %v3018 = vadd.f32 %v858, %v3017
      %v3019 = vpop.f32.mrf.mxu0
      %v3020 = vadd.f32 %v859, %v3019
      %3021 = vmatmul.bf16.gmra.mxu0 %v2952
      %v3022 = vpop.f32.mrf.mxu0
      %v3023 = vadd.f32 %v860, %v3022
      %v3024 = vpop.f32.mrf.mxu0
      %v3025 = vadd.f32 %v861, %v3024
      %3026 = vdwg.mxu0
      %3027 = vmax.xlane.f32.xlu0 %v2859
      %v3028 = vpop.xlane.xlu0 %3027
      %3029 = vmax.xlane.f32.xlu0 %v2861
      %v3030 = vpop.xlane.xlu0 %3029
      %3031 = vmax.xlane.f32.xlu0 %v2864
      %v3032 = vpop.xlane.xlu0 %3031
      %3033 = vmax.xlane.f32.xlu0 %v2866
      %v3034 = vpop.xlane.xlu0 %3033
      %3035 = vmax.xlane.f32.xlu0 %v2869
      %v3036 = vpop.xlane.xlu0 %3035
      %3037 = vmax.xlane.f32.xlu0 %v2871
      %v3038 = vpop.xlane.xlu0 %3037
      %3039 = vmax.xlane.f32.xlu0 %v2874
      %v3040 = vpop.xlane.xlu0 %3039
      %3041 = vmax.xlane.f32.xlu0 %v2876
      %v3042 = vpop.xlane.xlu0 %3041
      %3043 = vmax.xlane.f32.xlu0 %v2879
      %v3044 = vpop.xlane.xlu0 %3043
      %3045 = vmax.xlane.f32.xlu0 %v2881
      %v3046 = vpop.xlane.xlu0 %3045
      %3047 = vmax.xlane.f32.xlu0 %v2884
      %v3048 = vpop.xlane.xlu0 %3047
      %3049 = vmax.xlane.f32.xlu0 %v2886
      %v3050 = vpop.xlane.xlu0 %3049
      %3051 = vmax.xlane.f32.xlu0 %v2889
      %v3052 = vpop.xlane.xlu0 %3051
      %3053 = vmax.xlane.f32.xlu0 %v2891
      %v3054 = vpop.xlane.xlu0 %3053
      %3055 = vmax.xlane.f32.xlu0 %v2894
      %v3056 = vpop.xlane.xlu0 %3055
      %3057 = vmax.xlane.f32.xlu0 %v2896
      %v3058 = vpop.xlane.xlu0 %3057
      %3059 = vmax.xlane.f32.xlu0 %v2988
      %v3060 = vpop.xlane.xlu0 %3059
      %3061 = vmax.xlane.f32.xlu0 %v2990
      %v3062 = vpop.xlane.xlu0 %3061
      %3063 = vmax.xlane.f32.xlu0 %v2993
      %v3064 = vpop.xlane.xlu0 %3063
      %3065 = vmax.xlane.f32.xlu0 %v2995
      %v3066 = vpop.xlane.xlu0 %3065
      %3067 = vmax.xlane.f32.xlu0 %v2998
      %v3068 = vpop.xlane.xlu0 %3067
      %3069 = vmax.xlane.f32.xlu0 %v3000
      %v3070 = vpop.xlane.xlu0 %3069
      %3071 = vmax.xlane.f32.xlu0 %v3003
      %v3072 = vpop.xlane.xlu0 %3071
      %3073 = vmax.xlane.f32.xlu0 %v3005
      %v3074 = vpop.xlane.xlu0 %3073
      %3075 = vmax.xlane.f32.xlu0 %v3008
      %v3076 = vpop.xlane.xlu0 %3075
      %3077 = vmax.xlane.f32.xlu0 %v3010
      %v3078 = vpop.xlane.xlu0 %3077
      %3079 = vmax.xlane.f32.xlu0 %v3013
      %v3080 = vpop.xlane.xlu0 %3079
      %3081 = vmax.xlane.f32.xlu0 %v3015
      %v3082 = vpop.xlane.xlu0 %3081
      %3083 = vmax.xlane.f32.xlu0 %v3018
      %v3084 = vpop.xlane.xlu0 %3083
      %3085 = vmax.xlane.f32.xlu0 %v3020
      %v3086 = vpop.xlane.xlu0 %3085
      %3087 = vmax.xlane.f32.xlu0 %v3023
      %v3088 = vpop.xlane.xlu0 %3087
      %3089 = vmax.xlane.f32.xlu0 %v3025
      %v3090 = vpop.xlane.xlu0 %3089
      %v3091 = vsub.f32 %v2859, %v3028
      %v3092 = vsub.f32 %v2861, %v3030
      %v3093 = vsub.f32 %v2864, %v3032
      %v3094 = vsub.f32 %v2866, %v3034
      %v3095 = vsub.f32 %v2869, %v3036
      %v3096 = vsub.f32 %v2871, %v3038
      %v3097 = vsub.f32 %v2874, %v3040
      %v3098 = vsub.f32 %v2876, %v3042
      %v3099 = vsub.f32 %v2879, %v3044
      %v3100 = vsub.f32 %v2881, %v3046
      %v3101 = vsub.f32 %v2884, %v3048
      %v3102 = vsub.f32 %v2886, %v3050
      %v3103 = vsub.f32 %v2889, %v3052
      %v3104 = vsub.f32 %v2891, %v3054
      %v3105 = vsub.f32 %v2894, %v3056
      %v3106 = vsub.f32 %v2896, %v3058
      %v3107 = vsub.f32 %v2988, %v3060
      %v3108 = vsub.f32 %v2990, %v3062
      %v3109 = vsub.f32 %v2993, %v3064
      %v3110 = vsub.f32 %v2995, %v3066
      %v3111 = vsub.f32 %v2998, %v3068
      %v3112 = vsub.f32 %v3000, %v3070
      %v3113 = vsub.f32 %v3003, %v3072
      %v3114 = vsub.f32 %v3005, %v3074
      %v3115 = vsub.f32 %v3008, %v3076
      %v3116 = vsub.f32 %v3010, %v3078
      %v3117 = vsub.f32 %v3013, %v3080
      %v3118 = vsub.f32 %v3015, %v3082
      %v3119 = vsub.f32 %v3018, %v3084
      %v3120 = vsub.f32 %v3020, %v3086
      %v3121 = vsub.f32 %v3023, %v3088
      %v3122 = vsub.f32 %v3025, %v3090
      %v3123 = vmul.f32 %v3091, 1.442695
      %v3124 = vpow.pop %v3123
      %v3125 = vmul.f32 %v3092, 1.442695
      %v3126 = vpow.pop %v3125
      %v3127 = vmul.f32 %v3093, 1.442695
      %v3128 = vpow.pop %v3127
      %v3129 = vmul.f32 %v3094, 1.442695
      %v3130 = vpow.pop %v3129
      %v3131 = vmul.f32 %v3095, 1.442695
      %v3132 = vpow.pop %v3131
      %v3133 = vmul.f32 %v3096, 1.442695
      %v3134 = vpow.pop %v3133
      %v3135 = vmul.f32 %v3097, 1.442695
      %v3136 = vpow.pop %v3135
      %v3137 = vmul.f32 %v3098, 1.442695
      %v3138 = vpow.pop %v3137
      %v3139 = vmul.f32 %v3099, 1.442695
      %v3140 = vpow.pop %v3139
      %v3141 = vmul.f32 %v3100, 1.442695
      %v3142 = vpow.pop %v3141
      %v3143 = vmul.f32 %v3101, 1.442695
      %v3144 = vpow.pop %v3143
      %v3145 = vmul.f32 %v3102, 1.442695
      %v3146 = vpow.pop %v3145
      %v3147 = vmul.f32 %v3103, 1.442695
      %v3148 = vpow.pop %v3147
      %v3149 = vmul.f32 %v3104, 1.442695
      %v3150 = vpow.pop %v3149
      %v3151 = vmul.f32 %v3105, 1.442695
      %v3152 = vpow.pop %v3151
      %v3153 = vmul.f32 %v3106, 1.442695
      %v3154 = vpow.pop %v3153
      %v3155 = vmul.f32 %v3107, 1.442695
      %v3156 = vpow.pop %v3155
      %v3157 = vmul.f32 %v3108, 1.442695
      %v3158 = vpow.pop %v3157
      %v3159 = vmul.f32 %v3109, 1.442695
      %v3160 = vpow.pop %v3159
      %v3161 = vmul.f32 %v3110, 1.442695
      %v3162 = vpow.pop %v3161
      %v3163 = vmul.f32 %v3111, 1.442695
      %v3164 = vpow.pop %v3163
      %v3165 = vmul.f32 %v3112, 1.442695
      %v3166 = vpow.pop %v3165
      %v3167 = vmul.f32 %v3113, 1.442695
      %v3168 = vpow.pop %v3167
      %v3169 = vmul.f32 %v3114, 1.442695
      %v3170 = vpow.pop %v3169
      %v3171 = vmul.f32 %v3115, 1.442695
      %v3172 = vpow.pop %v3171
      %v3173 = vmul.f32 %v3116, 1.442695
      %v3174 = vpow.pop %v3173
      %v3175 = vmul.f32 %v3117, 1.442695
      %v3176 = vpow.pop %v3175
      %v3177 = vmul.f32 %v3118, 1.442695
      %v3178 = vpow.pop %v3177
      %v3179 = vmul.f32 %v3119, 1.442695
      %v3180 = vpow.pop %v3179
      %v3181 = vmul.f32 %v3120, 1.442695
      %v3182 = vpow.pop %v3181
      %v3183 = vmul.f32 %v3121, 1.442695
      %v3184 = vpow.pop %v3183
      %v3185 = vmul.f32 %v3122, 1.442695
      %v3186 = vpow.pop %v3185
      %3187 = vadd.xlane.f32.xlu0 %v3124
      %v3188 = vpop.xlane.xlu0 %3187
      %3189 = vadd.xlane.f32.xlu0 %v3126
      %v3190 = vpop.xlane.xlu0 %3189
      %3191 = vadd.xlane.f32.xlu0 %v3128
      %v3192 = vpop.xlane.xlu0 %3191
      %3193 = vadd.xlane.f32.xlu0 %v3130
      %v3194 = vpop.xlane.xlu0 %3193
      %3195 = vadd.xlane.f32.xlu0 %v3132
      %v3196 = vpop.xlane.xlu0 %3195
      %3197 = vadd.xlane.f32.xlu0 %v3134
      %v3198 = vpop.xlane.xlu0 %3197
      %3199 = vadd.xlane.f32.xlu0 %v3136
      %v3200 = vpop.xlane.xlu0 %3199
      %3201 = vadd.xlane.f32.xlu0 %v3138
      %v3202 = vpop.xlane.xlu0 %3201
      %3203 = vadd.xlane.f32.xlu0 %v3140
      %v3204 = vpop.xlane.xlu0 %3203
      %3205 = vadd.xlane.f32.xlu0 %v3142
      %v3206 = vpop.xlane.xlu0 %3205
      %3207 = vadd.xlane.f32.xlu0 %v3144
      %v3208 = vpop.xlane.xlu0 %3207
      %3209 = vadd.xlane.f32.xlu0 %v3146
      %v3210 = vpop.xlane.xlu0 %3209
      %3211 = vadd.xlane.f32.xlu0 %v3148
      %v3212 = vpop.xlane.xlu0 %3211
      %3213 = vadd.xlane.f32.xlu0 %v3150
      %v3214 = vpop.xlane.xlu0 %3213
      %3215 = vadd.xlane.f32.xlu0 %v3152
      %v3216 = vpop.xlane.xlu0 %3215
      %3217 = vadd.xlane.f32.xlu0 %v3154
      %v3218 = vpop.xlane.xlu0 %3217
      %3219 = vadd.xlane.f32.xlu0 %v3156
      %v3220 = vpop.xlane.xlu0 %3219
      %3221 = vadd.xlane.f32.xlu0 %v3158
      %v3222 = vpop.xlane.xlu0 %3221
      %3223 = vadd.xlane.f32.xlu0 %v3160
      %v3224 = vpop.xlane.xlu0 %3223
      %3225 = vadd.xlane.f32.xlu0 %v3162
      %v3226 = vpop.xlane.xlu0 %3225
      %3227 = vadd.xlane.f32.xlu0 %v3164
      %v3228 = vpop.xlane.xlu0 %3227
      %3229 = vadd.xlane.f32.xlu0 %v3166
      %v3230 = vpop.xlane.xlu0 %3229
      %3231 = vadd.xlane.f32.xlu0 %v3168
      %v3232 = vpop.xlane.xlu0 %3231
      %3233 = vadd.xlane.f32.xlu0 %v3170
      %v3234 = vpop.xlane.xlu0 %3233
      %3235 = vadd.xlane.f32.xlu0 %v3172
      %v3236 = vpop.xlane.xlu0 %3235
      %3237 = vadd.xlane.f32.xlu0 %v3174
      %v3238 = vpop.xlane.xlu0 %3237
      %3239 = vadd.xlane.f32.xlu0 %v3176
      %v3240 = vpop.xlane.xlu0 %3239
      %3241 = vadd.xlane.f32.xlu0 %v3178
      %v3242 = vpop.xlane.xlu0 %3241
      %3243 = vadd.xlane.f32.xlu0 %v3180
      %v3244 = vpop.xlane.xlu0 %3243
      %3245 = vadd.xlane.f32.xlu0 %v3182
      %v3246 = vpop.xlane.xlu0 %3245
      %3247 = vadd.xlane.f32.xlu0 %v3184
      %v3248 = vpop.xlane.xlu0 %3247
      %3249 = vadd.xlane.f32.xlu0 %v3186
      %v3250 = vpop.xlane.xlu0 %3249
      %v3251 = vrcp.pop %v3188
      %v3252 = vrcp.pop %v3190
      %v3253 = vrcp.pop %v3192
      %v3254 = vrcp.pop %v3194
      %v3255 = vrcp.pop %v3196
      %v3256 = vrcp.pop %v3198
      %v3257 = vrcp.pop %v3200
      %v3258 = vrcp.pop %v3202
      %v3259 = vrcp.pop %v3204
      %v3260 = vrcp.pop %v3206
      %v3261 = vrcp.pop %v3208
      %v3262 = vrcp.pop %v3210
      %v3263 = vrcp.pop %v3212
      %v3264 = vrcp.pop %v3214
      %v3265 = vrcp.pop %v3216
      %v3266 = vrcp.pop %v3218
      %v3267 = vrcp.pop %v3220
      %v3268 = vrcp.pop %v3222
      %v3269 = vrcp.pop %v3224
      %v3270 = vrcp.pop %v3226
      %v3271 = vrcp.pop %v3228
      %v3272 = vrcp.pop %v3230
      %v3273 = vrcp.pop %v3232
      %v3274 = vrcp.pop %v3234
      %v3275 = vrcp.pop %v3236
      %v3276 = vrcp.pop %v3238
      %v3277 = vrcp.pop %v3240
      %v3278 = vrcp.pop %v3242
      %v3279 = vrcp.pop %v3244
      %v3280 = vrcp.pop %v3246
      %v3281 = vrcp.pop %v3248
      %v3282 = vrcp.pop %v3250
      %v3283 = vmul.f32 %v3124, %v3251
      %v3284 = vmul.f32 %v3126, %v3252
      %v3285 = vmul.f32 %v3128, %v3253
      %v3286 = vmul.f32 %v3130, %v3254
      %v3287 = vmul.f32 %v3132, %v3255
      %v3288 = vmul.f32 %v3134, %v3256
      %v3289 = vmul.f32 %v3136, %v3257
      %v3290 = vmul.f32 %v3138, %v3258
      %v3291 = vmul.f32 %v3140, %v3259
      %v3292 = vmul.f32 %v3142, %v3260
      %v3293 = vmul.f32 %v3144, %v3261
      %v3294 = vmul.f32 %v3146, %v3262
      %v3295 = vmul.f32 %v3148, %v3263
      %v3296 = vmul.f32 %v3150, %v3264
      %v3297 = vmul.f32 %v3152, %v3265
      %v3298 = vmul.f32 %v3154, %v3266
      %v3299 = vmul.f32 %v3156, %v3267
      %v3300 = vmul.f32 %v3158, %v3268
      %v3301 = vmul.f32 %v3160, %v3269
      %v3302 = vmul.f32 %v3162, %v3270
      %v3303 = vmul.f32 %v3164, %v3271
      %v3304 = vmul.f32 %v3166, %v3272
      %v3305 = vmul.f32 %v3168, %v3273
      %v3306 = vmul.f32 %v3170, %v3274
      %v3307 = vmul.f32 %v3172, %v3275
      %v3308 = vmul.f32 %v3174, %v3276
      %v3309 = vmul.f32 %v3176, %v3277
      %v3310 = vmul.f32 %v3178, %v3278
      %v3311 = vmul.f32 %v3180, %v3279
      %v3312 = vmul.f32 %v3182, %v3280
      %v3313 = vmul.f32 %v3184, %v3281
      %v3314 = vmul.f32 %v3186, %v3282
      %v3315 = vpack.c.bf16 %v3283, %v3283
      %v3316 = vpack.c.bf16 %v3284, %v3284
      %v3317 = vpack.c.bf16 %v3285, %v3285
      %v3318 = vpack.c.bf16 %v3286, %v3286
      %v3319 = vpack.c.bf16 %v3287, %v3287
      %v3320 = vpack.c.bf16 %v3288, %v3288
      %v3321 = vpack.c.bf16 %v3289, %v3289
      %v3322 = vpack.c.bf16 %v3290, %v3290
      %v3323 = vpack.c.bf16 %v3291, %v3291
      %v3324 = vpack.c.bf16 %v3292, %v3292
      %v3325 = vpack.c.bf16 %v3293, %v3293
      %v3326 = vpack.c.bf16 %v3294, %v3294
      %v3327 = vpack.c.bf16 %v3295, %v3295
      %v3328 = vpack.c.bf16 %v3296, %v3296
      %v3329 = vpack.c.bf16 %v3297, %v3297
      %v3330 = vpack.c.bf16 %v3298, %v3298
      %v3331 = vpack.c.bf16 %v3299, %v3299
      %v3332 = vpack.c.bf16 %v3300, %v3300
      %v3333 = vpack.c.bf16 %v3301, %v3301
      %v3334 = vpack.c.bf16 %v3302, %v3302
      %v3335 = vpack.c.bf16 %v3303, %v3303
      %v3336 = vpack.c.bf16 %v3304, %v3304
      %v3337 = vpack.c.bf16 %v3305, %v3305
      %v3338 = vpack.c.bf16 %v3306, %v3306
      %v3339 = vpack.c.bf16 %v3307, %v3307
      %v3340 = vpack.c.bf16 %v3308, %v3308
      %v3341 = vpack.c.bf16 %v3309, %v3309
      %v3342 = vpack.c.bf16 %v3310, %v3310
      %v3343 = vpack.c.bf16 %v3311, %v3311
      %v3344 = vpack.c.bf16 %v3312, %v3312
      %v3345 = vpack.c.bf16 %v3313, %v3313
      %v3346 = vpack.c.bf16 %v3314, %v3314
      %v3363 = vunpack.c.l.b16 %v3315
      %v3364 = vunpack.c.l.b16 %v3316
      %v3365 = vunpack.c.l.b16 %v3317
      %v3366 = vunpack.c.l.b16 %v3318
      %v3367 = vunpack.c.l.b16 %v3319
      %v3368 = vunpack.c.l.b16 %v3320
      %v3369 = vunpack.c.l.b16 %v3321
      %v3370 = vunpack.c.l.b16 %v3322
      %v3371 = vunpack.c.l.b16 %v3323
      %v3372 = vunpack.c.l.b16 %v3324
      %v3373 = vunpack.c.l.b16 %v3325
      %v3374 = vunpack.c.l.b16 %v3326
      %v3375 = vunpack.c.l.b16 %v3327
      %v3376 = vunpack.c.l.b16 %v3328
      %v3377 = vunpack.c.l.b16 %v3329
      %v3378 = vunpack.c.l.b16 %v3330
      %v3379 = vpack.c.b16 %v3364, %v3363
      %v3380 = vpack.c.b16 %v3366, %v3365
      %v3381 = vpack.c.b16 %v3368, %v3367
      %v3382 = vpack.c.b16 %v3370, %v3369
      %v3383 = vpack.c.b16 %v3372, %v3371
      %v3384 = vpack.c.b16 %v3374, %v3373
      %v3385 = vpack.c.b16 %v3376, %v3375
      %v3386 = vpack.c.b16 %v3378, %v3377
      %3395 = vrot.lane.b32.xlu0 %v1915, 56
      %v3396 = vpop.permute.xlu0 %3395
      %3397 = vrot.lane.b32.xlu0 %v1916, 56
      %v3398 = vpop.permute.xlu0 %3397
      %3399 = vrot.lane.b32.xlu0 %v1917, 56
      %v3400 = vpop.permute.xlu0 %3399
      %3401 = vrot.lane.b32.xlu0 %v1918, 56
      %v3402 = vpop.permute.xlu0 %3401
      %3403 = vrot.lane.b32.xlu0 %v1919, 56
      %v3404 = vpop.permute.xlu0 %3403
      %3405 = vrot.lane.b32.xlu0 %v1920, 56
      %v3406 = vpop.permute.xlu0 %3405
      %3407 = vrot.lane.b32.xlu0 %v1921, 56
      %v3408 = vpop.permute.xlu0 %3407
      %3409 = vrot.lane.b32.xlu0 %v1922, 56
      %v3410 = vpop.permute.xlu0 %3409
      %3419 = vmatpush.bf16.msra.mxu0 %v3410
      %3420 = vmatpush.bf16.msra.mxu0 %v3408
      %3421 = vmatpush.bf16.msra.mxu0 %v3406
      %3422 = vmatpush.bf16.msra.mxu0 %v3404
      %3423 = vmatpush.bf16.msra.mxu0 %v3402
      %3424 = vmatpush.bf16.msra.mxu0 %v3400
      %3425 = vmatpush.bf16.msra.mxu0 %v3398
      %3426 = vmatpush.bf16.msra.mxu0 %v3396
      %3427 = vmatmul.bf16.gmra.mxu0 %v3379
      %v3428 = vpop.f32.mrf.mxu0
      %v3429 = vadd.f32 0.0, %v3428
      %v3430 = vpop.f32.mrf.mxu0
      %v3431 = vadd.f32 0.0, %v3430
      %3432 = vmatmul.bf16.gmra.mxu0 %v3380
      %v3433 = vpop.f32.mrf.mxu0
      %v3434 = vadd.f32 0.0, %v3433
      %v3435 = vpop.f32.mrf.mxu0
      %v3436 = vadd.f32 0.0, %v3435
      %3437 = vmatmul.bf16.gmra.mxu0 %v3381
      %v3438 = vpop.f32.mrf.mxu0
      %v3439 = vadd.f32 0.0, %v3438
      %v3440 = vpop.f32.mrf.mxu0
      %v3441 = vadd.f32 0.0, %v3440
      %3442 = vmatmul.bf16.gmra.mxu0 %v3382
      %v3443 = vpop.f32.mrf.mxu0
      %v3444 = vadd.f32 0.0, %v3443
      %v3445 = vpop.f32.mrf.mxu0
      %v3446 = vadd.f32 0.0, %v3445
      %3447 = vmatmul.bf16.gmra.mxu0 %v3383
      %v3448 = vpop.f32.mrf.mxu0
      %v3449 = vadd.f32 0.0, %v3448
      %v3450 = vpop.f32.mrf.mxu0
      %v3451 = vadd.f32 0.0, %v3450
      %3452 = vmatmul.bf16.gmra.mxu0 %v3384
      %v3453 = vpop.f32.mrf.mxu0
      %v3454 = vadd.f32 0.0, %v3453
      %v3455 = vpop.f32.mrf.mxu0
      %v3456 = vadd.f32 0.0, %v3455
      %3457 = vmatmul.bf16.gmra.mxu0 %v3385
      %v3458 = vpop.f32.mrf.mxu0
      %v3459 = vadd.f32 0.0, %v3458
      %v3460 = vpop.f32.mrf.mxu0
      %v3461 = vadd.f32 0.0, %v3460
      %3462 = vmatmul.bf16.gmra.mxu0 %v3386
      %v3463 = vpop.f32.mrf.mxu0
      %v3464 = vadd.f32 0.0, %v3463
      %v3465 = vpop.f32.mrf.mxu0
      %v3466 = vadd.f32 0.0, %v3465
      %3467 = vdwg.mxu0
      %v3484 = vunpack.c.l.b16 %v3331
      %v3485 = vunpack.c.l.b16 %v3332
      %v3486 = vunpack.c.l.b16 %v3333
      %v3487 = vunpack.c.l.b16 %v3334
      %v3488 = vunpack.c.l.b16 %v3335
      %v3489 = vunpack.c.l.b16 %v3336
      %v3490 = vunpack.c.l.b16 %v3337
      %v3491 = vunpack.c.l.b16 %v3338
      %v3492 = vunpack.c.l.b16 %v3339
      %v3493 = vunpack.c.l.b16 %v3340
      %v3494 = vunpack.c.l.b16 %v3341
      %v3495 = vunpack.c.l.b16 %v3342
      %v3496 = vunpack.c.l.b16 %v3343
      %v3497 = vunpack.c.l.b16 %v3344
      %v3498 = vunpack.c.l.b16 %v3345
      %v3499 = vunpack.c.l.b16 %v3346
      %v3500 = vpack.c.b16 %v3485, %v3484
      %v3501 = vpack.c.b16 %v3487, %v3486
      %v3502 = vpack.c.b16 %v3489, %v3488
      %v3503 = vpack.c.b16 %v3491, %v3490
      %v3504 = vpack.c.b16 %v3493, %v3492
      %v3505 = vpack.c.b16 %v3495, %v3494
      %v3506 = vpack.c.b16 %v3497, %v3496
      %v3507 = vpack.c.b16 %v3499, %v3498
      %3516 = vrot.lane.b32.xlu0 %v2069, 56
      %v3517 = vpop.permute.xlu0 %3516
      %3518 = vrot.lane.b32.xlu0 %v2070, 56
      %v3519 = vpop.permute.xlu0 %3518
      %3520 = vrot.lane.b32.xlu0 %v2071, 56
      %v3521 = vpop.permute.xlu0 %3520
      %3522 = vrot.lane.b32.xlu0 %v2072, 56
      %v3523 = vpop.permute.xlu0 %3522
      %3524 = vrot.lane.b32.xlu0 %v2073, 56
      %v3525 = vpop.permute.xlu0 %3524
      %3526 = vrot.lane.b32.xlu0 %v2074, 56
      %v3527 = vpop.permute.xlu0 %3526
      %3528 = vrot.lane.b32.xlu0 %v2075, 56
      %v3529 = vpop.permute.xlu0 %3528
      %3530 = vrot.lane.b32.xlu0 %v2076, 56
      %v3531 = vpop.permute.xlu0 %3530
      %3540 = vmatpush.bf16.msra.mxu0 %v3531
      %3541 = vmatpush.bf16.msra.mxu0 %v3529
      %3542 = vmatpush.bf16.msra.mxu0 %v3527
      %3543 = vmatpush.bf16.msra.mxu0 %v3525
      %3544 = vmatpush.bf16.msra.mxu0 %v3523
      %3545 = vmatpush.bf16.msra.mxu0 %v3521
      %3546 = vmatpush.bf16.msra.mxu0 %v3519
      %3547 = vmatpush.bf16.msra.mxu0 %v3517
      %3548 = vmatmul.bf16.gmra.mxu0 %v3500
      %v3549 = vpop.f32.mrf.mxu0
      %v3550 = vadd.f32 0.0, %v3549
      %v3551 = vpop.f32.mrf.mxu0
      %v3552 = vadd.f32 0.0, %v3551
      %3553 = vmatmul.bf16.gmra.mxu0 %v3501
      %v3554 = vpop.f32.mrf.mxu0
      %v3555 = vadd.f32 0.0, %v3554
      %v3556 = vpop.f32.mrf.mxu0
      %v3557 = vadd.f32 0.0, %v3556
      %3558 = vmatmul.bf16.gmra.mxu0 %v3502
      %v3559 = vpop.f32.mrf.mxu0
      %v3560 = vadd.f32 0.0, %v3559
      %v3561 = vpop.f32.mrf.mxu0
      %v3562 = vadd.f32 0.0, %v3561
      %3563 = vmatmul.bf16.gmra.mxu0 %v3503
      %v3564 = vpop.f32.mrf.mxu0
      %v3565 = vadd.f32 0.0, %v3564
      %v3566 = vpop.f32.mrf.mxu0
      %v3567 = vadd.f32 0.0, %v3566
      %3568 = vmatmul.bf16.gmra.mxu0 %v3504
      %v3569 = vpop.f32.mrf.mxu0
      %v3570 = vadd.f32 0.0, %v3569
      %v3571 = vpop.f32.mrf.mxu0
      %v3572 = vadd.f32 0.0, %v3571
      %3573 = vmatmul.bf16.gmra.mxu0 %v3505
      %v3574 = vpop.f32.mrf.mxu0
      %v3575 = vadd.f32 0.0, %v3574
      %v3576 = vpop.f32.mrf.mxu0
      %v3577 = vadd.f32 0.0, %v3576
      %3578 = vmatmul.bf16.gmra.mxu0 %v3506
      %v3579 = vpop.f32.mrf.mxu0
      %v3580 = vadd.f32 0.0, %v3579
      %v3581 = vpop.f32.mrf.mxu0
      %v3582 = vadd.f32 0.0, %v3581
      %3583 = vmatmul.bf16.gmra.mxu0 %v3507
      %v3584 = vpop.f32.mrf.mxu0
      %v3585 = vadd.f32 0.0, %v3584
      %v3586 = vpop.f32.mrf.mxu0
      %v3587 = vadd.f32 0.0, %v3586
      %3588 = vdwg.mxu0
      %v3589 = vpack.c.bf16 %v3431, %v3429
      %v3590 = vpack.c.bf16 %v3436, %v3434
      %v3591 = vpack.c.bf16 %v3441, %v3439
      %v3592 = vpack.c.bf16 %v3446, %v3444
      %v3593 = vpack.c.bf16 %v3451, %v3449
      %v3594 = vpack.c.bf16 %v3456, %v3454
      %v3595 = vpack.c.bf16 %v3461, %v3459
      %v3596 = vpack.c.bf16 %v3466, %v3464
      %v3597 = vpack.c.bf16 %v3552, %v3550
      %v3598 = vpack.c.bf16 %v3557, %v3555
      %v3599 = vpack.c.bf16 %v3562, %v3560
      %v3600 = vpack.c.bf16 %v3567, %v3565
      %v3601 = vpack.c.bf16 %v3572, %v3570
      %v3602 = vpack.c.bf16 %v3577, %v3575
      %v3603 = vpack.c.bf16 %v3582, %v3580
      %v3604 = vpack.c.bf16 %v3587, %v3585
      %v3605 = vld [vmem:[%s707 + $0x4] sm:$0xf]
      %v3607 = vsel %vm1939, %v3589, 0
      %v3610 = vsel %vm1939, %v3590, 0
      %v3613 = vsel %vm1939, %v3591, 0
      %v3616 = vsel %vm1939, %v3592, 0
      %v3619 = vsel %vm1939, %v3593, 0
      %v3622 = vsel %vm1939, %v3594, 0
      %v3625 = vsel %vm1939, %v3595, 0
      %v3628 = vsel %vm1939, %v3596, 0
      %v3631 = vsel %vm1939, %v3597, 0
      %v3634 = vsel %vm1939, %v3598, 0
      %v3637 = vsel %vm1939, %v3599, 0
      %v3640 = vsel %vm1939, %v3600, 0
      %v3643 = vsel %vm1939, %v3601, 0
      %v3646 = vsel %vm1939, %v3602, 0
      %v3649 = vsel %vm1939, %v3603, 0
      %v3652 = vsel %vm1939, %v3604, 0
      %vm3654 = vcmask 1043456
      %v3656 = vsel %vm3654, %v3605, 0
      %3658 = vmatpush.bf16.msra.mxu0 0
      %3659 = vmatpush.bf16.msra.mxu0 0
      %3660 = vmatpush.bf16.msra.mxu0 0
      %3661 = vmatpush.bf16.msra.mxu0 0
      %3662 = vmatpush.bf16.msra.mxu0 0
      %3663 = vmatpush.bf16.msra.mxu0 0
      %3664 = vmatpush.bf16.msra.mxu0 0
      %3665 = vmatpush.bf16.msra.mxu0 %v3656
      %3666 = vmatmul.bf16.gmra.mxu0 %v3607
      %v3667 = vpop.f32.mrf.mxu0
      %v3668 = vadd.f32 0.0, %v3667
      %v3669 = vpop.f32.mrf.mxu0
      %v3670 = vadd.f32 0.0, %v3669
      %3671 = vmatmul.bf16.gmra.mxu0 %v3610
      %v3672 = vpop.f32.mrf.mxu0
      %v3673 = vadd.f32 0.0, %v3672
      %v3674 = vpop.f32.mrf.mxu0
      %v3675 = vadd.f32 0.0, %v3674
      %3676 = vmatmul.bf16.gmra.mxu0 %v3613
      %v3677 = vpop.f32.mrf.mxu0
      %v3678 = vadd.f32 0.0, %v3677
      %v3679 = vpop.f32.mrf.mxu0
      %v3680 = vadd.f32 0.0, %v3679
      %3681 = vmatmul.bf16.gmra.mxu0 %v3616
      %v3682 = vpop.f32.mrf.mxu0
      %v3683 = vadd.f32 0.0, %v3682
      %v3684 = vpop.f32.mrf.mxu0
      %v3685 = vadd.f32 0.0, %v3684
      %3686 = vmatmul.bf16.gmra.mxu0 %v3619
      %v3687 = vpop.f32.mrf.mxu0
      %v3688 = vadd.f32 0.0, %v3687
      %v3689 = vpop.f32.mrf.mxu0
      %v3690 = vadd.f32 0.0, %v3689
      %3691 = vmatmul.bf16.gmra.mxu0 %v3622
      %v3692 = vpop.f32.mrf.mxu0
      %v3693 = vadd.f32 0.0, %v3692
      %v3694 = vpop.f32.mrf.mxu0
      %v3695 = vadd.f32 0.0, %v3694
      %3696 = vmatmul.bf16.gmra.mxu0 %v3625
      %v3697 = vpop.f32.mrf.mxu0
      %v3698 = vadd.f32 0.0, %v3697
      %v3699 = vpop.f32.mrf.mxu0
      %v3700 = vadd.f32 0.0, %v3699
      %3701 = vmatmul.bf16.gmra.mxu0 %v3628
      %v3702 = vpop.f32.mrf.mxu0
      %v3703 = vadd.f32 0.0, %v3702
      %v3704 = vpop.f32.mrf.mxu0
      %v3705 = vadd.f32 0.0, %v3704
      %3706 = vmatmul.bf16.gmra.mxu0 %v3631
      %v3707 = vpop.f32.mrf.mxu0
      %v3708 = vadd.f32 0.0, %v3707
      %v3709 = vpop.f32.mrf.mxu0
      %v3710 = vadd.f32 0.0, %v3709
      %3711 = vmatmul.bf16.gmra.mxu0 %v3634
      %v3712 = vpop.f32.mrf.mxu0
      %v3713 = vadd.f32 0.0, %v3712
      %v3714 = vpop.f32.mrf.mxu0
      %v3715 = vadd.f32 0.0, %v3714
      %3716 = vmatmul.bf16.gmra.mxu0 %v3637
      %v3717 = vpop.f32.mrf.mxu0
      %v3718 = vadd.f32 0.0, %v3717
      %v3719 = vpop.f32.mrf.mxu0
      %v3720 = vadd.f32 0.0, %v3719
      %3721 = vmatmul.bf16.gmra.mxu0 %v3640
      %v3722 = vpop.f32.mrf.mxu0
      %v3723 = vadd.f32 0.0, %v3722
      %v3724 = vpop.f32.mrf.mxu0
      %v3725 = vadd.f32 0.0, %v3724
      %3726 = vmatmul.bf16.gmra.mxu0 %v3643
      %v3727 = vpop.f32.mrf.mxu0
      %v3728 = vadd.f32 0.0, %v3727
      %v3729 = vpop.f32.mrf.mxu0
      %v3730 = vadd.f32 0.0, %v3729
      %3731 = vmatmul.bf16.gmra.mxu0 %v3646
      %v3732 = vpop.f32.mrf.mxu0
      %v3733 = vadd.f32 0.0, %v3732
      %v3734 = vpop.f32.mrf.mxu0
      %v3735 = vadd.f32 0.0, %v3734
      %3736 = vmatmul.bf16.gmra.mxu0 %v3649
      %v3737 = vpop.f32.mrf.mxu0
      %v3738 = vadd.f32 0.0, %v3737
      %v3739 = vpop.f32.mrf.mxu0
      %v3740 = vadd.f32 0.0, %v3739
      %3741 = vmatmul.bf16.gmra.mxu0 %v3652
      %v3742 = vpop.f32.mrf.mxu0
      %v3743 = vadd.f32 0.0, %v3742
      %v3744 = vpop.f32.mrf.mxu0
      %v3745 = vadd.f32 0.0, %v3744
      %3746 = vdwg.mxu0
      %v3748 = vsel %vm1939, %v2752, 0
      %v3751 = vsel %vm1939, %v2753, 0
      %v3754 = vsel %vm1939, %v2754, 0
      %v3757 = vsel %vm1939, %v2755, 0
      %v3760 = vsel %vm1939, %v2756, 0
      %v3763 = vsel %vm1939, %v2757, 0
      %v3766 = vsel %vm1939, %v2758, 0
      %v3769 = vsel %vm1939, %v2759, 0
      %v3772 = vsel %vm1939, %v2760, 0
      %v3775 = vsel %vm1939, %v2761, 0
      %v3778 = vsel %vm1939, %v2762, 0
      %v3781 = vsel %vm1939, %v2763, 0
      %v3784 = vsel %vm1939, %v2764, 0
      %v3787 = vsel %vm1939, %v2765, 0
      %v3790 = vsel %vm1939, %v2766, 0
      %v3793 = vsel %vm1939, %v2767, 0
      %v3796 = vsel %vm3654, %v2768, 0
      %3798 = vmatpush.bf16.msra.mxu0 0
      %3799 = vmatpush.bf16.msra.mxu0 0
      %3800 = vmatpush.bf16.msra.mxu0 0
      %3801 = vmatpush.bf16.msra.mxu0 0
      %3802 = vmatpush.bf16.msra.mxu0 0
      %3803 = vmatpush.bf16.msra.mxu0 0
      %3804 = vmatpush.bf16.msra.mxu0 0
      %3805 = vmatpush.bf16.msra.mxu0 %v3796
      %3806 = vmatmul.bf16.gmra.mxu0 %v3748
      %v3807 = vpop.f32.mrf.mxu0
      %v3808 = vadd.f32 %v3668, %v3807
      %v3809 = vpop.f32.mrf.mxu0
      %v3810 = vadd.f32 %v3670, %v3809
      %3811 = vmatmul.bf16.gmra.mxu0 %v3751
      %v3812 = vpop.f32.mrf.mxu0
      %v3813 = vadd.f32 %v3673, %v3812
      %v3814 = vpop.f32.mrf.mxu0
      %v3815 = vadd.f32 %v3675, %v3814
      %3816 = vmatmul.bf16.gmra.mxu0 %v3754
      %v3817 = vpop.f32.mrf.mxu0
      %v3818 = vadd.f32 %v3678, %v3817
      %v3819 = vpop.f32.mrf.mxu0
      %v3820 = vadd.f32 %v3680, %v3819
      %3821 = vmatmul.bf16.gmra.mxu0 %v3757
      %v3822 = vpop.f32.mrf.mxu0
      %v3823 = vadd.f32 %v3683, %v3822
      %v3824 = vpop.f32.mrf.mxu0
      %v3825 = vadd.f32 %v3685, %v3824
      %3826 = vmatmul.bf16.gmra.mxu0 %v3760
      %v3827 = vpop.f32.mrf.mxu0
      %v3828 = vadd.f32 %v3688, %v3827
      %v3829 = vpop.f32.mrf.mxu0
      %v3830 = vadd.f32 %v3690, %v3829
      %3831 = vmatmul.bf16.gmra.mxu0 %v3763
      %v3832 = vpop.f32.mrf.mxu0
      %v3833 = vadd.f32 %v3693, %v3832
      %v3834 = vpop.f32.mrf.mxu0
      %v3835 = vadd.f32 %v3695, %v3834
      %3836 = vmatmul.bf16.gmra.mxu0 %v3766
      %v3837 = vpop.f32.mrf.mxu0
      %v3838 = vadd.f32 %v3698, %v3837
      %v3839 = vpop.f32.mrf.mxu0
      %v3840 = vadd.f32 %v3700, %v3839
      %3841 = vmatmul.bf16.gmra.mxu0 %v3769
      %v3842 = vpop.f32.mrf.mxu0
      %v3843 = vadd.f32 %v3703, %v3842
      %v3844 = vpop.f32.mrf.mxu0
      %v3845 = vadd.f32 %v3705, %v3844
      %3846 = vmatmul.bf16.gmra.mxu0 %v3772
      %v3847 = vpop.f32.mrf.mxu0
      %v3848 = vadd.f32 %v3708, %v3847
      %v3849 = vpop.f32.mrf.mxu0
      %v3850 = vadd.f32 %v3710, %v3849
      %3851 = vmatmul.bf16.gmra.mxu0 %v3775
      %v3852 = vpop.f32.mrf.mxu0
      %v3853 = vadd.f32 %v3713, %v3852
      %v3854 = vpop.f32.mrf.mxu0
      %v3855 = vadd.f32 %v3715, %v3854
      %3856 = vmatmul.bf16.gmra.mxu0 %v3778
      %v3857 = vpop.f32.mrf.mxu0
      %v3858 = vadd.f32 %v3718, %v3857
      %v3859 = vpop.f32.mrf.mxu0
      %v3860 = vadd.f32 %v3720, %v3859
      %3861 = vmatmul.bf16.gmra.mxu0 %v3781
      %v3862 = vpop.f32.mrf.mxu0
      %v3863 = vadd.f32 %v3723, %v3862
      %v3864 = vpop.f32.mrf.mxu0
      %v3865 = vadd.f32 %v3725, %v3864
      %3866 = vmatmul.bf16.gmra.mxu0 %v3784
      %v3867 = vpop.f32.mrf.mxu0
      %v3868 = vadd.f32 %v3728, %v3867
      %v3869 = vpop.f32.mrf.mxu0
      %v3870 = vadd.f32 %v3730, %v3869
      %3871 = vmatmul.bf16.gmra.mxu0 %v3787
      %v3872 = vpop.f32.mrf.mxu0
      %v3873 = vadd.f32 %v3733, %v3872
      %v3874 = vpop.f32.mrf.mxu0
      %v3875 = vadd.f32 %v3735, %v3874
      %3876 = vmatmul.bf16.gmra.mxu0 %v3790
      %v3877 = vpop.f32.mrf.mxu0
      %v3878 = vadd.f32 %v3738, %v3877
      %v3879 = vpop.f32.mrf.mxu0
      %v3880 = vadd.f32 %v3740, %v3879
      %3881 = vmatmul.bf16.gmra.mxu0 %v3793
      %v3882 = vpop.f32.mrf.mxu0
      %v3883 = vadd.f32 %v3743, %v3882
      %v3884 = vpop.f32.mrf.mxu0
      %v3885 = vadd.f32 %v3745, %v3884
      %3886 = vdwg.mxu0
      %3887 = vrot.lane.b32.xlu0 %v1915, 112
      %v3888 = vpop.permute.xlu0 %3887
      %3889 = vrot.lane.b32.xlu0 %v1916, 112
      %v3890 = vpop.permute.xlu0 %3889
      %3891 = vrot.lane.b32.xlu0 %v1917, 112
      %v3892 = vpop.permute.xlu0 %3891
      %3893 = vrot.lane.b32.xlu0 %v1918, 112
      %v3894 = vpop.permute.xlu0 %3893
      %3895 = vrot.lane.b32.xlu0 %v1919, 112
      %v3896 = vpop.permute.xlu0 %3895
      %3897 = vrot.lane.b32.xlu0 %v1920, 112
      %v3898 = vpop.permute.xlu0 %3897
      %3899 = vrot.lane.b32.xlu0 %v1921, 112
      %v3900 = vpop.permute.xlu0 %3899
      %3901 = vrot.lane.b32.xlu0 %v1922, 112
      %v3902 = vpop.permute.xlu0 %3901
      %3903 = vrot.lane.b32.xlu0 %v1915, 80
      %v3904 = vpop.permute.xlu0 %3903
      %3905 = vrot.lane.b32.xlu0 %v1916, 80
      %v3906 = vpop.permute.xlu0 %3905
      %3907 = vrot.lane.b32.xlu0 %v1917, 80
      %v3908 = vpop.permute.xlu0 %3907
      %3909 = vrot.lane.b32.xlu0 %v1918, 80
      %v3910 = vpop.permute.xlu0 %3909
      %3911 = vrot.lane.b32.xlu0 %v1919, 80
      %v3912 = vpop.permute.xlu0 %3911
      %3913 = vrot.lane.b32.xlu0 %v1920, 80
      %v3914 = vpop.permute.xlu0 %3913
      %3915 = vrot.lane.b32.xlu0 %v1921, 80
      %v3916 = vpop.permute.xlu0 %3915
      %3917 = vrot.lane.b32.xlu0 %v1922, 80
      %v3918 = vpop.permute.xlu0 %3917
      %v3920 = vsel %vm1939, %v3888, 0
      %v3923 = vsel %vm1939, %v3890, 0
      %v3926 = vsel %vm1939, %v3892, 0
      %v3929 = vsel %vm1939, %v3894, 0
      %v3932 = vsel %vm1939, %v3896, 0
      %v3935 = vsel %vm1939, %v3898, 0
      %v3938 = vsel %vm1939, %v3900, 0
      %v3941 = vsel %vm1939, %v3902, 0
      %v3944 = vsel %vm1939, %v3904, 0
      %v3947 = vsel %vm1939, %v3906, 0
      %v3950 = vsel %vm1939, %v3908, 0
      %v3953 = vsel %vm1939, %v3910, 0
      %v3956 = vsel %vm1939, %v3912, 0
      %v3959 = vsel %vm1939, %v3914, 0
      %v3962 = vsel %vm1939, %v3916, 0
      %v3965 = vsel %vm1939, %v3918, 0
      %3967 = vmatpush.bf16.xpose.msra.mxu0 %v3965
      %3968 = vmatpush.bf16.xpose.msra.mxu0 %v3962
      %3969 = vmatpush.bf16.xpose.msra.mxu0 %v3959
      %3970 = vmatpush.bf16.xpose.msra.mxu0 %v3956
      %3971 = vmatpush.bf16.xpose.msra.mxu0 %v3953
      %3972 = vmatpush.bf16.xpose.msra.mxu0 %v3950
      %3973 = vmatpush.bf16.xpose.msra.mxu0 %v3947
      %3974 = vmatpush.bf16.xpose.msra.mxu0 %v3944
      %3975 = vmatmul.bf16.gmra.mxu0 %v3920
      %v3976 = vpop.f32.mrf.mxu0
      %v3977 = vadd.f32 %v846, %v3976
      %v3978 = vpop.f32.mrf.mxu0
      %v3979 = vadd.f32 %v847, %v3978
      %3980 = vmatmul.bf16.gmra.mxu0 %v3923
      %v3981 = vpop.f32.mrf.mxu0
      %v3982 = vadd.f32 %v848, %v3981
      %v3983 = vpop.f32.mrf.mxu0
      %v3984 = vadd.f32 %v849, %v3983
      %3985 = vmatmul.bf16.gmra.mxu0 %v3926
      %v3986 = vpop.f32.mrf.mxu0
      %v3987 = vadd.f32 %v850, %v3986
      %v3988 = vpop.f32.mrf.mxu0
      %v3989 = vadd.f32 %v851, %v3988
      %3990 = vmatmul.bf16.gmra.mxu0 %v3929
      %v3991 = vpop.f32.mrf.mxu0
      %v3992 = vadd.f32 %v852, %v3991
      %v3993 = vpop.f32.mrf.mxu0
      %v3994 = vadd.f32 %v853, %v3993
      %3995 = vmatmul.bf16.gmra.mxu0 %v3932
      %v3996 = vpop.f32.mrf.mxu0
      %v3997 = vadd.f32 %v854, %v3996
      %v3998 = vpop.f32.mrf.mxu0
      %v3999 = vadd.f32 %v855, %v3998
      %4000 = vmatmul.bf16.gmra.mxu0 %v3935
      %v4001 = vpop.f32.mrf.mxu0
      %v4002 = vadd.f32 %v856, %v4001
      %v4003 = vpop.f32.mrf.mxu0
      %v4004 = vadd.f32 %v857, %v4003
      %4005 = vmatmul.bf16.gmra.mxu0 %v3938
      %v4006 = vpop.f32.mrf.mxu0
      %v4007 = vadd.f32 %v858, %v4006
      %v4008 = vpop.f32.mrf.mxu0
      %v4009 = vadd.f32 %v859, %v4008
      %4010 = vmatmul.bf16.gmra.mxu0 %v3941
      %v4011 = vpop.f32.mrf.mxu0
      %v4012 = vadd.f32 %v860, %v4011
      %v4013 = vpop.f32.mrf.mxu0
      %v4014 = vadd.f32 %v861, %v4013
      %4015 = vdwg.mxu0
      %4016 = vrot.lane.b32.xlu0 %v2069, 112
      %v4017 = vpop.permute.xlu0 %4016
      %4018 = vrot.lane.b32.xlu0 %v2070, 112
      %v4019 = vpop.permute.xlu0 %4018
      %4020 = vrot.lane.b32.xlu0 %v2071, 112
      %v4021 = vpop.permute.xlu0 %4020
      %4022 = vrot.lane.b32.xlu0 %v2072, 112
      %v4023 = vpop.permute.xlu0 %4022
      %4024 = vrot.lane.b32.xlu0 %v2073, 112
      %v4025 = vpop.permute.xlu0 %4024
      %4026 = vrot.lane.b32.xlu0 %v2074, 112
      %v4027 = vpop.permute.xlu0 %4026
      %4028 = vrot.lane.b32.xlu0 %v2075, 112
      %v4029 = vpop.permute.xlu0 %4028
      %4030 = vrot.lane.b32.xlu0 %v2076, 112
      %v4031 = vpop.permute.xlu0 %4030
      %4032 = vrot.lane.b32.xlu0 %v2069, 80
      %v4033 = vpop.permute.xlu0 %4032
      %4034 = vrot.lane.b32.xlu0 %v2070, 80
      %v4035 = vpop.permute.xlu0 %4034
      %4036 = vrot.lane.b32.xlu0 %v2071, 80
      %v4037 = vpop.permute.xlu0 %4036
      %4038 = vrot.lane.b32.xlu0 %v2072, 80
      %v4039 = vpop.permute.xlu0 %4038
      %4040 = vrot.lane.b32.xlu0 %v2073, 80
      %v4041 = vpop.permute.xlu0 %4040
      %4042 = vrot.lane.b32.xlu0 %v2074, 80
      %v4043 = vpop.permute.xlu0 %4042
      %4044 = vrot.lane.b32.xlu0 %v2075, 80
      %v4045 = vpop.permute.xlu0 %4044
      %4046 = vrot.lane.b32.xlu0 %v2076, 80
      %v4047 = vpop.permute.xlu0 %4046
      %v4049 = vsel %vm1939, %v4017, 0
      %v4052 = vsel %vm1939, %v4019, 0
      %v4055 = vsel %vm1939, %v4021, 0
      %v4058 = vsel %vm1939, %v4023, 0
      %v4061 = vsel %vm1939, %v4025, 0
      %v4064 = vsel %vm1939, %v4027, 0
      %v4067 = vsel %vm1939, %v4029, 0
      %v4070 = vsel %vm1939, %v4031, 0
      %v4073 = vsel %vm1939, %v4033, 0
      %v4076 = vsel %vm1939, %v4035, 0
      %v4079 = vsel %vm1939, %v4037, 0
      %v4082 = vsel %vm1939, %v4039, 0
      %v4085 = vsel %vm1939, %v4041, 0
      %v4088 = vsel %vm1939, %v4043, 0
      %v4091 = vsel %vm1939, %v4045, 0
      %v4094 = vsel %vm1939, %v4047, 0
      %4096 = vmatpush.bf16.xpose.msra.mxu0 %v4094
      %4097 = vmatpush.bf16.xpose.msra.mxu0 %v4091
      %4098 = vmatpush.bf16.xpose.msra.mxu0 %v4088
      %4099 = vmatpush.bf16.xpose.msra.mxu0 %v4085
      %4100 = vmatpush.bf16.xpose.msra.mxu0 %v4082
      %4101 = vmatpush.bf16.xpose.msra.mxu0 %v4079
      %4102 = vmatpush.bf16.xpose.msra.mxu0 %v4076
      %4103 = vmatpush.bf16.xpose.msra.mxu0 %v4073
      %4104 = vmatmul.bf16.gmra.mxu0 %v4049
      %v4105 = vpop.f32.mrf.mxu0
      %v4106 = vadd.f32 %v846, %v4105
      %v4107 = vpop.f32.mrf.mxu0
      %v4108 = vadd.f32 %v847, %v4107
      %4109 = vmatmul.bf16.gmra.mxu0 %v4052
      %v4110 = vpop.f32.mrf.mxu0
      %v4111 = vadd.f32 %v848, %v4110
      %v4112 = vpop.f32.mrf.mxu0
      %v4113 = vadd.f32 %v849, %v4112
      %4114 = vmatmul.bf16.gmra.mxu0 %v4055
      %v4115 = vpop.f32.mrf.mxu0
      %v4116 = vadd.f32 %v850, %v4115
      %v4117 = vpop.f32.mrf.mxu0
      %v4118 = vadd.f32 %v851, %v4117
      %4119 = vmatmul.bf16.gmra.mxu0 %v4058
      %v4120 = vpop.f32.mrf.mxu0
      %v4121 = vadd.f32 %v852, %v4120
      %v4122 = vpop.f32.mrf.mxu0
      %v4123 = vadd.f32 %v853, %v4122
      %4124 = vmatmul.bf16.gmra.mxu0 %v4061
      %v4125 = vpop.f32.mrf.mxu0
      %v4126 = vadd.f32 %v854, %v4125
      %v4127 = vpop.f32.mrf.mxu0
      %v4128 = vadd.f32 %v855, %v4127
      %4129 = vmatmul.bf16.gmra.mxu0 %v4064
      %v4130 = vpop.f32.mrf.mxu0
      %v4131 = vadd.f32 %v856, %v4130
      %v4132 = vpop.f32.mrf.mxu0
      %v4133 = vadd.f32 %v857, %v4132
      %4134 = vmatmul.bf16.gmra.mxu0 %v4067
      %v4135 = vpop.f32.mrf.mxu0
      %v4136 = vadd.f32 %v858, %v4135
      %v4137 = vpop.f32.mrf.mxu0
      %v4138 = vadd.f32 %v859, %v4137
      %4139 = vmatmul.bf16.gmra.mxu0 %v4070
      %v4140 = vpop.f32.mrf.mxu0
      %v4141 = vadd.f32 %v860, %v4140
      %v4142 = vpop.f32.mrf.mxu0
      %v4143 = vadd.f32 %v861, %v4142
      %4144 = vdwg.mxu0
      %4145 = vmax.xlane.f32.xlu0 %v3977
      %v4146 = vpop.xlane.xlu0 %4145
      %4147 = vmax.xlane.f32.xlu0 %v3979
      %v4148 = vpop.xlane.xlu0 %4147
      %4149 = vmax.xlane.f32.xlu0 %v3982
      %v4150 = vpop.xlane.xlu0 %4149
      %4151 = vmax.xlane.f32.xlu0 %v3984
      %v4152 = vpop.xlane.xlu0 %4151
      %4153 = vmax.xlane.f32.xlu0 %v3987
      %v4154 = vpop.xlane.xlu0 %4153
      %4155 = vmax.xlane.f32.xlu0 %v3989
      %v4156 = vpop.xlane.xlu0 %4155
      %4157 = vmax.xlane.f32.xlu0 %v3992
      %v4158 = vpop.xlane.xlu0 %4157
      %4159 = vmax.xlane.f32.xlu0 %v3994
      %v4160 = vpop.xlane.xlu0 %4159
      %4161 = vmax.xlane.f32.xlu0 %v3997
      %v4162 = vpop.xlane.xlu0 %4161
      %4163 = vmax.xlane.f32.xlu0 %v3999
      %v4164 = vpop.xlane.xlu0 %4163
      %4165 = vmax.xlane.f32.xlu0 %v4002
      %v4166 = vpop.xlane.xlu0 %4165
      %4167 = vmax.xlane.f32.xlu0 %v4004
      %v4168 = vpop.xlane.xlu0 %4167
      %4169 = vmax.xlane.f32.xlu0 %v4007
      %v4170 = vpop.xlane.xlu0 %4169
      %4171 = vmax.xlane.f32.xlu0 %v4009
      %v4172 = vpop.xlane.xlu0 %4171
      %4173 = vmax.xlane.f32.xlu0 %v4012
      %v4174 = vpop.xlane.xlu0 %4173
      %4175 = vmax.xlane.f32.xlu0 %v4014
      %v4176 = vpop.xlane.xlu0 %4175
      %4177 = vmax.xlane.f32.xlu0 %v4106
      %v4178 = vpop.xlane.xlu0 %4177
      %4179 = vmax.xlane.f32.xlu0 %v4108
      %v4180 = vpop.xlane.xlu0 %4179
      %4181 = vmax.xlane.f32.xlu0 %v4111
      %v4182 = vpop.xlane.xlu0 %4181
      %4183 = vmax.xlane.f32.xlu0 %v4113
      %v4184 = vpop.xlane.xlu0 %4183
      %4185 = vmax.xlane.f32.xlu0 %v4116
      %v4186 = vpop.xlane.xlu0 %4185
      %4187 = vmax.xlane.f32.xlu0 %v4118
      %v4188 = vpop.xlane.xlu0 %4187
      %4189 = vmax.xlane.f32.xlu0 %v4121
      %v4190 = vpop.xlane.xlu0 %4189
      %4191 = vmax.xlane.f32.xlu0 %v4123
      %v4192 = vpop.xlane.xlu0 %4191
      %4193 = vmax.xlane.f32.xlu0 %v4126
      %v4194 = vpop.xlane.xlu0 %4193
      %4195 = vmax.xlane.f32.xlu0 %v4128
      %v4196 = vpop.xlane.xlu0 %4195
      %4197 = vmax.xlane.f32.xlu0 %v4131
      %v4198 = vpop.xlane.xlu0 %4197
      %4199 = vmax.xlane.f32.xlu0 %v4133
      %v4200 = vpop.xlane.xlu0 %4199
      %4201 = vmax.xlane.f32.xlu0 %v4136
      %v4202 = vpop.xlane.xlu0 %4201
      %4203 = vmax.xlane.f32.xlu0 %v4138
      %v4204 = vpop.xlane.xlu0 %4203
      %4205 = vmax.xlane.f32.xlu0 %v4141
      %v4206 = vpop.xlane.xlu0 %4205
      %4207 = vmax.xlane.f32.xlu0 %v4143
      %v4208 = vpop.xlane.xlu0 %4207
      %v4209 = vsub.f32 %v3977, %v4146
      %v4210 = vsub.f32 %v3979, %v4148
      %v4211 = vsub.f32 %v3982, %v4150
      %v4212 = vsub.f32 %v3984, %v4152
      %v4213 = vsub.f32 %v3987, %v4154
      %v4214 = vsub.f32 %v3989, %v4156
      %v4215 = vsub.f32 %v3992, %v4158
      %v4216 = vsub.f32 %v3994, %v4160
      %v4217 = vsub.f32 %v3997, %v4162
      %v4218 = vsub.f32 %v3999, %v4164
      %v4219 = vsub.f32 %v4002, %v4166
      %v4220 = vsub.f32 %v4004, %v4168
      %v4221 = vsub.f32 %v4007, %v4170
      %v4222 = vsub.f32 %v4009, %v4172
      %v4223 = vsub.f32 %v4012, %v4174
      %v4224 = vsub.f32 %v4014, %v4176
      %v4225 = vsub.f32 %v4106, %v4178
      %v4226 = vsub.f32 %v4108, %v4180
      %v4227 = vsub.f32 %v4111, %v4182
      %v4228 = vsub.f32 %v4113, %v4184
      %v4229 = vsub.f32 %v4116, %v4186
      %v4230 = vsub.f32 %v4118, %v4188
      %v4231 = vsub.f32 %v4121, %v4190
      %v4232 = vsub.f32 %v4123, %v4192
      %v4233 = vsub.f32 %v4126, %v4194
      %v4234 = vsub.f32 %v4128, %v4196
      %v4235 = vsub.f32 %v4131, %v4198
      %v4236 = vsub.f32 %v4133, %v4200
      %v4237 = vsub.f32 %v4136, %v4202
      %v4238 = vsub.f32 %v4138, %v4204
      %v4239 = vsub.f32 %v4141, %v4206
      %v4240 = vsub.f32 %v4143, %v4208
      %v4241 = vmul.f32 %v4209, 1.442695
      %v4242 = vpow.pop %v4241
      %v4243 = vmul.f32 %v4210, 1.442695
      %v4244 = vpow.pop %v4243
      %v4245 = vmul.f32 %v4211, 1.442695
      %v4246 = vpow.pop %v4245
      %v4247 = vmul.f32 %v4212, 1.442695
      %v4248 = vpow.pop %v4247
      %v4249 = vmul.f32 %v4213, 1.442695
      %v4250 = vpow.pop %v4249
      %v4251 = vmul.f32 %v4214, 1.442695
      %v4252 = vpow.pop %v4251
      %v4253 = vmul.f32 %v4215, 1.442695
      %v4254 = vpow.pop %v4253
      %v4255 = vmul.f32 %v4216, 1.442695
      %v4256 = vpow.pop %v4255
      %v4257 = vmul.f32 %v4217, 1.442695
      %v4258 = vpow.pop %v4257
      %v4259 = vmul.f32 %v4218, 1.442695
      %v4260 = vpow.pop %v4259
      %v4261 = vmul.f32 %v4219, 1.442695
      %v4262 = vpow.pop %v4261
      %v4263 = vmul.f32 %v4220, 1.442695
      %v4264 = vpow.pop %v4263
      %v4265 = vmul.f32 %v4221, 1.442695
      %v4266 = vpow.pop %v4265
      %v4267 = vmul.f32 %v4222, 1.442695
      %v4268 = vpow.pop %v4267
      %v4269 = vmul.f32 %v4223, 1.442695
      %v4270 = vpow.pop %v4269
      %v4271 = vmul.f32 %v4224, 1.442695
      %v4272 = vpow.pop %v4271
      %v4273 = vmul.f32 %v4225, 1.442695
      %v4274 = vpow.pop %v4273
      %v4275 = vmul.f32 %v4226, 1.442695
      %v4276 = vpow.pop %v4275
      %v4277 = vmul.f32 %v4227, 1.442695
      %v4278 = vpow.pop %v4277
      %v4279 = vmul.f32 %v4228, 1.442695
      %v4280 = vpow.pop %v4279
      %v4281 = vmul.f32 %v4229, 1.442695
      %v4282 = vpow.pop %v4281
      %v4283 = vmul.f32 %v4230, 1.442695
      %v4284 = vpow.pop %v4283
      %v4285 = vmul.f32 %v4231, 1.442695
      %v4286 = vpow.pop %v4285
      %v4287 = vmul.f32 %v4232, 1.442695
      %v4288 = vpow.pop %v4287
      %v4289 = vmul.f32 %v4233, 1.442695
      %v4290 = vpow.pop %v4289
      %v4291 = vmul.f32 %v4234, 1.442695
      %v4292 = vpow.pop %v4291
      %v4293 = vmul.f32 %v4235, 1.442695
      %v4294 = vpow.pop %v4293
      %v4295 = vmul.f32 %v4236, 1.442695
      %v4296 = vpow.pop %v4295
      %v4297 = vmul.f32 %v4237, 1.442695
      %v4298 = vpow.pop %v4297
      %v4299 = vmul.f32 %v4238, 1.442695
      %v4300 = vpow.pop %v4299
      %v4301 = vmul.f32 %v4239, 1.442695
      %v4302 = vpow.pop %v4301
      %v4303 = vmul.f32 %v4240, 1.442695
      %v4304 = vpow.pop %v4303
      %4305 = vadd.xlane.f32.xlu0 %v4242
      %v4306 = vpop.xlane.xlu0 %4305
      %4307 = vadd.xlane.f32.xlu0 %v4244
      %v4308 = vpop.xlane.xlu0 %4307
      %4309 = vadd.xlane.f32.xlu0 %v4246
      %v4310 = vpop.xlane.xlu0 %4309
      %4311 = vadd.xlane.f32.xlu0 %v4248
      %v4312 = vpop.xlane.xlu0 %4311
      %4313 = vadd.xlane.f32.xlu0 %v4250
      %v4314 = vpop.xlane.xlu0 %4313
      %4315 = vadd.xlane.f32.xlu0 %v4252
      %v4316 = vpop.xlane.xlu0 %4315
      %4317 = vadd.xlane.f32.xlu0 %v4254
      %v4318 = vpop.xlane.xlu0 %4317
      %4319 = vadd.xlane.f32.xlu0 %v4256
      %v4320 = vpop.xlane.xlu0 %4319
      %4321 = vadd.xlane.f32.xlu0 %v4258
      %v4322 = vpop.xlane.xlu0 %4321
      %4323 = vadd.xlane.f32.xlu0 %v4260
      %v4324 = vpop.xlane.xlu0 %4323
      %4325 = vadd.xlane.f32.xlu0 %v4262
      %v4326 = vpop.xlane.xlu0 %4325
      %4327 = vadd.xlane.f32.xlu0 %v4264
      %v4328 = vpop.xlane.xlu0 %4327
      %4329 = vadd.xlane.f32.xlu0 %v4266
      %v4330 = vpop.xlane.xlu0 %4329
      %4331 = vadd.xlane.f32.xlu0 %v4268
      %v4332 = vpop.xlane.xlu0 %4331
      %4333 = vadd.xlane.f32.xlu0 %v4270
      %v4334 = vpop.xlane.xlu0 %4333
      %4335 = vadd.xlane.f32.xlu0 %v4272
      %v4336 = vpop.xlane.xlu0 %4335
      %4337 = vadd.xlane.f32.xlu0 %v4274
      %v4338 = vpop.xlane.xlu0 %4337
      %4339 = vadd.xlane.f32.xlu0 %v4276
      %v4340 = vpop.xlane.xlu0 %4339
      %4341 = vadd.xlane.f32.xlu0 %v4278
      %v4342 = vpop.xlane.xlu0 %4341
      %4343 = vadd.xlane.f32.xlu0 %v4280
      %v4344 = vpop.xlane.xlu0 %4343
      %4345 = vadd.xlane.f32.xlu0 %v4282
      %v4346 = vpop.xlane.xlu0 %4345
      %4347 = vadd.xlane.f32.xlu0 %v4284
      %v4348 = vpop.xlane.xlu0 %4347
      %4349 = vadd.xlane.f32.xlu0 %v4286
      %v4350 = vpop.xlane.xlu0 %4349
      %4351 = vadd.xlane.f32.xlu0 %v4288
      %v4352 = vpop.xlane.xlu0 %4351
      %4353 = vadd.xlane.f32.xlu0 %v4290
      %v4354 = vpop.xlane.xlu0 %4353
      %4355 = vadd.xlane.f32.xlu0 %v4292
      %v4356 = vpop.xlane.xlu0 %4355
      %4357 = vadd.xlane.f32.xlu0 %v4294
      %v4358 = vpop.xlane.xlu0 %4357
      %4359 = vadd.xlane.f32.xlu0 %v4296
      %v4360 = vpop.xlane.xlu0 %4359
      %4361 = vadd.xlane.f32.xlu0 %v4298
      %v4362 = vpop.xlane.xlu0 %4361
      %4363 = vadd.xlane.f32.xlu0 %v4300
      %v4364 = vpop.xlane.xlu0 %4363
      %4365 = vadd.xlane.f32.xlu0 %v4302
      %v4366 = vpop.xlane.xlu0 %4365
      %4367 = vadd.xlane.f32.xlu0 %v4304
      %v4368 = vpop.xlane.xlu0 %4367
      %v4369 = vrcp.pop %v4306
      %v4370 = vrcp.pop %v4308
      %v4371 = vrcp.pop %v4310
      %v4372 = vrcp.pop %v4312
      %v4373 = vrcp.pop %v4314
      %v4374 = vrcp.pop %v4316
      %v4375 = vrcp.pop %v4318
      %v4376 = vrcp.pop %v4320
      %v4377 = vrcp.pop %v4322
      %v4378 = vrcp.pop %v4324
      %v4379 = vrcp.pop %v4326
      %v4380 = vrcp.pop %v4328
      %v4381 = vrcp.pop %v4330
      %v4382 = vrcp.pop %v4332
      %v4383 = vrcp.pop %v4334
      %v4384 = vrcp.pop %v4336
      %v4385 = vrcp.pop %v4338
      %v4386 = vrcp.pop %v4340
      %v4387 = vrcp.pop %v4342
      %v4388 = vrcp.pop %v4344
      %v4389 = vrcp.pop %v4346
      %v4390 = vrcp.pop %v4348
      %v4391 = vrcp.pop %v4350
      %v4392 = vrcp.pop %v4352
      %v4393 = vrcp.pop %v4354
      %v4394 = vrcp.pop %v4356
      %v4395 = vrcp.pop %v4358
      %v4396 = vrcp.pop %v4360
      %v4397 = vrcp.pop %v4362
      %v4398 = vrcp.pop %v4364
      %v4399 = vrcp.pop %v4366
      %v4400 = vrcp.pop %v4368
      %v4401 = vmul.f32 %v4242, %v4369
      %v4402 = vmul.f32 %v4244, %v4370
      %v4403 = vmul.f32 %v4246, %v4371
      %v4404 = vmul.f32 %v4248, %v4372
      %v4405 = vmul.f32 %v4250, %v4373
      %v4406 = vmul.f32 %v4252, %v4374
      %v4407 = vmul.f32 %v4254, %v4375
      %v4408 = vmul.f32 %v4256, %v4376
      %v4409 = vmul.f32 %v4258, %v4377
      %v4410 = vmul.f32 %v4260, %v4378
      %v4411 = vmul.f32 %v4262, %v4379
      %v4412 = vmul.f32 %v4264, %v4380
      %v4413 = vmul.f32 %v4266, %v4381
      %v4414 = vmul.f32 %v4268, %v4382
      %v4415 = vmul.f32 %v4270, %v4383
      %v4416 = vmul.f32 %v4272, %v4384
      %v4417 = vmul.f32 %v4274, %v4385
      %v4418 = vmul.f32 %v4276, %v4386
      %v4419 = vmul.f32 %v4278, %v4387
      %v4420 = vmul.f32 %v4280, %v4388
      %v4421 = vmul.f32 %v4282, %v4389
      %v4422 = vmul.f32 %v4284, %v4390
      %v4423 = vmul.f32 %v4286, %v4391
      %v4424 = vmul.f32 %v4288, %v4392
      %v4425 = vmul.f32 %v4290, %v4393
      %v4426 = vmul.f32 %v4292, %v4394
      %v4427 = vmul.f32 %v4294, %v4395
      %v4428 = vmul.f32 %v4296, %v4396
      %v4429 = vmul.f32 %v4298, %v4397
      %v4430 = vmul.f32 %v4300, %v4398
      %v4431 = vmul.f32 %v4302, %v4399
      %v4432 = vmul.f32 %v4304, %v4400
      %v4433 = vpack.c.bf16 %v4401, %v4401
      %v4434 = vpack.c.bf16 %v4402, %v4402
      %v4435 = vpack.c.bf16 %v4403, %v4403
      %v4436 = vpack.c.bf16 %v4404, %v4404
      %v4437 = vpack.c.bf16 %v4405, %v4405
      %v4438 = vpack.c.bf16 %v4406, %v4406
      %v4439 = vpack.c.bf16 %v4407, %v4407
      %v4440 = vpack.c.bf16 %v4408, %v4408
      %v4441 = vpack.c.bf16 %v4409, %v4409
      %v4442 = vpack.c.bf16 %v4410, %v4410
      %v4443 = vpack.c.bf16 %v4411, %v4411
      %v4444 = vpack.c.bf16 %v4412, %v4412
      %v4445 = vpack.c.bf16 %v4413, %v4413
      %v4446 = vpack.c.bf16 %v4414, %v4414
      %v4447 = vpack.c.bf16 %v4415, %v4415
      %v4448 = vpack.c.bf16 %v4416, %v4416
      %v4449 = vpack.c.bf16 %v4417, %v4417
      %v4450 = vpack.c.bf16 %v4418, %v4418
      %v4451 = vpack.c.bf16 %v4419, %v4419
      %v4452 = vpack.c.bf16 %v4420, %v4420
      %v4453 = vpack.c.bf16 %v4421, %v4421
      %v4454 = vpack.c.bf16 %v4422, %v4422
      %v4455 = vpack.c.bf16 %v4423, %v4423
      %v4456 = vpack.c.bf16 %v4424, %v4424
      %v4457 = vpack.c.bf16 %v4425, %v4425
      %v4458 = vpack.c.bf16 %v4426, %v4426
      %v4459 = vpack.c.bf16 %v4427, %v4427
      %v4460 = vpack.c.bf16 %v4428, %v4428
      %v4461 = vpack.c.bf16 %v4429, %v4429
      %v4462 = vpack.c.bf16 %v4430, %v4430
      %v4463 = vpack.c.bf16 %v4431, %v4431
      %v4464 = vpack.c.bf16 %v4432, %v4432
      %v4481 = vunpack.c.l.b16 %v4433
      %v4482 = vunpack.c.l.b16 %v4434
      %v4483 = vunpack.c.l.b16 %v4435
      %v4484 = vunpack.c.l.b16 %v4436
      %v4485 = vunpack.c.l.b16 %v4437
      %v4486 = vunpack.c.l.b16 %v4438
      %v4487 = vunpack.c.l.b16 %v4439
      %v4488 = vunpack.c.l.b16 %v4440
      %v4489 = vunpack.c.l.b16 %v4441
      %v4490 = vunpack.c.l.b16 %v4442
      %v4491 = vunpack.c.l.b16 %v4443
      %v4492 = vunpack.c.l.b16 %v4444
      %v4493 = vunpack.c.l.b16 %v4445
      %v4494 = vunpack.c.l.b16 %v4446
      %v4495 = vunpack.c.l.b16 %v4447
      %v4496 = vunpack.c.l.b16 %v4448
      %v4497 = vpack.c.b16 %v4482, %v4481
      %v4498 = vpack.c.b16 %v4484, %v4483
      %v4499 = vpack.c.b16 %v4486, %v4485
      %v4500 = vpack.c.b16 %v4488, %v4487
      %v4501 = vpack.c.b16 %v4490, %v4489
      %v4502 = vpack.c.b16 %v4492, %v4491
      %v4503 = vpack.c.b16 %v4494, %v4493
      %v4504 = vpack.c.b16 %v4496, %v4495
      %4513 = vrot.lane.b32.xlu0 %v1915, 48
      %v4514 = vpop.permute.xlu0 %4513
      %4515 = vrot.lane.b32.xlu0 %v1916, 48
      %v4516 = vpop.permute.xlu0 %4515
      %4517 = vrot.lane.b32.xlu0 %v1917, 48
      %v4518 = vpop.permute.xlu0 %4517
      %4519 = vrot.lane.b32.xlu0 %v1918, 48
      %v4520 = vpop.permute.xlu0 %4519
      %4521 = vrot.lane.b32.xlu0 %v1919, 48
      %v4522 = vpop.permute.xlu0 %4521
      %4523 = vrot.lane.b32.xlu0 %v1920, 48
      %v4524 = vpop.permute.xlu0 %4523
      %4525 = vrot.lane.b32.xlu0 %v1921, 48
      %v4526 = vpop.permute.xlu0 %4525
      %4527 = vrot.lane.b32.xlu0 %v1922, 48
      %v4528 = vpop.permute.xlu0 %4527
      %4537 = vmatpush.bf16.msra.mxu0 %v4528
      %4538 = vmatpush.bf16.msra.mxu0 %v4526
      %4539 = vmatpush.bf16.msra.mxu0 %v4524
      %4540 = vmatpush.bf16.msra.mxu0 %v4522
      %4541 = vmatpush.bf16.msra.mxu0 %v4520
      %4542 = vmatpush.bf16.msra.mxu0 %v4518
      %4543 = vmatpush.bf16.msra.mxu0 %v4516
      %4544 = vmatpush.bf16.msra.mxu0 %v4514
      %4545 = vmatmul.bf16.gmra.mxu0 %v4497
      %v4546 = vpop.f32.mrf.mxu0
      %v4547 = vadd.f32 0.0, %v4546
      %v4548 = vpop.f32.mrf.mxu0
      %v4549 = vadd.f32 0.0, %v4548
      %4550 = vmatmul.bf16.gmra.mxu0 %v4498
      %v4551 = vpop.f32.mrf.mxu0
      %v4552 = vadd.f32 0.0, %v4551
      %v4553 = vpop.f32.mrf.mxu0
      %v4554 = vadd.f32 0.0, %v4553
      %4555 = vmatmul.bf16.gmra.mxu0 %v4499
      %v4556 = vpop.f32.mrf.mxu0
      %v4557 = vadd.f32 0.0, %v4556
      %v4558 = vpop.f32.mrf.mxu0
      %v4559 = vadd.f32 0.0, %v4558
      %4560 = vmatmul.bf16.gmra.mxu0 %v4500
      %v4561 = vpop.f32.mrf.mxu0
      %v4562 = vadd.f32 0.0, %v4561
      %v4563 = vpop.f32.mrf.mxu0
      %v4564 = vadd.f32 0.0, %v4563
      %4565 = vmatmul.bf16.gmra.mxu0 %v4501
      %v4566 = vpop.f32.mrf.mxu0
      %v4567 = vadd.f32 0.0, %v4566
      %v4568 = vpop.f32.mrf.mxu0
      %v4569 = vadd.f32 0.0, %v4568
      %4570 = vmatmul.bf16.gmra.mxu0 %v4502
      %v4571 = vpop.f32.mrf.mxu0
      %v4572 = vadd.f32 0.0, %v4571
      %v4573 = vpop.f32.mrf.mxu0
      %v4574 = vadd.f32 0.0, %v4573
      %4575 = vmatmul.bf16.gmra.mxu0 %v4503
      %v4576 = vpop.f32.mrf.mxu0
      %v4577 = vadd.f32 0.0, %v4576
      %v4578 = vpop.f32.mrf.mxu0
      %v4579 = vadd.f32 0.0, %v4578
      %4580 = vmatmul.bf16.gmra.mxu0 %v4504
      %v4581 = vpop.f32.mrf.mxu0
      %v4582 = vadd.f32 0.0, %v4581
      %v4583 = vpop.f32.mrf.mxu0
      %v4584 = vadd.f32 0.0, %v4583
      %4585 = vdwg.mxu0
      %v4602 = vunpack.c.l.b16 %v4449
      %v4603 = vunpack.c.l.b16 %v4450
      %v4604 = vunpack.c.l.b16 %v4451
      %v4605 = vunpack.c.l.b16 %v4452
      %v4606 = vunpack.c.l.b16 %v4453
      %v4607 = vunpack.c.l.b16 %v4454
      %v4608 = vunpack.c.l.b16 %v4455
      %v4609 = vunpack.c.l.b16 %v4456
      %v4610 = vunpack.c.l.b16 %v4457
      %v4611 = vunpack.c.l.b16 %v4458
      %v4612 = vunpack.c.l.b16 %v4459
      %v4613 = vunpack.c.l.b16 %v4460
      %v4614 = vunpack.c.l.b16 %v4461
      %v4615 = vunpack.c.l.b16 %v4462
      %v4616 = vunpack.c.l.b16 %v4463
      %v4617 = vunpack.c.l.b16 %v4464
      %v4618 = vpack.c.b16 %v4603, %v4602
      %v4619 = vpack.c.b16 %v4605, %v4604
      %v4620 = vpack.c.b16 %v4607, %v4606
      %v4621 = vpack.c.b16 %v4609, %v4608
      %v4622 = vpack.c.b16 %v4611, %v4610
      %v4623 = vpack.c.b16 %v4613, %v4612
      %v4624 = vpack.c.b16 %v4615, %v4614
      %v4625 = vpack.c.b16 %v4617, %v4616
      %4634 = vrot.lane.b32.xlu0 %v2069, 48
      %v4635 = vpop.permute.xlu0 %4634
      %4636 = vrot.lane.b32.xlu0 %v2070, 48
      %v4637 = vpop.permute.xlu0 %4636
      %4638 = vrot.lane.b32.xlu0 %v2071, 48
      %v4639 = vpop.permute.xlu0 %4638
      %4640 = vrot.lane.b32.xlu0 %v2072, 48
      %v4641 = vpop.permute.xlu0 %4640
      %4642 = vrot.lane.b32.xlu0 %v2073, 48
      %v4643 = vpop.permute.xlu0 %4642
      %4644 = vrot.lane.b32.xlu0 %v2074, 48
      %v4645 = vpop.permute.xlu0 %4644
      %4646 = vrot.lane.b32.xlu0 %v2075, 48
      %v4647 = vpop.permute.xlu0 %4646
      %4648 = vrot.lane.b32.xlu0 %v2076, 48
      %v4649 = vpop.permute.xlu0 %4648
      %4658 = vmatpush.bf16.msra.mxu0 %v4649
      %4659 = vmatpush.bf16.msra.mxu0 %v4647
      %4660 = vmatpush.bf16.msra.mxu0 %v4645
      %4661 = vmatpush.bf16.msra.mxu0 %v4643
      %4662 = vmatpush.bf16.msra.mxu0 %v4641
      %4663 = vmatpush.bf16.msra.mxu0 %v4639
      %4664 = vmatpush.bf16.msra.mxu0 %v4637
      %4665 = vmatpush.bf16.msra.mxu0 %v4635
      %4666 = vmatmul.bf16.gmra.mxu0 %v4618
      %v4667 = vpop.f32.mrf.mxu0
      %v4668 = vadd.f32 0.0, %v4667
      %v4669 = vpop.f32.mrf.mxu0
      %v4670 = vadd.f32 0.0, %v4669
      %4671 = vmatmul.bf16.gmra.mxu0 %v4619
      %v4672 = vpop.f32.mrf.mxu0
      %v4673 = vadd.f32 0.0, %v4672
      %v4674 = vpop.f32.mrf.mxu0
      %v4675 = vadd.f32 0.0, %v4674
      %4676 = vmatmul.bf16.gmra.mxu0 %v4620
      %v4677 = vpop.f32.mrf.mxu0
      %v4678 = vadd.f32 0.0, %v4677
      %v4679 = vpop.f32.mrf.mxu0
      %v4680 = vadd.f32 0.0, %v4679
      %4681 = vmatmul.bf16.gmra.mxu0 %v4621
      %v4682 = vpop.f32.mrf.mxu0
      %v4683 = vadd.f32 0.0, %v4682
      %v4684 = vpop.f32.mrf.mxu0
      %v4685 = vadd.f32 0.0, %v4684
      %4686 = vmatmul.bf16.gmra.mxu0 %v4622
      %v4687 = vpop.f32.mrf.mxu0
      %v4688 = vadd.f32 0.0, %v4687
      %v4689 = vpop.f32.mrf.mxu0
      %v4690 = vadd.f32 0.0, %v4689
      %4691 = vmatmul.bf16.gmra.mxu0 %v4623
      %v4692 = vpop.f32.mrf.mxu0
      %v4693 = vadd.f32 0.0, %v4692
      %v4694 = vpop.f32.mrf.mxu0
      %v4695 = vadd.f32 0.0, %v4694
      %4696 = vmatmul.bf16.gmra.mxu0 %v4624
      %v4697 = vpop.f32.mrf.mxu0
      %v4698 = vadd.f32 0.0, %v4697
      %v4699 = vpop.f32.mrf.mxu0
      %v4700 = vadd.f32 0.0, %v4699
      %4701 = vmatmul.bf16.gmra.mxu0 %v4625
      %v4702 = vpop.f32.mrf.mxu0
      %v4703 = vadd.f32 0.0, %v4702
      %v4704 = vpop.f32.mrf.mxu0
      %v4705 = vadd.f32 0.0, %v4704
      %4706 = vdwg.mxu0
      %v4707 = vpack.c.bf16 %v4549, %v4547
      %v4708 = vpack.c.bf16 %v4554, %v4552
      %v4709 = vpack.c.bf16 %v4559, %v4557
      %v4710 = vpack.c.bf16 %v4564, %v4562
      %v4711 = vpack.c.bf16 %v4569, %v4567
      %v4712 = vpack.c.bf16 %v4574, %v4572
      %v4713 = vpack.c.bf16 %v4579, %v4577
      %v4714 = vpack.c.bf16 %v4584, %v4582
      %v4715 = vpack.c.bf16 %v4670, %v4668
      %v4716 = vpack.c.bf16 %v4675, %v4673
      %v4717 = vpack.c.bf16 %v4680, %v4678
      %v4718 = vpack.c.bf16 %v4685, %v4683
      %v4719 = vpack.c.bf16 %v4690, %v4688
      %v4720 = vpack.c.bf16 %v4695, %v4693
      %v4721 = vpack.c.bf16 %v4700, %v4698
      %v4722 = vpack.c.bf16 %v4705, %v4703
      %v4723 = vld [vmem:[%s707 + $0x8] sm:$0xf]
      %v4725 = vsel %vm1939, %v4707, 0
      %v4728 = vsel %vm1939, %v4708, 0
      %v4731 = vsel %vm1939, %v4709, 0
      %v4734 = vsel %vm1939, %v4710, 0
      %v4737 = vsel %vm1939, %v4711, 0
      %v4740 = vsel %vm1939, %v4712, 0
      %v4743 = vsel %vm1939, %v4713, 0
      %v4746 = vsel %vm1939, %v4714, 0
      %v4749 = vsel %vm1939, %v4715, 0
      %v4752 = vsel %vm1939, %v4716, 0
      %v4755 = vsel %vm1939, %v4717, 0
      %v4758 = vsel %vm1939, %v4718, 0
      %v4761 = vsel %vm1939, %v4719, 0
      %v4764 = vsel %vm1939, %v4720, 0
      %v4767 = vsel %vm1939, %v4721, 0
      %v4770 = vsel %vm1939, %v4722, 0
      %v4773 = vsel %vm3654, %v4723, 0
      %4775 = vmatpush.bf16.msra.mxu0 0
      %4776 = vmatpush.bf16.msra.mxu0 0
      %4777 = vmatpush.bf16.msra.mxu0 0
      %4778 = vmatpush.bf16.msra.mxu0 0
      %4779 = vmatpush.bf16.msra.mxu0 0
      %4780 = vmatpush.bf16.msra.mxu0 0
      %4781 = vmatpush.bf16.msra.mxu0 0
      %4782 = vmatpush.bf16.msra.mxu0 %v4773
      %4783 = vmatmul.bf16.gmra.mxu0 %v4725
      %v4784 = vpop.f32.mrf.mxu0
      %v4785 = vadd.f32 0.0, %v4784
      %v4786 = vpop.f32.mrf.mxu0
      %v4787 = vadd.f32 0.0, %v4786
      %4788 = vmatmul.bf16.gmra.mxu0 %v4728
      %v4789 = vpop.f32.mrf.mxu0
      %v4790 = vadd.f32 0.0, %v4789
      %v4791 = vpop.f32.mrf.mxu0
      %v4792 = vadd.f32 0.0, %v4791
      %4793 = vmatmul.bf16.gmra.mxu0 %v4731
      %v4794 = vpop.f32.mrf.mxu0
      %v4795 = vadd.f32 0.0, %v4794
      %v4796 = vpop.f32.mrf.mxu0
      %v4797 = vadd.f32 0.0, %v4796
      %4798 = vmatmul.bf16.gmra.mxu0 %v4734
      %v4799 = vpop.f32.mrf.mxu0
      %v4800 = vadd.f32 0.0, %v4799
      %v4801 = vpop.f32.mrf.mxu0
      %v4802 = vadd.f32 0.0, %v4801
      %4803 = vmatmul.bf16.gmra.mxu0 %v4737
      %v4804 = vpop.f32.mrf.mxu0
      %v4805 = vadd.f32 0.0, %v4804
      %v4806 = vpop.f32.mrf.mxu0
      %v4807 = vadd.f32 0.0, %v4806
      %4808 = vmatmul.bf16.gmra.mxu0 %v4740
      %v4809 = vpop.f32.mrf.mxu0
      %v4810 = vadd.f32 0.0, %v4809
      %v4811 = vpop.f32.mrf.mxu0
      %v4812 = vadd.f32 0.0, %v4811
      %4813 = vmatmul.bf16.gmra.mxu0 %v4743
      %v4814 = vpop.f32.mrf.mxu0
      %v4815 = vadd.f32 0.0, %v4814
      %v4816 = vpop.f32.mrf.mxu0
      %v4817 = vadd.f32 0.0, %v4816
      %4818 = vmatmul.bf16.gmra.mxu0 %v4746
      %v4819 = vpop.f32.mrf.mxu0
      %v4820 = vadd.f32 0.0, %v4819
      %v4821 = vpop.f32.mrf.mxu0
      %v4822 = vadd.f32 0.0, %v4821
      %4823 = vmatmul.bf16.gmra.mxu0 %v4749
      %v4824 = vpop.f32.mrf.mxu0
      %v4825 = vadd.f32 0.0, %v4824
      %v4826 = vpop.f32.mrf.mxu0
      %v4827 = vadd.f32 0.0, %v4826
      %4828 = vmatmul.bf16.gmra.mxu0 %v4752
      %v4829 = vpop.f32.mrf.mxu0
      %v4830 = vadd.f32 0.0, %v4829
      %v4831 = vpop.f32.mrf.mxu0
      %v4832 = vadd.f32 0.0, %v4831
      %4833 = vmatmul.bf16.gmra.mxu0 %v4755
      %v4834 = vpop.f32.mrf.mxu0
      %v4835 = vadd.f32 0.0, %v4834
      %v4836 = vpop.f32.mrf.mxu0
      %v4837 = vadd.f32 0.0, %v4836
      %4838 = vmatmul.bf16.gmra.mxu0 %v4758
      %v4839 = vpop.f32.mrf.mxu0
      %v4840 = vadd.f32 0.0, %v4839
      %v4841 = vpop.f32.mrf.mxu0
      %v4842 = vadd.f32 0.0, %v4841
      %4843 = vmatmul.bf16.gmra.mxu0 %v4761
      %v4844 = vpop.f32.mrf.mxu0
      %v4845 = vadd.f32 0.0, %v4844
      %v4846 = vpop.f32.mrf.mxu0
      %v4847 = vadd.f32 0.0, %v4846
      %4848 = vmatmul.bf16.gmra.mxu0 %v4764
      %v4849 = vpop.f32.mrf.mxu0
      %v4850 = vadd.f32 0.0, %v4849
      %v4851 = vpop.f32.mrf.mxu0
      %v4852 = vadd.f32 0.0, %v4851
      %4853 = vmatmul.bf16.gmra.mxu0 %v4767
      %v4854 = vpop.f32.mrf.mxu0
      %v4855 = vadd.f32 0.0, %v4854
      %v4856 = vpop.f32.mrf.mxu0
      %v4857 = vadd.f32 0.0, %v4856
      %4858 = vmatmul.bf16.gmra.mxu0 %v4770
      %v4859 = vpop.f32.mrf.mxu0
      %v4860 = vadd.f32 0.0, %v4859
      %v4861 = vpop.f32.mrf.mxu0
      %v4862 = vadd.f32 0.0, %v4861
      %4863 = vdwg.mxu0
      %v4864 = vadd.f32 %v3808, %v4785
      %v4865 = vadd.f32 %v3810, %v4787
      %v4866 = vadd.f32 %v3813, %v4790
      %v4867 = vadd.f32 %v3815, %v4792
      %v4868 = vadd.f32 %v3818, %v4795
      %v4869 = vadd.f32 %v3820, %v4797
      %v4870 = vadd.f32 %v3823, %v4800
      %v4871 = vadd.f32 %v3825, %v4802
      %v4872 = vadd.f32 %v3828, %v4805
      %v4873 = vadd.f32 %v3830, %v4807
      %v4874 = vadd.f32 %v3833, %v4810
      %v4875 = vadd.f32 %v3835, %v4812
      %v4876 = vadd.f32 %v3838, %v4815
      %v4877 = vadd.f32 %v3840, %v4817
      %v4878 = vadd.f32 %v3843, %v4820
      %v4879 = vadd.f32 %v3845, %v4822
      %v4880 = vadd.f32 %v3848, %v4825
      %v4881 = vadd.f32 %v3850, %v4827
      %v4882 = vadd.f32 %v3853, %v4830
      %v4883 = vadd.f32 %v3855, %v4832
      %v4884 = vadd.f32 %v3858, %v4835
      %v4885 = vadd.f32 %v3860, %v4837
      %v4886 = vadd.f32 %v3863, %v4840
      %v4887 = vadd.f32 %v3865, %v4842
      %v4888 = vadd.f32 %v3868, %v4845
      %v4889 = vadd.f32 %v3870, %v4847
      %v4890 = vadd.f32 %v3873, %v4850
      %v4891 = vadd.f32 %v3875, %v4852
      %v4892 = vadd.f32 %v3878, %v4855
      %v4893 = vadd.f32 %v3880, %v4857
      %v4894 = vadd.f32 %v3883, %v4860
      %v4895 = vadd.f32 %v3885, %v4862
      %4896 = vrot.lane.b32.xlu0 %v1915, 104
      %v4897 = vpop.permute.xlu0 %4896
      %4898 = vrot.lane.b32.xlu0 %v1916, 104
      %v4899 = vpop.permute.xlu0 %4898
      %4900 = vrot.lane.b32.xlu0 %v1917, 104
      %v4901 = vpop.permute.xlu0 %4900
      %4902 = vrot.lane.b32.xlu0 %v1918, 104
      %v4903 = vpop.permute.xlu0 %4902
      %4904 = vrot.lane.b32.xlu0 %v1919, 104
      %v4905 = vpop.permute.xlu0 %4904
      %4906 = vrot.lane.b32.xlu0 %v1920, 104
      %v4907 = vpop.permute.xlu0 %4906
      %4908 = vrot.lane.b32.xlu0 %v1921, 104
      %v4909 = vpop.permute.xlu0 %4908
      %4910 = vrot.lane.b32.xlu0 %v1922, 104
      %v4911 = vpop.permute.xlu0 %4910
      %4912 = vrot.lane.b32.xlu0 %v1915, 72
      %v4913 = vpop.permute.xlu0 %4912
      %4914 = vrot.lane.b32.xlu0 %v1916, 72
      %v4915 = vpop.permute.xlu0 %4914
      %4916 = vrot.lane.b32.xlu0 %v1917, 72
      %v4917 = vpop.permute.xlu0 %4916
      %4918 = vrot.lane.b32.xlu0 %v1918, 72
      %v4919 = vpop.permute.xlu0 %4918
      %4920 = vrot.lane.b32.xlu0 %v1919, 72
      %v4921 = vpop.permute.xlu0 %4920
      %4922 = vrot.lane.b32.xlu0 %v1920, 72
      %v4923 = vpop.permute.xlu0 %4922
      %4924 = vrot.lane.b32.xlu0 %v1921, 72
      %v4925 = vpop.permute.xlu0 %4924
      %4926 = vrot.lane.b32.xlu0 %v1922, 72
      %v4927 = vpop.permute.xlu0 %4926
      %v4929 = vsel %vm1939, %v4897, 0
      %v4932 = vsel %vm1939, %v4899, 0
      %v4935 = vsel %vm1939, %v4901, 0
      %v4938 = vsel %vm1939, %v4903, 0
      %v4941 = vsel %vm1939, %v4905, 0
      %v4944 = vsel %vm1939, %v4907, 0
      %v4947 = vsel %vm1939, %v4909, 0
      %v4950 = vsel %vm1939, %v4911, 0
      %v4953 = vsel %vm1939, %v4913, 0
      %v4956 = vsel %vm1939, %v4915, 0
      %v4959 = vsel %vm1939, %v4917, 0
      %v4962 = vsel %vm1939, %v4919, 0
      %v4965 = vsel %vm1939, %v4921, 0
      %v4968 = vsel %vm1939, %v4923, 0
      %v4971 = vsel %vm1939, %v4925, 0
      %v4974 = vsel %vm1939, %v4927, 0
      %4976 = vmatpush.bf16.xpose.msra.mxu0 %v4974
      %4977 = vmatpush.bf16.xpose.msra.mxu0 %v4971
      %4978 = vmatpush.bf16.xpose.msra.mxu0 %v4968
      %4979 = vmatpush.bf16.xpose.msra.mxu0 %v4965
      %4980 = vmatpush.bf16.xpose.msra.mxu0 %v4962
      %4981 = vmatpush.bf16.xpose.msra.mxu0 %v4959
      %4982 = vmatpush.bf16.xpose.msra.mxu0 %v4956
      %4983 = vmatpush.bf16.xpose.msra.mxu0 %v4953
      %4984 = vmatmul.bf16.gmra.mxu0 %v4929
      %v4985 = vpop.f32.mrf.mxu0
      %v4986 = vadd.f32 %v846, %v4985
      %v4987 = vpop.f32.mrf.mxu0
      %v4988 = vadd.f32 %v847, %v4987
      %4989 = vmatmul.bf16.gmra.mxu0 %v4932
      %v4990 = vpop.f32.mrf.mxu0
      %v4991 = vadd.f32 %v848, %v4990
      %v4992 = vpop.f32.mrf.mxu0
      %v4993 = vadd.f32 %v849, %v4992
      %4994 = vmatmul.bf16.gmra.mxu0 %v4935
      %v4995 = vpop.f32.mrf.mxu0
      %v4996 = vadd.f32 %v850, %v4995
      %v4997 = vpop.f32.mrf.mxu0
      %v4998 = vadd.f32 %v851, %v4997
      %4999 = vmatmul.bf16.gmra.mxu0 %v4938
      %v5000 = vpop.f32.mrf.mxu0
      %v5001 = vadd.f32 %v852, %v5000
      %v5002 = vpop.f32.mrf.mxu0
      %v5003 = vadd.f32 %v853, %v5002
      %5004 = vmatmul.bf16.gmra.mxu0 %v4941
      %v5005 = vpop.f32.mrf.mxu0
      %v5006 = vadd.f32 %v854, %v5005
      %v5007 = vpop.f32.mrf.mxu0
      %v5008 = vadd.f32 %v855, %v5007
      %5009 = vmatmul.bf16.gmra.mxu0 %v4944
      %v5010 = vpop.f32.mrf.mxu0
      %v5011 = vadd.f32 %v856, %v5010
      %v5012 = vpop.f32.mrf.mxu0
      %v5013 = vadd.f32 %v857, %v5012
      %5014 = vmatmul.bf16.gmra.mxu0 %v4947
      %v5015 = vpop.f32.mrf.mxu0
      %v5016 = vadd.f32 %v858, %v5015
      %v5017 = vpop.f32.mrf.mxu0
      %v5018 = vadd.f32 %v859, %v5017
      %5019 = vmatmul.bf16.gmra.mxu0 %v4950
      %v5020 = vpop.f32.mrf.mxu0
      %v5021 = vadd.f32 %v860, %v5020
      %v5022 = vpop.f32.mrf.mxu0
      %v5023 = vadd.f32 %v861, %v5022
      %5024 = vdwg.mxu0
      %5025 = vrot.lane.b32.xlu0 %v2069, 104
      %v5026 = vpop.permute.xlu0 %5025
      %5027 = vrot.lane.b32.xlu0 %v2070, 104
      %v5028 = vpop.permute.xlu0 %5027
      %5029 = vrot.lane.b32.xlu0 %v2071, 104
      %v5030 = vpop.permute.xlu0 %5029
      %5031 = vrot.lane.b32.xlu0 %v2072, 104
      %v5032 = vpop.permute.xlu0 %5031
      %5033 = vrot.lane.b32.xlu0 %v2073, 104
      %v5034 = vpop.permute.xlu0 %5033
      %5035 = vrot.lane.b32.xlu0 %v2074, 104
      %v5036 = vpop.permute.xlu0 %5035
      %5037 = vrot.lane.b32.xlu0 %v2075, 104
      %v5038 = vpop.permute.xlu0 %5037
      %5039 = vrot.lane.b32.xlu0 %v2076, 104
      %v5040 = vpop.permute.xlu0 %5039
      %5041 = vrot.lane.b32.xlu0 %v2069, 72
      %v5042 = vpop.permute.xlu0 %5041
      %5043 = vrot.lane.b32.xlu0 %v2070, 72
      %v5044 = vpop.permute.xlu0 %5043
      %5045 = vrot.lane.b32.xlu0 %v2071, 72
      %v5046 = vpop.permute.xlu0 %5045
      %5047 = vrot.lane.b32.xlu0 %v2072, 72
      %v5048 = vpop.permute.xlu0 %5047
      %5049 = vrot.lane.b32.xlu0 %v2073, 72
      %v5050 = vpop.permute.xlu0 %5049
      %5051 = vrot.lane.b32.xlu0 %v2074, 72
      %v5052 = vpop.permute.xlu0 %5051
      %5053 = vrot.lane.b32.xlu0 %v2075, 72
      %v5054 = vpop.permute.xlu0 %5053
      %5055 = vrot.lane.b32.xlu0 %v2076, 72
      %v5056 = vpop.permute.xlu0 %5055
      %v5058 = vsel %vm1939, %v5026, 0
      %v5061 = vsel %vm1939, %v5028, 0
      %v5064 = vsel %vm1939, %v5030, 0
      %v5067 = vsel %vm1939, %v5032, 0
      %v5070 = vsel %vm1939, %v5034, 0
      %v5073 = vsel %vm1939, %v5036, 0
      %v5076 = vsel %vm1939, %v5038, 0
      %v5079 = vsel %vm1939, %v5040, 0
      %v5082 = vsel %vm1939, %v5042, 0
      %v5085 = vsel %vm1939, %v5044, 0
      %v5088 = vsel %vm1939, %v5046, 0
      %v5091 = vsel %vm1939, %v5048, 0
      %v5094 = vsel %vm1939, %v5050, 0
      %v5097 = vsel %vm1939, %v5052, 0
      %v5100 = vsel %vm1939, %v5054, 0
      %v5103 = vsel %vm1939, %v5056, 0
      %5105 = vmatpush.bf16.xpose.msra.mxu0 %v5103
      %5106 = vmatpush.bf16.xpose.msra.mxu0 %v5100
      %5107 = vmatpush.bf16.xpose.msra.mxu0 %v5097
      %5108 = vmatpush.bf16.xpose.msra.mxu0 %v5094
      %5109 = vmatpush.bf16.xpose.msra.mxu0 %v5091
      %5110 = vmatpush.bf16.xpose.msra.mxu0 %v5088
      %5111 = vmatpush.bf16.xpose.msra.mxu0 %v5085
      %5112 = vmatpush.bf16.xpose.msra.mxu0 %v5082
      %5113 = vmatmul.bf16.gmra.mxu0 %v5058
      %v5114 = vpop.f32.mrf.mxu0
      %v5115 = vadd.f32 %v846, %v5114
      %v5116 = vpop.f32.mrf.mxu0
      %v5117 = vadd.f32 %v847, %v5116
      %5118 = vmatmul.bf16.gmra.mxu0 %v5061
      %v5119 = vpop.f32.mrf.mxu0
      %v5120 = vadd.f32 %v848, %v5119
      %v5121 = vpop.f32.mrf.mxu0
      %v5122 = vadd.f32 %v849, %v5121
      %5123 = vmatmul.bf16.gmra.mxu0 %v5064
      %v5124 = vpop.f32.mrf.mxu0
      %v5125 = vadd.f32 %v850, %v5124
      %v5126 = vpop.f32.mrf.mxu0
      %v5127 = vadd.f32 %v851, %v5126
      %5128 = vmatmul.bf16.gmra.mxu0 %v5067
      %v5129 = vpop.f32.mrf.mxu0
      %v5130 = vadd.f32 %v852, %v5129
      %v5131 = vpop.f32.mrf.mxu0
      %v5132 = vadd.f32 %v853, %v5131
      %5133 = vmatmul.bf16.gmra.mxu0 %v5070
      %v5134 = vpop.f32.mrf.mxu0
      %v5135 = vadd.f32 %v854, %v5134
      %v5136 = vpop.f32.mrf.mxu0
      %v5137 = vadd.f32 %v855, %v5136
      %5138 = vmatmul.bf16.gmra.mxu0 %v5073
      %v5139 = vpop.f32.mrf.mxu0
      %v5140 = vadd.f32 %v856, %v5139
      %v5141 = vpop.f32.mrf.mxu0
      %v5142 = vadd.f32 %v857, %v5141
      %5143 = vmatmul.bf16.gmra.mxu0 %v5076
      %v5144 = vpop.f32.mrf.mxu0
      %v5145 = vadd.f32 %v858, %v5144
      %v5146 = vpop.f32.mrf.mxu0
      %v5147 = vadd.f32 %v859, %v5146
      %5148 = vmatmul.bf16.gmra.mxu0 %v5079
      %v5149 = vpop.f32.mrf.mxu0
      %v5150 = vadd.f32 %v860, %v5149
      %v5151 = vpop.f32.mrf.mxu0
      %v5152 = vadd.f32 %v861, %v5151
      %5153 = vdwg.mxu0
      %5154 = vmax.xlane.f32.xlu0 %v4986
      %v5155 = vpop.xlane.xlu0 %5154
      %5156 = vmax.xlane.f32.xlu0 %v4988
      %v5157 = vpop.xlane.xlu0 %5156
      %5158 = vmax.xlane.f32.xlu0 %v4991
      %v5159 = vpop.xlane.xlu0 %5158
      %5160 = vmax.xlane.f32.xlu0 %v4993
      %v5161 = vpop.xlane.xlu0 %5160
      %5162 = vmax.xlane.f32.xlu0 %v4996
      %v5163 = vpop.xlane.xlu0 %5162
      %5164 = vmax.xlane.f32.xlu0 %v4998
      %v5165 = vpop.xlane.xlu0 %5164
      %5166 = vmax.xlane.f32.xlu0 %v5001
      %v5167 = vpop.xlane.xlu0 %5166
      %5168 = vmax.xlane.f32.xlu0 %v5003
      %v5169 = vpop.xlane.xlu0 %5168
      %5170 = vmax.xlane.f32.xlu0 %v5006
      %v5171 = vpop.xlane.xlu0 %5170
      %5172 = vmax.xlane.f32.xlu0 %v5008
      %v5173 = vpop.xlane.xlu0 %5172
      %5174 = vmax.xlane.f32.xlu0 %v5011
      %v5175 = vpop.xlane.xlu0 %5174
      %5176 = vmax.xlane.f32.xlu0 %v5013
      %v5177 = vpop.xlane.xlu0 %5176
      %5178 = vmax.xlane.f32.xlu0 %v5016
      %v5179 = vpop.xlane.xlu0 %5178
      %5180 = vmax.xlane.f32.xlu0 %v5018
      %v5181 = vpop.xlane.xlu0 %5180
      %5182 = vmax.xlane.f32.xlu0 %v5021
      %v5183 = vpop.xlane.xlu0 %5182
      %5184 = vmax.xlane.f32.xlu0 %v5023
      %v5185 = vpop.xlane.xlu0 %5184
      %5186 = vmax.xlane.f32.xlu0 %v5115
      %v5187 = vpop.xlane.xlu0 %5186
      %5188 = vmax.xlane.f32.xlu0 %v5117
      %v5189 = vpop.xlane.xlu0 %5188
      %5190 = vmax.xlane.f32.xlu0 %v5120
      %v5191 = vpop.xlane.xlu0 %5190
      %5192 = vmax.xlane.f32.xlu0 %v5122
      %v5193 = vpop.xlane.xlu0 %5192
      %5194 = vmax.xlane.f32.xlu0 %v5125
      %v5195 = vpop.xlane.xlu0 %5194
      %5196 = vmax.xlane.f32.xlu0 %v5127
      %v5197 = vpop.xlane.xlu0 %5196
      %5198 = vmax.xlane.f32.xlu0 %v5130
      %v5199 = vpop.xlane.xlu0 %5198
      %5200 = vmax.xlane.f32.xlu0 %v5132
      %v5201 = vpop.xlane.xlu0 %5200
      %5202 = vmax.xlane.f32.xlu0 %v5135
      %v5203 = vpop.xlane.xlu0 %5202
      %5204 = vmax.xlane.f32.xlu0 %v5137
      %v5205 = vpop.xlane.xlu0 %5204
      %5206 = vmax.xlane.f32.xlu0 %v5140
      %v5207 = vpop.xlane.xlu0 %5206
      %5208 = vmax.xlane.f32.xlu0 %v5142
      %v5209 = vpop.xlane.xlu0 %5208
      %5210 = vmax.xlane.f32.xlu0 %v5145
      %v5211 = vpop.xlane.xlu0 %5210
      %5212 = vmax.xlane.f32.xlu0 %v5147
      %v5213 = vpop.xlane.xlu0 %5212
      %5214 = vmax.xlane.f32.xlu0 %v5150
      %v5215 = vpop.xlane.xlu0 %5214
      %5216 = vmax.xlane.f32.xlu0 %v5152
      %v5217 = vpop.xlane.xlu0 %5216
      %v5218 = vsub.f32 %v4986, %v5155
      %v5219 = vsub.f32 %v4988, %v5157
      %v5220 = vsub.f32 %v4991, %v5159
      %v5221 = vsub.f32 %v4993, %v5161
      %v5222 = vsub.f32 %v4996, %v5163
      %v5223 = vsub.f32 %v4998, %v5165
      %v5224 = vsub.f32 %v5001, %v5167
      %v5225 = vsub.f32 %v5003, %v5169
      %v5226 = vsub.f32 %v5006, %v5171
      %v5227 = vsub.f32 %v5008, %v5173
      %v5228 = vsub.f32 %v5011, %v5175
      %v5229 = vsub.f32 %v5013, %v5177
      %v5230 = vsub.f32 %v5016, %v5179
      %v5231 = vsub.f32 %v5018, %v5181
      %v5232 = vsub.f32 %v5021, %v5183
      %v5233 = vsub.f32 %v5023, %v5185
      %v5234 = vsub.f32 %v5115, %v5187
      %v5235 = vsub.f32 %v5117, %v5189
      %v5236 = vsub.f32 %v5120, %v5191
      %v5237 = vsub.f32 %v5122, %v5193
      %v5238 = vsub.f32 %v5125, %v5195
      %v5239 = vsub.f32 %v5127, %v5197
      %v5240 = vsub.f32 %v5130, %v5199
      %v5241 = vsub.f32 %v5132, %v5201
      %v5242 = vsub.f32 %v5135, %v5203
      %v5243 = vsub.f32 %v5137, %v5205
      %v5244 = vsub.f32 %v5140, %v5207
      %v5245 = vsub.f32 %v5142, %v5209
      %v5246 = vsub.f32 %v5145, %v5211
      %v5247 = vsub.f32 %v5147, %v5213
      %v5248 = vsub.f32 %v5150, %v5215
      %v5249 = vsub.f32 %v5152, %v5217
      %v5250 = vmul.f32 %v5218, 1.442695
      %v5251 = vpow.pop %v5250
      %v5252 = vmul.f32 %v5219, 1.442695
      %v5253 = vpow.pop %v5252
      %v5254 = vmul.f32 %v5220, 1.442695
      %v5255 = vpow.pop %v5254
      %v5256 = vmul.f32 %v5221, 1.442695
      %v5257 = vpow.pop %v5256
      %v5258 = vmul.f32 %v5222, 1.442695
      %v5259 = vpow.pop %v5258
      %v5260 = vmul.f32 %v5223, 1.442695
      %v5261 = vpow.pop %v5260
      %v5262 = vmul.f32 %v5224, 1.442695
      %v5263 = vpow.pop %v5262
      %v5264 = vmul.f32 %v5225, 1.442695
      %v5265 = vpow.pop %v5264
      %v5266 = vmul.f32 %v5226, 1.442695
      %v5267 = vpow.pop %v5266
      %v5268 = vmul.f32 %v5227, 1.442695
      %v5269 = vpow.pop %v5268
      %v5270 = vmul.f32 %v5228, 1.442695
      %v5271 = vpow.pop %v5270
      %v5272 = vmul.f32 %v5229, 1.442695
      %v5273 = vpow.pop %v5272
      %v5274 = vmul.f32 %v5230, 1.442695
      %v5275 = vpow.pop %v5274
      %v5276 = vmul.f32 %v5231, 1.442695
      %v5277 = vpow.pop %v5276
      %v5278 = vmul.f32 %v5232, 1.442695
      %v5279 = vpow.pop %v5278
      %v5280 = vmul.f32 %v5233, 1.442695
      %v5281 = vpow.pop %v5280
      %v5282 = vmul.f32 %v5234, 1.442695
      %v5283 = vpow.pop %v5282
      %v5284 = vmul.f32 %v5235, 1.442695
      %v5285 = vpow.pop %v5284
      %v5286 = vmul.f32 %v5236, 1.442695
      %v5287 = vpow.pop %v5286
      %v5288 = vmul.f32 %v5237, 1.442695
      %v5289 = vpow.pop %v5288
      %v5290 = vmul.f32 %v5238, 1.442695
      %v5291 = vpow.pop %v5290
      %v5292 = vmul.f32 %v5239, 1.442695
      %v5293 = vpow.pop %v5292
      %v5294 = vmul.f32 %v5240, 1.442695
      %v5295 = vpow.pop %v5294
      %v5296 = vmul.f32 %v5241, 1.442695
      %v5297 = vpow.pop %v5296
      %v5298 = vmul.f32 %v5242, 1.442695
      %v5299 = vpow.pop %v5298
      %v5300 = vmul.f32 %v5243, 1.442695
      %v5301 = vpow.pop %v5300
      %v5302 = vmul.f32 %v5244, 1.442695
      %v5303 = vpow.pop %v5302
      %v5304 = vmul.f32 %v5245, 1.442695
      %v5305 = vpow.pop %v5304
      %v5306 = vmul.f32 %v5246, 1.442695
      %v5307 = vpow.pop %v5306
      %v5308 = vmul.f32 %v5247, 1.442695
      %v5309 = vpow.pop %v5308
      %v5310 = vmul.f32 %v5248, 1.442695
      %v5311 = vpow.pop %v5310
      %v5312 = vmul.f32 %v5249, 1.442695
      %v5313 = vpow.pop %v5312
      %5314 = vadd.xlane.f32.xlu0 %v5251
      %v5315 = vpop.xlane.xlu0 %5314
      %5316 = vadd.xlane.f32.xlu0 %v5253
      %v5317 = vpop.xlane.xlu0 %5316
      %5318 = vadd.xlane.f32.xlu0 %v5255
      %v5319 = vpop.xlane.xlu0 %5318
      %5320 = vadd.xlane.f32.xlu0 %v5257
      %v5321 = vpop.xlane.xlu0 %5320
      %5322 = vadd.xlane.f32.xlu0 %v5259
      %v5323 = vpop.xlane.xlu0 %5322
      %5324 = vadd.xlane.f32.xlu0 %v5261
      %v5325 = vpop.xlane.xlu0 %5324
      %5326 = vadd.xlane.f32.xlu0 %v5263
      %v5327 = vpop.xlane.xlu0 %5326
      %5328 = vadd.xlane.f32.xlu0 %v5265
      %v5329 = vpop.xlane.xlu0 %5328
      %5330 = vadd.xlane.f32.xlu0 %v5267
      %v5331 = vpop.xlane.xlu0 %5330
      %5332 = vadd.xlane.f32.xlu0 %v5269
      %v5333 = vpop.xlane.xlu0 %5332
      %5334 = vadd.xlane.f32.xlu0 %v5271
      %v5335 = vpop.xlane.xlu0 %5334
      %5336 = vadd.xlane.f32.xlu0 %v5273
      %v5337 = vpop.xlane.xlu0 %5336
      %5338 = vadd.xlane.f32.xlu0 %v5275
      %v5339 = vpop.xlane.xlu0 %5338
      %5340 = vadd.xlane.f32.xlu0 %v5277
      %v5341 = vpop.xlane.xlu0 %5340
      %5342 = vadd.xlane.f32.xlu0 %v5279
      %v5343 = vpop.xlane.xlu0 %5342
      %5344 = vadd.xlane.f32.xlu0 %v5281
      %v5345 = vpop.xlane.xlu0 %5344
      %5346 = vadd.xlane.f32.xlu0 %v5283
      %v5347 = vpop.xlane.xlu0 %5346
      %5348 = vadd.xlane.f32.xlu0 %v5285
      %v5349 = vpop.xlane.xlu0 %5348
      %5350 = vadd.xlane.f32.xlu0 %v5287
      %v5351 = vpop.xlane.xlu0 %5350
      %5352 = vadd.xlane.f32.xlu0 %v5289
      %v5353 = vpop.xlane.xlu0 %5352
      %5354 = vadd.xlane.f32.xlu0 %v5291
      %v5355 = vpop.xlane.xlu0 %5354
      %5356 = vadd.xlane.f32.xlu0 %v5293
      %v5357 = vpop.xlane.xlu0 %5356
      %5358 = vadd.xlane.f32.xlu0 %v5295
      %v5359 = vpop.xlane.xlu0 %5358
      %5360 = vadd.xlane.f32.xlu0 %v5297
      %v5361 = vpop.xlane.xlu0 %5360
      %5362 = vadd.xlane.f32.xlu0 %v5299
      %v5363 = vpop.xlane.xlu0 %5362
      %5364 = vadd.xlane.f32.xlu0 %v5301
      %v5365 = vpop.xlane.xlu0 %5364
      %5366 = vadd.xlane.f32.xlu0 %v5303
      %v5367 = vpop.xlane.xlu0 %5366
      %5368 = vadd.xlane.f32.xlu0 %v5305
      %v5369 = vpop.xlane.xlu0 %5368
      %5370 = vadd.xlane.f32.xlu0 %v5307
      %v5371 = vpop.xlane.xlu0 %5370
      %5372 = vadd.xlane.f32.xlu0 %v5309
      %v5373 = vpop.xlane.xlu0 %5372
      %5374 = vadd.xlane.f32.xlu0 %v5311
      %v5375 = vpop.xlane.xlu0 %5374
      %5376 = vadd.xlane.f32.xlu0 %v5313
      %v5377 = vpop.xlane.xlu0 %5376
      %v5378 = vrcp.pop %v5315
      %v5379 = vrcp.pop %v5317
      %v5380 = vrcp.pop %v5319
      %v5381 = vrcp.pop %v5321
      %v5382 = vrcp.pop %v5323
      %v5383 = vrcp.pop %v5325
      %v5384 = vrcp.pop %v5327
      %v5385 = vrcp.pop %v5329
      %v5386 = vrcp.pop %v5331
      %v5387 = vrcp.pop %v5333
      %v5388 = vrcp.pop %v5335
      %v5389 = vrcp.pop %v5337
      %v5390 = vrcp.pop %v5339
      %v5391 = vrcp.pop %v5341
      %v5392 = vrcp.pop %v5343
      %v5393 = vrcp.pop %v5345
      %v5394 = vrcp.pop %v5347
      %v5395 = vrcp.pop %v5349
      %v5396 = vrcp.pop %v5351
      %v5397 = vrcp.pop %v5353
      %v5398 = vrcp.pop %v5355
      %v5399 = vrcp.pop %v5357
      %v5400 = vrcp.pop %v5359
      %v5401 = vrcp.pop %v5361
      %v5402 = vrcp.pop %v5363
      %v5403 = vrcp.pop %v5365
      %v5404 = vrcp.pop %v5367
      %v5405 = vrcp.pop %v5369
      %v5406 = vrcp.pop %v5371
      %v5407 = vrcp.pop %v5373
      %v5408 = vrcp.pop %v5375
      %v5409 = vrcp.pop %v5377
      %v5410 = vmul.f32 %v5251, %v5378
      %v5411 = vmul.f32 %v5253, %v5379
      %v5412 = vmul.f32 %v5255, %v5380
      %v5413 = vmul.f32 %v5257, %v5381
      %v5414 = vmul.f32 %v5259, %v5382
      %v5415 = vmul.f32 %v5261, %v5383
      %v5416 = vmul.f32 %v5263, %v5384
      %v5417 = vmul.f32 %v5265, %v5385
      %v5418 = vmul.f32 %v5267, %v5386
      %v5419 = vmul.f32 %v5269, %v5387
      %v5420 = vmul.f32 %v5271, %v5388
      %v5421 = vmul.f32 %v5273, %v5389
      %v5422 = vmul.f32 %v5275, %v5390
      %v5423 = vmul.f32 %v5277, %v5391
      %v5424 = vmul.f32 %v5279, %v5392
      %v5425 = vmul.f32 %v5281, %v5393
      %v5426 = vmul.f32 %v5283, %v5394
      %v5427 = vmul.f32 %v5285, %v5395
      %v5428 = vmul.f32 %v5287, %v5396
      %v5429 = vmul.f32 %v5289, %v5397
      %v5430 = vmul.f32 %v5291, %v5398
      %v5431 = vmul.f32 %v5293, %v5399
      %v5432 = vmul.f32 %v5295, %v5400
      %v5433 = vmul.f32 %v5297, %v5401
      %v5434 = vmul.f32 %v5299, %v5402
      %v5435 = vmul.f32 %v5301, %v5403
      %v5436 = vmul.f32 %v5303, %v5404
      %v5437 = vmul.f32 %v5305, %v5405
      %v5438 = vmul.f32 %v5307, %v5406
      %v5439 = vmul.f32 %v5309, %v5407
      %v5440 = vmul.f32 %v5311, %v5408
      %v5441 = vmul.f32 %v5313, %v5409
      %v5442 = vpack.c.bf16 %v5410, %v5410
      %v5443 = vpack.c.bf16 %v5411, %v5411
      %v5444 = vpack.c.bf16 %v5412, %v5412
      %v5445 = vpack.c.bf16 %v5413, %v5413
      %v5446 = vpack.c.bf16 %v5414, %v5414
      %v5447 = vpack.c.bf16 %v5415, %v5415
      %v5448 = vpack.c.bf16 %v5416, %v5416
      %v5449 = vpack.c.bf16 %v5417, %v5417
      %v5450 = vpack.c.bf16 %v5418, %v5418
      %v5451 = vpack.c.bf16 %v5419, %v5419
      %v5452 = vpack.c.bf16 %v5420, %v5420
      %v5453 = vpack.c.bf16 %v5421, %v5421
      %v5454 = vpack.c.bf16 %v5422, %v5422
      %v5455 = vpack.c.bf16 %v5423, %v5423
      %v5456 = vpack.c.bf16 %v5424, %v5424
      %v5457 = vpack.c.bf16 %v5425, %v5425
      %v5458 = vpack.c.bf16 %v5426, %v5426
      %v5459 = vpack.c.bf16 %v5427, %v5427
      %v5460 = vpack.c.bf16 %v5428, %v5428
      %v5461 = vpack.c.bf16 %v5429, %v5429
      %v5462 = vpack.c.bf16 %v5430, %v5430
      %v5463 = vpack.c.bf16 %v5431, %v5431
      %v5464 = vpack.c.bf16 %v5432, %v5432
      %v5465 = vpack.c.bf16 %v5433, %v5433
      %v5466 = vpack.c.bf16 %v5434, %v5434
      %v5467 = vpack.c.bf16 %v5435, %v5435
      %v5468 = vpack.c.bf16 %v5436, %v5436
      %v5469 = vpack.c.bf16 %v5437, %v5437
      %v5470 = vpack.c.bf16 %v5438, %v5438
      %v5471 = vpack.c.bf16 %v5439, %v5439
      %v5472 = vpack.c.bf16 %v5440, %v5440
      %v5473 = vpack.c.bf16 %v5441, %v5441
      %v5490 = vunpack.c.l.b16 %v5442
      %v5491 = vunpack.c.l.b16 %v5443
      %v5492 = vunpack.c.l.b16 %v5444
      %v5493 = vunpack.c.l.b16 %v5445
      %v5494 = vunpack.c.l.b16 %v5446
      %v5495 = vunpack.c.l.b16 %v5447
      %v5496 = vunpack.c.l.b16 %v5448
      %v5497 = vunpack.c.l.b16 %v5449
      %v5498 = vunpack.c.l.b16 %v5450
      %v5499 = vunpack.c.l.b16 %v5451
      %v5500 = vunpack.c.l.b16 %v5452
      %v5501 = vunpack.c.l.b16 %v5453
      %v5502 = vunpack.c.l.b16 %v5454
      %v5503 = vunpack.c.l.b16 %v5455
      %v5504 = vunpack.c.l.b16 %v5456
      %v5505 = vunpack.c.l.b16 %v5457
      %v5506 = vpack.c.b16 %v5491, %v5490
      %v5507 = vpack.c.b16 %v5493, %v5492
      %v5508 = vpack.c.b16 %v5495, %v5494
      %v5509 = vpack.c.b16 %v5497, %v5496
      %v5510 = vpack.c.b16 %v5499, %v5498
      %v5511 = vpack.c.b16 %v5501, %v5500
      %v5512 = vpack.c.b16 %v5503, %v5502
      %v5513 = vpack.c.b16 %v5505, %v5504
      %5522 = vrot.lane.b32.xlu0 %v1915, 40
      %v5523 = vpop.permute.xlu0 %5522
      %5524 = vrot.lane.b32.xlu0 %v1916, 40
      %v5525 = vpop.permute.xlu0 %5524
      %5526 = vrot.lane.b32.xlu0 %v1917, 40
      %v5527 = vpop.permute.xlu0 %5526
      %5528 = vrot.lane.b32.xlu0 %v1918, 40
      %v5529 = vpop.permute.xlu0 %5528
      %5530 = vrot.lane.b32.xlu0 %v1919, 40
      %v5531 = vpop.permute.xlu0 %5530
      %5532 = vrot.lane.b32.xlu0 %v1920, 40
      %v5533 = vpop.permute.xlu0 %5532
      %5534 = vrot.lane.b32.xlu0 %v1921, 40
      %v5535 = vpop.permute.xlu0 %5534
      %5536 = vrot.lane.b32.xlu0 %v1922, 40
      %v5537 = vpop.permute.xlu0 %5536
      %5546 = vmatpush.bf16.msra.mxu0 %v5537
      %5547 = vmatpush.bf16.msra.mxu0 %v5535
      %5548 = vmatpush.bf16.msra.mxu0 %v5533
      %5549 = vmatpush.bf16.msra.mxu0 %v5531
      %5550 = vmatpush.bf16.msra.mxu0 %v5529
      %5551 = vmatpush.bf16.msra.mxu0 %v5527
      %5552 = vmatpush.bf16.msra.mxu0 %v5525
      %5553 = vmatpush.bf16.msra.mxu0 %v5523
      %5554 = vmatmul.bf16.gmra.mxu0 %v5506
      %v5555 = vpop.f32.mrf.mxu0
      %v5556 = vadd.f32 0.0, %v5555
      %v5557 = vpop.f32.mrf.mxu0
      %v5558 = vadd.f32 0.0, %v5557
      %5559 = vmatmul.bf16.gmra.mxu0 %v5507
      %v5560 = vpop.f32.mrf.mxu0
      %v5561 = vadd.f32 0.0, %v5560
      %v5562 = vpop.f32.mrf.mxu0
      %v5563 = vadd.f32 0.0, %v5562
      %5564 = vmatmul.bf16.gmra.mxu0 %v5508
      %v5565 = vpop.f32.mrf.mxu0
      %v5566 = vadd.f32 0.0, %v5565
      %v5567 = vpop.f32.mrf.mxu0
      %v5568 = vadd.f32 0.0, %v5567
      %5569 = vmatmul.bf16.gmra.mxu0 %v5509
      %v5570 = vpop.f32.mrf.mxu0
      %v5571 = vadd.f32 0.0, %v5570
      %v5572 = vpop.f32.mrf.mxu0
      %v5573 = vadd.f32 0.0, %v5572
      %5574 = vmatmul.bf16.gmra.mxu0 %v5510
      %v5575 = vpop.f32.mrf.mxu0
      %v5576 = vadd.f32 0.0, %v5575
      %v5577 = vpop.f32.mrf.mxu0
      %v5578 = vadd.f32 0.0, %v5577
      %5579 = vmatmul.bf16.gmra.mxu0 %v5511
      %v5580 = vpop.f32.mrf.mxu0
      %v5581 = vadd.f32 0.0, %v5580
      %v5582 = vpop.f32.mrf.mxu0
      %v5583 = vadd.f32 0.0, %v5582
      %5584 = vmatmul.bf16.gmra.mxu0 %v5512
      %v5585 = vpop.f32.mrf.mxu0
      %v5586 = vadd.f32 0.0, %v5585
      %v5587 = vpop.f32.mrf.mxu0
      %v5588 = vadd.f32 0.0, %v5587
      %5589 = vmatmul.bf16.gmra.mxu0 %v5513
      %v5590 = vpop.f32.mrf.mxu0
      %v5591 = vadd.f32 0.0, %v5590
      %v5592 = vpop.f32.mrf.mxu0
      %v5593 = vadd.f32 0.0, %v5592
      %5594 = vdwg.mxu0
      %v5611 = vunpack.c.l.b16 %v5458
      %v5612 = vunpack.c.l.b16 %v5459
      %v5613 = vunpack.c.l.b16 %v5460
      %v5614 = vunpack.c.l.b16 %v5461
      %v5615 = vunpack.c.l.b16 %v5462
      %v5616 = vunpack.c.l.b16 %v5463
      %v5617 = vunpack.c.l.b16 %v5464
      %v5618 = vunpack.c.l.b16 %v5465
      %v5619 = vunpack.c.l.b16 %v5466
      %v5620 = vunpack.c.l.b16 %v5467
      %v5621 = vunpack.c.l.b16 %v5468
      %v5622 = vunpack.c.l.b16 %v5469
      %v5623 = vunpack.c.l.b16 %v5470
      %v5624 = vunpack.c.l.b16 %v5471
      %v5625 = vunpack.c.l.b16 %v5472
      %v5626 = vunpack.c.l.b16 %v5473
      %v5627 = vpack.c.b16 %v5612, %v5611
      %v5628 = vpack.c.b16 %v5614, %v5613
      %v5629 = vpack.c.b16 %v5616, %v5615
      %v5630 = vpack.c.b16 %v5618, %v5617
      %v5631 = vpack.c.b16 %v5620, %v5619
      %v5632 = vpack.c.b16 %v5622, %v5621
      %v5633 = vpack.c.b16 %v5624, %v5623
      %v5634 = vpack.c.b16 %v5626, %v5625
      %5643 = vrot.lane.b32.xlu0 %v2069, 40
      %v5644 = vpop.permute.xlu0 %5643
      %5645 = vrot.lane.b32.xlu0 %v2070, 40
      %v5646 = vpop.permute.xlu0 %5645
      %5647 = vrot.lane.b32.xlu0 %v2071, 40
      %v5648 = vpop.permute.xlu0 %5647
      %5649 = vrot.lane.b32.xlu0 %v2072, 40
      %v5650 = vpop.permute.xlu0 %5649
      %5651 = vrot.lane.b32.xlu0 %v2073, 40
      %v5652 = vpop.permute.xlu0 %5651
      %5653 = vrot.lane.b32.xlu0 %v2074, 40
      %v5654 = vpop.permute.xlu0 %5653
      %5655 = vrot.lane.b32.xlu0 %v2075, 40
      %v5656 = vpop.permute.xlu0 %5655
      %5657 = vrot.lane.b32.xlu0 %v2076, 40
      %v5658 = vpop.permute.xlu0 %5657
      %5667 = vmatpush.bf16.msra.mxu0 %v5658
      %5668 = vmatpush.bf16.msra.mxu0 %v5656
      %5669 = vmatpush.bf16.msra.mxu0 %v5654
      %5670 = vmatpush.bf16.msra.mxu0 %v5652
      %5671 = vmatpush.bf16.msra.mxu0 %v5650
      %5672 = vmatpush.bf16.msra.mxu0 %v5648
      %5673 = vmatpush.bf16.msra.mxu0 %v5646
      %5674 = vmatpush.bf16.msra.mxu0 %v5644
      %5675 = vmatmul.bf16.gmra.mxu0 %v5627
      %v5676 = vpop.f32.mrf.mxu0
      %v5677 = vadd.f32 0.0, %v5676
      %v5678 = vpop.f32.mrf.mxu0
      %v5679 = vadd.f32 0.0, %v5678
      %5680 = vmatmul.bf16.gmra.mxu0 %v5628
      %v5681 = vpop.f32.mrf.mxu0
      %v5682 = vadd.f32 0.0, %v5681
      %v5683 = vpop.f32.mrf.mxu0
      %v5684 = vadd.f32 0.0, %v5683
      %5685 = vmatmul.bf16.gmra.mxu0 %v5629
      %v5686 = vpop.f32.mrf.mxu0
      %v5687 = vadd.f32 0.0, %v5686
      %v5688 = vpop.f32.mrf.mxu0
      %v5689 = vadd.f32 0.0, %v5688
      %5690 = vmatmul.bf16.gmra.mxu0 %v5630
      %v5691 = vpop.f32.mrf.mxu0
      %v5692 = vadd.f32 0.0, %v5691
      %v5693 = vpop.f32.mrf.mxu0
      %v5694 = vadd.f32 0.0, %v5693
      %5695 = vmatmul.bf16.gmra.mxu0 %v5631
      %v5696 = vpop.f32.mrf.mxu0
      %v5697 = vadd.f32 0.0, %v5696
      %v5698 = vpop.f32.mrf.mxu0
      %v5699 = vadd.f32 0.0, %v5698
      %5700 = vmatmul.bf16.gmra.mxu0 %v5632
      %v5701 = vpop.f32.mrf.mxu0
      %v5702 = vadd.f32 0.0, %v5701
      %v5703 = vpop.f32.mrf.mxu0
      %v5704 = vadd.f32 0.0, %v5703
      %5705 = vmatmul.bf16.gmra.mxu0 %v5633
      %v5706 = vpop.f32.mrf.mxu0
      %v5707 = vadd.f32 0.0, %v5706
      %v5708 = vpop.f32.mrf.mxu0
      %v5709 = vadd.f32 0.0, %v5708
      %5710 = vmatmul.bf16.gmra.mxu0 %v5634
      %v5711 = vpop.f32.mrf.mxu0
      %v5712 = vadd.f32 0.0, %v5711
      %v5713 = vpop.f32.mrf.mxu0
      %v5714 = vadd.f32 0.0, %v5713
      %5715 = vdwg.mxu0
      %v5716 = vpack.c.bf16 %v5558, %v5556
      %v5717 = vpack.c.bf16 %v5563, %v5561
      %v5718 = vpack.c.bf16 %v5568, %v5566
      %v5719 = vpack.c.bf16 %v5573, %v5571
      %v5720 = vpack.c.bf16 %v5578, %v5576
      %v5721 = vpack.c.bf16 %v5583, %v5581
      %v5722 = vpack.c.bf16 %v5588, %v5586
      %v5723 = vpack.c.bf16 %v5593, %v5591
      %v5724 = vpack.c.bf16 %v5679, %v5677
      %v5725 = vpack.c.bf16 %v5684, %v5682
      %v5726 = vpack.c.bf16 %v5689, %v5687
      %v5727 = vpack.c.bf16 %v5694, %v5692
      %v5728 = vpack.c.bf16 %v5699, %v5697
      %v5729 = vpack.c.bf16 %v5704, %v5702
      %v5730 = vpack.c.bf16 %v5709, %v5707
      %v5731 = vpack.c.bf16 %v5714, %v5712
      %v5732 = vld [vmem:[%s707 + $0xc] sm:$0xf]
      %v5734 = vsel %vm1939, %v5716, 0
      %v5737 = vsel %vm1939, %v5717, 0
      %v5740 = vsel %vm1939, %v5718, 0
      %v5743 = vsel %vm1939, %v5719, 0
      %v5746 = vsel %vm1939, %v5720, 0
      %v5749 = vsel %vm1939, %v5721, 0
      %v5752 = vsel %vm1939, %v5722, 0
      %v5755 = vsel %vm1939, %v5723, 0
      %v5758 = vsel %vm1939, %v5724, 0
      %v5761 = vsel %vm1939, %v5725, 0
      %v5764 = vsel %vm1939, %v5726, 0
      %v5767 = vsel %vm1939, %v5727, 0
      %v5770 = vsel %vm1939, %v5728, 0
      %v5773 = vsel %vm1939, %v5729, 0
      %v5776 = vsel %vm1939, %v5730, 0
      %v5779 = vsel %vm1939, %v5731, 0
      %v5782 = vsel %vm3654, %v5732, 0
      %5784 = vmatpush.bf16.msra.mxu0 0
      %5785 = vmatpush.bf16.msra.mxu0 0
      %5786 = vmatpush.bf16.msra.mxu0 0
      %5787 = vmatpush.bf16.msra.mxu0 0
      %5788 = vmatpush.bf16.msra.mxu0 0
      %5789 = vmatpush.bf16.msra.mxu0 0
      %5790 = vmatpush.bf16.msra.mxu0 0
      %5791 = vmatpush.bf16.msra.mxu0 %v5782
      %5792 = vmatmul.bf16.gmra.mxu0 %v5734
      %v5793 = vpop.f32.mrf.mxu0
      %v5794 = vadd.f32 0.0, %v5793
      %v5795 = vpop.f32.mrf.mxu0
      %v5796 = vadd.f32 0.0, %v5795
      %5797 = vmatmul.bf16.gmra.mxu0 %v5737
      %v5798 = vpop.f32.mrf.mxu0
      %v5799 = vadd.f32 0.0, %v5798
      %v5800 = vpop.f32.mrf.mxu0
      %v5801 = vadd.f32 0.0, %v5800
      %5802 = vmatmul.bf16.gmra.mxu0 %v5740
      %v5803 = vpop.f32.mrf.mxu0
      %v5804 = vadd.f32 0.0, %v5803
      %v5805 = vpop.f32.mrf.mxu0
      %v5806 = vadd.f32 0.0, %v5805
      %5807 = vmatmul.bf16.gmra.mxu0 %v5743
      %v5808 = vpop.f32.mrf.mxu0
      %v5809 = vadd.f32 0.0, %v5808
      %v5810 = vpop.f32.mrf.mxu0
      %v5811 = vadd.f32 0.0, %v5810
      %5812 = vmatmul.bf16.gmra.mxu0 %v5746
      %v5813 = vpop.f32.mrf.mxu0
      %v5814 = vadd.f32 0.0, %v5813
      %v5815 = vpop.f32.mrf.mxu0
      %v5816 = vadd.f32 0.0, %v5815
      %5817 = vmatmul.bf16.gmra.mxu0 %v5749
      %v5818 = vpop.f32.mrf.mxu0
      %v5819 = vadd.f32 0.0, %v5818
      %v5820 = vpop.f32.mrf.mxu0
      %v5821 = vadd.f32 0.0, %v5820
      %5822 = vmatmul.bf16.gmra.mxu0 %v5752
      %v5823 = vpop.f32.mrf.mxu0
      %v5824 = vadd.f32 0.0, %v5823
      %v5825 = vpop.f32.mrf.mxu0
      %v5826 = vadd.f32 0.0, %v5825
      %5827 = vmatmul.bf16.gmra.mxu0 %v5755
      %v5828 = vpop.f32.mrf.mxu0
      %v5829 = vadd.f32 0.0, %v5828
      %v5830 = vpop.f32.mrf.mxu0
      %v5831 = vadd.f32 0.0, %v5830
      %5832 = vmatmul.bf16.gmra.mxu0 %v5758
      %v5833 = vpop.f32.mrf.mxu0
      %v5834 = vadd.f32 0.0, %v5833
      %v5835 = vpop.f32.mrf.mxu0
      %v5836 = vadd.f32 0.0, %v5835
      %5837 = vmatmul.bf16.gmra.mxu0 %v5761
      %v5838 = vpop.f32.mrf.mxu0
      %v5839 = vadd.f32 0.0, %v5838
      %v5840 = vpop.f32.mrf.mxu0
      %v5841 = vadd.f32 0.0, %v5840
      %5842 = vmatmul.bf16.gmra.mxu0 %v5764
      %v5843 = vpop.f32.mrf.mxu0
      %v5844 = vadd.f32 0.0, %v5843
      %v5845 = vpop.f32.mrf.mxu0
      %v5846 = vadd.f32 0.0, %v5845
      %5847 = vmatmul.bf16.gmra.mxu0 %v5767
      %v5848 = vpop.f32.mrf.mxu0
      %v5849 = vadd.f32 0.0, %v5848
      %v5850 = vpop.f32.mrf.mxu0
      %v5851 = vadd.f32 0.0, %v5850
      %5852 = vmatmul.bf16.gmra.mxu0 %v5770
      %v5853 = vpop.f32.mrf.mxu0
      %v5854 = vadd.f32 0.0, %v5853
      %v5855 = vpop.f32.mrf.mxu0
      %v5856 = vadd.f32 0.0, %v5855
      %5857 = vmatmul.bf16.gmra.mxu0 %v5773
      %v5858 = vpop.f32.mrf.mxu0
      %v5859 = vadd.f32 0.0, %v5858
      %v5860 = vpop.f32.mrf.mxu0
      %v5861 = vadd.f32 0.0, %v5860
      %5862 = vmatmul.bf16.gmra.mxu0 %v5776
      %v5863 = vpop.f32.mrf.mxu0
      %v5864 = vadd.f32 0.0, %v5863
      %v5865 = vpop.f32.mrf.mxu0
      %v5866 = vadd.f32 0.0, %v5865
      %5867 = vmatmul.bf16.gmra.mxu0 %v5779
      %v5868 = vpop.f32.mrf.mxu0
      %v5869 = vadd.f32 0.0, %v5868
      %v5870 = vpop.f32.mrf.mxu0
      %v5871 = vadd.f32 0.0, %v5870
      %5872 = vdwg.mxu0
      %v5873 = vadd.f32 %v4864, %v5794
      %v5874 = vadd.f32 %v4865, %v5796
      %v5875 = vadd.f32 %v4866, %v5799
      %v5876 = vadd.f32 %v4867, %v5801
      %v5877 = vadd.f32 %v4868, %v5804
      %v5878 = vadd.f32 %v4869, %v5806
      %v5879 = vadd.f32 %v4870, %v5809
      %v5880 = vadd.f32 %v4871, %v5811
      %v5881 = vadd.f32 %v4872, %v5814
      %v5882 = vadd.f32 %v4873, %v5816
      %v5883 = vadd.f32 %v4874, %v5819
      %v5884 = vadd.f32 %v4875, %v5821
      %v5885 = vadd.f32 %v4876, %v5824
      %v5886 = vadd.f32 %v4877, %v5826
      %v5887 = vadd.f32 %v4878, %v5829
      %v5888 = vadd.f32 %v4879, %v5831
      %v5889 = vadd.f32 %v4880, %v5834
      %v5890 = vadd.f32 %v4881, %v5836
      %v5891 = vadd.f32 %v4882, %v5839
      %v5892 = vadd.f32 %v4883, %v5841
      %v5893 = vadd.f32 %v4884, %v5844
      %v5894 = vadd.f32 %v4885, %v5846
      %v5895 = vadd.f32 %v4886, %v5849
      %v5896 = vadd.f32 %v4887, %v5851
      %v5897 = vadd.f32 %v4888, %v5854
      %v5898 = vadd.f32 %v4889, %v5856
      %v5899 = vadd.f32 %v4890, %v5859
      %v5900 = vadd.f32 %v4891, %v5861
      %v5901 = vadd.f32 %v4892, %v5864
      %v5902 = vadd.f32 %v4893, %v5866
      %v5903 = vadd.f32 %v4894, %v5869
      %v5904 = vadd.f32 %v4895, %v5871
      %v5905 = vadd.f32 %v814, %v5873
      %v5906 = vadd.f32 %v815, %v5874
      %v5907 = vadd.f32 %v816, %v5875
      %v5908 = vadd.f32 %v817, %v5876
      %v5909 = vadd.f32 %v818, %v5877
      %v5910 = vadd.f32 %v819, %v5878
      %v5911 = vadd.f32 %v820, %v5879
      %v5912 = vadd.f32 %v821, %v5880
      %v5913 = vadd.f32 %v822, %v5881
      %v5914 = vadd.f32 %v823, %v5882
      %v5915 = vadd.f32 %v824, %v5883
      %v5916 = vadd.f32 %v825, %v5884
      %v5917 = vadd.f32 %v826, %v5885
      %v5918 = vadd.f32 %v827, %v5886
      %v5919 = vadd.f32 %v828, %v5887
      %v5920 = vadd.f32 %v829, %v5888
      %v5921 = vadd.f32 %v830, %v5889
      %v5922 = vadd.f32 %v831, %v5890
      %v5923 = vadd.f32 %v832, %v5891
      %v5924 = vadd.f32 %v833, %v5892
      %v5925 = vadd.f32 %v834, %v5893
      %v5926 = vadd.f32 %v835, %v5894
      %v5927 = vadd.f32 %v836, %v5895
      %v5928 = vadd.f32 %v837, %v5896
      %v5929 = vadd.f32 %v838, %v5897
      %v5930 = vadd.f32 %v839, %v5898
      %v5931 = vadd.f32 %v840, %v5899
      %v5932 = vadd.f32 %v841, %v5900
      %v5933 = vadd.f32 %v842, %v5901
      %v5934 = vadd.f32 %v843, %v5902
      %v5935 = vadd.f32 %v844, %v5903
      %v5936 = vadd.f32 %v845, %v5904
      %v5937 = vld [vmem:[%s710] sm:$0x1]
      %v5939 = vperm.slane %v5937, 0
      %v5941 = vadd.f32 %v5905, %v5939
      %v5942 = vadd.f32 %v5906, %v5939
      %v5943 = vadd.f32 %v5907, %v5939
      %v5944 = vadd.f32 %v5908, %v5939
      %v5945 = vadd.f32 %v5909, %v5939
      %v5946 = vadd.f32 %v5910, %v5939
      %v5947 = vadd.f32 %v5911, %v5939
      %v5948 = vadd.f32 %v5912, %v5939
      %v5949 = vadd.f32 %v5913, %v5939
      %v5950 = vadd.f32 %v5914, %v5939
      %v5951 = vadd.f32 %v5915, %v5939
      %v5952 = vadd.f32 %v5916, %v5939
      %v5953 = vadd.f32 %v5917, %v5939
      %v5954 = vadd.f32 %v5918, %v5939
      %v5955 = vadd.f32 %v5919, %v5939
      %v5956 = vadd.f32 %v5920, %v5939
      %v5957 = vadd.f32 %v5921, %v5939
      %v5958 = vadd.f32 %v5922, %v5939
      %v5959 = vadd.f32 %v5923, %v5939
      %v5960 = vadd.f32 %v5924, %v5939
      %v5961 = vadd.f32 %v5925, %v5939
      %v5962 = vadd.f32 %v5926, %v5939
      %v5963 = vadd.f32 %v5927, %v5939
      %v5964 = vadd.f32 %v5928, %v5939
      %v5965 = vadd.f32 %v5929, %v5939
      %v5966 = vadd.f32 %v5930, %v5939
      %v5967 = vadd.f32 %v5931, %v5939
      %v5968 = vadd.f32 %v5932, %v5939
      %v5969 = vadd.f32 %v5933, %v5939
      %v5970 = vadd.f32 %v5934, %v5939
      %v5971 = vadd.f32 %v5935, %v5939
      %v5972 = vadd.f32 %v5936, %v5939
      %v5973 = vld [vmem:[%s713] sm:$0x1]
      %v5974 = vld [vmem:[%s716] sm:$0x1]
      %v5975 = vsel %vm864, %v5941, 0.0
      %5976 = vadd.xlane.f32.xlu0 %v5975
      %v5977 = vpop.xlane.xlu0 %5976
      %v5978 = vsel %vm864, %v5942, 0.0
      %5979 = vadd.xlane.f32.xlu0 %v5978
      %v5980 = vpop.xlane.xlu0 %5979
      %v5981 = vsel %vm864, %v5943, 0.0
      %5982 = vadd.xlane.f32.xlu0 %v5981
      %v5983 = vpop.xlane.xlu0 %5982
      %v5984 = vsel %vm864, %v5944, 0.0
      %5985 = vadd.xlane.f32.xlu0 %v5984
      %v5986 = vpop.xlane.xlu0 %5985
      %v5987 = vsel %vm864, %v5945, 0.0
      %5988 = vadd.xlane.f32.xlu0 %v5987
      %v5989 = vpop.xlane.xlu0 %5988
      %v5990 = vsel %vm864, %v5946, 0.0
      %5991 = vadd.xlane.f32.xlu0 %v5990
      %v5992 = vpop.xlane.xlu0 %5991
      %v5993 = vsel %vm864, %v5947, 0.0
      %5994 = vadd.xlane.f32.xlu0 %v5993
      %v5995 = vpop.xlane.xlu0 %5994
      %v5996 = vsel %vm864, %v5948, 0.0
      %5997 = vadd.xlane.f32.xlu0 %v5996
      %v5998 = vpop.xlane.xlu0 %5997
      %v5999 = vsel %vm864, %v5949, 0.0
      %6000 = vadd.xlane.f32.xlu0 %v5999
      %v6001 = vpop.xlane.xlu0 %6000
      %v6002 = vsel %vm864, %v5950, 0.0
      %6003 = vadd.xlane.f32.xlu0 %v6002
      %v6004 = vpop.xlane.xlu0 %6003
      %v6005 = vsel %vm864, %v5951, 0.0
      %6006 = vadd.xlane.f32.xlu0 %v6005
      %v6007 = vpop.xlane.xlu0 %6006
      %v6008 = vsel %vm864, %v5952, 0.0
      %6009 = vadd.xlane.f32.xlu0 %v6008
      %v6010 = vpop.xlane.xlu0 %6009
      %v6011 = vsel %vm864, %v5953, 0.0
      %6012 = vadd.xlane.f32.xlu0 %v6011
      %v6013 = vpop.xlane.xlu0 %6012
      %v6014 = vsel %vm864, %v5954, 0.0
      %6015 = vadd.xlane.f32.xlu0 %v6014
      %v6016 = vpop.xlane.xlu0 %6015
      %v6017 = vsel %vm864, %v5955, 0.0
      %6018 = vadd.xlane.f32.xlu0 %v6017
      %v6019 = vpop.xlane.xlu0 %6018
      %v6020 = vsel %vm864, %v5956, 0.0
      %6021 = vadd.xlane.f32.xlu0 %v6020
      %v6022 = vpop.xlane.xlu0 %6021
      %v6023 = vsel %vm864, %v5957, 0.0
      %6024 = vadd.xlane.f32.xlu0 %v6023
      %v6025 = vpop.xlane.xlu0 %6024
      %v6026 = vsel %vm864, %v5958, 0.0
      %6027 = vadd.xlane.f32.xlu0 %v6026
      %v6028 = vpop.xlane.xlu0 %6027
      %v6029 = vsel %vm864, %v5959, 0.0
      %6030 = vadd.xlane.f32.xlu0 %v6029
      %v6031 = vpop.xlane.xlu0 %6030
      %v6032 = vsel %vm864, %v5960, 0.0
      %6033 = vadd.xlane.f32.xlu0 %v6032
      %v6034 = vpop.xlane.xlu0 %6033
      %v6035 = vsel %vm864, %v5961, 0.0
      %6036 = vadd.xlane.f32.xlu0 %v6035
      %v6037 = vpop.xlane.xlu0 %6036
      %v6038 = vsel %vm864, %v5962, 0.0
      %6039 = vadd.xlane.f32.xlu0 %v6038
      %v6040 = vpop.xlane.xlu0 %6039
      %v6041 = vsel %vm864, %v5963, 0.0
      %6042 = vadd.xlane.f32.xlu0 %v6041
      %v6043 = vpop.xlane.xlu0 %6042
      %v6044 = vsel %vm864, %v5964, 0.0
      %6045 = vadd.xlane.f32.xlu0 %v6044
      %v6046 = vpop.xlane.xlu0 %6045
      %v6047 = vsel %vm864, %v5965, 0.0
      %6048 = vadd.xlane.f32.xlu0 %v6047
      %v6049 = vpop.xlane.xlu0 %6048
      %v6050 = vsel %vm864, %v5966, 0.0
      %6051 = vadd.xlane.f32.xlu0 %v6050
      %v6052 = vpop.xlane.xlu0 %6051
      %v6053 = vsel %vm864, %v5967, 0.0
      %6054 = vadd.xlane.f32.xlu0 %v6053
      %v6055 = vpop.xlane.xlu0 %6054
      %v6056 = vsel %vm864, %v5968, 0.0
      %6057 = vadd.xlane.f32.xlu0 %v6056
      %v6058 = vpop.xlane.xlu0 %6057
      %v6059 = vsel %vm864, %v5969, 0.0
      %6060 = vadd.xlane.f32.xlu0 %v6059
      %v6061 = vpop.xlane.xlu0 %6060
      %v6062 = vsel %vm864, %v5970, 0.0
      %6063 = vadd.xlane.f32.xlu0 %v6062
      %v6064 = vpop.xlane.xlu0 %6063
      %v6065 = vsel %vm864, %v5971, 0.0
      %6066 = vadd.xlane.f32.xlu0 %v6065
      %v6067 = vpop.xlane.xlu0 %6066
      %v6068 = vsel %vm864, %v5972, 0.0
      %6069 = vadd.xlane.f32.xlu0 %v6068
      %v6070 = vpop.xlane.xlu0 %6069
      %v6071 = vmul.f32 %v5977, %v967
      %v6072 = vmul.f32 %v5980, %v967
      %v6073 = vmul.f32 %v5983, %v967
      %v6074 = vmul.f32 %v5986, %v967
      %v6075 = vmul.f32 %v5989, %v967
      %v6076 = vmul.f32 %v5992, %v967
      %v6077 = vmul.f32 %v5995, %v967
      %v6078 = vmul.f32 %v5998, %v967
      %v6079 = vmul.f32 %v6001, %v967
      %v6080 = vmul.f32 %v6004, %v967
      %v6081 = vmul.f32 %v6007, %v967
      %v6082 = vmul.f32 %v6010, %v967
      %v6083 = vmul.f32 %v6013, %v967
      %v6084 = vmul.f32 %v6016, %v967
      %v6085 = vmul.f32 %v6019, %v967
      %v6086 = vmul.f32 %v6022, %v967
      %v6087 = vmul.f32 %v6025, %v967
      %v6088 = vmul.f32 %v6028, %v967
      %v6089 = vmul.f32 %v6031, %v967
      %v6090 = vmul.f32 %v6034, %v967
      %v6091 = vmul.f32 %v6037, %v967
      %v6092 = vmul.f32 %v6040, %v967
      %v6093 = vmul.f32 %v6043, %v967
      %v6094 = vmul.f32 %v6046, %v967
      %v6095 = vmul.f32 %v6049, %v967
      %v6096 = vmul.f32 %v6052, %v967
      %v6097 = vmul.f32 %v6055, %v967
      %v6098 = vmul.f32 %v6058, %v967
      %v6099 = vmul.f32 %v6061, %v967
      %v6100 = vmul.f32 %v6064, %v967
      %v6101 = vmul.f32 %v6067, %v967
      %v6102 = vmul.f32 %v6070, %v967
      %v6103 = vsub.f32 %v5941, %v6071
      %v6104 = vsub.f32 %v5942, %v6072
      %v6105 = vsub.f32 %v5943, %v6073
      %v6106 = vsub.f32 %v5944, %v6074
      %v6107 = vsub.f32 %v5945, %v6075
      %v6108 = vsub.f32 %v5946, %v6076
      %v6109 = vsub.f32 %v5947, %v6077
      %v6110 = vsub.f32 %v5948, %v6078
      %v6111 = vsub.f32 %v5949, %v6079
      %v6112 = vsub.f32 %v5950, %v6080
      %v6113 = vsub.f32 %v5951, %v6081
      %v6114 = vsub.f32 %v5952, %v6082
      %v6115 = vsub.f32 %v5953, %v6083
      %v6116 = vsub.f32 %v5954, %v6084
      %v6117 = vsub.f32 %v5955, %v6085
      %v6118 = vsub.f32 %v5956, %v6086
      %v6119 = vsub.f32 %v5957, %v6087
      %v6120 = vsub.f32 %v5958, %v6088
      %v6121 = vsub.f32 %v5959, %v6089
      %v6122 = vsub.f32 %v5960, %v6090
      %v6123 = vsub.f32 %v5961, %v6091
      %v6124 = vsub.f32 %v5962, %v6092
      %v6125 = vsub.f32 %v5963, %v6093
      %v6126 = vsub.f32 %v5964, %v6094
      %v6127 = vsub.f32 %v5965, %v6095
      %v6128 = vsub.f32 %v5966, %v6096
      %v6129 = vsub.f32 %v5967, %v6097
      %v6130 = vsub.f32 %v5968, %v6098
      %v6131 = vsub.f32 %v5969, %v6099
      %v6132 = vsub.f32 %v5970, %v6100
      %v6133 = vsub.f32 %v5971, %v6101
      %v6134 = vsub.f32 %v5972, %v6102
      %v6135 = vmul.f32 %v6103, %v6103
      %v6136 = vmul.f32 %v6104, %v6104
      %v6137 = vmul.f32 %v6105, %v6105
      %v6138 = vmul.f32 %v6106, %v6106
      %v6139 = vmul.f32 %v6107, %v6107
      %v6140 = vmul.f32 %v6108, %v6108
      %v6141 = vmul.f32 %v6109, %v6109
      %v6142 = vmul.f32 %v6110, %v6110
      %v6143 = vmul.f32 %v6111, %v6111
      %v6144 = vmul.f32 %v6112, %v6112
      %v6145 = vmul.f32 %v6113, %v6113
      %v6146 = vmul.f32 %v6114, %v6114
      %v6147 = vmul.f32 %v6115, %v6115
      %v6148 = vmul.f32 %v6116, %v6116
      %v6149 = vmul.f32 %v6117, %v6117
      %v6150 = vmul.f32 %v6118, %v6118
      %v6151 = vmul.f32 %v6119, %v6119
      %v6152 = vmul.f32 %v6120, %v6120
      %v6153 = vmul.f32 %v6121, %v6121
      %v6154 = vmul.f32 %v6122, %v6122
      %v6155 = vmul.f32 %v6123, %v6123
      %v6156 = vmul.f32 %v6124, %v6124
      %v6157 = vmul.f32 %v6125, %v6125
      %v6158 = vmul.f32 %v6126, %v6126
      %v6159 = vmul.f32 %v6127, %v6127
      %v6160 = vmul.f32 %v6128, %v6128
      %v6161 = vmul.f32 %v6129, %v6129
      %v6162 = vmul.f32 %v6130, %v6130
      %v6163 = vmul.f32 %v6131, %v6131
      %v6164 = vmul.f32 %v6132, %v6132
      %v6165 = vmul.f32 %v6133, %v6133
      %v6166 = vmul.f32 %v6134, %v6134
      %v6167 = vsel %vm864, %v6135, 0.0
      %6168 = vadd.xlane.f32.xlu0 %v6167
      %v6169 = vpop.xlane.xlu0 %6168
      %v6170 = vsel %vm864, %v6136, 0.0
      %6171 = vadd.xlane.f32.xlu0 %v6170
      %v6172 = vpop.xlane.xlu0 %6171
      %v6173 = vsel %vm864, %v6137, 0.0
      %6174 = vadd.xlane.f32.xlu0 %v6173
      %v6175 = vpop.xlane.xlu0 %6174
      %v6176 = vsel %vm864, %v6138, 0.0
      %6177 = vadd.xlane.f32.xlu0 %v6176
      %v6178 = vpop.xlane.xlu0 %6177
      %v6179 = vsel %vm864, %v6139, 0.0
      %6180 = vadd.xlane.f32.xlu0 %v6179
      %v6181 = vpop.xlane.xlu0 %6180
      %v6182 = vsel %vm864, %v6140, 0.0
      %6183 = vadd.xlane.f32.xlu0 %v6182
      %v6184 = vpop.xlane.xlu0 %6183
      %v6185 = vsel %vm864, %v6141, 0.0
      %6186 = vadd.xlane.f32.xlu0 %v6185
      %v6187 = vpop.xlane.xlu0 %6186
      %v6188 = vsel %vm864, %v6142, 0.0
      %6189 = vadd.xlane.f32.xlu0 %v6188
      %v6190 = vpop.xlane.xlu0 %6189
      %v6191 = vsel %vm864, %v6143, 0.0
      %6192 = vadd.xlane.f32.xlu0 %v6191
      %v6193 = vpop.xlane.xlu0 %6192
      %v6194 = vsel %vm864, %v6144, 0.0
      %6195 = vadd.xlane.f32.xlu0 %v6194
      %v6196 = vpop.xlane.xlu0 %6195
      %v6197 = vsel %vm864, %v6145, 0.0
      %6198 = vadd.xlane.f32.xlu0 %v6197
      %v6199 = vpop.xlane.xlu0 %6198
      %v6200 = vsel %vm864, %v6146, 0.0
      %6201 = vadd.xlane.f32.xlu0 %v6200
      %v6202 = vpop.xlane.xlu0 %6201
      %v6203 = vsel %vm864, %v6147, 0.0
      %6204 = vadd.xlane.f32.xlu0 %v6203
      %v6205 = vpop.xlane.xlu0 %6204
      %v6206 = vsel %vm864, %v6148, 0.0
      %6207 = vadd.xlane.f32.xlu0 %v6206
      %v6208 = vpop.xlane.xlu0 %6207
      %v6209 = vsel %vm864, %v6149, 0.0
      %6210 = vadd.xlane.f32.xlu0 %v6209
      %v6211 = vpop.xlane.xlu0 %6210
      %v6212 = vsel %vm864, %v6150, 0.0
      %6213 = vadd.xlane.f32.xlu0 %v6212
      %v6214 = vpop.xlane.xlu0 %6213
      %v6215 = vsel %vm864, %v6151, 0.0
      %6216 = vadd.xlane.f32.xlu0 %v6215
      %v6217 = vpop.xlane.xlu0 %6216
      %v6218 = vsel %vm864, %v6152, 0.0
      %6219 = vadd.xlane.f32.xlu0 %v6218
      %v6220 = vpop.xlane.xlu0 %6219
      %v6221 = vsel %vm864, %v6153, 0.0
      %6222 = vadd.xlane.f32.xlu0 %v6221
      %v6223 = vpop.xlane.xlu0 %6222
      %v6224 = vsel %vm864, %v6154, 0.0
      %6225 = vadd.xlane.f32.xlu0 %v6224
      %v6226 = vpop.xlane.xlu0 %6225
      %v6227 = vsel %vm864, %v6155, 0.0
      %6228 = vadd.xlane.f32.xlu0 %v6227
      %v6229 = vpop.xlane.xlu0 %6228
      %v6230 = vsel %vm864, %v6156, 0.0
      %6231 = vadd.xlane.f32.xlu0 %v6230
      %v6232 = vpop.xlane.xlu0 %6231
      %v6233 = vsel %vm864, %v6157, 0.0
      %6234 = vadd.xlane.f32.xlu0 %v6233
      %v6235 = vpop.xlane.xlu0 %6234
      %v6236 = vsel %vm864, %v6158, 0.0
      %6237 = vadd.xlane.f32.xlu0 %v6236
      %v6238 = vpop.xlane.xlu0 %6237
      %v6239 = vsel %vm864, %v6159, 0.0
      %6240 = vadd.xlane.f32.xlu0 %v6239
      %v6241 = vpop.xlane.xlu0 %6240
      %v6242 = vsel %vm864, %v6160, 0.0
      %6243 = vadd.xlane.f32.xlu0 %v6242
      %v6244 = vpop.xlane.xlu0 %6243
      %v6245 = vsel %vm864, %v6161, 0.0
      %6246 = vadd.xlane.f32.xlu0 %v6245
      %v6247 = vpop.xlane.xlu0 %6246
      %v6248 = vsel %vm864, %v6162, 0.0
      %6249 = vadd.xlane.f32.xlu0 %v6248
      %v6250 = vpop.xlane.xlu0 %6249
      %v6251 = vsel %vm864, %v6163, 0.0
      %6252 = vadd.xlane.f32.xlu0 %v6251
      %v6253 = vpop.xlane.xlu0 %6252
      %v6254 = vsel %vm864, %v6164, 0.0
      %6255 = vadd.xlane.f32.xlu0 %v6254
      %v6256 = vpop.xlane.xlu0 %6255
      %v6257 = vsel %vm864, %v6165, 0.0
      %6258 = vadd.xlane.f32.xlu0 %v6257
      %v6259 = vpop.xlane.xlu0 %6258
      %v6260 = vsel %vm864, %v6166, 0.0
      %6261 = vadd.xlane.f32.xlu0 %v6260
      %v6262 = vpop.xlane.xlu0 %6261
      %v6263 = vmul.f32 %v6169, %v967
      %v6264 = vmul.f32 %v6172, %v967
      %v6265 = vmul.f32 %v6175, %v967
      %v6266 = vmul.f32 %v6178, %v967
      %v6267 = vmul.f32 %v6181, %v967
      %v6268 = vmul.f32 %v6184, %v967
      %v6269 = vmul.f32 %v6187, %v967
      %v6270 = vmul.f32 %v6190, %v967
      %v6271 = vmul.f32 %v6193, %v967
      %v6272 = vmul.f32 %v6196, %v967
      %v6273 = vmul.f32 %v6199, %v967
      %v6274 = vmul.f32 %v6202, %v967
      %v6275 = vmul.f32 %v6205, %v967
      %v6276 = vmul.f32 %v6208, %v967
      %v6277 = vmul.f32 %v6211, %v967
      %v6278 = vmul.f32 %v6214, %v967
      %v6279 = vmul.f32 %v6217, %v967
      %v6280 = vmul.f32 %v6220, %v967
      %v6281 = vmul.f32 %v6223, %v967
      %v6282 = vmul.f32 %v6226, %v967
      %v6283 = vmul.f32 %v6229, %v967
      %v6284 = vmul.f32 %v6232, %v967
      %v6285 = vmul.f32 %v6235, %v967
      %v6286 = vmul.f32 %v6238, %v967
      %v6287 = vmul.f32 %v6241, %v967
      %v6288 = vmul.f32 %v6244, %v967
      %v6289 = vmul.f32 %v6247, %v967
      %v6290 = vmul.f32 %v6250, %v967
      %v6291 = vmul.f32 %v6253, %v967
      %v6292 = vmul.f32 %v6256, %v967
      %v6293 = vmul.f32 %v6259, %v967
      %v6294 = vmul.f32 %v6262, %v967
      %v6295 = vadd.f32 %v6263, 1e-05
      %v6296 = vadd.f32 %v6264, 1e-05
      %v6297 = vadd.f32 %v6265, 1e-05
      %v6298 = vadd.f32 %v6266, 1e-05
      %v6299 = vadd.f32 %v6267, 1e-05
      %v6300 = vadd.f32 %v6268, 1e-05
      %v6301 = vadd.f32 %v6269, 1e-05
      %v6302 = vadd.f32 %v6270, 1e-05
      %v6303 = vadd.f32 %v6271, 1e-05
      %v6304 = vadd.f32 %v6272, 1e-05
      %v6305 = vadd.f32 %v6273, 1e-05
      %v6306 = vadd.f32 %v6274, 1e-05
      %v6307 = vadd.f32 %v6275, 1e-05
      %v6308 = vadd.f32 %v6276, 1e-05
      %v6309 = vadd.f32 %v6277, 1e-05
      %v6310 = vadd.f32 %v6278, 1e-05
      %v6311 = vadd.f32 %v6279, 1e-05
      %v6312 = vadd.f32 %v6280, 1e-05
      %v6313 = vadd.f32 %v6281, 1e-05
      %v6314 = vadd.f32 %v6282, 1e-05
      %v6315 = vadd.f32 %v6283, 1e-05
      %v6316 = vadd.f32 %v6284, 1e-05
      %v6317 = vadd.f32 %v6285, 1e-05
      %v6318 = vadd.f32 %v6286, 1e-05
      %v6319 = vadd.f32 %v6287, 1e-05
      %v6320 = vadd.f32 %v6288, 1e-05
      %v6321 = vadd.f32 %v6289, 1e-05
      %v6322 = vadd.f32 %v6290, 1e-05
      %v6323 = vadd.f32 %v6291, 1e-05
      %v6324 = vadd.f32 %v6292, 1e-05
      %v6325 = vadd.f32 %v6293, 1e-05
      %v6326 = vadd.f32 %v6294, 1e-05
      %v6327 = vrsqrt.pop %v6295
      %v6328 = vmul.f32 %v6327, %v6295
      %v6329 = vmul.f32 %v6328, %v6327
      %v6330 = vmul.f32 0.5, %v6329
      %v6331 = vsub.f32 1.5, %v6330
      %v6332 = vmul.f32 %v6327, %v6331
      %vm6333 = vweird.f32 %v6295
      %vm6334 = vweird.f32 %v6327
      %vm6335 = vmor %vm6333, %vm6334
      %v6336 = vsel %vm6335, %v6327, %v6332
      %v6337 = vrsqrt.pop %v6296
      %v6338 = vmul.f32 %v6337, %v6296
      %v6339 = vmul.f32 %v6338, %v6337
      %v6340 = vmul.f32 0.5, %v6339
      %v6341 = vsub.f32 1.5, %v6340
      %v6342 = vmul.f32 %v6337, %v6341
      %vm6343 = vweird.f32 %v6296
      %vm6344 = vweird.f32 %v6337
      %vm6345 = vmor %vm6343, %vm6344
      %v6346 = vsel %vm6345, %v6337, %v6342
      %v6347 = vrsqrt.pop %v6297
      %v6348 = vmul.f32 %v6347, %v6297
      %v6349 = vmul.f32 %v6348, %v6347
      %v6350 = vmul.f32 0.5, %v6349
      %v6351 = vsub.f32 1.5, %v6350
      %v6352 = vmul.f32 %v6347, %v6351
      %vm6353 = vweird.f32 %v6297
      %vm6354 = vweird.f32 %v6347
      %vm6355 = vmor %vm6353, %vm6354
      %v6356 = vsel %vm6355, %v6347, %v6352
      %v6357 = vrsqrt.pop %v6298
      %v6358 = vmul.f32 %v6357, %v6298
      %v6359 = vmul.f32 %v6358, %v6357
      %v6360 = vmul.f32 0.5, %v6359
      %v6361 = vsub.f32 1.5, %v6360
      %v6362 = vmul.f32 %v6357, %v6361
      %vm6363 = vweird.f32 %v6298
      %vm6364 = vweird.f32 %v6357
      %vm6365 = vmor %vm6363, %vm6364
      %v6366 = vsel %vm6365, %v6357, %v6362
      %v6367 = vrsqrt.pop %v6299
      %v6368 = vmul.f32 %v6367, %v6299
      %v6369 = vmul.f32 %v6368, %v6367
      %v6370 = vmul.f32 0.5, %v6369
      %v6371 = vsub.f32 1.5, %v6370
      %v6372 = vmul.f32 %v6367, %v6371
      %vm6373 = vweird.f32 %v6299
      %vm6374 = vweird.f32 %v6367
      %vm6375 = vmor %vm6373, %vm6374
      %v6376 = vsel %vm6375, %v6367, %v6372
      %v6377 = vrsqrt.pop %v6300
      %v6378 = vmul.f32 %v6377, %v6300
      %v6379 = vmul.f32 %v6378, %v6377
      %v6380 = vmul.f32 0.5, %v6379
      %v6381 = vsub.f32 1.5, %v6380
      %v6382 = vmul.f32 %v6377, %v6381
      %vm6383 = vweird.f32 %v6300
      %vm6384 = vweird.f32 %v6377
      %vm6385 = vmor %vm6383, %vm6384
      %v6386 = vsel %vm6385, %v6377, %v6382
      %v6387 = vrsqrt.pop %v6301
      %v6388 = vmul.f32 %v6387, %v6301
      %v6389 = vmul.f32 %v6388, %v6387
      %v6390 = vmul.f32 0.5, %v6389
      %v6391 = vsub.f32 1.5, %v6390
      %v6392 = vmul.f32 %v6387, %v6391
      %vm6393 = vweird.f32 %v6301
      %vm6394 = vweird.f32 %v6387
      %vm6395 = vmor %vm6393, %vm6394
      %v6396 = vsel %vm6395, %v6387, %v6392
      %v6397 = vrsqrt.pop %v6302
      %v6398 = vmul.f32 %v6397, %v6302
      %v6399 = vmul.f32 %v6398, %v6397
      %v6400 = vmul.f32 0.5, %v6399
      %v6401 = vsub.f32 1.5, %v6400
      %v6402 = vmul.f32 %v6397, %v6401
      %vm6403 = vweird.f32 %v6302
      %vm6404 = vweird.f32 %v6397
      %vm6405 = vmor %vm6403, %vm6404
      %v6406 = vsel %vm6405, %v6397, %v6402
      %v6407 = vrsqrt.pop %v6303
      %v6408 = vmul.f32 %v6407, %v6303
      %v6409 = vmul.f32 %v6408, %v6407
      %v6410 = vmul.f32 0.5, %v6409
      %v6411 = vsub.f32 1.5, %v6410
      %v6412 = vmul.f32 %v6407, %v6411
      %vm6413 = vweird.f32 %v6303
      %vm6414 = vweird.f32 %v6407
      %vm6415 = vmor %vm6413, %vm6414
      %v6416 = vsel %vm6415, %v6407, %v6412
      %v6417 = vrsqrt.pop %v6304
      %v6418 = vmul.f32 %v6417, %v6304
      %v6419 = vmul.f32 %v6418, %v6417
      %v6420 = vmul.f32 0.5, %v6419
      %v6421 = vsub.f32 1.5, %v6420
      %v6422 = vmul.f32 %v6417, %v6421
      %vm6423 = vweird.f32 %v6304
      %vm6424 = vweird.f32 %v6417
      %vm6425 = vmor %vm6423, %vm6424
      %v6426 = vsel %vm6425, %v6417, %v6422
      %v6427 = vrsqrt.pop %v6305
      %v6428 = vmul.f32 %v6427, %v6305
      %v6429 = vmul.f32 %v6428, %v6427
      %v6430 = vmul.f32 0.5, %v6429
      %v6431 = vsub.f32 1.5, %v6430
      %v6432 = vmul.f32 %v6427, %v6431
      %vm6433 = vweird.f32 %v6305
      %vm6434 = vweird.f32 %v6427
      %vm6435 = vmor %vm6433, %vm6434
      %v6436 = vsel %vm6435, %v6427, %v6432
      %v6437 = vrsqrt.pop %v6306
      %v6438 = vmul.f32 %v6437, %v6306
      %v6439 = vmul.f32 %v6438, %v6437
      %v6440 = vmul.f32 0.5, %v6439
      %v6441 = vsub.f32 1.5, %v6440
      %v6442 = vmul.f32 %v6437, %v6441
      %vm6443 = vweird.f32 %v6306
      %vm6444 = vweird.f32 %v6437
      %vm6445 = vmor %vm6443, %vm6444
      %v6446 = vsel %vm6445, %v6437, %v6442
      %v6447 = vrsqrt.pop %v6307
      %v6448 = vmul.f32 %v6447, %v6307
      %v6449 = vmul.f32 %v6448, %v6447
      %v6450 = vmul.f32 0.5, %v6449
      %v6451 = vsub.f32 1.5, %v6450
      %v6452 = vmul.f32 %v6447, %v6451
      %vm6453 = vweird.f32 %v6307
      %vm6454 = vweird.f32 %v6447
      %vm6455 = vmor %vm6453, %vm6454
      %v6456 = vsel %vm6455, %v6447, %v6452
      %v6457 = vrsqrt.pop %v6308
      %v6458 = vmul.f32 %v6457, %v6308
      %v6459 = vmul.f32 %v6458, %v6457
      %v6460 = vmul.f32 0.5, %v6459
      %v6461 = vsub.f32 1.5, %v6460
      %v6462 = vmul.f32 %v6457, %v6461
      %vm6463 = vweird.f32 %v6308
      %vm6464 = vweird.f32 %v6457
      %vm6465 = vmor %vm6463, %vm6464
      %v6466 = vsel %vm6465, %v6457, %v6462
      %v6467 = vrsqrt.pop %v6309
      %v6468 = vmul.f32 %v6467, %v6309
      %v6469 = vmul.f32 %v6468, %v6467
      %v6470 = vmul.f32 0.5, %v6469
      %v6471 = vsub.f32 1.5, %v6470
      %v6472 = vmul.f32 %v6467, %v6471
      %vm6473 = vweird.f32 %v6309
      %vm6474 = vweird.f32 %v6467
      %vm6475 = vmor %vm6473, %vm6474
      %v6476 = vsel %vm6475, %v6467, %v6472
      %v6477 = vrsqrt.pop %v6310
      %v6478 = vmul.f32 %v6477, %v6310
      %v6479 = vmul.f32 %v6478, %v6477
      %v6480 = vmul.f32 0.5, %v6479
      %v6481 = vsub.f32 1.5, %v6480
      %v6482 = vmul.f32 %v6477, %v6481
      %vm6483 = vweird.f32 %v6310
      %vm6484 = vweird.f32 %v6477
      %vm6485 = vmor %vm6483, %vm6484
      %v6486 = vsel %vm6485, %v6477, %v6482
      %v6487 = vrsqrt.pop %v6311
      %v6488 = vmul.f32 %v6487, %v6311
      %v6489 = vmul.f32 %v6488, %v6487
      %v6490 = vmul.f32 0.5, %v6489
      %v6491 = vsub.f32 1.5, %v6490
      %v6492 = vmul.f32 %v6487, %v6491
      %vm6493 = vweird.f32 %v6311
      %vm6494 = vweird.f32 %v6487
      %vm6495 = vmor %vm6493, %vm6494
      %v6496 = vsel %vm6495, %v6487, %v6492
      %v6497 = vrsqrt.pop %v6312
      %v6498 = vmul.f32 %v6497, %v6312
      %v6499 = vmul.f32 %v6498, %v6497
      %v6500 = vmul.f32 0.5, %v6499
      %v6501 = vsub.f32 1.5, %v6500
      %v6502 = vmul.f32 %v6497, %v6501
      %vm6503 = vweird.f32 %v6312
      %vm6504 = vweird.f32 %v6497
      %vm6505 = vmor %vm6503, %vm6504
      %v6506 = vsel %vm6505, %v6497, %v6502
      %v6507 = vrsqrt.pop %v6313
      %v6508 = vmul.f32 %v6507, %v6313
      %v6509 = vmul.f32 %v6508, %v6507
      %v6510 = vmul.f32 0.5, %v6509
      %v6511 = vsub.f32 1.5, %v6510
      %v6512 = vmul.f32 %v6507, %v6511
      %vm6513 = vweird.f32 %v6313
      %vm6514 = vweird.f32 %v6507
      %vm6515 = vmor %vm6513, %vm6514
      %v6516 = vsel %vm6515, %v6507, %v6512
      %v6517 = vrsqrt.pop %v6314
      %v6518 = vmul.f32 %v6517, %v6314
      %v6519 = vmul.f32 %v6518, %v6517
      %v6520 = vmul.f32 0.5, %v6519
      %v6521 = vsub.f32 1.5, %v6520
      %v6522 = vmul.f32 %v6517, %v6521
      %vm6523 = vweird.f32 %v6314
      %vm6524 = vweird.f32 %v6517
      %vm6525 = vmor %vm6523, %vm6524
      %v6526 = vsel %vm6525, %v6517, %v6522
      %v6527 = vrsqrt.pop %v6315
      %v6528 = vmul.f32 %v6527, %v6315
      %v6529 = vmul.f32 %v6528, %v6527
      %v6530 = vmul.f32 0.5, %v6529
      %v6531 = vsub.f32 1.5, %v6530
      %v6532 = vmul.f32 %v6527, %v6531
      %vm6533 = vweird.f32 %v6315
      %vm6534 = vweird.f32 %v6527
      %vm6535 = vmor %vm6533, %vm6534
      %v6536 = vsel %vm6535, %v6527, %v6532
      %v6537 = vrsqrt.pop %v6316
      %v6538 = vmul.f32 %v6537, %v6316
      %v6539 = vmul.f32 %v6538, %v6537
      %v6540 = vmul.f32 0.5, %v6539
      %v6541 = vsub.f32 1.5, %v6540
      %v6542 = vmul.f32 %v6537, %v6541
      %vm6543 = vweird.f32 %v6316
      %vm6544 = vweird.f32 %v6537
      %vm6545 = vmor %vm6543, %vm6544
      %v6546 = vsel %vm6545, %v6537, %v6542
      %v6547 = vrsqrt.pop %v6317
      %v6548 = vmul.f32 %v6547, %v6317
      %v6549 = vmul.f32 %v6548, %v6547
      %v6550 = vmul.f32 0.5, %v6549
      %v6551 = vsub.f32 1.5, %v6550
      %v6552 = vmul.f32 %v6547, %v6551
      %vm6553 = vweird.f32 %v6317
      %vm6554 = vweird.f32 %v6547
      %vm6555 = vmor %vm6553, %vm6554
      %v6556 = vsel %vm6555, %v6547, %v6552
      %v6557 = vrsqrt.pop %v6318
      %v6558 = vmul.f32 %v6557, %v6318
      %v6559 = vmul.f32 %v6558, %v6557
      %v6560 = vmul.f32 0.5, %v6559
      %v6561 = vsub.f32 1.5, %v6560
      %v6562 = vmul.f32 %v6557, %v6561
      %vm6563 = vweird.f32 %v6318
      %vm6564 = vweird.f32 %v6557
      %vm6565 = vmor %vm6563, %vm6564
      %v6566 = vsel %vm6565, %v6557, %v6562
      %v6567 = vrsqrt.pop %v6319
      %v6568 = vmul.f32 %v6567, %v6319
      %v6569 = vmul.f32 %v6568, %v6567
      %v6570 = vmul.f32 0.5, %v6569
      %v6571 = vsub.f32 1.5, %v6570
      %v6572 = vmul.f32 %v6567, %v6571
      %vm6573 = vweird.f32 %v6319
      %vm6574 = vweird.f32 %v6567
      %vm6575 = vmor %vm6573, %vm6574
      %v6576 = vsel %vm6575, %v6567, %v6572
      %v6577 = vrsqrt.pop %v6320
      %v6578 = vmul.f32 %v6577, %v6320
      %v6579 = vmul.f32 %v6578, %v6577
      %v6580 = vmul.f32 0.5, %v6579
      %v6581 = vsub.f32 1.5, %v6580
      %v6582 = vmul.f32 %v6577, %v6581
      %vm6583 = vweird.f32 %v6320
      %vm6584 = vweird.f32 %v6577
      %vm6585 = vmor %vm6583, %vm6584
      %v6586 = vsel %vm6585, %v6577, %v6582
      %v6587 = vrsqrt.pop %v6321
      %v6588 = vmul.f32 %v6587, %v6321
      %v6589 = vmul.f32 %v6588, %v6587
      %v6590 = vmul.f32 0.5, %v6589
      %v6591 = vsub.f32 1.5, %v6590
      %v6592 = vmul.f32 %v6587, %v6591
      %vm6593 = vweird.f32 %v6321
      %vm6594 = vweird.f32 %v6587
      %vm6595 = vmor %vm6593, %vm6594
      %v6596 = vsel %vm6595, %v6587, %v6592
      %v6597 = vrsqrt.pop %v6322
      %v6598 = vmul.f32 %v6597, %v6322
      %v6599 = vmul.f32 %v6598, %v6597
      %v6600 = vmul.f32 0.5, %v6599
      %v6601 = vsub.f32 1.5, %v6600
      %v6602 = vmul.f32 %v6597, %v6601
      %vm6603 = vweird.f32 %v6322
      %vm6604 = vweird.f32 %v6597
      %vm6605 = vmor %vm6603, %vm6604
      %v6606 = vsel %vm6605, %v6597, %v6602
      %v6607 = vrsqrt.pop %v6323
      %v6608 = vmul.f32 %v6607, %v6323
      %v6609 = vmul.f32 %v6608, %v6607
      %v6610 = vmul.f32 0.5, %v6609
      %v6611 = vsub.f32 1.5, %v6610
      %v6612 = vmul.f32 %v6607, %v6611
      %vm6613 = vweird.f32 %v6323
      %vm6614 = vweird.f32 %v6607
      %vm6615 = vmor %vm6613, %vm6614
      %v6616 = vsel %vm6615, %v6607, %v6612
      %v6617 = vrsqrt.pop %v6324
      %v6618 = vmul.f32 %v6617, %v6324
      %v6619 = vmul.f32 %v6618, %v6617
      %v6620 = vmul.f32 0.5, %v6619
      %v6621 = vsub.f32 1.5, %v6620
      %v6622 = vmul.f32 %v6617, %v6621
      %vm6623 = vweird.f32 %v6324
      %vm6624 = vweird.f32 %v6617
      %vm6625 = vmor %vm6623, %vm6624
      %v6626 = vsel %vm6625, %v6617, %v6622
      %v6627 = vrsqrt.pop %v6325
      %v6628 = vmul.f32 %v6627, %v6325
      %v6629 = vmul.f32 %v6628, %v6627
      %v6630 = vmul.f32 0.5, %v6629
      %v6631 = vsub.f32 1.5, %v6630
      %v6632 = vmul.f32 %v6627, %v6631
      %vm6633 = vweird.f32 %v6325
      %vm6634 = vweird.f32 %v6627
      %vm6635 = vmor %vm6633, %vm6634
      %v6636 = vsel %vm6635, %v6627, %v6632
      %v6637 = vrsqrt.pop %v6326
      %v6638 = vmul.f32 %v6637, %v6326
      %v6639 = vmul.f32 %v6638, %v6637
      %v6640 = vmul.f32 0.5, %v6639
      %v6641 = vsub.f32 1.5, %v6640
      %v6642 = vmul.f32 %v6637, %v6641
      %vm6643 = vweird.f32 %v6326
      %vm6644 = vweird.f32 %v6637
      %vm6645 = vmor %vm6643, %vm6644
      %v6646 = vsel %vm6645, %v6637, %v6642
      %v6647 = vmul.f32 %v6103, %v6336
      %v6648 = vmul.f32 %v6104, %v6346
      %v6649 = vmul.f32 %v6105, %v6356
      %v6650 = vmul.f32 %v6106, %v6366
      %v6651 = vmul.f32 %v6107, %v6376
      %v6652 = vmul.f32 %v6108, %v6386
      %v6653 = vmul.f32 %v6109, %v6396
      %v6654 = vmul.f32 %v6110, %v6406
      %v6655 = vmul.f32 %v6111, %v6416
      %v6656 = vmul.f32 %v6112, %v6426
      %v6657 = vmul.f32 %v6113, %v6436
      %v6658 = vmul.f32 %v6114, %v6446
      %v6659 = vmul.f32 %v6115, %v6456
      %v6660 = vmul.f32 %v6116, %v6466
      %v6661 = vmul.f32 %v6117, %v6476
      %v6662 = vmul.f32 %v6118, %v6486
      %v6663 = vmul.f32 %v6119, %v6496
      %v6664 = vmul.f32 %v6120, %v6506
      %v6665 = vmul.f32 %v6121, %v6516
      %v6666 = vmul.f32 %v6122, %v6526
      %v6667 = vmul.f32 %v6123, %v6536
      %v6668 = vmul.f32 %v6124, %v6546
      %v6669 = vmul.f32 %v6125, %v6556
      %v6670 = vmul.f32 %v6126, %v6566
      %v6671 = vmul.f32 %v6127, %v6576
      %v6672 = vmul.f32 %v6128, %v6586
      %v6673 = vmul.f32 %v6129, %v6596
      %v6674 = vmul.f32 %v6130, %v6606
      %v6675 = vmul.f32 %v6131, %v6616
      %v6676 = vmul.f32 %v6132, %v6626
      %v6677 = vmul.f32 %v6133, %v6636
      %v6678 = vmul.f32 %v6134, %v6646
      %v6680 = vperm.slane %v5973, 0
      %v6682 = vmul.f32 %v6647, %v6680
      %v6683 = vmul.f32 %v6648, %v6680
      %v6684 = vmul.f32 %v6649, %v6680
      %v6685 = vmul.f32 %v6650, %v6680
      %v6686 = vmul.f32 %v6651, %v6680
      %v6687 = vmul.f32 %v6652, %v6680
      %v6688 = vmul.f32 %v6653, %v6680
      %v6689 = vmul.f32 %v6654, %v6680
      %v6690 = vmul.f32 %v6655, %v6680
      %v6691 = vmul.f32 %v6656, %v6680
      %v6692 = vmul.f32 %v6657, %v6680
      %v6693 = vmul.f32 %v6658, %v6680
      %v6694 = vmul.f32 %v6659, %v6680
      %v6695 = vmul.f32 %v6660, %v6680
      %v6696 = vmul.f32 %v6661, %v6680
      %v6697 = vmul.f32 %v6662, %v6680
      %v6698 = vmul.f32 %v6663, %v6680
      %v6699 = vmul.f32 %v6664, %v6680
      %v6700 = vmul.f32 %v6665, %v6680
      %v6701 = vmul.f32 %v6666, %v6680
      %v6702 = vmul.f32 %v6667, %v6680
      %v6703 = vmul.f32 %v6668, %v6680
      %v6704 = vmul.f32 %v6669, %v6680
      %v6705 = vmul.f32 %v6670, %v6680
      %v6706 = vmul.f32 %v6671, %v6680
      %v6707 = vmul.f32 %v6672, %v6680
      %v6708 = vmul.f32 %v6673, %v6680
      %v6709 = vmul.f32 %v6674, %v6680
      %v6710 = vmul.f32 %v6675, %v6680
      %v6711 = vmul.f32 %v6676, %v6680
      %v6712 = vmul.f32 %v6677, %v6680
      %v6713 = vmul.f32 %v6678, %v6680
      %v6715 = vperm.slane %v5974, 0
      %v6717 = vadd.f32 %v6682, %v6715
      %v6718 = vadd.f32 %v6683, %v6715
      %v6719 = vadd.f32 %v6684, %v6715
      %v6720 = vadd.f32 %v6685, %v6715
      %v6721 = vadd.f32 %v6686, %v6715
      %v6722 = vadd.f32 %v6687, %v6715
      %v6723 = vadd.f32 %v6688, %v6715
      %v6724 = vadd.f32 %v6689, %v6715
      %v6725 = vadd.f32 %v6690, %v6715
      %v6726 = vadd.f32 %v6691, %v6715
      %v6727 = vadd.f32 %v6692, %v6715
      %v6728 = vadd.f32 %v6693, %v6715
      %v6729 = vadd.f32 %v6694, %v6715
      %v6730 = vadd.f32 %v6695, %v6715
      %v6731 = vadd.f32 %v6696, %v6715
      %v6732 = vadd.f32 %v6697, %v6715
      %v6733 = vadd.f32 %v6698, %v6715
      %v6734 = vadd.f32 %v6699, %v6715
      %v6735 = vadd.f32 %v6700, %v6715
      %v6736 = vadd.f32 %v6701, %v6715
      %v6737 = vadd.f32 %v6702, %v6715
      %v6738 = vadd.f32 %v6703, %v6715
      %v6739 = vadd.f32 %v6704, %v6715
      %v6740 = vadd.f32 %v6705, %v6715
      %v6741 = vadd.f32 %v6706, %v6715
      %v6742 = vadd.f32 %v6707, %v6715
      %v6743 = vadd.f32 %v6708, %v6715
      %v6744 = vadd.f32 %v6709, %v6715
      %v6745 = vadd.f32 %v6710, %v6715
      %v6746 = vadd.f32 %v6711, %v6715
      %v6747 = vadd.f32 %v6712, %v6715
      %v6748 = vadd.f32 %v6713, %v6715
      %v6749 = vld [vmem:[%s721] sm:$0xf]
      %v6750 = vld [vmem:[%s721 + $0x4] sm:$0xf]
      %v6751 = vld [vmem:[%s721 + $0x8] sm:$0xf]
      %v6752 = vld [vmem:[%s721 + $0xc] sm:$0xf]
      %v6753 = vld [vmem:[%s724] sm:$0x1]
      %v6754 = vpack.c.bf16 %v6718, %v6717
      %v6755 = vpack.c.bf16 %v6720, %v6719
      %v6756 = vpack.c.bf16 %v6722, %v6721
      %v6757 = vpack.c.bf16 %v6724, %v6723
      %v6758 = vpack.c.bf16 %v6726, %v6725
      %v6759 = vpack.c.bf16 %v6728, %v6727
      %v6760 = vpack.c.bf16 %v6730, %v6729
      %v6761 = vpack.c.bf16 %v6732, %v6731
      %v6762 = vpack.c.bf16 %v6734, %v6733
      %v6763 = vpack.c.bf16 %v6736, %v6735
      %v6764 = vpack.c.bf16 %v6738, %v6737
      %v6765 = vpack.c.bf16 %v6740, %v6739
      %v6766 = vpack.c.bf16 %v6742, %v6741
      %v6767 = vpack.c.bf16 %v6744, %v6743
      %v6768 = vpack.c.bf16 %v6746, %v6745
      %v6769 = vpack.c.bf16 %v6748, %v6747
      %v6774 = vunpack.c.l.b16 %v6749
      %v6775 = vunpack.c.l.b16 %v6750
      %v6776 = vunpack.c.l.b16 %v6751
      %v6777 = vunpack.c.l.b16 %v6752
      %v6778 = vpack.c.b16 %v6775, %v6774
      %v6779 = vpack.c.b16 %v6777, %v6776
      %v6783 = vsel %vm864, %v6754, 0
      %v6786 = vsel %vm864, %v6755, 0
      %v6789 = vsel %vm864, %v6756, 0
      %v6792 = vsel %vm864, %v6757, 0
      %v6795 = vsel %vm864, %v6758, 0
      %v6798 = vsel %vm864, %v6759, 0
      %v6801 = vsel %vm864, %v6760, 0
      %v6804 = vsel %vm864, %v6761, 0
      %v6807 = vsel %vm864, %v6762, 0
      %v6810 = vsel %vm864, %v6763, 0
      %v6813 = vsel %vm864, %v6764, 0
      %v6816 = vsel %vm864, %v6765, 0
      %v6819 = vsel %vm864, %v6766, 0
      %v6822 = vsel %vm864, %v6767, 0
      %v6825 = vsel %vm864, %v6768, 0
      %v6828 = vsel %vm864, %v6769, 0
      %6830 = vmatpush.bf16.msra.mxu0 0
      %6831 = vmatpush.bf16.msra.mxu0 0
      %6832 = vmatpush.bf16.msra.mxu0 0
      %6833 = vmatpush.bf16.msra.mxu0 0
      %6834 = vmatpush.bf16.msra.mxu0 0
      %6835 = vmatpush.bf16.msra.mxu0 0
      %6836 = vmatpush.bf16.msra.mxu0 %v6779
      %6837 = vmatpush.bf16.msra.mxu0 %v6778
      %6838 = vmatmul.bf16.gmra.mxu0 %v6783
      %v6839 = vpop.f32.mrf.mxu0
      %v6840 = vadd.f32 0.0, %v6839
      %v6841 = vpop.f32.mrf.mxu0
      %v6842 = vadd.f32 0.0, %v6841
      %6843 = vmatmul.bf16.gmra.mxu0 %v6786
      %v6844 = vpop.f32.mrf.mxu0
      %v6845 = vadd.f32 0.0, %v6844
      %v6846 = vpop.f32.mrf.mxu0
      %v6847 = vadd.f32 0.0, %v6846
      %6848 = vmatmul.bf16.gmra.mxu0 %v6789
      %v6849 = vpop.f32.mrf.mxu0
      %v6850 = vadd.f32 0.0, %v6849
      %v6851 = vpop.f32.mrf.mxu0
      %v6852 = vadd.f32 0.0, %v6851
      %6853 = vmatmul.bf16.gmra.mxu0 %v6792
      %v6854 = vpop.f32.mrf.mxu0
      %v6855 = vadd.f32 0.0, %v6854
      %v6856 = vpop.f32.mrf.mxu0
      %v6857 = vadd.f32 0.0, %v6856
      %6858 = vmatmul.bf16.gmra.mxu0 %v6795
      %v6859 = vpop.f32.mrf.mxu0
      %v6860 = vadd.f32 0.0, %v6859
      %v6861 = vpop.f32.mrf.mxu0
      %v6862 = vadd.f32 0.0, %v6861
      %6863 = vmatmul.bf16.gmra.mxu0 %v6798
      %v6864 = vpop.f32.mrf.mxu0
      %v6865 = vadd.f32 0.0, %v6864
      %v6866 = vpop.f32.mrf.mxu0
      %v6867 = vadd.f32 0.0, %v6866
      %6868 = vmatmul.bf16.gmra.mxu0 %v6801
      %v6869 = vpop.f32.mrf.mxu0
      %v6870 = vadd.f32 0.0, %v6869
      %v6871 = vpop.f32.mrf.mxu0
      %v6872 = vadd.f32 0.0, %v6871
      %6873 = vmatmul.bf16.gmra.mxu0 %v6804
      %v6874 = vpop.f32.mrf.mxu0
      %v6875 = vadd.f32 0.0, %v6874
      %v6876 = vpop.f32.mrf.mxu0
      %v6877 = vadd.f32 0.0, %v6876
      %6878 = vmatmul.bf16.gmra.mxu0 %v6807
      %v6879 = vpop.f32.mrf.mxu0
      %v6880 = vadd.f32 0.0, %v6879
      %v6881 = vpop.f32.mrf.mxu0
      %v6882 = vadd.f32 0.0, %v6881
      %6883 = vmatmul.bf16.gmra.mxu0 %v6810
      %v6884 = vpop.f32.mrf.mxu0
      %v6885 = vadd.f32 0.0, %v6884
      %v6886 = vpop.f32.mrf.mxu0
      %v6887 = vadd.f32 0.0, %v6886
      %6888 = vmatmul.bf16.gmra.mxu0 %v6813
      %v6889 = vpop.f32.mrf.mxu0
      %v6890 = vadd.f32 0.0, %v6889
      %v6891 = vpop.f32.mrf.mxu0
      %v6892 = vadd.f32 0.0, %v6891
      %6893 = vmatmul.bf16.gmra.mxu0 %v6816
      %v6894 = vpop.f32.mrf.mxu0
      %v6895 = vadd.f32 0.0, %v6894
      %v6896 = vpop.f32.mrf.mxu0
      %v6897 = vadd.f32 0.0, %v6896
      %6898 = vmatmul.bf16.gmra.mxu0 %v6819
      %v6899 = vpop.f32.mrf.mxu0
      %v6900 = vadd.f32 0.0, %v6899
      %v6901 = vpop.f32.mrf.mxu0
      %v6902 = vadd.f32 0.0, %v6901
      %6903 = vmatmul.bf16.gmra.mxu0 %v6822
      %v6904 = vpop.f32.mrf.mxu0
      %v6905 = vadd.f32 0.0, %v6904
      %v6906 = vpop.f32.mrf.mxu0
      %v6907 = vadd.f32 0.0, %v6906
      %6908 = vmatmul.bf16.gmra.mxu0 %v6825
      %v6909 = vpop.f32.mrf.mxu0
      %v6910 = vadd.f32 0.0, %v6909
      %v6911 = vpop.f32.mrf.mxu0
      %v6912 = vadd.f32 0.0, %v6911
      %6913 = vmatmul.bf16.gmra.mxu0 %v6828
      %v6914 = vpop.f32.mrf.mxu0
      %v6915 = vadd.f32 0.0, %v6914
      %v6916 = vpop.f32.mrf.mxu0
      %v6917 = vadd.f32 0.0, %v6916
      %6918 = vdwg.mxu0
      %v6920 = vperm.slane %v6753, 0
      %v6922 = vadd.f32 %v6840, %v6920
      %v6923 = vadd.f32 %v6842, %v6920
      %v6924 = vadd.f32 %v6845, %v6920
      %v6925 = vadd.f32 %v6847, %v6920
      %v6926 = vadd.f32 %v6850, %v6920
      %v6927 = vadd.f32 %v6852, %v6920
      %v6928 = vadd.f32 %v6855, %v6920
      %v6929 = vadd.f32 %v6857, %v6920
      %v6930 = vadd.f32 %v6860, %v6920
      %v6931 = vadd.f32 %v6862, %v6920
      %v6932 = vadd.f32 %v6865, %v6920
      %v6933 = vadd.f32 %v6867, %v6920
      %v6934 = vadd.f32 %v6870, %v6920
      %v6935 = vadd.f32 %v6872, %v6920
      %v6936 = vadd.f32 %v6875, %v6920
      %v6937 = vadd.f32 %v6877, %v6920
      %v6938 = vadd.f32 %v6880, %v6920
      %v6939 = vadd.f32 %v6882, %v6920
      %v6940 = vadd.f32 %v6885, %v6920
      %v6941 = vadd.f32 %v6887, %v6920
      %v6942 = vadd.f32 %v6890, %v6920
      %v6943 = vadd.f32 %v6892, %v6920
      %v6944 = vadd.f32 %v6895, %v6920
      %v6945 = vadd.f32 %v6897, %v6920
      %v6946 = vadd.f32 %v6900, %v6920
      %v6947 = vadd.f32 %v6902, %v6920
      %v6948 = vadd.f32 %v6905, %v6920
      %v6949 = vadd.f32 %v6907, %v6920
      %v6950 = vadd.f32 %v6910, %v6920
      %v6951 = vadd.f32 %v6912, %v6920
      %v6952 = vadd.f32 %v6915, %v6920
      %v6953 = vadd.f32 %v6917, %v6920
      %v6954 = vmul.f32 %v6922, 1.702
      %v6955 = vmul.f32 %v6923, 1.702
      %v6956 = vmul.f32 %v6924, 1.702
      %v6957 = vmul.f32 %v6925, 1.702
      %v6958 = vmul.f32 %v6926, 1.702
      %v6959 = vmul.f32 %v6927, 1.702
      %v6960 = vmul.f32 %v6928, 1.702
      %v6961 = vmul.f32 %v6929, 1.702
      %v6962 = vmul.f32 %v6930, 1.702
      %v6963 = vmul.f32 %v6931, 1.702
      %v6964 = vmul.f32 %v6932, 1.702
      %v6965 = vmul.f32 %v6933, 1.702
      %v6966 = vmul.f32 %v6934, 1.702
      %v6967 = vmul.f32 %v6935, 1.702
      %v6968 = vmul.f32 %v6936, 1.702
      %v6969 = vmul.f32 %v6937, 1.702
      %v6970 = vmul.f32 %v6938, 1.702
      %v6971 = vmul.f32 %v6939, 1.702
      %v6972 = vmul.f32 %v6940, 1.702
      %v6973 = vmul.f32 %v6941, 1.702
      %v6974 = vmul.f32 %v6942, 1.702
      %v6975 = vmul.f32 %v6943, 1.702
      %v6976 = vmul.f32 %v6944, 1.702
      %v6977 = vmul.f32 %v6945, 1.702
      %v6978 = vmul.f32 %v6946, 1.702
      %v6979 = vmul.f32 %v6947, 1.702
      %v6980 = vmul.f32 %v6948, 1.702
      %v6981 = vmul.f32 %v6949, 1.702
      %v6982 = vmul.f32 %v6950, 1.702
      %v6983 = vmul.f32 %v6951, 1.702
      %v6984 = vmul.f32 %v6952, 1.702
      %v6985 = vmul.f32 %v6953, 1.702
      %v6986 = vxor.u32 %v6954, 2147483648
      %v6987 = vxor.u32 %v6955, 2147483648
      %v6988 = vxor.u32 %v6956, 2147483648
      %v6989 = vxor.u32 %v6957, 2147483648
      %v6990 = vxor.u32 %v6958, 2147483648
      %v6991 = vxor.u32 %v6959, 2147483648
      %v6992 = vxor.u32 %v6960, 2147483648
      %v6993 = vxor.u32 %v6961, 2147483648
      %v6994 = vxor.u32 %v6962, 2147483648
      %v6995 = vxor.u32 %v6963, 2147483648
      %v6996 = vxor.u32 %v6964, 2147483648
      %v6997 = vxor.u32 %v6965, 2147483648
      %v6998 = vxor.u32 %v6966, 2147483648
      %v6999 = vxor.u32 %v6967, 2147483648
      %v7000 = vxor.u32 %v6968, 2147483648
      %v7001 = vxor.u32 %v6969, 2147483648
      %v7002 = vxor.u32 %v6970, 2147483648
      %v7003 = vxor.u32 %v6971, 2147483648
      %v7004 = vxor.u32 %v6972, 2147483648
      %v7005 = vxor.u32 %v6973, 2147483648
      %v7006 = vxor.u32 %v6974, 2147483648
      %v7007 = vxor.u32 %v6975, 2147483648
      %v7008 = vxor.u32 %v6976, 2147483648
      %v7009 = vxor.u32 %v6977, 2147483648
      %v7010 = vxor.u32 %v6978, 2147483648
      %v7011 = vxor.u32 %v6979, 2147483648
      %v7012 = vxor.u32 %v6980, 2147483648
      %v7013 = vxor.u32 %v6981, 2147483648
      %v7014 = vxor.u32 %v6982, 2147483648
      %v7015 = vxor.u32 %v6983, 2147483648
      %v7016 = vxor.u32 %v6984, 2147483648
      %v7017 = vxor.u32 %v6985, 2147483648
      %v7018 = vmul.f32 %v6986, 1.442695
      %v7019 = vpow.pop %v7018
      %v7020 = vmul.f32 %v6987, 1.442695
      %v7021 = vpow.pop %v7020
      %v7022 = vmul.f32 %v6988, 1.442695
      %v7023 = vpow.pop %v7022
      %v7024 = vmul.f32 %v6989, 1.442695
      %v7025 = vpow.pop %v7024
      %v7026 = vmul.f32 %v6990, 1.442695
      %v7027 = vpow.pop %v7026
      %v7028 = vmul.f32 %v6991, 1.442695
      %v7029 = vpow.pop %v7028
      %v7030 = vmul.f32 %v6992, 1.442695
      %v7031 = vpow.pop %v7030
      %v7032 = vmul.f32 %v6993, 1.442695
      %v7033 = vpow.pop %v7032
      %v7034 = vmul.f32 %v6994, 1.442695
      %v7035 = vpow.pop %v7034
      %v7036 = vmul.f32 %v6995, 1.442695
      %v7037 = vpow.pop %v7036
      %v7038 = vmul.f32 %v6996, 1.442695
      %v7039 = vpow.pop %v7038
      %v7040 = vmul.f32 %v6997, 1.442695
      %v7041 = vpow.pop %v7040
      %v7042 = vmul.f32 %v6998, 1.442695
      %v7043 = vpow.pop %v7042
      %v7044 = vmul.f32 %v6999, 1.442695
      %v7045 = vpow.pop %v7044
      %v7046 = vmul.f32 %v7000, 1.442695
      %v7047 = vpow.pop %v7046
      %v7048 = vmul.f32 %v7001, 1.442695
      %v7049 = vpow.pop %v7048
      %v7050 = vmul.f32 %v7002, 1.442695
      %v7051 = vpow.pop %v7050
      %v7052 = vmul.f32 %v7003, 1.442695
      %v7053 = vpow.pop %v7052
      %v7054 = vmul.f32 %v7004, 1.442695
      %v7055 = vpow.pop %v7054
      %v7056 = vmul.f32 %v7005, 1.442695
      %v7057 = vpow.pop %v7056
      %v7058 = vmul.f32 %v7006, 1.442695
      %v7059 = vpow.pop %v7058
      %v7060 = vmul.f32 %v7007, 1.442695
      %v7061 = vpow.pop %v7060
      %v7062 = vmul.f32 %v7008, 1.442695
      %v7063 = vpow.pop %v7062
      %v7064 = vmul.f32 %v7009, 1.442695
      %v7065 = vpow.pop %v7064
      %v7066 = vmul.f32 %v7010, 1.442695
      %v7067 = vpow.pop %v7066
      %v7068 = vmul.f32 %v7011, 1.442695
      %v7069 = vpow.pop %v7068
      %v7070 = vmul.f32 %v7012, 1.442695
      %v7071 = vpow.pop %v7070
      %v7072 = vmul.f32 %v7013, 1.442695
      %v7073 = vpow.pop %v7072
      %v7074 = vmul.f32 %v7014, 1.442695
      %v7075 = vpow.pop %v7074
      %v7076 = vmul.f32 %v7015, 1.442695
      %v7077 = vpow.pop %v7076
      %v7078 = vmul.f32 %v7016, 1.442695
      %v7079 = vpow.pop %v7078
      %v7080 = vmul.f32 %v7017, 1.442695
      %v7081 = vpow.pop %v7080
      %v7082 = vadd.f32 %v7019, 1.0
      %v7083 = vadd.f32 %v7021, 1.0
      %v7084 = vadd.f32 %v7023, 1.0
      %v7085 = vadd.f32 %v7025, 1.0
      %v7086 = vadd.f32 %v7027, 1.0
      %v7087 = vadd.f32 %v7029, 1.0
      %v7088 = vadd.f32 %v7031, 1.0
      %v7089 = vadd.f32 %v7033, 1.0
      %v7090 = vadd.f32 %v7035, 1.0
      %v7091 = vadd.f32 %v7037, 1.0
      %v7092 = vadd.f32 %v7039, 1.0
      %v7093 = vadd.f32 %v7041, 1.0
      %v7094 = vadd.f32 %v7043, 1.0
      %v7095 = vadd.f32 %v7045, 1.0
      %v7096 = vadd.f32 %v7047, 1.0
      %v7097 = vadd.f32 %v7049, 1.0
      %v7098 = vadd.f32 %v7051, 1.0
      %v7099 = vadd.f32 %v7053, 1.0
      %v7100 = vadd.f32 %v7055, 1.0
      %v7101 = vadd.f32 %v7057, 1.0
      %v7102 = vadd.f32 %v7059, 1.0
      %v7103 = vadd.f32 %v7061, 1.0
      %v7104 = vadd.f32 %v7063, 1.0
      %v7105 = vadd.f32 %v7065, 1.0
      %v7106 = vadd.f32 %v7067, 1.0
      %v7107 = vadd.f32 %v7069, 1.0
      %v7108 = vadd.f32 %v7071, 1.0
      %v7109 = vadd.f32 %v7073, 1.0
      %v7110 = vadd.f32 %v7075, 1.0
      %v7111 = vadd.f32 %v7077, 1.0
      %v7112 = vadd.f32 %v7079, 1.0
      %v7113 = vadd.f32 %v7081, 1.0
      %v7114 = vrcp.pop %v7082
      %v7115 = vmul.f32 %v7082, %v7114
      %v7116 = vsub.f32 1.0, %v7115
      %v7117 = vmul.f32 %v7114, %v7116
      %v7118 = vadd.f32 %v7114, %v7117
      %vm7119 = vweird.f32 %v7082
      %vm7120 = vweird.f32 %v7114
      %vm7121 = vmor %vm7119, %vm7120
      %v7122 = vsel %vm7121, %v7114, %v7118
      %v7123 = vand.u32 2147483647, %v7082
      %vm7124 = vcmp.eq.f32.partialorder %v7123, 8.507059e+37
      %v7125 = vand.u32 %v7082, 2147483648
      %v7126 = vor.u32 1.1754944e-38, %v7125
      %v7127 = vsel %vm7124, %v7126, %v7122
      %v7128 = vmul.f32 1.0, %v7127
      %v7129 = vrcp.pop %v7083
      %v7130 = vmul.f32 %v7083, %v7129
      %v7131 = vsub.f32 1.0, %v7130
      %v7132 = vmul.f32 %v7129, %v7131
      %v7133 = vadd.f32 %v7129, %v7132
      %vm7134 = vweird.f32 %v7083
      %vm7135 = vweird.f32 %v7129
      %vm7136 = vmor %vm7134, %vm7135
      %v7137 = vsel %vm7136, %v7129, %v7133
      %v7138 = vand.u32 2147483647, %v7083
      %vm7139 = vcmp.eq.f32.partialorder %v7138, 8.507059e+37
      %v7140 = vand.u32 %v7083, 2147483648
      %v7141 = vor.u32 1.1754944e-38, %v7140
      %v7142 = vsel %vm7139, %v7141, %v7137
      %v7143 = vmul.f32 1.0, %v7142
      %v7144 = vrcp.pop %v7084
      %v7145 = vmul.f32 %v7084, %v7144
      %v7146 = vsub.f32 1.0, %v7145
      %v7147 = vmul.f32 %v7144, %v7146
      %v7148 = vadd.f32 %v7144, %v7147
      %vm7149 = vweird.f32 %v7084
      %vm7150 = vweird.f32 %v7144
      %vm7151 = vmor %vm7149, %vm7150
      %v7152 = vsel %vm7151, %v7144, %v7148
      %v7153 = vand.u32 2147483647, %v7084
      %vm7154 = vcmp.eq.f32.partialorder %v7153, 8.507059e+37
      %v7155 = vand.u32 %v7084, 2147483648
      %v7156 = vor.u32 1.1754944e-38, %v7155
      %v7157 = vsel %vm7154, %v7156, %v7152
      %v7158 = vmul.f32 1.0, %v7157
      %v7159 = vrcp.pop %v7085
      %v7160 = vmul.f32 %v7085, %v7159
      %v7161 = vsub.f32 1.0, %v7160
      %v7162 = vmul.f32 %v7159, %v7161
      %v7163 = vadd.f32 %v7159, %v7162
      %vm7164 = vweird.f32 %v7085
      %vm7165 = vweird.f32 %v7159
      %vm7166 = vmor %vm7164, %vm7165
      %v7167 = vsel %vm7166, %v7159, %v7163
      %v7168 = vand.u32 2147483647, %v7085
      %vm7169 = vcmp.eq.f32.partialorder %v7168, 8.507059e+37
      %v7170 = vand.u32 %v7085, 2147483648
      %v7171 = vor.u32 1.1754944e-38, %v7170
      %v7172 = vsel %vm7169, %v7171, %v7167
      %v7173 = vmul.f32 1.0, %v7172
      %v7174 = vrcp.pop %v7086
      %v7175 = vmul.f32 %v7086, %v7174
      %v7176 = vsub.f32 1.0, %v7175
      %v7177 = vmul.f32 %v7174, %v7176
      %v7178 = vadd.f32 %v7174, %v7177
      %vm7179 = vweird.f32 %v7086
      %vm7180 = vweird.f32 %v7174
      %vm7181 = vmor %vm7179, %vm7180
      %v7182 = vsel %vm7181, %v7174, %v7178
      %v7183 = vand.u32 2147483647, %v7086
      %vm7184 = vcmp.eq.f32.partialorder %v7183, 8.507059e+37
      %v7185 = vand.u32 %v7086, 2147483648
      %v7186 = vor.u32 1.1754944e-38, %v7185
      %v7187 = vsel %vm7184, %v7186, %v7182
      %v7188 = vmul.f32 1.0, %v7187
      %v7189 = vrcp.pop %v7087
      %v7190 = vmul.f32 %v7087, %v7189
      %v7191 = vsub.f32 1.0, %v7190
      %v7192 = vmul.f32 %v7189, %v7191
      %v7193 = vadd.f32 %v7189, %v7192
      %vm7194 = vweird.f32 %v7087
      %vm7195 = vweird.f32 %v7189
      %vm7196 = vmor %vm7194, %vm7195
      %v7197 = vsel %vm7196, %v7189, %v7193
      %v7198 = vand.u32 2147483647, %v7087
      %vm7199 = vcmp.eq.f32.partialorder %v7198, 8.507059e+37
      %v7200 = vand.u32 %v7087, 2147483648
      %v7201 = vor.u32 1.1754944e-38, %v7200
      %v7202 = vsel %vm7199, %v7201, %v7197
      %v7203 = vmul.f32 1.0, %v7202
      %v7204 = vrcp.pop %v7088
      %v7205 = vmul.f32 %v7088, %v7204
      %v7206 = vsub.f32 1.0, %v7205
      %v7207 = vmul.f32 %v7204, %v7206
      %v7208 = vadd.f32 %v7204, %v7207
      %vm7209 = vweird.f32 %v7088
      %vm7210 = vweird.f32 %v7204
      %vm7211 = vmor %vm7209, %vm7210
      %v7212 = vsel %vm7211, %v7204, %v7208
      %v7213 = vand.u32 2147483647, %v7088
      %vm7214 = vcmp.eq.f32.partialorder %v7213, 8.507059e+37
      %v7215 = vand.u32 %v7088, 2147483648
      %v7216 = vor.u32 1.1754944e-38, %v7215
      %v7217 = vsel %vm7214, %v7216, %v7212
      %v7218 = vmul.f32 1.0, %v7217
      %v7219 = vrcp.pop %v7089
      %v7220 = vmul.f32 %v7089, %v7219
      %v7221 = vsub.f32 1.0, %v7220
      %v7222 = vmul.f32 %v7219, %v7221
      %v7223 = vadd.f32 %v7219, %v7222
      %vm7224 = vweird.f32 %v7089
      %vm7225 = vweird.f32 %v7219
      %vm7226 = vmor %vm7224, %vm7225
      %v7227 = vsel %vm7226, %v7219, %v7223
      %v7228 = vand.u32 2147483647, %v7089
      %vm7229 = vcmp.eq.f32.partialorder %v7228, 8.507059e+37
      %v7230 = vand.u32 %v7089, 2147483648
      %v7231 = vor.u32 1.1754944e-38, %v7230
      %v7232 = vsel %vm7229, %v7231, %v7227
      %v7233 = vmul.f32 1.0, %v7232
      %v7234 = vrcp.pop %v7090
      %v7235 = vmul.f32 %v7090, %v7234
      %v7236 = vsub.f32 1.0, %v7235
      %v7237 = vmul.f32 %v7234, %v7236
      %v7238 = vadd.f32 %v7234, %v7237
      %vm7239 = vweird.f32 %v7090
      %vm7240 = vweird.f32 %v7234
      %vm7241 = vmor %vm7239, %vm7240
      %v7242 = vsel %vm7241, %v7234, %v7238
      %v7243 = vand.u32 2147483647, %v7090
      %vm7244 = vcmp.eq.f32.partialorder %v7243, 8.507059e+37
      %v7245 = vand.u32 %v7090, 2147483648
      %v7246 = vor.u32 1.1754944e-38, %v7245
      %v7247 = vsel %vm7244, %v7246, %v7242
      %v7248 = vmul.f32 1.0, %v7247
      %v7249 = vrcp.pop %v7091
      %v7250 = vmul.f32 %v7091, %v7249
      %v7251 = vsub.f32 1.0, %v7250
      %v7252 = vmul.f32 %v7249, %v7251
      %v7253 = vadd.f32 %v7249, %v7252
      %vm7254 = vweird.f32 %v7091
      %vm7255 = vweird.f32 %v7249
      %vm7256 = vmor %vm7254, %vm7255
      %v7257 = vsel %vm7256, %v7249, %v7253
      %v7258 = vand.u32 2147483647, %v7091
      %vm7259 = vcmp.eq.f32.partialorder %v7258, 8.507059e+37
      %v7260 = vand.u32 %v7091, 2147483648
      %v7261 = vor.u32 1.1754944e-38, %v7260
      %v7262 = vsel %vm7259, %v7261, %v7257
      %v7263 = vmul.f32 1.0, %v7262
      %v7264 = vrcp.pop %v7092
      %v7265 = vmul.f32 %v7092, %v7264
      %v7266 = vsub.f32 1.0, %v7265
      %v7267 = vmul.f32 %v7264, %v7266
      %v7268 = vadd.f32 %v7264, %v7267
      %vm7269 = vweird.f32 %v7092
      %vm7270 = vweird.f32 %v7264
      %vm7271 = vmor %vm7269, %vm7270
      %v7272 = vsel %vm7271, %v7264, %v7268
      %v7273 = vand.u32 2147483647, %v7092
      %vm7274 = vcmp.eq.f32.partialorder %v7273, 8.507059e+37
      %v7275 = vand.u32 %v7092, 2147483648
      %v7276 = vor.u32 1.1754944e-38, %v7275
      %v7277 = vsel %vm7274, %v7276, %v7272
      %v7278 = vmul.f32 1.0, %v7277
      %v7279 = vrcp.pop %v7093
      %v7280 = vmul.f32 %v7093, %v7279
      %v7281 = vsub.f32 1.0, %v7280
      %v7282 = vmul.f32 %v7279, %v7281
      %v7283 = vadd.f32 %v7279, %v7282
      %vm7284 = vweird.f32 %v7093
      %vm7285 = vweird.f32 %v7279
      %vm7286 = vmor %vm7284, %vm7285
      %v7287 = vsel %vm7286, %v7279, %v7283
      %v7288 = vand.u32 2147483647, %v7093
      %vm7289 = vcmp.eq.f32.partialorder %v7288, 8.507059e+37
      %v7290 = vand.u32 %v7093, 2147483648
      %v7291 = vor.u32 1.1754944e-38, %v7290
      %v7292 = vsel %vm7289, %v7291, %v7287
      %v7293 = vmul.f32 1.0, %v7292
      %v7294 = vrcp.pop %v7094
      %v7295 = vmul.f32 %v7094, %v7294
      %v7296 = vsub.f32 1.0, %v7295
      %v7297 = vmul.f32 %v7294, %v7296
      %v7298 = vadd.f32 %v7294, %v7297
      %vm7299 = vweird.f32 %v7094
      %vm7300 = vweird.f32 %v7294
      %vm7301 = vmor %vm7299, %vm7300
      %v7302 = vsel %vm7301, %v7294, %v7298
      %v7303 = vand.u32 2147483647, %v7094
      %vm7304 = vcmp.eq.f32.partialorder %v7303, 8.507059e+37
      %v7305 = vand.u32 %v7094, 2147483648
      %v7306 = vor.u32 1.1754944e-38, %v7305
      %v7307 = vsel %vm7304, %v7306, %v7302
      %v7308 = vmul.f32 1.0, %v7307
      %v7309 = vrcp.pop %v7095
      %v7310 = vmul.f32 %v7095, %v7309
      %v7311 = vsub.f32 1.0, %v7310
      %v7312 = vmul.f32 %v7309, %v7311
      %v7313 = vadd.f32 %v7309, %v7312
      %vm7314 = vweird.f32 %v7095
      %vm7315 = vweird.f32 %v7309
      %vm7316 = vmor %vm7314, %vm7315
      %v7317 = vsel %vm7316, %v7309, %v7313
      %v7318 = vand.u32 2147483647, %v7095
      %vm7319 = vcmp.eq.f32.partialorder %v7318, 8.507059e+37
      %v7320 = vand.u32 %v7095, 2147483648
      %v7321 = vor.u32 1.1754944e-38, %v7320
      %v7322 = vsel %vm7319, %v7321, %v7317
      %v7323 = vmul.f32 1.0, %v7322
      %v7324 = vrcp.pop %v7096
      %v7325 = vmul.f32 %v7096, %v7324
      %v7326 = vsub.f32 1.0, %v7325
      %v7327 = vmul.f32 %v7324, %v7326
      %v7328 = vadd.f32 %v7324, %v7327
      %vm7329 = vweird.f32 %v7096
      %vm7330 = vweird.f32 %v7324
      %vm7331 = vmor %vm7329, %vm7330
      %v7332 = vsel %vm7331, %v7324, %v7328
      %v7333 = vand.u32 2147483647, %v7096
      %vm7334 = vcmp.eq.f32.partialorder %v7333, 8.507059e+37
      %v7335 = vand.u32 %v7096, 2147483648
      %v7336 = vor.u32 1.1754944e-38, %v7335
      %v7337 = vsel %vm7334, %v7336, %v7332
      %v7338 = vmul.f32 1.0, %v7337
      %v7339 = vrcp.pop %v7097
      %v7340 = vmul.f32 %v7097, %v7339
      %v7341 = vsub.f32 1.0, %v7340
      %v7342 = vmul.f32 %v7339, %v7341
      %v7343 = vadd.f32 %v7339, %v7342
      %vm7344 = vweird.f32 %v7097
      %vm7345 = vweird.f32 %v7339
      %vm7346 = vmor %vm7344, %vm7345
      %v7347 = vsel %vm7346, %v7339, %v7343
      %v7348 = vand.u32 2147483647, %v7097
      %vm7349 = vcmp.eq.f32.partialorder %v7348, 8.507059e+37
      %v7350 = vand.u32 %v7097, 2147483648
      %v7351 = vor.u32 1.1754944e-38, %v7350
      %v7352 = vsel %vm7349, %v7351, %v7347
      %v7353 = vmul.f32 1.0, %v7352
      %v7354 = vrcp.pop %v7098
      %v7355 = vmul.f32 %v7098, %v7354
      %v7356 = vsub.f32 1.0, %v7355
      %v7357 = vmul.f32 %v7354, %v7356
      %v7358 = vadd.f32 %v7354, %v7357
      %vm7359 = vweird.f32 %v7098
      %vm7360 = vweird.f32 %v7354
      %vm7361 = vmor %vm7359, %vm7360
      %v7362 = vsel %vm7361, %v7354, %v7358
      %v7363 = vand.u32 2147483647, %v7098
      %vm7364 = vcmp.eq.f32.partialorder %v7363, 8.507059e+37
      %v7365 = vand.u32 %v7098, 2147483648
      %v7366 = vor.u32 1.1754944e-38, %v7365
      %v7367 = vsel %vm7364, %v7366, %v7362
      %v7368 = vmul.f32 1.0, %v7367
      %v7369 = vrcp.pop %v7099
      %v7370 = vmul.f32 %v7099, %v7369
      %v7371 = vsub.f32 1.0, %v7370
      %v7372 = vmul.f32 %v7369, %v7371
      %v7373 = vadd.f32 %v7369, %v7372
      %vm7374 = vweird.f32 %v7099
      %vm7375 = vweird.f32 %v7369
      %vm7376 = vmor %vm7374, %vm7375
      %v7377 = vsel %vm7376, %v7369, %v7373
      %v7378 = vand.u32 2147483647, %v7099
      %vm7379 = vcmp.eq.f32.partialorder %v7378, 8.507059e+37
      %v7380 = vand.u32 %v7099, 2147483648
      %v7381 = vor.u32 1.1754944e-38, %v7380
      %v7382 = vsel %vm7379, %v7381, %v7377
      %v7383 = vmul.f32 1.0, %v7382
      %v7384 = vrcp.pop %v7100
      %v7385 = vmul.f32 %v7100, %v7384
      %v7386 = vsub.f32 1.0, %v7385
      %v7387 = vmul.f32 %v7384, %v7386
      %v7388 = vadd.f32 %v7384, %v7387
      %vm7389 = vweird.f32 %v7100
      %vm7390 = vweird.f32 %v7384
      %vm7391 = vmor %vm7389, %vm7390
      %v7392 = vsel %vm7391, %v7384, %v7388
      %v7393 = vand.u32 2147483647, %v7100
      %vm7394 = vcmp.eq.f32.partialorder %v7393, 8.507059e+37
      %v7395 = vand.u32 %v7100, 2147483648
      %v7396 = vor.u32 1.1754944e-38, %v7395
      %v7397 = vsel %vm7394, %v7396, %v7392
      %v7398 = vmul.f32 1.0, %v7397
      %v7399 = vrcp.pop %v7101
      %v7400 = vmul.f32 %v7101, %v7399
      %v7401 = vsub.f32 1.0, %v7400
      %v7402 = vmul.f32 %v7399, %v7401
      %v7403 = vadd.f32 %v7399, %v7402
      %vm7404 = vweird.f32 %v7101
      %vm7405 = vweird.f32 %v7399
      %vm7406 = vmor %vm7404, %vm7405
      %v7407 = vsel %vm7406, %v7399, %v7403
      %v7408 = vand.u32 2147483647, %v7101
      %vm7409 = vcmp.eq.f32.partialorder %v7408, 8.507059e+37
      %v7410 = vand.u32 %v7101, 2147483648
      %v7411 = vor.u32 1.1754944e-38, %v7410
      %v7412 = vsel %vm7409, %v7411, %v7407
      %v7413 = vmul.f32 1.0, %v7412
      %v7414 = vrcp.pop %v7102
      %v7415 = vmul.f32 %v7102, %v7414
      %v7416 = vsub.f32 1.0, %v7415
      %v7417 = vmul.f32 %v7414, %v7416
      %v7418 = vadd.f32 %v7414, %v7417
      %vm7419 = vweird.f32 %v7102
      %vm7420 = vweird.f32 %v7414
      %vm7421 = vmor %vm7419, %vm7420
      %v7422 = vsel %vm7421, %v7414, %v7418
      %v7423 = vand.u32 2147483647, %v7102
      %vm7424 = vcmp.eq.f32.partialorder %v7423, 8.507059e+37
      %v7425 = vand.u32 %v7102, 2147483648
      %v7426 = vor.u32 1.1754944e-38, %v7425
      %v7427 = vsel %vm7424, %v7426, %v7422
      %v7428 = vmul.f32 1.0, %v7427
      %v7429 = vrcp.pop %v7103
      %v7430 = vmul.f32 %v7103, %v7429
      %v7431 = vsub.f32 1.0, %v7430
      %v7432 = vmul.f32 %v7429, %v7431
      %v7433 = vadd.f32 %v7429, %v7432
      %vm7434 = vweird.f32 %v7103
      %vm7435 = vweird.f32 %v7429
      %vm7436 = vmor %vm7434, %vm7435
      %v7437 = vsel %vm7436, %v7429, %v7433
      %v7438 = vand.u32 2147483647, %v7103
      %vm7439 = vcmp.eq.f32.partialorder %v7438, 8.507059e+37
      %v7440 = vand.u32 %v7103, 2147483648
      %v7441 = vor.u32 1.1754944e-38, %v7440
      %v7442 = vsel %vm7439, %v7441, %v7437
      %v7443 = vmul.f32 1.0, %v7442
      %v7444 = vrcp.pop %v7104
      %v7445 = vmul.f32 %v7104, %v7444
      %v7446 = vsub.f32 1.0, %v7445
      %v7447 = vmul.f32 %v7444, %v7446
      %v7448 = vadd.f32 %v7444, %v7447
      %vm7449 = vweird.f32 %v7104
      %vm7450 = vweird.f32 %v7444
      %vm7451 = vmor %vm7449, %vm7450
      %v7452 = vsel %vm7451, %v7444, %v7448
      %v7453 = vand.u32 2147483647, %v7104
      %vm7454 = vcmp.eq.f32.partialorder %v7453, 8.507059e+37
      %v7455 = vand.u32 %v7104, 2147483648
      %v7456 = vor.u32 1.1754944e-38, %v7455
      %v7457 = vsel %vm7454, %v7456, %v7452
      %v7458 = vmul.f32 1.0, %v7457
      %v7459 = vrcp.pop %v7105
      %v7460 = vmul.f32 %v7105, %v7459
      %v7461 = vsub.f32 1.0, %v7460
      %v7462 = vmul.f32 %v7459, %v7461
      %v7463 = vadd.f32 %v7459, %v7462
      %vm7464 = vweird.f32 %v7105
      %vm7465 = vweird.f32 %v7459
      %vm7466 = vmor %vm7464, %vm7465
      %v7467 = vsel %vm7466, %v7459, %v7463
      %v7468 = vand.u32 2147483647, %v7105
      %vm7469 = vcmp.eq.f32.partialorder %v7468, 8.507059e+37
      %v7470 = vand.u32 %v7105, 2147483648
      %v7471 = vor.u32 1.1754944e-38, %v7470
      %v7472 = vsel %vm7469, %v7471, %v7467
      %v7473 = vmul.f32 1.0, %v7472
      %v7474 = vrcp.pop %v7106
      %v7475 = vmul.f32 %v7106, %v7474
      %v7476 = vsub.f32 1.0, %v7475
      %v7477 = vmul.f32 %v7474, %v7476
      %v7478 = vadd.f32 %v7474, %v7477
      %vm7479 = vweird.f32 %v7106
      %vm7480 = vweird.f32 %v7474
      %vm7481 = vmor %vm7479, %vm7480
      %v7482 = vsel %vm7481, %v7474, %v7478
      %v7483 = vand.u32 2147483647, %v7106
      %vm7484 = vcmp.eq.f32.partialorder %v7483, 8.507059e+37
      %v7485 = vand.u32 %v7106, 2147483648
      %v7486 = vor.u32 1.1754944e-38, %v7485
      %v7487 = vsel %vm7484, %v7486, %v7482
      %v7488 = vmul.f32 1.0, %v7487
      %v7489 = vrcp.pop %v7107
      %v7490 = vmul.f32 %v7107, %v7489
      %v7491 = vsub.f32 1.0, %v7490
      %v7492 = vmul.f32 %v7489, %v7491
      %v7493 = vadd.f32 %v7489, %v7492
      %vm7494 = vweird.f32 %v7107
      %vm7495 = vweird.f32 %v7489
      %vm7496 = vmor %vm7494, %vm7495
      %v7497 = vsel %vm7496, %v7489, %v7493
      %v7498 = vand.u32 2147483647, %v7107
      %vm7499 = vcmp.eq.f32.partialorder %v7498, 8.507059e+37
      %v7500 = vand.u32 %v7107, 2147483648
      %v7501 = vor.u32 1.1754944e-38, %v7500
      %v7502 = vsel %vm7499, %v7501, %v7497
      %v7503 = vmul.f32 1.0, %v7502
      %v7504 = vrcp.pop %v7108
      %v7505 = vmul.f32 %v7108, %v7504
      %v7506 = vsub.f32 1.0, %v7505
      %v7507 = vmul.f32 %v7504, %v7506
      %v7508 = vadd.f32 %v7504, %v7507
      %vm7509 = vweird.f32 %v7108
      %vm7510 = vweird.f32 %v7504
      %vm7511 = vmor %vm7509, %vm7510
      %v7512 = vsel %vm7511, %v7504, %v7508
      %v7513 = vand.u32 2147483647, %v7108
      %vm7514 = vcmp.eq.f32.partialorder %v7513, 8.507059e+37
      %v7515 = vand.u32 %v7108, 2147483648
      %v7516 = vor.u32 1.1754944e-38, %v7515
      %v7517 = vsel %vm7514, %v7516, %v7512
      %v7518 = vmul.f32 1.0, %v7517
      %v7519 = vrcp.pop %v7109
      %v7520 = vmul.f32 %v7109, %v7519
      %v7521 = vsub.f32 1.0, %v7520
      %v7522 = vmul.f32 %v7519, %v7521
      %v7523 = vadd.f32 %v7519, %v7522
      %vm7524 = vweird.f32 %v7109
      %vm7525 = vweird.f32 %v7519
      %vm7526 = vmor %vm7524, %vm7525
      %v7527 = vsel %vm7526, %v7519, %v7523
      %v7528 = vand.u32 2147483647, %v7109
      %vm7529 = vcmp.eq.f32.partialorder %v7528, 8.507059e+37
      %v7530 = vand.u32 %v7109, 2147483648
      %v7531 = vor.u32 1.1754944e-38, %v7530
      %v7532 = vsel %vm7529, %v7531, %v7527
      %v7533 = vmul.f32 1.0, %v7532
      %v7534 = vrcp.pop %v7110
      %v7535 = vmul.f32 %v7110, %v7534
      %v7536 = vsub.f32 1.0, %v7535
      %v7537 = vmul.f32 %v7534, %v7536
      %v7538 = vadd.f32 %v7534, %v7537
      %vm7539 = vweird.f32 %v7110
      %vm7540 = vweird.f32 %v7534
      %vm7541 = vmor %vm7539, %vm7540
      %v7542 = vsel %vm7541, %v7534, %v7538
      %v7543 = vand.u32 2147483647, %v7110
      %vm7544 = vcmp.eq.f32.partialorder %v7543, 8.507059e+37
      %v7545 = vand.u32 %v7110, 2147483648
      %v7546 = vor.u32 1.1754944e-38, %v7545
      %v7547 = vsel %vm7544, %v7546, %v7542
      %v7548 = vmul.f32 1.0, %v7547
      %v7549 = vrcp.pop %v7111
      %v7550 = vmul.f32 %v7111, %v7549
      %v7551 = vsub.f32 1.0, %v7550
      %v7552 = vmul.f32 %v7549, %v7551
      %v7553 = vadd.f32 %v7549, %v7552
      %vm7554 = vweird.f32 %v7111
      %vm7555 = vweird.f32 %v7549
      %vm7556 = vmor %vm7554, %vm7555
      %v7557 = vsel %vm7556, %v7549, %v7553
      %v7558 = vand.u32 2147483647, %v7111
      %vm7559 = vcmp.eq.f32.partialorder %v7558, 8.507059e+37
      %v7560 = vand.u32 %v7111, 2147483648
      %v7561 = vor.u32 1.1754944e-38, %v7560
      %v7562 = vsel %vm7559, %v7561, %v7557
      %v7563 = vmul.f32 1.0, %v7562
      %v7564 = vrcp.pop %v7112
      %v7565 = vmul.f32 %v7112, %v7564
      %v7566 = vsub.f32 1.0, %v7565
      %v7567 = vmul.f32 %v7564, %v7566
      %v7568 = vadd.f32 %v7564, %v7567
      %vm7569 = vweird.f32 %v7112
      %vm7570 = vweird.f32 %v7564
      %vm7571 = vmor %vm7569, %vm7570
      %v7572 = vsel %vm7571, %v7564, %v7568
      %v7573 = vand.u32 2147483647, %v7112
      %vm7574 = vcmp.eq.f32.partialorder %v7573, 8.507059e+37
      %v7575 = vand.u32 %v7112, 2147483648
      %v7576 = vor.u32 1.1754944e-38, %v7575
      %v7577 = vsel %vm7574, %v7576, %v7572
      %v7578 = vmul.f32 1.0, %v7577
      %v7579 = vrcp.pop %v7113
      %v7580 = vmul.f32 %v7113, %v7579
      %v7581 = vsub.f32 1.0, %v7580
      %v7582 = vmul.f32 %v7579, %v7581
      %v7583 = vadd.f32 %v7579, %v7582
      %vm7584 = vweird.f32 %v7113
      %vm7585 = vweird.f32 %v7579
      %vm7586 = vmor %vm7584, %vm7585
      %v7587 = vsel %vm7586, %v7579, %v7583
      %v7588 = vand.u32 2147483647, %v7113
      %vm7589 = vcmp.eq.f32.partialorder %v7588, 8.507059e+37
      %v7590 = vand.u32 %v7113, 2147483648
      %v7591 = vor.u32 1.1754944e-38, %v7590
      %v7592 = vsel %vm7589, %v7591, %v7587
      %v7593 = vmul.f32 1.0, %v7592
      %v7594 = vmul.f32 %v6922, %v7128
      %v7595 = vmul.f32 %v6923, %v7143
      %v7596 = vmul.f32 %v6924, %v7158
      %v7597 = vmul.f32 %v6925, %v7173
      %v7598 = vmul.f32 %v6926, %v7188
      %v7599 = vmul.f32 %v6927, %v7203
      %v7600 = vmul.f32 %v6928, %v7218
      %v7601 = vmul.f32 %v6929, %v7233
      %v7602 = vmul.f32 %v6930, %v7248
      %v7603 = vmul.f32 %v6931, %v7263
      %v7604 = vmul.f32 %v6932, %v7278
      %v7605 = vmul.f32 %v6933, %v7293
      %v7606 = vmul.f32 %v6934, %v7308
      %v7607 = vmul.f32 %v6935, %v7323
      %v7608 = vmul.f32 %v6936, %v7338
      %v7609 = vmul.f32 %v6937, %v7353
      %v7610 = vmul.f32 %v6938, %v7368
      %v7611 = vmul.f32 %v6939, %v7383
      %v7612 = vmul.f32 %v6940, %v7398
      %v7613 = vmul.f32 %v6941, %v7413
      %v7614 = vmul.f32 %v6942, %v7428
      %v7615 = vmul.f32 %v6943, %v7443
      %v7616 = vmul.f32 %v6944, %v7458
      %v7617 = vmul.f32 %v6945, %v7473
      %v7618 = vmul.f32 %v6946, %v7488
      %v7619 = vmul.f32 %v6947, %v7503
      %v7620 = vmul.f32 %v6948, %v7518
      %v7621 = vmul.f32 %v6949, %v7533
      %v7622 = vmul.f32 %v6950, %v7548
      %v7623 = vmul.f32 %v6951, %v7563
      %v7624 = vmul.f32 %v6952, %v7578
      %v7625 = vmul.f32 %v6953, %v7593
      %v7626 = vld [vmem:[%s729] sm:$0xf]
      %v7627 = vld [vmem:[%s729 + $0x4] sm:$0xf]
      %v7628 = vld [vmem:[%s729 + $0x8] sm:$0xf]
      %v7629 = vld [vmem:[%s729 + $0xc] sm:$0xf]
      %v7630 = vld [vmem:[%s729 + $0x10] sm:$0xf]
      %v7631 = vld [vmem:[%s729 + $0x14] sm:$0xf]
      %v7632 = vld [vmem:[%s729 + $0x18] sm:$0xf]
      %v7633 = vld [vmem:[%s729 + $0x1c] sm:$0xf]
      %v7634 = vld [vmem:[%s729 + $0x20] sm:$0xf]
      %v7635 = vld [vmem:[%s729 + $0x24] sm:$0xf]
      %v7636 = vld [vmem:[%s729 + $0x28] sm:$0xf]
      %v7637 = vld [vmem:[%s729 + $0x2c] sm:$0xf]
      %v7638 = vld [vmem:[%s729 + $0x30] sm:$0xf]
      %v7639 = vld [vmem:[%s729 + $0x34] sm:$0xf]
      %v7640 = vld [vmem:[%s729 + $0x38] sm:$0xf]
      %v7641 = vld [vmem:[%s729 + $0x3c] sm:$0xf]
      %v7642 = vld [vmem:[%s732] sm:$0x1]
      %v7643 = vpack.c.bf16 %v7595, %v7594
      %v7644 = vpack.c.bf16 %v7597, %v7596
      %v7645 = vpack.c.bf16 %v7599, %v7598
      %v7646 = vpack.c.bf16 %v7601, %v7600
      %v7647 = vpack.c.bf16 %v7603, %v7602
      %v7648 = vpack.c.bf16 %v7605, %v7604
      %v7649 = vpack.c.bf16 %v7607, %v7606
      %v7650 = vpack.c.bf16 %v7609, %v7608
      %v7651 = vpack.c.bf16 %v7611, %v7610
      %v7652 = vpack.c.bf16 %v7613, %v7612
      %v7653 = vpack.c.bf16 %v7615, %v7614
      %v7654 = vpack.c.bf16 %v7617, %v7616
      %v7655 = vpack.c.bf16 %v7619, %v7618
      %v7656 = vpack.c.bf16 %v7621, %v7620
      %v7657 = vpack.c.bf16 %v7623, %v7622
      %v7658 = vpack.c.bf16 %v7625, %v7624
      %v7675 = vunpack.c.l.b16 %v7626
      %v7676 = vunpack.c.l.b16 %v7627
      %v7677 = vunpack.c.l.b16 %v7628
      %v7678 = vunpack.c.l.b16 %v7629
      %v7679 = vunpack.c.l.b16 %v7630
      %v7680 = vunpack.c.l.b16 %v7631
      %v7681 = vunpack.c.l.b16 %v7632
      %v7682 = vunpack.c.l.b16 %v7633
      %v7683 = vunpack.c.l.b16 %v7634
      %v7684 = vunpack.c.l.b16 %v7635
      %v7685 = vunpack.c.l.b16 %v7636
      %v7686 = vunpack.c.l.b16 %v7637
      %v7687 = vunpack.c.l.b16 %v7638
      %v7688 = vunpack.c.l.b16 %v7639
      %v7689 = vunpack.c.l.b16 %v7640
      %v7690 = vunpack.c.l.b16 %v7641
      %v7691 = vpack.c.b16 %v7676, %v7675
      %v7692 = vpack.c.b16 %v7678, %v7677
      %v7693 = vpack.c.b16 %v7680, %v7679
      %v7694 = vpack.c.b16 %v7682, %v7681
      %v7695 = vpack.c.b16 %v7684, %v7683
      %v7696 = vpack.c.b16 %v7686, %v7685
      %v7697 = vpack.c.b16 %v7688, %v7687
      %v7698 = vpack.c.b16 %v7690, %v7689
      %7707 = vmatpush.bf16.msra.mxu0 %v7698
      %7708 = vmatpush.bf16.msra.mxu0 %v7697
      %7709 = vmatpush.bf16.msra.mxu0 %v7696
      %7710 = vmatpush.bf16.msra.mxu0 %v7695
      %7711 = vmatpush.bf16.msra.mxu0 %v7694
      %7712 = vmatpush.bf16.msra.mxu0 %v7693
      %7713 = vmatpush.bf16.msra.mxu0 %v7692
      %7714 = vmatpush.bf16.msra.mxu0 %v7691
      %7715 = vmatmul.bf16.gmra.mxu0 %v7643
      %v7716 = vpop.f32.mrf.mxu0
      %v7717 = vadd.f32 0.0, %v7716
      %v7718 = vpop.f32.mrf.mxu0
      %v7719 = vadd.f32 0.0, %v7718
      %7720 = vmatmul.bf16.gmra.mxu0 %v7644
      %v7721 = vpop.f32.mrf.mxu0
      %v7722 = vadd.f32 0.0, %v7721
      %v7723 = vpop.f32.mrf.mxu0
      %v7724 = vadd.f32 0.0, %v7723
      %7725 = vmatmul.bf16.gmra.mxu0 %v7645
      %v7726 = vpop.f32.mrf.mxu0
      %v7727 = vadd.f32 0.0, %v7726
      %v7728 = vpop.f32.mrf.mxu0
      %v7729 = vadd.f32 0.0, %v7728
      %7730 = vmatmul.bf16.gmra.mxu0 %v7646
      %v7731 = vpop.f32.mrf.mxu0
      %v7732 = vadd.f32 0.0, %v7731
      %v7733 = vpop.f32.mrf.mxu0
      %v7734 = vadd.f32 0.0, %v7733
      %7735 = vmatmul.bf16.gmra.mxu0 %v7647
      %v7736 = vpop.f32.mrf.mxu0
      %v7737 = vadd.f32 0.0, %v7736
      %v7738 = vpop.f32.mrf.mxu0
      %v7739 = vadd.f32 0.0, %v7738
      %7740 = vmatmul.bf16.gmra.mxu0 %v7648
      %v7741 = vpop.f32.mrf.mxu0
      %v7742 = vadd.f32 0.0, %v7741
      %v7743 = vpop.f32.mrf.mxu0
      %v7744 = vadd.f32 0.0, %v7743
      %7745 = vmatmul.bf16.gmra.mxu0 %v7649
      %v7746 = vpop.f32.mrf.mxu0
      %v7747 = vadd.f32 0.0, %v7746
      %v7748 = vpop.f32.mrf.mxu0
      %v7749 = vadd.f32 0.0, %v7748
      %7750 = vmatmul.bf16.gmra.mxu0 %v7650
      %v7751 = vpop.f32.mrf.mxu0
      %v7752 = vadd.f32 0.0, %v7751
      %v7753 = vpop.f32.mrf.mxu0
      %v7754 = vadd.f32 0.0, %v7753
      %7755 = vmatmul.bf16.gmra.mxu0 %v7651
      %v7756 = vpop.f32.mrf.mxu0
      %v7757 = vadd.f32 0.0, %v7756
      %v7758 = vpop.f32.mrf.mxu0
      %v7759 = vadd.f32 0.0, %v7758
      %7760 = vmatmul.bf16.gmra.mxu0 %v7652
      %v7761 = vpop.f32.mrf.mxu0
      %v7762 = vadd.f32 0.0, %v7761
      %v7763 = vpop.f32.mrf.mxu0
      %v7764 = vadd.f32 0.0, %v7763
      %7765 = vmatmul.bf16.gmra.mxu0 %v7653
      %v7766 = vpop.f32.mrf.mxu0
      %v7767 = vadd.f32 0.0, %v7766
      %v7768 = vpop.f32.mrf.mxu0
      %v7769 = vadd.f32 0.0, %v7768
      %7770 = vmatmul.bf16.gmra.mxu0 %v7654
      %v7771 = vpop.f32.mrf.mxu0
      %v7772 = vadd.f32 0.0, %v7771
      %v7773 = vpop.f32.mrf.mxu0
      %v7774 = vadd.f32 0.0, %v7773
      %7775 = vmatmul.bf16.gmra.mxu0 %v7655
      %v7776 = vpop.f32.mrf.mxu0
      %v7777 = vadd.f32 0.0, %v7776
      %v7778 = vpop.f32.mrf.mxu0
      %v7779 = vadd.f32 0.0, %v7778
      %7780 = vmatmul.bf16.gmra.mxu0 %v7656
      %v7781 = vpop.f32.mrf.mxu0
      %v7782 = vadd.f32 0.0, %v7781
      %v7783 = vpop.f32.mrf.mxu0
      %v7784 = vadd.f32 0.0, %v7783
      %7785 = vmatmul.bf16.gmra.mxu0 %v7657
      %v7786 = vpop.f32.mrf.mxu0
      %v7787 = vadd.f32 0.0, %v7786
      %v7788 = vpop.f32.mrf.mxu0
      %v7789 = vadd.f32 0.0, %v7788
      %7790 = vmatmul.bf16.gmra.mxu0 %v7658
      %v7791 = vpop.f32.mrf.mxu0
      %v7792 = vadd.f32 0.0, %v7791
      %v7793 = vpop.f32.mrf.mxu0
      %v7794 = vadd.f32 0.0, %v7793
      %7795 = vdwg.mxu0
      %v7797 = vperm.slane %v7642, 0
      %v7799 = vadd.f32 %v7717, %v7797
      %v7800 = vadd.f32 %v7719, %v7797
      %v7801 = vadd.f32 %v7722, %v7797
      %v7802 = vadd.f32 %v7724, %v7797
      %v7803 = vadd.f32 %v7727, %v7797
      %v7804 = vadd.f32 %v7729, %v7797
      %v7805 = vadd.f32 %v7732, %v7797
      %v7806 = vadd.f32 %v7734, %v7797
      %v7807 = vadd.f32 %v7737, %v7797
      %v7808 = vadd.f32 %v7739, %v7797
      %v7809 = vadd.f32 %v7742, %v7797
      %v7810 = vadd.f32 %v7744, %v7797
      %v7811 = vadd.f32 %v7747, %v7797
      %v7812 = vadd.f32 %v7749, %v7797
      %v7813 = vadd.f32 %v7752, %v7797
      %v7814 = vadd.f32 %v7754, %v7797
      %v7815 = vadd.f32 %v7757, %v7797
      %v7816 = vadd.f32 %v7759, %v7797
      %v7817 = vadd.f32 %v7762, %v7797
      %v7818 = vadd.f32 %v7764, %v7797
      %v7819 = vadd.f32 %v7767, %v7797
      %v7820 = vadd.f32 %v7769, %v7797
      %v7821 = vadd.f32 %v7772, %v7797
      %v7822 = vadd.f32 %v7774, %v7797
      %v7823 = vadd.f32 %v7777, %v7797
      %v7824 = vadd.f32 %v7779, %v7797
      %v7825 = vadd.f32 %v7782, %v7797
      %v7826 = vadd.f32 %v7784, %v7797
      %v7827 = vadd.f32 %v7787, %v7797
      %v7828 = vadd.f32 %v7789, %v7797
      %v7829 = vadd.f32 %v7792, %v7797
      %v7830 = vadd.f32 %v7794, %v7797
      %v7831 = vadd.f32 %v5941, %v7799
      %v7832 = vadd.f32 %v5942, %v7800
      %v7833 = vadd.f32 %v5943, %v7801
      %v7834 = vadd.f32 %v5944, %v7802
      %v7835 = vadd.f32 %v5945, %v7803
      %v7836 = vadd.f32 %v5946, %v7804
      %v7837 = vadd.f32 %v5947, %v7805
      %v7838 = vadd.f32 %v5948, %v7806
      %v7839 = vadd.f32 %v5949, %v7807
      %v7840 = vadd.f32 %v5950, %v7808
      %v7841 = vadd.f32 %v5951, %v7809
      %v7842 = vadd.f32 %v5952, %v7810
      %v7843 = vadd.f32 %v5953, %v7811
      %v7844 = vadd.f32 %v5954, %v7812
      %v7845 = vadd.f32 %v5955, %v7813
      %v7846 = vadd.f32 %v5956, %v7814
      %v7847 = vadd.f32 %v5957, %v7815
      %v7848 = vadd.f32 %v5958, %v7816
      %v7849 = vadd.f32 %v5959, %v7817
      %v7850 = vadd.f32 %v5960, %v7818
      %v7851 = vadd.f32 %v5961, %v7819
      %v7852 = vadd.f32 %v5962, %v7820
      %v7853 = vadd.f32 %v5963, %v7821
      %v7854 = vadd.f32 %v5964, %v7822
      %v7855 = vadd.f32 %v5965, %v7823
      %v7856 = vadd.f32 %v5966, %v7824
      %v7857 = vadd.f32 %v5967, %v7825
      %v7858 = vadd.f32 %v5968, %v7826
      %v7859 = vadd.f32 %v5969, %v7827
      %v7860 = vadd.f32 %v5970, %v7828
      %v7861 = vadd.f32 %v5971, %v7829
      %v7862 = vadd.f32 %v5972, %v7830
      %7863 = vst.msk [vmem:[#allocation2] sm:$0xff] %vm864, %v7831
      %7864 = vst.msk [vmem:[#allocation2 + $0x8] sm:$0xff] %vm864, %v7832
      %7865 = vst.msk [vmem:[#allocation2 + $0x10] sm:$0xff] %vm864, %v7833
      %7866 = vst.msk [vmem:[#allocation2 + $0x18] sm:$0xff] %vm864, %v7834
      %7867 = vst.msk [vmem:[#allocation2 + $0x20] sm:$0xff] %vm864, %v7835
      %7868 = vst.msk [vmem:[#allocation2 + $0x28] sm:$0xff] %vm864, %v7836
      %7869 = vst.msk [vmem:[#allocation2 + $0x30] sm:$0xff] %vm864, %v7837
      %7870 = vst.msk [vmem:[#allocation2 + $0x38] sm:$0xff] %vm864, %v7838
      %7871 = vst.msk [vmem:[#allocation2 + $0x40] sm:$0xff] %vm864, %v7839
      %7872 = vst.msk [vmem:[#allocation2 + $0x48] sm:$0xff] %vm864, %v7840
      %7873 = vst.msk [vmem:[#allocation2 + $0x50] sm:$0xff] %vm864, %v7841
      %7874 = vst.msk [vmem:[#allocation2 + $0x58] sm:$0xff] %vm864, %v7842
      %7875 = vst.msk [vmem:[#allocation2 + $0x60] sm:$0xff] %vm864, %v7843
      %7876 = vst.msk [vmem:[#allocation2 + $0x68] sm:$0xff] %vm864, %v7844
      %7877 = vst.msk [vmem:[#allocation2 + $0x70] sm:$0xff] %vm864, %v7845
      %7878 = vst.msk [vmem:[#allocation2 + $0x78] sm:$0xff] %vm864, %v7846
      %7879 = vst.msk [vmem:[#allocation2 + $0x80] sm:$0xff] %vm864, %v7847
      %7880 = vst.msk [vmem:[#allocation2 + $0x88] sm:$0xff] %vm864, %v7848
      %7881 = vst.msk [vmem:[#allocation2 + $0x90] sm:$0xff] %vm864, %v7849
      %7882 = vst.msk [vmem:[#allocation2 + $0x98] sm:$0xff] %vm864, %v7850
      %7883 = vst.msk [vmem:[#allocation2 + $0xa0] sm:$0xff] %vm864, %v7851
      %7884 = vst.msk [vmem:[#allocation2 + $0xa8] sm:$0xff] %vm864, %v7852
      %7885 = vst.msk [vmem:[#allocation2 + $0xb0] sm:$0xff] %vm864, %v7853
      %7886 = vst.msk [vmem:[#allocation2 + $0xb8] sm:$0xff] %vm864, %v7854
      %7887 = vst.msk [vmem:[#allocation2 + $0xc0] sm:$0xff] %vm864, %v7855
      %7888 = vst.msk [vmem:[#allocation2 + $0xc8] sm:$0xff] %vm864, %v7856
      %7889 = vst.msk [vmem:[#allocation2 + $0xd0] sm:$0xff] %vm864, %v7857
      %7890 = vst.msk [vmem:[#allocation2 + $0xd8] sm:$0xff] %vm864, %v7858
      %7891 = vst.msk [vmem:[#allocation2 + $0xe0] sm:$0xff] %vm864, %v7859
      %7892 = vst.msk [vmem:[#allocation2 + $0xe8] sm:$0xff] %vm864, %v7860
      %7893 = vst.msk [vmem:[#allocation2 + $0xf0] sm:$0xff] %vm864, %v7861
      %7894 = vst.msk [vmem:[#allocation2 + $0xf8] sm:$0xff] %vm864, %v7862
      %v7895 = vld [vmem:[%s14] sm:$0x1]
      %v7896 = vld [vmem:[%s15] sm:$0x1]
      %v7897 = vsel %vm864, %v7831, 0.0
      %7898 = vadd.xlane.f32.xlu0 %v7897
      %v7899 = vpop.xlane.xlu0 %7898
      %v7900 = vsel %vm864, %v7832, 0.0
      %7901 = vadd.xlane.f32.xlu0 %v7900
      %v7902 = vpop.xlane.xlu0 %7901
      %v7903 = vsel %vm864, %v7833, 0.0
      %7904 = vadd.xlane.f32.xlu0 %v7903
      %v7905 = vpop.xlane.xlu0 %7904
      %v7906 = vsel %vm864, %v7834, 0.0
      %7907 = vadd.xlane.f32.xlu0 %v7906
      %v7908 = vpop.xlane.xlu0 %7907
      %v7909 = vsel %vm864, %v7835, 0.0
      %7910 = vadd.xlane.f32.xlu0 %v7909
      %v7911 = vpop.xlane.xlu0 %7910
      %v7912 = vsel %vm864, %v7836, 0.0
      %7913 = vadd.xlane.f32.xlu0 %v7912
      %v7914 = vpop.xlane.xlu0 %7913
      %v7915 = vsel %vm864, %v7837, 0.0
      %7916 = vadd.xlane.f32.xlu0 %v7915
      %v7917 = vpop.xlane.xlu0 %7916
      %v7918 = vsel %vm864, %v7838, 0.0
      %7919 = vadd.xlane.f32.xlu0 %v7918
      %v7920 = vpop.xlane.xlu0 %7919
      %v7921 = vsel %vm864, %v7839, 0.0
      %7922 = vadd.xlane.f32.xlu0 %v7921
      %v7923 = vpop.xlane.xlu0 %7922
      %v7924 = vsel %vm864, %v7840, 0.0
      %7925 = vadd.xlane.f32.xlu0 %v7924
      %v7926 = vpop.xlane.xlu0 %7925
      %v7927 = vsel %vm864, %v7841, 0.0
      %7928 = vadd.xlane.f32.xlu0 %v7927
      %v7929 = vpop.xlane.xlu0 %7928
      %v7930 = vsel %vm864, %v7842, 0.0
      %7931 = vadd.xlane.f32.xlu0 %v7930
      %v7932 = vpop.xlane.xlu0 %7931
      %v7933 = vsel %vm864, %v7843, 0.0
      %7934 = vadd.xlane.f32.xlu0 %v7933
      %v7935 = vpop.xlane.xlu0 %7934
      %v7936 = vsel %vm864, %v7844, 0.0
      %7937 = vadd.xlane.f32.xlu0 %v7936
      %v7938 = vpop.xlane.xlu0 %7937
      %v7939 = vsel %vm864, %v7845, 0.0
      %7940 = vadd.xlane.f32.xlu0 %v7939
      %v7941 = vpop.xlane.xlu0 %7940
      %v7942 = vsel %vm864, %v7846, 0.0
      %7943 = vadd.xlane.f32.xlu0 %v7942
      %v7944 = vpop.xlane.xlu0 %7943
      %v7945 = vsel %vm864, %v7847, 0.0
      %7946 = vadd.xlane.f32.xlu0 %v7945
      %v7947 = vpop.xlane.xlu0 %7946
      %v7948 = vsel %vm864, %v7848, 0.0
      %7949 = vadd.xlane.f32.xlu0 %v7948
      %v7950 = vpop.xlane.xlu0 %7949
      %v7951 = vsel %vm864, %v7849, 0.0
      %7952 = vadd.xlane.f32.xlu0 %v7951
      %v7953 = vpop.xlane.xlu0 %7952
      %v7954 = vsel %vm864, %v7850, 0.0
      %7955 = vadd.xlane.f32.xlu0 %v7954
      %v7956 = vpop.xlane.xlu0 %7955
      %v7957 = vsel %vm864, %v7851, 0.0
      %7958 = vadd.xlane.f32.xlu0 %v7957
      %v7959 = vpop.xlane.xlu0 %7958
      %v7960 = vsel %vm864, %v7852, 0.0
      %7961 = vadd.xlane.f32.xlu0 %v7960
      %v7962 = vpop.xlane.xlu0 %7961
      %v7963 = vsel %vm864, %v7853, 0.0
      %7964 = vadd.xlane.f32.xlu0 %v7963
      %v7965 = vpop.xlane.xlu0 %7964
      %v7966 = vsel %vm864, %v7854, 0.0
      %7967 = vadd.xlane.f32.xlu0 %v7966
      %v7968 = vpop.xlane.xlu0 %7967
      %v7969 = vsel %vm864, %v7855, 0.0
      %7970 = vadd.xlane.f32.xlu0 %v7969
      %v7971 = vpop.xlane.xlu0 %7970
      %v7972 = vsel %vm864, %v7856, 0.0
      %7973 = vadd.xlane.f32.xlu0 %v7972
      %v7974 = vpop.xlane.xlu0 %7973
      %v7975 = vsel %vm864, %v7857, 0.0
      %7976 = vadd.xlane.f32.xlu0 %v7975
      %v7977 = vpop.xlane.xlu0 %7976
      %v7978 = vsel %vm864, %v7858, 0.0
      %7979 = vadd.xlane.f32.xlu0 %v7978
      %v7980 = vpop.xlane.xlu0 %7979
      %v7981 = vsel %vm864, %v7859, 0.0
      %7982 = vadd.xlane.f32.xlu0 %v7981
      %v7983 = vpop.xlane.xlu0 %7982
      %v7984 = vsel %vm864, %v7860, 0.0
      %7985 = vadd.xlane.f32.xlu0 %v7984
      %v7986 = vpop.xlane.xlu0 %7985
      %v7987 = vsel %vm864, %v7861, 0.0
      %7988 = vadd.xlane.f32.xlu0 %v7987
      %v7989 = vpop.xlane.xlu0 %7988
      %v7990 = vsel %vm864, %v7862, 0.0
      %7991 = vadd.xlane.f32.xlu0 %v7990
      %v7992 = vpop.xlane.xlu0 %7991
      %v7993 = vmul.f32 %v7899, %v967
      %v7994 = vmul.f32 %v7902, %v967
      %v7995 = vmul.f32 %v7905, %v967
      %v7996 = vmul.f32 %v7908, %v967
      %v7997 = vmul.f32 %v7911, %v967
      %v7998 = vmul.f32 %v7914, %v967
      %v7999 = vmul.f32 %v7917, %v967
      %v8000 = vmul.f32 %v7920, %v967
      %v8001 = vmul.f32 %v7923, %v967
      %v8002 = vmul.f32 %v7926, %v967
      %v8003 = vmul.f32 %v7929, %v967
      %v8004 = vmul.f32 %v7932, %v967
      %v8005 = vmul.f32 %v7935, %v967
      %v8006 = vmul.f32 %v7938, %v967
      %v8007 = vmul.f32 %v7941, %v967
      %v8008 = vmul.f32 %v7944, %v967
      %v8009 = vmul.f32 %v7947, %v967
      %v8010 = vmul.f32 %v7950, %v967
      %v8011 = vmul.f32 %v7953, %v967
      %v8012 = vmul.f32 %v7956, %v967
      %v8013 = vmul.f32 %v7959, %v967
      %v8014 = vmul.f32 %v7962, %v967
      %v8015 = vmul.f32 %v7965, %v967
      %v8016 = vmul.f32 %v7968, %v967
      %v8017 = vmul.f32 %v7971, %v967
      %v8018 = vmul.f32 %v7974, %v967
      %v8019 = vmul.f32 %v7977, %v967
      %v8020 = vmul.f32 %v7980, %v967
      %v8021 = vmul.f32 %v7983, %v967
      %v8022 = vmul.f32 %v7986, %v967
      %v8023 = vmul.f32 %v7989, %v967
      %v8024 = vmul.f32 %v7992, %v967
      %v8025 = vsub.f32 %v7831, %v7993
      %v8026 = vsub.f32 %v7832, %v7994
      %v8027 = vsub.f32 %v7833, %v7995
      %v8028 = vsub.f32 %v7834, %v7996
      %v8029 = vsub.f32 %v7835, %v7997
      %v8030 = vsub.f32 %v7836, %v7998
      %v8031 = vsub.f32 %v7837, %v7999
      %v8032 = vsub.f32 %v7838, %v8000
      %v8033 = vsub.f32 %v7839, %v8001
      %v8034 = vsub.f32 %v7840, %v8002
      %v8035 = vsub.f32 %v7841, %v8003
      %v8036 = vsub.f32 %v7842, %v8004
      %v8037 = vsub.f32 %v7843, %v8005
      %v8038 = vsub.f32 %v7844, %v8006
      %v8039 = vsub.f32 %v7845, %v8007
      %v8040 = vsub.f32 %v7846, %v8008
      %v8041 = vsub.f32 %v7847, %v8009
      %v8042 = vsub.f32 %v7848, %v8010
      %v8043 = vsub.f32 %v7849, %v8011
      %v8044 = vsub.f32 %v7850, %v8012
      %v8045 = vsub.f32 %v7851, %v8013
      %v8046 = vsub.f32 %v7852, %v8014
      %v8047 = vsub.f32 %v7853, %v8015
      %v8048 = vsub.f32 %v7854, %v8016
      %v8049 = vsub.f32 %v7855, %v8017
      %v8050 = vsub.f32 %v7856, %v8018
      %v8051 = vsub.f32 %v7857, %v8019
      %v8052 = vsub.f32 %v7858, %v8020
      %v8053 = vsub.f32 %v7859, %v8021
      %v8054 = vsub.f32 %v7860, %v8022
      %v8055 = vsub.f32 %v7861, %v8023
      %v8056 = vsub.f32 %v7862, %v8024
      %v8057 = vmul.f32 %v8025, %v8025
      %v8058 = vmul.f32 %v8026, %v8026
      %v8059 = vmul.f32 %v8027, %v8027
      %v8060 = vmul.f32 %v8028, %v8028
      %v8061 = vmul.f32 %v8029, %v8029
      %v8062 = vmul.f32 %v8030, %v8030
      %v8063 = vmul.f32 %v8031, %v8031
      %v8064 = vmul.f32 %v8032, %v8032
      %v8065 = vmul.f32 %v8033, %v8033
      %v8066 = vmul.f32 %v8034, %v8034
      %v8067 = vmul.f32 %v8035, %v8035
      %v8068 = vmul.f32 %v8036, %v8036
      %v8069 = vmul.f32 %v8037, %v8037
      %v8070 = vmul.f32 %v8038, %v8038
      %v8071 = vmul.f32 %v8039, %v8039
      %v8072 = vmul.f32 %v8040, %v8040
      %v8073 = vmul.f32 %v8041, %v8041
      %v8074 = vmul.f32 %v8042, %v8042
      %v8075 = vmul.f32 %v8043, %v8043
      %v8076 = vmul.f32 %v8044, %v8044
      %v8077 = vmul.f32 %v8045, %v8045
      %v8078 = vmul.f32 %v8046, %v8046
      %v8079 = vmul.f32 %v8047, %v8047
      %v8080 = vmul.f32 %v8048, %v8048
      %v8081 = vmul.f32 %v8049, %v8049
      %v8082 = vmul.f32 %v8050, %v8050
      %v8083 = vmul.f32 %v8051, %v8051
      %v8084 = vmul.f32 %v8052, %v8052
      %v8085 = vmul.f32 %v8053, %v8053
      %v8086 = vmul.f32 %v8054, %v8054
      %v8087 = vmul.f32 %v8055, %v8055
      %v8088 = vmul.f32 %v8056, %v8056
      %v8089 = vsel %vm864, %v8057, 0.0
      %8090 = vadd.xlane.f32.xlu0 %v8089
      %v8091 = vpop.xlane.xlu0 %8090
      %v8092 = vsel %vm864, %v8058, 0.0
      %8093 = vadd.xlane.f32.xlu0 %v8092
      %v8094 = vpop.xlane.xlu0 %8093
      %v8095 = vsel %vm864, %v8059, 0.0
      %8096 = vadd.xlane.f32.xlu0 %v8095
      %v8097 = vpop.xlane.xlu0 %8096
      %v8098 = vsel %vm864, %v8060, 0.0
      %8099 = vadd.xlane.f32.xlu0 %v8098
      %v8100 = vpop.xlane.xlu0 %8099
      %v8101 = vsel %vm864, %v8061, 0.0
      %8102 = vadd.xlane.f32.xlu0 %v8101
      %v8103 = vpop.xlane.xlu0 %8102
      %v8104 = vsel %vm864, %v8062, 0.0
      %8105 = vadd.xlane.f32.xlu0 %v8104
      %v8106 = vpop.xlane.xlu0 %8105
      %v8107 = vsel %vm864, %v8063, 0.0
      %8108 = vadd.xlane.f32.xlu0 %v8107
      %v8109 = vpop.xlane.xlu0 %8108
      %v8110 = vsel %vm864, %v8064, 0.0
      %8111 = vadd.xlane.f32.xlu0 %v8110
      %v8112 = vpop.xlane.xlu0 %8111
      %v8113 = vsel %vm864, %v8065, 0.0
      %8114 = vadd.xlane.f32.xlu0 %v8113
      %v8115 = vpop.xlane.xlu0 %8114
      %v8116 = vsel %vm864, %v8066, 0.0
      %8117 = vadd.xlane.f32.xlu0 %v8116
      %v8118 = vpop.xlane.xlu0 %8117
      %v8119 = vsel %vm864, %v8067, 0.0
      %8120 = vadd.xlane.f32.xlu0 %v8119
      %v8121 = vpop.xlane.xlu0 %8120
      %v8122 = vsel %vm864, %v8068, 0.0
      %8123 = vadd.xlane.f32.xlu0 %v8122
      %v8124 = vpop.xlane.xlu0 %8123
      %v8125 = vsel %vm864, %v8069, 0.0
      %8126 = vadd.xlane.f32.xlu0 %v8125
      %v8127 = vpop.xlane.xlu0 %8126
      %v8128 = vsel %vm864, %v8070, 0.0
      %8129 = vadd.xlane.f32.xlu0 %v8128
      %v8130 = vpop.xlane.xlu0 %8129
      %v8131 = vsel %vm864, %v8071, 0.0
      %8132 = vadd.xlane.f32.xlu0 %v8131
      %v8133 = vpop.xlane.xlu0 %8132
      %v8134 = vsel %vm864, %v8072, 0.0
      %8135 = vadd.xlane.f32.xlu0 %v8134
      %v8136 = vpop.xlane.xlu0 %8135
      %v8137 = vsel %vm864, %v8073, 0.0
      %8138 = vadd.xlane.f32.xlu0 %v8137
      %v8139 = vpop.xlane.xlu0 %8138
      %v8140 = vsel %vm864, %v8074, 0.0
      %8141 = vadd.xlane.f32.xlu0 %v8140
      %v8142 = vpop.xlane.xlu0 %8141
      %v8143 = vsel %vm864, %v8075, 0.0
      %8144 = vadd.xlane.f32.xlu0 %v8143
      %v8145 = vpop.xlane.xlu0 %8144
      %v8146 = vsel %vm864, %v8076, 0.0
      %8147 = vadd.xlane.f32.xlu0 %v8146
      %v8148 = vpop.xlane.xlu0 %8147
      %v8149 = vsel %vm864, %v8077, 0.0
      %8150 = vadd.xlane.f32.xlu0 %v8149
      %v8151 = vpop.xlane.xlu0 %8150
      %v8152 = vsel %vm864, %v8078, 0.0
      %8153 = vadd.xlane.f32.xlu0 %v8152
      %v8154 = vpop.xlane.xlu0 %8153
      %v8155 = vsel %vm864, %v8079, 0.0
      %8156 = vadd.xlane.f32.xlu0 %v8155
      %v8157 = vpop.xlane.xlu0 %8156
      %v8158 = vsel %vm864, %v8080, 0.0
      %8159 = vadd.xlane.f32.xlu0 %v8158
      %v8160 = vpop.xlane.xlu0 %8159
      %v8161 = vsel %vm864, %v8081, 0.0
      %8162 = vadd.xlane.f32.xlu0 %v8161
      %v8163 = vpop.xlane.xlu0 %8162
      %v8164 = vsel %vm864, %v8082, 0.0
      %8165 = vadd.xlane.f32.xlu0 %v8164
      %v8166 = vpop.xlane.xlu0 %8165
      %v8167 = vsel %vm864, %v8083, 0.0
      %8168 = vadd.xlane.f32.xlu0 %v8167
      %v8169 = vpop.xlane.xlu0 %8168
      %v8170 = vsel %vm864, %v8084, 0.0
      %8171 = vadd.xlane.f32.xlu0 %v8170
      %v8172 = vpop.xlane.xlu0 %8171
      %v8173 = vsel %vm864, %v8085, 0.0
      %8174 = vadd.xlane.f32.xlu0 %v8173
      %v8175 = vpop.xlane.xlu0 %8174
      %v8176 = vsel %vm864, %v8086, 0.0
      %8177 = vadd.xlane.f32.xlu0 %v8176
      %v8178 = vpop.xlane.xlu0 %8177
      %v8179 = vsel %vm864, %v8087, 0.0
      %8180 = vadd.xlane.f32.xlu0 %v8179
      %v8181 = vpop.xlane.xlu0 %8180
      %v8182 = vsel %vm864, %v8088, 0.0
      %8183 = vadd.xlane.f32.xlu0 %v8182
      %v8184 = vpop.xlane.xlu0 %8183
      %v8185 = vmul.f32 %v8091, %v967
      %v8186 = vmul.f32 %v8094, %v967
      %v8187 = vmul.f32 %v8097, %v967
      %v8188 = vmul.f32 %v8100, %v967
      %v8189 = vmul.f32 %v8103, %v967
      %v8190 = vmul.f32 %v8106, %v967
      %v8191 = vmul.f32 %v8109, %v967
      %v8192 = vmul.f32 %v8112, %v967
      %v8193 = vmul.f32 %v8115, %v967
      %v8194 = vmul.f32 %v8118, %v967
      %v8195 = vmul.f32 %v8121, %v967
      %v8196 = vmul.f32 %v8124, %v967
      %v8197 = vmul.f32 %v8127, %v967
      %v8198 = vmul.f32 %v8130, %v967
      %v8199 = vmul.f32 %v8133, %v967
      %v8200 = vmul.f32 %v8136, %v967
      %v8201 = vmul.f32 %v8139, %v967
      %v8202 = vmul.f32 %v8142, %v967
      %v8203 = vmul.f32 %v8145, %v967
      %v8204 = vmul.f32 %v8148, %v967
      %v8205 = vmul.f32 %v8151, %v967
      %v8206 = vmul.f32 %v8154, %v967
      %v8207 = vmul.f32 %v8157, %v967
      %v8208 = vmul.f32 %v8160, %v967
      %v8209 = vmul.f32 %v8163, %v967
      %v8210 = vmul.f32 %v8166, %v967
      %v8211 = vmul.f32 %v8169, %v967
      %v8212 = vmul.f32 %v8172, %v967
      %v8213 = vmul.f32 %v8175, %v967
      %v8214 = vmul.f32 %v8178, %v967
      %v8215 = vmul.f32 %v8181, %v967
      %v8216 = vmul.f32 %v8184, %v967
      %v8217 = vadd.f32 %v8185, 1e-05
      %v8218 = vadd.f32 %v8186, 1e-05
      %v8219 = vadd.f32 %v8187, 1e-05
      %v8220 = vadd.f32 %v8188, 1e-05
      %v8221 = vadd.f32 %v8189, 1e-05
      %v8222 = vadd.f32 %v8190, 1e-05
      %v8223 = vadd.f32 %v8191, 1e-05
      %v8224 = vadd.f32 %v8192, 1e-05
      %v8225 = vadd.f32 %v8193, 1e-05
      %v8226 = vadd.f32 %v8194, 1e-05
      %v8227 = vadd.f32 %v8195, 1e-05
      %v8228 = vadd.f32 %v8196, 1e-05
      %v8229 = vadd.f32 %v8197, 1e-05
      %v8230 = vadd.f32 %v8198, 1e-05
      %v8231 = vadd.f32 %v8199, 1e-05
      %v8232 = vadd.f32 %v8200, 1e-05
      %v8233 = vadd.f32 %v8201, 1e-05
      %v8234 = vadd.f32 %v8202, 1e-05
      %v8235 = vadd.f32 %v8203, 1e-05
      %v8236 = vadd.f32 %v8204, 1e-05
      %v8237 = vadd.f32 %v8205, 1e-05
      %v8238 = vadd.f32 %v8206, 1e-05
      %v8239 = vadd.f32 %v8207, 1e-05
      %v8240 = vadd.f32 %v8208, 1e-05
      %v8241 = vadd.f32 %v8209, 1e-05
      %v8242 = vadd.f32 %v8210, 1e-05
      %v8243 = vadd.f32 %v8211, 1e-05
      %v8244 = vadd.f32 %v8212, 1e-05
      %v8245 = vadd.f32 %v8213, 1e-05
      %v8246 = vadd.f32 %v8214, 1e-05
      %v8247 = vadd.f32 %v8215, 1e-05
      %v8248 = vadd.f32 %v8216, 1e-05
      %v8249 = vrsqrt.pop %v8217
      %v8250 = vmul.f32 %v8249, %v8217
      %v8251 = vmul.f32 %v8250, %v8249
      %v8252 = vmul.f32 0.5, %v8251
      %v8253 = vsub.f32 1.5, %v8252
      %v8254 = vmul.f32 %v8249, %v8253
      %vm8255 = vweird.f32 %v8217
      %vm8256 = vweird.f32 %v8249
      %vm8257 = vmor %vm8255, %vm8256
      %v8258 = vsel %vm8257, %v8249, %v8254
      %v8259 = vrsqrt.pop %v8218
      %v8260 = vmul.f32 %v8259, %v8218
      %v8261 = vmul.f32 %v8260, %v8259
      %v8262 = vmul.f32 0.5, %v8261
      %v8263 = vsub.f32 1.5, %v8262
      %v8264 = vmul.f32 %v8259, %v8263
      %vm8265 = vweird.f32 %v8218
      %vm8266 = vweird.f32 %v8259
      %vm8267 = vmor %vm8265, %vm8266
      %v8268 = vsel %vm8267, %v8259, %v8264
      %v8269 = vrsqrt.pop %v8219
      %v8270 = vmul.f32 %v8269, %v8219
      %v8271 = vmul.f32 %v8270, %v8269
      %v8272 = vmul.f32 0.5, %v8271
      %v8273 = vsub.f32 1.5, %v8272
      %v8274 = vmul.f32 %v8269, %v8273
      %vm8275 = vweird.f32 %v8219
      %vm8276 = vweird.f32 %v8269
      %vm8277 = vmor %vm8275, %vm8276
      %v8278 = vsel %vm8277, %v8269, %v8274
      %v8279 = vrsqrt.pop %v8220
      %v8280 = vmul.f32 %v8279, %v8220
      %v8281 = vmul.f32 %v8280, %v8279
      %v8282 = vmul.f32 0.5, %v8281
      %v8283 = vsub.f32 1.5, %v8282
      %v8284 = vmul.f32 %v8279, %v8283
      %vm8285 = vweird.f32 %v8220
      %vm8286 = vweird.f32 %v8279
      %vm8287 = vmor %vm8285, %vm8286
      %v8288 = vsel %vm8287, %v8279, %v8284
      %v8289 = vrsqrt.pop %v8221
      %v8290 = vmul.f32 %v8289, %v8221
      %v8291 = vmul.f32 %v8290, %v8289
      %v8292 = vmul.f32 0.5, %v8291
      %v8293 = vsub.f32 1.5, %v8292
      %v8294 = vmul.f32 %v8289, %v8293
      %vm8295 = vweird.f32 %v8221
      %vm8296 = vweird.f32 %v8289
      %vm8297 = vmor %vm8295, %vm8296
      %v8298 = vsel %vm8297, %v8289, %v8294
      %v8299 = vrsqrt.pop %v8222
      %v8300 = vmul.f32 %v8299, %v8222
      %v8301 = vmul.f32 %v8300, %v8299
      %v8302 = vmul.f32 0.5, %v8301
      %v8303 = vsub.f32 1.5, %v8302
      %v8304 = vmul.f32 %v8299, %v8303
      %vm8305 = vweird.f32 %v8222
      %vm8306 = vweird.f32 %v8299
      %vm8307 = vmor %vm8305, %vm8306
      %v8308 = vsel %vm8307, %v8299, %v8304
      %v8309 = vrsqrt.pop %v8223
      %v8310 = vmul.f32 %v8309, %v8223
      %v8311 = vmul.f32 %v8310, %v8309
      %v8312 = vmul.f32 0.5, %v8311
      %v8313 = vsub.f32 1.5, %v8312
      %v8314 = vmul.f32 %v8309, %v8313
      %vm8315 = vweird.f32 %v8223
      %vm8316 = vweird.f32 %v8309
      %vm8317 = vmor %vm8315, %vm8316
      %v8318 = vsel %vm8317, %v8309, %v8314
      %v8319 = vrsqrt.pop %v8224
      %v8320 = vmul.f32 %v8319, %v8224
      %v8321 = vmul.f32 %v8320, %v8319
      %v8322 = vmul.f32 0.5, %v8321
      %v8323 = vsub.f32 1.5, %v8322
      %v8324 = vmul.f32 %v8319, %v8323
      %vm8325 = vweird.f32 %v8224
      %vm8326 = vweird.f32 %v8319
      %vm8327 = vmor %vm8325, %vm8326
      %v8328 = vsel %vm8327, %v8319, %v8324
      %v8329 = vrsqrt.pop %v8225
      %v8330 = vmul.f32 %v8329, %v8225
      %v8331 = vmul.f32 %v8330, %v8329
      %v8332 = vmul.f32 0.5, %v8331
      %v8333 = vsub.f32 1.5, %v8332
      %v8334 = vmul.f32 %v8329, %v8333
      %vm8335 = vweird.f32 %v8225
      %vm8336 = vweird.f32 %v8329
      %vm8337 = vmor %vm8335, %vm8336
      %v8338 = vsel %vm8337, %v8329, %v8334
      %v8339 = vrsqrt.pop %v8226
      %v8340 = vmul.f32 %v8339, %v8226
      %v8341 = vmul.f32 %v8340, %v8339
      %v8342 = vmul.f32 0.5, %v8341
      %v8343 = vsub.f32 1.5, %v8342
      %v8344 = vmul.f32 %v8339, %v8343
      %vm8345 = vweird.f32 %v8226
      %vm8346 = vweird.f32 %v8339
      %vm8347 = vmor %vm8345, %vm8346
      %v8348 = vsel %vm8347, %v8339, %v8344
      %v8349 = vrsqrt.pop %v8227
      %v8350 = vmul.f32 %v8349, %v8227
      %v8351 = vmul.f32 %v8350, %v8349
      %v8352 = vmul.f32 0.5, %v8351
      %v8353 = vsub.f32 1.5, %v8352
      %v8354 = vmul.f32 %v8349, %v8353
      %vm8355 = vweird.f32 %v8227
      %vm8356 = vweird.f32 %v8349
      %vm8357 = vmor %vm8355, %vm8356
      %v8358 = vsel %vm8357, %v8349, %v8354
      %v8359 = vrsqrt.pop %v8228
      %v8360 = vmul.f32 %v8359, %v8228
      %v8361 = vmul.f32 %v8360, %v8359
      %v8362 = vmul.f32 0.5, %v8361
      %v8363 = vsub.f32 1.5, %v8362
      %v8364 = vmul.f32 %v8359, %v8363
      %vm8365 = vweird.f32 %v8228
      %vm8366 = vweird.f32 %v8359
      %vm8367 = vmor %vm8365, %vm8366
      %v8368 = vsel %vm8367, %v8359, %v8364
      %v8369 = vrsqrt.pop %v8229
      %v8370 = vmul.f32 %v8369, %v8229
      %v8371 = vmul.f32 %v8370, %v8369
      %v8372 = vmul.f32 0.5, %v8371
      %v8373 = vsub.f32 1.5, %v8372
      %v8374 = vmul.f32 %v8369, %v8373
      %vm8375 = vweird.f32 %v8229
      %vm8376 = vweird.f32 %v8369
      %vm8377 = vmor %vm8375, %vm8376
      %v8378 = vsel %vm8377, %v8369, %v8374
      %v8379 = vrsqrt.pop %v8230
      %v8380 = vmul.f32 %v8379, %v8230
      %v8381 = vmul.f32 %v8380, %v8379
      %v8382 = vmul.f32 0.5, %v8381
      %v8383 = vsub.f32 1.5, %v8382
      %v8384 = vmul.f32 %v8379, %v8383
      %vm8385 = vweird.f32 %v8230
      %vm8386 = vweird.f32 %v8379
      %vm8387 = vmor %vm8385, %vm8386
      %v8388 = vsel %vm8387, %v8379, %v8384
      %v8389 = vrsqrt.pop %v8231
      %v8390 = vmul.f32 %v8389, %v8231
      %v8391 = vmul.f32 %v8390, %v8389
      %v8392 = vmul.f32 0.5, %v8391
      %v8393 = vsub.f32 1.5, %v8392
      %v8394 = vmul.f32 %v8389, %v8393
      %vm8395 = vweird.f32 %v8231
      %vm8396 = vweird.f32 %v8389
      %vm8397 = vmor %vm8395, %vm8396
      %v8398 = vsel %vm8397, %v8389, %v8394
      %v8399 = vrsqrt.pop %v8232
      %v8400 = vmul.f32 %v8399, %v8232
      %v8401 = vmul.f32 %v8400, %v8399
      %v8402 = vmul.f32 0.5, %v8401
      %v8403 = vsub.f32 1.5, %v8402
      %v8404 = vmul.f32 %v8399, %v8403
      %vm8405 = vweird.f32 %v8232
      %vm8406 = vweird.f32 %v8399
      %vm8407 = vmor %vm8405, %vm8406
      %v8408 = vsel %vm8407, %v8399, %v8404
      %v8409 = vrsqrt.pop %v8233
      %v8410 = vmul.f32 %v8409, %v8233
      %v8411 = vmul.f32 %v8410, %v8409
      %v8412 = vmul.f32 0.5, %v8411
      %v8413 = vsub.f32 1.5, %v8412
      %v8414 = vmul.f32 %v8409, %v8413
      %vm8415 = vweird.f32 %v8233
      %vm8416 = vweird.f32 %v8409
      %vm8417 = vmor %vm8415, %vm8416
      %v8418 = vsel %vm8417, %v8409, %v8414
      %v8419 = vrsqrt.pop %v8234
      %v8420 = vmul.f32 %v8419, %v8234
      %v8421 = vmul.f32 %v8420, %v8419
      %v8422 = vmul.f32 0.5, %v8421
      %v8423 = vsub.f32 1.5, %v8422
      %v8424 = vmul.f32 %v8419, %v8423
      %vm8425 = vweird.f32 %v8234
      %vm8426 = vweird.f32 %v8419
      %vm8427 = vmor %vm8425, %vm8426
      %v8428 = vsel %vm8427, %v8419, %v8424
      %v8429 = vrsqrt.pop %v8235
      %v8430 = vmul.f32 %v8429, %v8235
      %v8431 = vmul.f32 %v8430, %v8429
      %v8432 = vmul.f32 0.5, %v8431
      %v8433 = vsub.f32 1.5, %v8432
      %v8434 = vmul.f32 %v8429, %v8433
      %vm8435 = vweird.f32 %v8235
      %vm8436 = vweird.f32 %v8429
      %vm8437 = vmor %vm8435, %vm8436
      %v8438 = vsel %vm8437, %v8429, %v8434
      %v8439 = vrsqrt.pop %v8236
      %v8440 = vmul.f32 %v8439, %v8236
      %v8441 = vmul.f32 %v8440, %v8439
      %v8442 = vmul.f32 0.5, %v8441
      %v8443 = vsub.f32 1.5, %v8442
      %v8444 = vmul.f32 %v8439, %v8443
      %vm8445 = vweird.f32 %v8236
      %vm8446 = vweird.f32 %v8439
      %vm8447 = vmor %vm8445, %vm8446
      %v8448 = vsel %vm8447, %v8439, %v8444
      %v8449 = vrsqrt.pop %v8237
      %v8450 = vmul.f32 %v8449, %v8237
      %v8451 = vmul.f32 %v8450, %v8449
      %v8452 = vmul.f32 0.5, %v8451
      %v8453 = vsub.f32 1.5, %v8452
      %v8454 = vmul.f32 %v8449, %v8453
      %vm8455 = vweird.f32 %v8237
      %vm8456 = vweird.f32 %v8449
      %vm8457 = vmor %vm8455, %vm8456
      %v8458 = vsel %vm8457, %v8449, %v8454
      %v8459 = vrsqrt.pop %v8238
      %v8460 = vmul.f32 %v8459, %v8238
      %v8461 = vmul.f32 %v8460, %v8459
      %v8462 = vmul.f32 0.5, %v8461
      %v8463 = vsub.f32 1.5, %v8462
      %v8464 = vmul.f32 %v8459, %v8463
      %vm8465 = vweird.f32 %v8238
      %vm8466 = vweird.f32 %v8459
      %vm8467 = vmor %vm8465, %vm8466
      %v8468 = vsel %vm8467, %v8459, %v8464
      %v8469 = vrsqrt.pop %v8239
      %v8470 = vmul.f32 %v8469, %v8239
      %v8471 = vmul.f32 %v8470, %v8469
      %v8472 = vmul.f32 0.5, %v8471
      %v8473 = vsub.f32 1.5, %v8472
      %v8474 = vmul.f32 %v8469, %v8473
      %vm8475 = vweird.f32 %v8239
      %vm8476 = vweird.f32 %v8469
      %vm8477 = vmor %vm8475, %vm8476
      %v8478 = vsel %vm8477, %v8469, %v8474
      %v8479 = vrsqrt.pop %v8240
      %v8480 = vmul.f32 %v8479, %v8240
      %v8481 = vmul.f32 %v8480, %v8479
      %v8482 = vmul.f32 0.5, %v8481
      %v8483 = vsub.f32 1.5, %v8482
      %v8484 = vmul.f32 %v8479, %v8483
      %vm8485 = vweird.f32 %v8240
      %vm8486 = vweird.f32 %v8479
      %vm8487 = vmor %vm8485, %vm8486
      %v8488 = vsel %vm8487, %v8479, %v8484
      %v8489 = vrsqrt.pop %v8241
      %v8490 = vmul.f32 %v8489, %v8241
      %v8491 = vmul.f32 %v8490, %v8489
      %v8492 = vmul.f32 0.5, %v8491
      %v8493 = vsub.f32 1.5, %v8492
      %v8494 = vmul.f32 %v8489, %v8493
      %vm8495 = vweird.f32 %v8241
      %vm8496 = vweird.f32 %v8489
      %vm8497 = vmor %vm8495, %vm8496
      %v8498 = vsel %vm8497, %v8489, %v8494
      %v8499 = vrsqrt.pop %v8242
      %v8500 = vmul.f32 %v8499, %v8242
      %v8501 = vmul.f32 %v8500, %v8499
      %v8502 = vmul.f32 0.5, %v8501
      %v8503 = vsub.f32 1.5, %v8502
      %v8504 = vmul.f32 %v8499, %v8503
      %vm8505 = vweird.f32 %v8242
      %vm8506 = vweird.f32 %v8499
      %vm8507 = vmor %vm8505, %vm8506
      %v8508 = vsel %vm8507, %v8499, %v8504
      %v8509 = vrsqrt.pop %v8243
      %v8510 = vmul.f32 %v8509, %v8243
      %v8511 = vmul.f32 %v8510, %v8509
      %v8512 = vmul.f32 0.5, %v8511
      %v8513 = vsub.f32 1.5, %v8512
      %v8514 = vmul.f32 %v8509, %v8513
      %vm8515 = vweird.f32 %v8243
      %vm8516 = vweird.f32 %v8509
      %vm8517 = vmor %vm8515, %vm8516
      %v8518 = vsel %vm8517, %v8509, %v8514
      %v8519 = vrsqrt.pop %v8244
      %v8520 = vmul.f32 %v8519, %v8244
      %v8521 = vmul.f32 %v8520, %v8519
      %v8522 = vmul.f32 0.5, %v8521
      %v8523 = vsub.f32 1.5, %v8522
      %v8524 = vmul.f32 %v8519, %v8523
      %vm8525 = vweird.f32 %v8244
      %vm8526 = vweird.f32 %v8519
      %vm8527 = vmor %vm8525, %vm8526
      %v8528 = vsel %vm8527, %v8519, %v8524
      %v8529 = vrsqrt.pop %v8245
      %v8530 = vmul.f32 %v8529, %v8245
      %v8531 = vmul.f32 %v8530, %v8529
      %v8532 = vmul.f32 0.5, %v8531
      %v8533 = vsub.f32 1.5, %v8532
      %v8534 = vmul.f32 %v8529, %v8533
      %vm8535 = vweird.f32 %v8245
      %vm8536 = vweird.f32 %v8529
      %vm8537 = vmor %vm8535, %vm8536
      %v8538 = vsel %vm8537, %v8529, %v8534
      %v8539 = vrsqrt.pop %v8246
      %v8540 = vmul.f32 %v8539, %v8246
      %v8541 = vmul.f32 %v8540, %v8539
      %v8542 = vmul.f32 0.5, %v8541
      %v8543 = vsub.f32 1.5, %v8542
      %v8544 = vmul.f32 %v8539, %v8543
      %vm8545 = vweird.f32 %v8246
      %vm8546 = vweird.f32 %v8539
      %vm8547 = vmor %vm8545, %vm8546
      %v8548 = vsel %vm8547, %v8539, %v8544
      %v8549 = vrsqrt.pop %v8247
      %v8550 = vmul.f32 %v8549, %v8247
      %v8551 = vmul.f32 %v8550, %v8549
      %v8552 = vmul.f32 0.5, %v8551
      %v8553 = vsub.f32 1.5, %v8552
      %v8554 = vmul.f32 %v8549, %v8553
      %vm8555 = vweird.f32 %v8247
      %vm8556 = vweird.f32 %v8549
      %vm8557 = vmor %vm8555, %vm8556
      %v8558 = vsel %vm8557, %v8549, %v8554
      %v8559 = vrsqrt.pop %v8248
      %v8560 = vmul.f32 %v8559, %v8248
      %v8561 = vmul.f32 %v8560, %v8559
      %v8562 = vmul.f32 0.5, %v8561
      %v8563 = vsub.f32 1.5, %v8562
      %v8564 = vmul.f32 %v8559, %v8563
      %vm8565 = vweird.f32 %v8248
      %vm8566 = vweird.f32 %v8559
      %vm8567 = vmor %vm8565, %vm8566
      %v8568 = vsel %vm8567, %v8559, %v8564
      %v8569 = vmul.f32 %v8025, %v8258
      %v8570 = vmul.f32 %v8026, %v8268
      %v8571 = vmul.f32 %v8027, %v8278
      %v8572 = vmul.f32 %v8028, %v8288
      %v8573 = vmul.f32 %v8029, %v8298
      %v8574 = vmul.f32 %v8030, %v8308
      %v8575 = vmul.f32 %v8031, %v8318
      %v8576 = vmul.f32 %v8032, %v8328
      %v8577 = vmul.f32 %v8033, %v8338
      %v8578 = vmul.f32 %v8034, %v8348
      %v8579 = vmul.f32 %v8035, %v8358
      %v8580 = vmul.f32 %v8036, %v8368
      %v8581 = vmul.f32 %v8037, %v8378
      %v8582 = vmul.f32 %v8038, %v8388
      %v8583 = vmul.f32 %v8039, %v8398
      %v8584 = vmul.f32 %v8040, %v8408
      %v8585 = vmul.f32 %v8041, %v8418
      %v8586 = vmul.f32 %v8042, %v8428
      %v8587 = vmul.f32 %v8043, %v8438
      %v8588 = vmul.f32 %v8044, %v8448
      %v8589 = vmul.f32 %v8045, %v8458
      %v8590 = vmul.f32 %v8046, %v8468
      %v8591 = vmul.f32 %v8047, %v8478
      %v8592 = vmul.f32 %v8048, %v8488
      %v8593 = vmul.f32 %v8049, %v8498
      %v8594 = vmul.f32 %v8050, %v8508
      %v8595 = vmul.f32 %v8051, %v8518
      %v8596 = vmul.f32 %v8052, %v8528
      %v8597 = vmul.f32 %v8053, %v8538
      %v8598 = vmul.f32 %v8054, %v8548
      %v8599 = vmul.f32 %v8055, %v8558
      %v8600 = vmul.f32 %v8056, %v8568
      %v8602 = vperm.slane %v7895, 0
      %v8604 = vmul.f32 %v8569, %v8602
      %v8605 = vmul.f32 %v8570, %v8602
      %v8606 = vmul.f32 %v8571, %v8602
      %v8607 = vmul.f32 %v8572, %v8602
      %v8608 = vmul.f32 %v8573, %v8602
      %v8609 = vmul.f32 %v8574, %v8602
      %v8610 = vmul.f32 %v8575, %v8602
      %v8611 = vmul.f32 %v8576, %v8602
      %v8612 = vmul.f32 %v8577, %v8602
      %v8613 = vmul.f32 %v8578, %v8602
      %v8614 = vmul.f32 %v8579, %v8602
      %v8615 = vmul.f32 %v8580, %v8602
      %v8616 = vmul.f32 %v8581, %v8602
      %v8617 = vmul.f32 %v8582, %v8602
      %v8618 = vmul.f32 %v8583, %v8602
      %v8619 = vmul.f32 %v8584, %v8602
      %v8620 = vmul.f32 %v8585, %v8602
      %v8621 = vmul.f32 %v8586, %v8602
      %v8622 = vmul.f32 %v8587, %v8602
      %v8623 = vmul.f32 %v8588, %v8602
      %v8624 = vmul.f32 %v8589, %v8602
      %v8625 = vmul.f32 %v8590, %v8602
      %v8626 = vmul.f32 %v8591, %v8602
      %v8627 = vmul.f32 %v8592, %v8602
      %v8628 = vmul.f32 %v8593, %v8602
      %v8629 = vmul.f32 %v8594, %v8602
      %v8630 = vmul.f32 %v8595, %v8602
      %v8631 = vmul.f32 %v8596, %v8602
      %v8632 = vmul.f32 %v8597, %v8602
      %v8633 = vmul.f32 %v8598, %v8602
      %v8634 = vmul.f32 %v8599, %v8602
      %v8635 = vmul.f32 %v8600, %v8602
      %v8637 = vperm.slane %v7896, 0
      %v8639 = vadd.f32 %v8604, %v8637
      %v8640 = vadd.f32 %v8605, %v8637
      %v8641 = vadd.f32 %v8606, %v8637
      %v8642 = vadd.f32 %v8607, %v8637
      %v8643 = vadd.f32 %v8608, %v8637
      %v8644 = vadd.f32 %v8609, %v8637
      %v8645 = vadd.f32 %v8610, %v8637
      %v8646 = vadd.f32 %v8611, %v8637
      %v8647 = vadd.f32 %v8612, %v8637
      %v8648 = vadd.f32 %v8613, %v8637
      %v8649 = vadd.f32 %v8614, %v8637
      %v8650 = vadd.f32 %v8615, %v8637
      %v8651 = vadd.f32 %v8616, %v8637
      %v8652 = vadd.f32 %v8617, %v8637
      %v8653 = vadd.f32 %v8618, %v8637
      %v8654 = vadd.f32 %v8619, %v8637
      %v8655 = vadd.f32 %v8620, %v8637
      %v8656 = vadd.f32 %v8621, %v8637
      %v8657 = vadd.f32 %v8622, %v8637
      %v8658 = vadd.f32 %v8623, %v8637
      %v8659 = vadd.f32 %v8624, %v8637
      %v8660 = vadd.f32 %v8625, %v8637
      %v8661 = vadd.f32 %v8626, %v8637
      %v8662 = vadd.f32 %v8627, %v8637
      %v8663 = vadd.f32 %v8628, %v8637
      %v8664 = vadd.f32 %v8629, %v8637
      %v8665 = vadd.f32 %v8630, %v8637
      %v8666 = vadd.f32 %v8631, %v8637
      %v8667 = vadd.f32 %v8632, %v8637
      %v8668 = vadd.f32 %v8633, %v8637
      %v8669 = vadd.f32 %v8634, %v8637
      %v8670 = vadd.f32 %v8635, %v8637
      %v8671 = vpack.c.bf16 %v8639, %v8639
      %v8672 = vpack.c.bf16 %v8640, %v8640
      %v8673 = vpack.c.bf16 %v8641, %v8641
      %v8674 = vpack.c.bf16 %v8642, %v8642
      %v8675 = vpack.c.bf16 %v8643, %v8643
      %v8676 = vpack.c.bf16 %v8644, %v8644
      %v8677 = vpack.c.bf16 %v8645, %v8645
      %v8678 = vpack.c.bf16 %v8646, %v8646
      %v8679 = vpack.c.bf16 %v8647, %v8647
      %v8680 = vpack.c.bf16 %v8648, %v8648
      %v8681 = vpack.c.bf16 %v8649, %v8649
      %v8682 = vpack.c.bf16 %v8650, %v8650
      %v8683 = vpack.c.bf16 %v8651, %v8651
      %v8684 = vpack.c.bf16 %v8652, %v8652
      %v8685 = vpack.c.bf16 %v8653, %v8653
      %v8686 = vpack.c.bf16 %v8654, %v8654
      %v8687 = vpack.c.bf16 %v8655, %v8655
      %v8688 = vpack.c.bf16 %v8656, %v8656
      %v8689 = vpack.c.bf16 %v8657, %v8657
      %v8690 = vpack.c.bf16 %v8658, %v8658
      %v8691 = vpack.c.bf16 %v8659, %v8659
      %v8692 = vpack.c.bf16 %v8660, %v8660
      %v8693 = vpack.c.bf16 %v8661, %v8661
      %v8694 = vpack.c.bf16 %v8662, %v8662
      %v8695 = vpack.c.bf16 %v8663, %v8663
      %v8696 = vpack.c.bf16 %v8664, %v8664
      %v8697 = vpack.c.bf16 %v8665, %v8665
      %v8698 = vpack.c.bf16 %v8666, %v8666
      %v8699 = vpack.c.bf16 %v8667, %v8667
      %v8700 = vpack.c.bf16 %v8668, %v8668
      %v8701 = vpack.c.bf16 %v8669, %v8669
      %v8702 = vpack.c.bf16 %v8670, %v8670
      %vm8703 = vcmask 257024
      %8704 = vst.msk [vmem:[%s742] sm:$0xf] %vm8703, %v8671
      %8705 = vst.msk [vmem:[%s742 + $0x4] sm:$0xf] %vm8703, %v8672
      %8706 = vst.msk [vmem:[%s742 + $0x8] sm:$0xf] %vm8703, %v8673
      %8707 = vst.msk [vmem:[%s742 + $0xc] sm:$0xf] %vm8703, %v8674
      %8708 = vst.msk [vmem:[%s742 + $0x10] sm:$0xf] %vm8703, %v8675
      %8709 = vst.msk [vmem:[%s742 + $0x14] sm:$0xf] %vm8703, %v8676
      %8710 = vst.msk [vmem:[%s742 + $0x18] sm:$0xf] %vm8703, %v8677
      %8711 = vst.msk [vmem:[%s742 + $0x1c] sm:$0xf] %vm8703, %v8678
      %8712 = vst.msk [vmem:[%s742 + $0x20] sm:$0xf] %vm8703, %v8679
      %8713 = vst.msk [vmem:[%s742 + $0x24] sm:$0xf] %vm8703, %v8680
      %8714 = vst.msk [vmem:[%s742 + $0x28] sm:$0xf] %vm8703, %v8681
      %8715 = vst.msk [vmem:[%s742 + $0x2c] sm:$0xf] %vm8703, %v8682
      %8716 = vst.msk [vmem:[%s742 + $0x30] sm:$0xf] %vm8703, %v8683
      %8717 = vst.msk [vmem:[%s742 + $0x34] sm:$0xf] %vm8703, %v8684
      %8718 = vst.msk [vmem:[%s742 + $0x38] sm:$0xf] %vm8703, %v8685
      %8719 = vst.msk [vmem:[%s742 + $0x3c] sm:$0xf] %vm8703, %v8686
      %8720 = vst.msk [vmem:[%s742 + $0x40] sm:$0xf] %vm8703, %v8687
      %8721 = vst.msk [vmem:[%s742 + $0x44] sm:$0xf] %vm8703, %v8688
      %8722 = vst.msk [vmem:[%s742 + $0x48] sm:$0xf] %vm8703, %v8689
      %8723 = vst.msk [vmem:[%s742 + $0x4c] sm:$0xf] %vm8703, %v8690
      %8724 = vst.msk [vmem:[%s742 + $0x50] sm:$0xf] %vm8703, %v8691
      %8725 = vst.msk [vmem:[%s742 + $0x54] sm:$0xf] %vm8703, %v8692
      %8726 = vst.msk [vmem:[%s742 + $0x58] sm:$0xf] %vm8703, %v8693
      %8727 = vst.msk [vmem:[%s742 + $0x5c] sm:$0xf] %vm8703, %v8694
      %8728 = vst.msk [vmem:[%s742 + $0x60] sm:$0xf] %vm8703, %v8695
      %8729 = vst.msk [vmem:[%s742 + $0x64] sm:$0xf] %vm8703, %v8696
      %8730 = vst.msk [vmem:[%s742 + $0x68] sm:$0xf] %vm8703, %v8697
      %8731 = vst.msk [vmem:[%s742 + $0x6c] sm:$0xf] %vm8703, %v8698
      %8732 = vst.msk [vmem:[%s742 + $0x70] sm:$0xf] %vm8703, %v8699
      %8733 = vst.msk [vmem:[%s742 + $0x74] sm:$0xf] %vm8703, %v8700
      %8734 = vst.msk [vmem:[%s742 + $0x78] sm:$0xf] %vm8703, %v8701
      %8735 = vst.msk [vmem:[%s742 + $0x7c] sm:$0xf] %vm8703, %v8702
      %s8736 = smul.u32 2, %s31
      %p8737 = scmp.lt.s32.totalorder %s32, 2
      %s8738 = scalar_select %p8737, %s32, 2
      %p8739 = scmp.lt.s32.totalorder %s8736, 1
      %s8740 = scalar_select %p8739, %s8736, 1
      %s8741 = smul.addr %s8740, 16
      %s8742 = smul.addr %s8738, 32
      %s8743 = sadd.s32 %s8741, %s8742
      %s8744 = smul.addr %s8743, 4
      %s8745 = scalar_lea.vmem %s16, %s8744
      // Predicated region
      $region89: #{tpu_custom_call.1} parent=83 // pred_check
        %p8746 = pneg %p460
      $region90: #{tpu_custom_call.1} parent=83 // pred_check_branch
        %8748 = sbr.rel (%p8746) target = $region92
      $region91: #{tpu_custom_call.1} parent=83 // pred_region
        %s8749 = smul.u32 2, %s31
      $region92: #{tpu_custom_call.1} parent=83 // pred_fallthru
        _
    $region84: #{tpu_custom_call.1} parent=5 // pred_fallthru
      _
    %p8750 = scmp.le.s32.totalorder 2, %s22
    // Predicated region
    $region93: #{tpu_custom_call.1} parent=5 // pred_check
      %p8751 = pneg %p8750
    $region94: #{tpu_custom_call.1} parent=5 // pred_check_branch
      %8753 = sbr.rel (%p8751) target = $region96
    $region95: #{tpu_custom_call.1} parent=5 // pred_region
      %s8754 = ssub.s32 %s22, 2
      // Predicated region
      $region97: #{tpu_custom_call.1} parent=95 // pred_check
        %p8755 = pneg %p466
      $region98: #{tpu_custom_call.1} parent=95 // pred_check_branch
        %8757 = sbr.rel (%p8755) target = $region100
      $region99: #{tpu_custom_call.1} parent=95 // pred_region
        %s8758 = smul.u32 2, %s33
        %p8759 = scmp.lt.s32.totalorder %s34, 2
        %s8760 = scalar_select %p8759, %s34, 2
        %p8761 = scmp.lt.s32.totalorder %s8758, 1
        %s8762 = scalar_select %p8761, %s8758, 1
        %s8763 = smul.addr %s8762, 16
        %s8764 = smul.addr %s8760, 32
        %s8765 = sadd.s32 %s8763, %s8764
        %s8766 = smul.addr %s8765, 4
        %s8767 = scalar_lea.vmem %s16, %s8766
      $region100: #{tpu_custom_call.1} parent=95 // pred_fallthru
        _
    $region96: #{tpu_custom_call.1} parent=5 // pred_fallthru
      _
  $region6: #{tpu_custom_call.1} parent=0 // loop_footer
    %s26 = sadd.s32 1, %s22
  $region7: #{tpu_custom_call.1} parent=0 // loop_footer_branch
    %21 = sbr.rel target = $region3
  $region8: #{tpu_custom_call.1} parent=0 // loop_exit
    _

</llo_original>
